<compile_context>
chip_gen: v7x
topology: tpu7x:2x2x1
jax: 0.10.0
libtpu: 0.0.40
codegen_flags: <defaults>
</compile_context>

<pallas_src>
import math
import functools
import numpy as np
import jax
import jax.numpy as jnp
from jax.experimental import pallas as pl
from jax.experimental.pallas import tpu as pltpu

# ---- small config, consistent with the module (d_model divisible by heads, even) ----
D_MODEL = 40
HEADS = 5
D_K = D_MODEL // HEADS
D_FF = 2048          # FeedForward default d_ff
N_LAYERS = 3
VOCAB = 50
MAX_SEQ_LEN = 200
EPS = 1e-5           # nn.LayerNorm default eps

WEIGHT_ORDER = ('wqkv', 'bqkv', 'wo', 'bo',
                'g1', 'be1', 'g2', 'be2',
                'w1', 'b1', 'w2', 'b2')


def _layernorm(x, gamma, beta):
    mu = jnp.mean(x, axis=-1, keepdims=True)
    var = jnp.mean((x - mu) ** 2, axis=-1, keepdims=True)
    return (x - mu) * jax.lax.rsqrt(var + EPS) * gamma + beta


def encoder_kernel(x_ref, bias_ref,
                   wqkv_ref, bqkv_ref, wo_ref, bo_ref,
                   g1_ref, be1_ref, g2_ref, be2_ref,
                   w1_ref, b1_ref, w2_ref, b2_ref,
                   fg_ref, fb_ref,
                   out_ref, aw_ref,
                   *, heads, n_layers):
    """Whole encoder in one invocation (no grid): pos-encoded x in, (out, attn_w) out."""
    B, S, D = x_ref.shape
    N = B * S
    dk = D // heads
    scale = 1.0 / math.sqrt(dk)

    # Activations as a (B*S, D) matrix for the whole encoder (batch folded into rows).
    x = x_ref[...].reshape(N, D)                                   # f32

    # Additive score bias (padding mask + cross-batch block mask), hoisted and
    # broadcast to all heads once (JAX does not CSE broadcast_in_dim).
    neg = jnp.broadcast_to(bias_ref[...][None, :, :], (heads, N, N))

    for l in range(n_layers):            # static unroll: no per-grid-step overhead
        last = (l == n_layers - 1)

        # ---------------- norm_1 + MultiHeadAttention + residual ----------------
        x2 = _layernorm(x, g1_ref[l], be1_ref[l])                  # f32
        # fused Q|K|V projection: one (N, D) @ (D, 3D) matmul, f32 accumulation
        qkv = jnp.dot(x2.astype(jnp.bfloat16), wqkv_ref[l],
                      preferred_element_type=jnp.float32) + bqkv_ref[l]   # (N, 3D) f32
        qkv = qkv.astype(jnp.bfloat16)
        # columns are packed head-major: per-head contiguous [q(dk) | k(dk) | v(dk)]
        qkv_h = jnp.stack([qkv[:, h * 3 * dk:(h + 1) * 3 * dk]
                           for h in range(heads)], axis=0)         # (H, N, 3*dk) bf16
        q = qkv_h[:, :, 0 * dk:1 * dk]
        k = qkv_h[:, :, 1 * dk:2 * dk]
        v = qkv_h[:, :, 2 * dk:3 * dk]

        # scores, batched over heads only (single batch dim); batch rows are
        # folded into N and cross-batch entries are removed by the -2e9 bias.
        s = jnp.einsum('hqc,hkc->hqk', q, k,
                       preferred_element_type=jnp.float32) * scale  # (H, N, N) f32
        s = s + neg                                                 # masked_fill(mask==0)
        s = s - jnp.max(s, axis=-1, keepdims=True)                  # stable softmax
        e = jnp.exp(s)
        denom = jnp.sum(e, axis=-1, keepdims=True)
        if last:
            p = e / denom                 # exact probs for the returned attention_weight
        else:
            p = e * pl.reciprocal(denom, approx=True)               # EUP slot

        o = jnp.einsum('hqk,hkc->hqc', p.astype(jnp.bfloat16), v,
                       preferred_element_type=jnp.float32)          # (H, N, dk) f32
        # concat heads along lanes -> one K=D output projection (== self.out(concat))
        o_cat = jnp.concatenate([o[h] for h in range(heads)], axis=-1)   # (N, D)
        attn = jnp.dot(o_cat.astype(jnp.bfloat16), wo_ref[l],
                       preferred_element_type=jnp.float32) + bo_ref[l]
        x = x + attn                      # residual (dropout_1 = identity in eval)

        if last:                          # module returns the last layer's weights
            for b in range(B):
                aw_ref[b] = p[:, b * S:(b + 1) * S, b * S:(b + 1) * S]

        # ---------------- norm_2 + FeedForward + residual ----------------
        x2 = _layernorm(x, g2_ref[l], be2_ref[l])
        h1 = jnp.dot(x2.astype(jnp.bfloat16), w1_ref[l],
                     preferred_element_type=jnp.float32) + b1_ref[l]      # (N, d_ff) f32
        h1 = jnp.maximum(h1, 0.0)         # ReLU in f32 (dropout = identity in eval)
        ff = jnp.dot(h1.astype(jnp.bfloat16), w2_ref[l],
                     preferred_element_type=jnp.float32) + b2_ref[l]
        x = x + ff                        # residual (dropout_2 = identity in eval)

    # ---------------- final Encoder.norm ----------------
    out_ref[...] = _layernorm(x, fg_ref[...], fb_ref[...]).reshape(B, S, D)


def run_encoder(x, bias, stacked, final_g, final_b):
    B, S, D = x.shape
    weights = [stacked[name] for name in WEIGHT_ORDER]
    vmem = pl.BlockSpec(memory_space=pltpu.MemorySpace.VMEM)   # whole array, VMEM resident
    n_in = 2 + len(weights) + 2
    return pl.pallas_call(
        functools.partial(encoder_kernel, heads=HEADS, n_layers=N_LAYERS),
        out_shape=(jax.ShapeDtypeStruct((B, S, D), jnp.float32),
                   jax.ShapeDtypeStruct((B, HEADS, S, S), jnp.float32)),
        in_specs=[vmem] * n_in,
        out_specs=(vmem, vmem),
    )(x, bias, *weights, final_g, final_b)


def positional_encoding_table(max_seq_len, d_model):
    # Exactly the (quirky) formula from the PyTorch PositionalEncoder.__init__.
    pe = np.zeros((max_seq_len, d_model), dtype=np.float32)
    for pos in range(max_seq_len):
        for i in range(0, d_model, 2):
            pe[pos, i] = math.sin(pos / 10000 ** (2 * i / d_model))
            pe[pos, i + 1] = math.cos(pos / 10000 ** (2 * (i + 1) / d_model))
    return jnp.asarray(pe)


def init_params(key):
    keys = iter(jax.random.split(key, 128))

    def lin(in_d, out_d):
        w = jax.random.normal(next(keys), (in_d, out_d), jnp.float32) * 0.05
        b = jax.random.normal(next(keys), (1, out_d), jnp.float32) * 0.05
        return w, b

    emb = jax.random.normal(next(keys), (VOCAB, D_MODEL), jnp.float32)  # frozen table
    layers = []
    for _ in range(N_LAYERS):
        p = {}
        p['wq'], p['bq'] = lin(D_MODEL, D_MODEL)
        p['wk'], p['bk'] = lin(D_MODEL, D_MODEL)
        p['wv'], p['bv'] = lin(D_MODEL, D_MODEL)
        p['wo'], p['bo'] = lin(D_MODEL, D_MODEL)
        p['g1'] = jnp.ones((1, D_MODEL), jnp.float32)
        p['be1'] = jnp.zeros((1, D_MODEL), jnp.float32)
        p['g2'] = jnp.ones((1, D_MODEL), jnp.float32)
        p['be2'] = jnp.zeros((1, D_MODEL), jnp.float32)
        p['w1'], p['b1'] = lin(D_MODEL, D_FF)
        p['w2'], p['b2'] = lin(D_FF, D_MODEL)
        layers.append(p)
    final_g = jnp.ones((1, D_MODEL), jnp.float32)
    final_b = jnp.zeros((1, D_MODEL), jnp.float32)
    return emb, layers, final_g, final_b


def prepare_params(layers):
    """Stack per-layer params along a leading layer axis.  Q/K/V weights are
    fused into one (D, 3*D) matrix with columns packed head-major
    [head h: q(dk) | k(dk) | v(dk)]; matmul weights cast to bf16."""
    def pack_qkv(wq, wk, wv):
        blocks = []
        for h in range(HEADS):
            sl = slice(h * D_K, (h + 1) * D_K)
            blocks += [wq[:, sl], wk[:, sl], wv[:, sl]]
        return jnp.concatenate(blocks, axis=1)          # (., 3*D)

    per = {name: [] for name in WEIGHT_ORDER}
    for p in layers:
        per['wqkv'].append(pack_qkv(p['wq'], p['wk'], p['wv']).astype(jnp.bfloat16))
        per['bqkv'].append(pack_qkv(p['bq'], p['bk'], p['bv']))         # (1, 3*D) f32
        per['wo'].append(p['wo'].astype(jnp.bfloat16))
        per['bo'].append(p['bo'])
        per['g1'].append(p['g1']); per['be1'].append(p['be1'])
        per['g2'].append(p['g2']); per['be2'].append(p['be2'])
        per['w1'].append(p['w1'].astype(jnp.bfloat16)); per['b1'].append(p['b1'])
        per['w2'].append(p['w2'].astype(jnp.bfloat16)); per['b2'].append(p['b2'])
    return {k: jnp.stack(v, axis=0) for k, v in per.items()}


def encoder_forward(src, mask, emb, stacked, final_g, final_b, pe_table):
    B, S = src.shape
    # Embedder: frozen embedding lookup (glue, not the hot path).
    x = jnp.take(emb, src, axis=0)                              # (B, S, D) f32
    # PositionalEncoder: x*sqrt(d_model) + pe  (dropout = identity in eval).
    x = x * math.sqrt(D_MODEL) + pe_table[:S][None, :, :]
    # Additive attention-score bias, hoisted out of the kernel:
    #   -1e9 where the key position is padding (masked_fill semantics),
    #   -2e9 on cross-batch entries (batch is folded into matmul rows inside
    #   the kernel, so different batches must never attend to each other;
    #   exp(-2e9) underflows to exactly 0, leaving per-batch softmax intact).
    key_valid = (mask[:, 0, :] != 0).reshape(B * S)
    batch_of_row = jnp.repeat(jnp.arange(B), S)
    same_batch = batch_of_row[:, None] == batch_of_row[None, :]
    bias = jnp.where(same_batch,
                     jnp.where(key_valid[None, :], 0.0, -1e9),
                     -2e9).astype(jnp.float32)                  # (B*S, B*S)
    out, attn_w = run_encoder(x.astype(jnp.float32), bias, stacked, final_g, final_b)
    return out, attn_w


if __name__ == "__main__":
    key = jax.random.PRNGKey(0)
    k_src, k_par = jax.random.split(key, 2)

    B, S = 2, 16
    pad_id = 1
    src = jax.random.randint(k_src, (B, S), 2, VOCAB, dtype=jnp.int32)
    # make the second sequence have 4 padded positions
    lengths = jnp.array([S, S - 4])
    pos = jnp.arange(S)[None, :]
    src = jnp.where(pos < lengths[:, None], src, pad_id)
    mask = (src != pad_id).astype(jnp.int32)[:, None, :]   # (B, 1, S), torch mask.unsqueeze(1)

    emb, layers, final_g, final_b = init_params(k_par)
    stacked = prepare_params(layers)
    pe_table = positional_encoding_table(MAX_SEQ_LEN, D_MODEL)

    fwd = jax.jit(encoder_forward)
    out, attn_w = fwd(src, mask, emb, stacked, final_g, final_b, pe_table)
    out, attn_w = jax.block_until_ready((out, attn_w))

    assert out.shape == (B, S, D_MODEL)
    assert attn_w.shape == (B, HEADS, S, S)
    assert bool(jnp.all(jnp.isfinite(out)))
    assert bool(jnp.all(jnp.isfinite(attn_w)))
    # last-layer attention rows must be proper probability distributions
    row_sum_err = float(jnp.max(jnp.abs(jnp.sum(attn_w, axis=-1) - 1.0)))
    assert row_sum_err < 1e-3, row_sum_err
    print("KERNEL_OK")
</pallas_src>

<mosaic_0001>
module attributes {stable_mosaic.version = 11 : i64} {
  func.func @encoder_kernel(%arg0: memref<2x16x40xf32, #tpu.memory_space<vmem>>, %arg1: memref<32x32xf32, #tpu.memory_space<vmem>>, %arg2: memref<3x40x120xbf16, #tpu.memory_space<vmem>>, %arg3: memref<3x1x120xf32, #tpu.memory_space<vmem>>, %arg4: memref<3x40x40xbf16, #tpu.memory_space<vmem>>, %arg5: memref<3x1x40xf32, #tpu.memory_space<vmem>>, %arg6: memref<3x1x40xf32, #tpu.memory_space<vmem>>, %arg7: memref<3x1x40xf32, #tpu.memory_space<vmem>>, %arg8: memref<3x1x40xf32, #tpu.memory_space<vmem>>, %arg9: memref<3x1x40xf32, #tpu.memory_space<vmem>>, %arg10: memref<3x40x2048xbf16, #tpu.memory_space<vmem>>, %arg11: memref<3x1x2048xf32, #tpu.memory_space<vmem>>, %arg12: memref<3x2048x40xbf16, #tpu.memory_space<vmem>>, %arg13: memref<3x1x40xf32, #tpu.memory_space<vmem>>, %arg14: memref<1x40xf32, #tpu.memory_space<vmem>>, %arg15: memref<1x40xf32, #tpu.memory_space<vmem>>, %arg16: memref<2x16x40xf32, #tpu.memory_space<vmem>>, %arg17: memref<2x5x16x16xf32, #tpu.memory_space<vmem>>) attributes {dimension_semantics = [], scalar_prefetch = 0 : i64, scratch_operands = 0 : i64, tpu.core_type = #tpu.core_type<tc>} {
    %c0 = arith.constant 0 : index
    %c0_0 = arith.constant 0 : index
    %c0_1 = arith.constant 0 : index
    %0 = vector.load %arg0[%c0, %c0_0, %c0_1] : memref<2x16x40xf32, #tpu.memory_space<vmem>>, vector<2x16x40xf32>
    %1 = vector.shape_cast %0 : vector<2x16x40xf32> to vector<32x40xf32>
    %c0_2 = arith.constant 0 : index
    %c0_3 = arith.constant 0 : index
    %2 = vector.load %arg1[%c0_2, %c0_3] : memref<32x32xf32, #tpu.memory_space<vmem>>, vector<32x32xf32>
    %3 = vector.shape_cast %2 : vector<32x32xf32> to vector<1x32x32xf32>
    %4 = vector.shape_cast %3 : vector<1x32x32xf32> to vector<1x32x32xf32>
    %5 = vector.broadcast %4 : vector<1x32x32xf32> to vector<5x32x32xf32>
    %c0_4 = arith.constant 0 : index
    %c0_5 = arith.constant 0 : index
    %c0_6 = arith.constant 0 : index
    %6 = vector.load %arg6[%c0_4, %c0_5, %c0_6] : memref<3x1x40xf32, #tpu.memory_space<vmem>>, vector<1x1x40xf32>
    %7 = vector.shape_cast %6 : vector<1x1x40xf32> to vector<1x40xf32>
    %c0_7 = arith.constant 0 : index
    %c0_8 = arith.constant 0 : index
    %c0_9 = arith.constant 0 : index
    %8 = vector.load %arg7[%c0_7, %c0_8, %c0_9] : memref<3x1x40xf32, #tpu.memory_space<vmem>>, vector<1x1x40xf32>
    %9 = vector.shape_cast %8 : vector<1x1x40xf32> to vector<1x40xf32>
    %cst = arith.constant dense<0.000000e+00> : vector<32xf32>
    %10 = vector.multi_reduction <add>, %1, %cst [1] : vector<32x40xf32> to vector<32xf32>
    %11 = vector.shape_cast %10 : vector<32xf32> to vector<32x1xf32>
    %cst_10 = arith.constant 4.000000e+01 : f32
    %12 = vector.broadcast %cst_10 : f32 to vector<32x1xf32>
    %13 = arith.divf %11, %12 : vector<32x1xf32>
    %14 = vector.broadcast %13 : vector<32x1xf32> to vector<32x40xf32>
    %15 = arith.subf %1, %14 : vector<32x40xf32>
    %16 = arith.mulf %15, %15 : vector<32x40xf32>
    %cst_11 = arith.constant dense<0.000000e+00> : vector<32xf32>
    %17 = vector.multi_reduction <add>, %16, %cst_11 [1] : vector<32x40xf32> to vector<32xf32>
    %18 = vector.shape_cast %17 : vector<32xf32> to vector<32x1xf32>
    %cst_12 = arith.constant 4.000000e+01 : f32
    %19 = vector.broadcast %cst_12 : f32 to vector<32x1xf32>
    %20 = arith.divf %18, %19 : vector<32x1xf32>
    %21 = vector.broadcast %13 : vector<32x1xf32> to vector<32x40xf32>
    %22 = arith.subf %1, %21 : vector<32x40xf32>
    %cst_13 = arith.constant 9.99999974E-6 : f32
    %23 = vector.broadcast %cst_13 : f32 to vector<32x1xf32>
    %24 = arith.addf %20, %23 : vector<32x1xf32>
    %25 = math.rsqrt %24 : vector<32x1xf32>
    %26 = vector.broadcast %25 : vector<32x1xf32> to vector<32x40xf32>
    %27 = arith.mulf %22, %26 : vector<32x40xf32>
    %28 = vector.broadcast %7 : vector<1x40xf32> to vector<32x40xf32>
    %29 = arith.mulf %27, %28 : vector<32x40xf32>
    %30 = vector.broadcast %9 : vector<1x40xf32> to vector<32x40xf32>
    %31 = arith.addf %29, %30 : vector<32x40xf32>
    %32 = arith.truncf %31 : vector<32x40xf32> to vector<32x40xbf16>
    %c0_14 = arith.constant 0 : index
    %c0_15 = arith.constant 0 : index
    %c0_16 = arith.constant 0 : index
    %33 = vector.load %arg2[%c0_14, %c0_15, %c0_16] : memref<3x40x120xbf16, #tpu.memory_space<vmem>>, vector<1x40x120xbf16>
    %34 = vector.shape_cast %33 : vector<1x40x120xbf16> to vector<40x120xbf16>
    %cst_17 = arith.constant dense<0.000000e+00> : vector<32x120xf32>
    %35 = tpu.matmul %32, %34, %cst_17 {dimension_numbers = #tpu.dot_dimension_numbers<[1], [0], [0], [1], [0, 0, 1, 1], [], []>} : vector<32x40xbf16>, vector<40x120xbf16>, vector<32x120xf32> -> vector<32x120xf32>
    %c0_18 = arith.constant 0 : index
    %c0_19 = arith.constant 0 : index
    %c0_20 = arith.constant 0 : index
    %36 = vector.load %arg3[%c0_18, %c0_19, %c0_20] : memref<3x1x120xf32, #tpu.memory_space<vmem>>, vector<1x1x120xf32>
    %37 = vector.shape_cast %36 : vector<1x1x120xf32> to vector<1x120xf32>
    %38 = vector.broadcast %37 : vector<1x120xf32> to vector<32x120xf32>
    %39 = arith.addf %35, %38 : vector<32x120xf32>
    %40 = arith.truncf %39 : vector<32x120xf32> to vector<32x120xbf16>
    %41 = vector.extract_strided_slice %40 {offsets = [0, 0], sizes = [32, 24], strides = [1, 1]} : vector<32x120xbf16> to vector<32x24xbf16>
    %42 = vector.extract_strided_slice %40 {offsets = [0, 24], sizes = [32, 24], strides = [1, 1]} : vector<32x120xbf16> to vector<32x24xbf16>
    %43 = vector.extract_strided_slice %40 {offsets = [0, 48], sizes = [32, 24], strides = [1, 1]} : vector<32x120xbf16> to vector<32x24xbf16>
    %44 = vector.extract_strided_slice %40 {offsets = [0, 72], sizes = [32, 24], strides = [1, 1]} : vector<32x120xbf16> to vector<32x24xbf16>
    %45 = vector.extract_strided_slice %40 {offsets = [0, 96], sizes = [32, 24], strides = [1, 1]} : vector<32x120xbf16> to vector<32x24xbf16>
    %46 = vector.shape_cast %41 : vector<32x24xbf16> to vector<1x32x24xbf16>
    %47 = vector.shape_cast %42 : vector<32x24xbf16> to vector<1x32x24xbf16>
    %48 = vector.shape_cast %43 : vector<32x24xbf16> to vector<1x32x24xbf16>
    %49 = vector.shape_cast %44 : vector<32x24xbf16> to vector<1x32x24xbf16>
    %50 = vector.shape_cast %45 : vector<32x24xbf16> to vector<1x32x24xbf16>
    %51 = tpu.concatenate %46, %47, %48, %49, %50 in 0 : vector<1x32x24xbf16>, vector<1x32x24xbf16>, vector<1x32x24xbf16>, vector<1x32x24xbf16>, vector<1x32x24xbf16> -> vector<5x32x24xbf16>
    %52 = vector.extract_strided_slice %51 {offsets = [0, 0, 0], sizes = [5, 32, 8], strides = [1, 1, 1]} : vector<5x32x24xbf16> to vector<5x32x8xbf16>
    %53 = vector.extract_strided_slice %51 {offsets = [0, 0, 8], sizes = [5, 32, 8], strides = [1, 1, 1]} : vector<5x32x24xbf16> to vector<5x32x8xbf16>
    %54 = vector.extract_strided_slice %51 {offsets = [0, 0, 16], sizes = [5, 32, 8], strides = [1, 1, 1]} : vector<5x32x24xbf16> to vector<5x32x8xbf16>
    "tpu.trace_start"() <{level = 10 : i32, message = "hqc,hkc->hqk"}> : () -> ()
    %cst_21 = arith.constant dense<0.000000e+00> : vector<5x32x32xf32>
    %55 = tpu.matmul %52, %53, %cst_21 {dimension_numbers = #tpu.dot_dimension_numbers<[2], [2], [1], [1], [0, 0, 0, 1, 1, 1], [0], [0]>} : vector<5x32x8xbf16>, vector<5x32x8xbf16>, vector<5x32x32xf32> -> vector<5x32x32xf32>
    "tpu.trace_stop"() : () -> ()
    %cst_22 = arith.constant 0.353553385 : f32
    %56 = vector.broadcast %cst_22 : f32 to vector<5x32x32xf32>
    %57 = arith.mulf %55, %56 : vector<5x32x32xf32>
    %58 = arith.addf %57, %5 : vector<5x32x32xf32>
    %cst_23 = arith.constant dense<0xFF800000> : vector<5x32xf32>
    %59 = vector.multi_reduction <maximumf>, %58, %cst_23 [2] : vector<5x32x32xf32> to vector<5x32xf32>
    %60 = vector.shape_cast %59 : vector<5x32xf32> to vector<5x32x1xf32>
    %61 = vector.broadcast %60 : vector<5x32x1xf32> to vector<5x32x32xf32>
    %62 = arith.subf %58, %61 : vector<5x32x32xf32>
    %63 = math.exp %62 : vector<5x32x32xf32>
    %cst_24 = arith.constant dense<0.000000e+00> : vector<5x32xf32>
    %64 = vector.multi_reduction <add>, %63, %cst_24 [2] : vector<5x32x32xf32> to vector<5x32xf32>
    %65 = vector.shape_cast %64 : vector<5x32xf32> to vector<5x32x1xf32>
    %66 = tpu.reciprocal %65 {approx = true} : vector<5x32x1xf32> -> vector<5x32x1xf32>
    %67 = vector.broadcast %66 : vector<5x32x1xf32> to vector<5x32x32xf32>
    %68 = arith.mulf %63, %67 : vector<5x32x32xf32>
    %69 = arith.truncf %68 : vector<5x32x32xf32> to vector<5x32x32xbf16>
    "tpu.trace_start"() <{level = 10 : i32, message = "hqk,hkc->hqc"}> : () -> ()
    %cst_25 = arith.constant dense<0.000000e+00> : vector<5x32x8xf32>
    %70 = tpu.matmul %69, %54, %cst_25 {dimension_numbers = #tpu.dot_dimension_numbers<[2], [1], [1], [2], [0, 0, 0, 1, 1, 2], [0], [0]>} : vector<5x32x32xbf16>, vector<5x32x8xbf16>, vector<5x32x8xf32> -> vector<5x32x8xf32>
    "tpu.trace_stop"() : () -> ()
    %71 = vector.extract_strided_slice %70 {offsets = [0, 0, 0], sizes = [1, 32, 8], strides = [1, 1, 1]} : vector<5x32x8xf32> to vector<1x32x8xf32>
    %72 = vector.shape_cast %71 : vector<1x32x8xf32> to vector<32x8xf32>
    %73 = vector.extract_strided_slice %70 {offsets = [1, 0, 0], sizes = [1, 32, 8], strides = [1, 1, 1]} : vector<5x32x8xf32> to vector<1x32x8xf32>
    %74 = vector.shape_cast %73 : vector<1x32x8xf32> to vector<32x8xf32>
    %75 = vector.extract_strided_slice %70 {offsets = [2, 0, 0], sizes = [1, 32, 8], strides = [1, 1, 1]} : vector<5x32x8xf32> to vector<1x32x8xf32>
    %76 = vector.shape_cast %75 : vector<1x32x8xf32> to vector<32x8xf32>
    %77 = vector.extract_strided_slice %70 {offsets = [3, 0, 0], sizes = [1, 32, 8], strides = [1, 1, 1]} : vector<5x32x8xf32> to vector<1x32x8xf32>
    %78 = vector.shape_cast %77 : vector<1x32x8xf32> to vector<32x8xf32>
    %79 = vector.extract_strided_slice %70 {offsets = [4, 0, 0], sizes = [1, 32, 8], strides = [1, 1, 1]} : vector<5x32x8xf32> to vector<1x32x8xf32>
    %80 = vector.shape_cast %79 : vector<1x32x8xf32> to vector<32x8xf32>
    %81 = tpu.concatenate %72, %74, %76, %78, %80 in 1 : vector<32x8xf32>, vector<32x8xf32>, vector<32x8xf32>, vector<32x8xf32>, vector<32x8xf32> -> vector<32x40xf32>
    %82 = arith.truncf %81 : vector<32x40xf32> to vector<32x40xbf16>
    %c0_26 = arith.constant 0 : index
    %c0_27 = arith.constant 0 : index
    %c0_28 = arith.constant 0 : index
    %83 = vector.load %arg4[%c0_26, %c0_27, %c0_28] : memref<3x40x40xbf16, #tpu.memory_space<vmem>>, vector<1x40x40xbf16>
    %84 = vector.shape_cast %83 : vector<1x40x40xbf16> to vector<40x40xbf16>
    %cst_29 = arith.constant dense<0.000000e+00> : vector<32x40xf32>
    %85 = tpu.matmul %82, %84, %cst_29 {dimension_numbers = #tpu.dot_dimension_numbers<[1], [0], [0], [1], [0, 0, 1, 1], [], []>} : vector<32x40xbf16>, vector<40x40xbf16>, vector<32x40xf32> -> vector<32x40xf32>
    %c0_30 = arith.constant 0 : index
    %c0_31 = arith.constant 0 : index
    %c0_32 = arith.constant 0 : index
    %86 = vector.load %arg5[%c0_30, %c0_31, %c0_32] : memref<3x1x40xf32, #tpu.memory_space<vmem>>, vector<1x1x40xf32>
    %87 = vector.shape_cast %86 : vector<1x1x40xf32> to vector<1x40xf32>
    %88 = vector.broadcast %87 : vector<1x40xf32> to vector<32x40xf32>
    %89 = arith.addf %85, %88 : vector<32x40xf32>
    %90 = arith.addf %1, %89 : vector<32x40xf32>
    %c0_33 = arith.constant 0 : index
    %c0_34 = arith.constant 0 : index
    %c0_35 = arith.constant 0 : index
    %91 = vector.load %arg8[%c0_33, %c0_34, %c0_35] : memref<3x1x40xf32, #tpu.memory_space<vmem>>, vector<1x1x40xf32>
    %92 = vector.shape_cast %91 : vector<1x1x40xf32> to vector<1x40xf32>
    %c0_36 = arith.constant 0 : index
    %c0_37 = arith.constant 0 : index
    %c0_38 = arith.constant 0 : index
    %93 = vector.load %arg9[%c0_36, %c0_37, %c0_38] : memref<3x1x40xf32, #tpu.memory_space<vmem>>, vector<1x1x40xf32>
    %94 = vector.shape_cast %93 : vector<1x1x40xf32> to vector<1x40xf32>
    %cst_39 = arith.constant dense<0.000000e+00> : vector<32xf32>
    %95 = vector.multi_reduction <add>, %90, %cst_39 [1] : vector<32x40xf32> to vector<32xf32>
    %96 = vector.shape_cast %95 : vector<32xf32> to vector<32x1xf32>
    %cst_40 = arith.constant 4.000000e+01 : f32
    %97 = vector.broadcast %cst_40 : f32 to vector<32x1xf32>
    %98 = arith.divf %96, %97 : vector<32x1xf32>
    %99 = vector.broadcast %98 : vector<32x1xf32> to vector<32x40xf32>
    %100 = arith.subf %90, %99 : vector<32x40xf32>
    %101 = arith.mulf %100, %100 : vector<32x40xf32>
    %cst_41 = arith.constant dense<0.000000e+00> : vector<32xf32>
    %102 = vector.multi_reduction <add>, %101, %cst_41 [1] : vector<32x40xf32> to vector<32xf32>
    %103 = vector.shape_cast %102 : vector<32xf32> to vector<32x1xf32>
    %cst_42 = arith.constant 4.000000e+01 : f32
    %104 = vector.broadcast %cst_42 : f32 to vector<32x1xf32>
    %105 = arith.divf %103, %104 : vector<32x1xf32>
    %106 = vector.broadcast %98 : vector<32x1xf32> to vector<32x40xf32>
    %107 = arith.subf %90, %106 : vector<32x40xf32>
    %cst_43 = arith.constant 9.99999974E-6 : f32
    %108 = vector.broadcast %cst_43 : f32 to vector<32x1xf32>
    %109 = arith.addf %105, %108 : vector<32x1xf32>
    %110 = math.rsqrt %109 : vector<32x1xf32>
    %111 = vector.broadcast %110 : vector<32x1xf32> to vector<32x40xf32>
    %112 = arith.mulf %107, %111 : vector<32x40xf32>
    %113 = vector.broadcast %92 : vector<1x40xf32> to vector<32x40xf32>
    %114 = arith.mulf %112, %113 : vector<32x40xf32>
    %115 = vector.broadcast %94 : vector<1x40xf32> to vector<32x40xf32>
    %116 = arith.addf %114, %115 : vector<32x40xf32>
    %117 = arith.truncf %116 : vector<32x40xf32> to vector<32x40xbf16>
    %c0_44 = arith.constant 0 : index
    %c0_45 = arith.constant 0 : index
    %c0_46 = arith.constant 0 : index
    %118 = vector.load %arg10[%c0_44, %c0_45, %c0_46] : memref<3x40x2048xbf16, #tpu.memory_space<vmem>>, vector<1x40x2048xbf16>
    %119 = vector.shape_cast %118 : vector<1x40x2048xbf16> to vector<40x2048xbf16>
    %cst_47 = arith.constant dense<0.000000e+00> : vector<32x2048xf32>
    %120 = tpu.matmul %117, %119, %cst_47 {dimension_numbers = #tpu.dot_dimension_numbers<[1], [0], [0], [1], [0, 0, 1, 1], [], []>} : vector<32x40xbf16>, vector<40x2048xbf16>, vector<32x2048xf32> -> vector<32x2048xf32>
    %c0_48 = arith.constant 0 : index
    %c0_49 = arith.constant 0 : index
    %c0_50 = arith.constant 0 : index
    %121 = vector.load %arg11[%c0_48, %c0_49, %c0_50] : memref<3x1x2048xf32, #tpu.memory_space<vmem>>, vector<1x1x2048xf32>
    %122 = vector.shape_cast %121 : vector<1x1x2048xf32> to vector<1x2048xf32>
    %123 = vector.broadcast %122 : vector<1x2048xf32> to vector<32x2048xf32>
    %124 = arith.addf %120, %123 : vector<32x2048xf32>
    %cst_51 = arith.constant 0.000000e+00 : f32
    %125 = vector.broadcast %cst_51 : f32 to vector<32x2048xf32>
    %126 = arith.maximumf %124, %125 : vector<32x2048xf32>
    %127 = arith.truncf %126 : vector<32x2048xf32> to vector<32x2048xbf16>
    %c0_52 = arith.constant 0 : index
    %c0_53 = arith.constant 0 : index
    %c0_54 = arith.constant 0 : index
    %128 = vector.load %arg12[%c0_52, %c0_53, %c0_54] : memref<3x2048x40xbf16, #tpu.memory_space<vmem>>, vector<1x2048x40xbf16>
    %129 = vector.shape_cast %128 : vector<1x2048x40xbf16> to vector<2048x40xbf16>
    %cst_55 = arith.constant dense<0.000000e+00> : vector<32x40xf32>
    %130 = tpu.matmul %127, %129, %cst_55 {dimension_numbers = #tpu.dot_dimension_numbers<[1], [0], [0], [1], [0, 0, 1, 1], [], []>} : vector<32x2048xbf16>, vector<2048x40xbf16>, vector<32x40xf32> -> vector<32x40xf32>
    %c0_56 = arith.constant 0 : index
    %c0_57 = arith.constant 0 : index
    %c0_58 = arith.constant 0 : index
    %131 = vector.load %arg13[%c0_56, %c0_57, %c0_58] : memref<3x1x40xf32, #tpu.memory_space<vmem>>, vector<1x1x40xf32>
    %132 = vector.shape_cast %131 : vector<1x1x40xf32> to vector<1x40xf32>
    %133 = vector.broadcast %132 : vector<1x40xf32> to vector<32x40xf32>
    %134 = arith.addf %130, %133 : vector<32x40xf32>
    %135 = arith.addf %90, %134 : vector<32x40xf32>
    %c1 = arith.constant 1 : index
    %c0_59 = arith.constant 0 : index
    %c0_60 = arith.constant 0 : index
    %136 = vector.load %arg6[%c1, %c0_59, %c0_60] : memref<3x1x40xf32, #tpu.memory_space<vmem>>, vector<1x1x40xf32>
    %137 = vector.shape_cast %136 : vector<1x1x40xf32> to vector<1x40xf32>
    %c1_61 = arith.constant 1 : index
    %c0_62 = arith.constant 0 : index
    %c0_63 = arith.constant 0 : index
    %138 = vector.load %arg7[%c1_61, %c0_62, %c0_63] : memref<3x1x40xf32, #tpu.memory_space<vmem>>, vector<1x1x40xf32>
    %139 = vector.shape_cast %138 : vector<1x1x40xf32> to vector<1x40xf32>
    %cst_64 = arith.constant dense<0.000000e+00> : vector<32xf32>
    %140 = vector.multi_reduction <add>, %135, %cst_64 [1] : vector<32x40xf32> to vector<32xf32>
    %141 = vector.shape_cast %140 : vector<32xf32> to vector<32x1xf32>
    %cst_65 = arith.constant 4.000000e+01 : f32
    %142 = vector.broadcast %cst_65 : f32 to vector<32x1xf32>
    %143 = arith.divf %141, %142 : vector<32x1xf32>
    %144 = vector.broadcast %143 : vector<32x1xf32> to vector<32x40xf32>
    %145 = arith.subf %135, %144 : vector<32x40xf32>
    %146 = arith.mulf %145, %145 : vector<32x40xf32>
    %cst_66 = arith.constant dense<0.000000e+00> : vector<32xf32>
    %147 = vector.multi_reduction <add>, %146, %cst_66 [1] : vector<32x40xf32> to vector<32xf32>
    %148 = vector.shape_cast %147 : vector<32xf32> to vector<32x1xf32>
    %cst_67 = arith.constant 4.000000e+01 : f32
    %149 = vector.broadcast %cst_67 : f32 to vector<32x1xf32>
    %150 = arith.divf %148, %149 : vector<32x1xf32>
    %151 = vector.broadcast %143 : vector<32x1xf32> to vector<32x40xf32>
    %152 = arith.subf %135, %151 : vector<32x40xf32>
    %cst_68 = arith.constant 9.99999974E-6 : f32
    %153 = vector.broadcast %cst_68 : f32 to vector<32x1xf32>
    %154 = arith.addf %150, %153 : vector<32x1xf32>
    %155 = math.rsqrt %154 : vector<32x1xf32>
    %156 = vector.broadcast %155 : vector<32x1xf32> to vector<32x40xf32>
    %157 = arith.mulf %152, %156 : vector<32x40xf32>
    %158 = vector.broadcast %137 : vector<1x40xf32> to vector<32x40xf32>
    %159 = arith.mulf %157, %158 : vector<32x40xf32>
    %160 = vector.broadcast %139 : vector<1x40xf32> to vector<32x40xf32>
    %161 = arith.addf %159, %160 : vector<32x40xf32>
    %162 = arith.truncf %161 : vector<32x40xf32> to vector<32x40xbf16>
    %c1_69 = arith.constant 1 : index
    %c0_70 = arith.constant 0 : index
    %c0_71 = arith.constant 0 : index
    %163 = vector.load %arg2[%c1_69, %c0_70, %c0_71] : memref<3x40x120xbf16, #tpu.memory_space<vmem>>, vector<1x40x120xbf16>
    %164 = vector.shape_cast %163 : vector<1x40x120xbf16> to vector<40x120xbf16>
    %cst_72 = arith.constant dense<0.000000e+00> : vector<32x120xf32>
    %165 = tpu.matmul %162, %164, %cst_72 {dimension_numbers = #tpu.dot_dimension_numbers<[1], [0], [0], [1], [0, 0, 1, 1], [], []>} : vector<32x40xbf16>, vector<40x120xbf16>, vector<32x120xf32> -> vector<32x120xf32>
    %c1_73 = arith.constant 1 : index
    %c0_74 = arith.constant 0 : index
    %c0_75 = arith.constant 0 : index
    %166 = vector.load %arg3[%c1_73, %c0_74, %c0_75] : memref<3x1x120xf32, #tpu.memory_space<vmem>>, vector<1x1x120xf32>
    %167 = vector.shape_cast %166 : vector<1x1x120xf32> to vector<1x120xf32>
    %168 = vector.broadcast %167 : vector<1x120xf32> to vector<32x120xf32>
    %169 = arith.addf %165, %168 : vector<32x120xf32>
    %170 = arith.truncf %169 : vector<32x120xf32> to vector<32x120xbf16>
    %171 = vector.extract_strided_slice %170 {offsets = [0, 0], sizes = [32, 24], strides = [1, 1]} : vector<32x120xbf16> to vector<32x24xbf16>
    %172 = vector.extract_strided_slice %170 {offsets = [0, 24], sizes = [32, 24], strides = [1, 1]} : vector<32x120xbf16> to vector<32x24xbf16>
    %173 = vector.extract_strided_slice %170 {offsets = [0, 48], sizes = [32, 24], strides = [1, 1]} : vector<32x120xbf16> to vector<32x24xbf16>
    %174 = vector.extract_strided_slice %170 {offsets = [0, 72], sizes = [32, 24], strides = [1, 1]} : vector<32x120xbf16> to vector<32x24xbf16>
    %175 = vector.extract_strided_slice %170 {offsets = [0, 96], sizes = [32, 24], strides = [1, 1]} : vector<32x120xbf16> to vector<32x24xbf16>
    %176 = vector.shape_cast %171 : vector<32x24xbf16> to vector<1x32x24xbf16>
    %177 = vector.shape_cast %172 : vector<32x24xbf16> to vector<1x32x24xbf16>
    %178 = vector.shape_cast %173 : vector<32x24xbf16> to vector<1x32x24xbf16>
    %179 = vector.shape_cast %174 : vector<32x24xbf16> to vector<1x32x24xbf16>
    %180 = vector.shape_cast %175 : vector<32x24xbf16> to vector<1x32x24xbf16>
    %181 = tpu.concatenate %176, %177, %178, %179, %180 in 0 : vector<1x32x24xbf16>, vector<1x32x24xbf16>, vector<1x32x24xbf16>, vector<1x32x24xbf16>, vector<1x32x24xbf16> -> vector<5x32x24xbf16>
    %182 = vector.extract_strided_slice %181 {offsets = [0, 0, 0], sizes = [5, 32, 8], strides = [1, 1, 1]} : vector<5x32x24xbf16> to vector<5x32x8xbf16>
    %183 = vector.extract_strided_slice %181 {offsets = [0, 0, 8], sizes = [5, 32, 8], strides = [1, 1, 1]} : vector<5x32x24xbf16> to vector<5x32x8xbf16>
    %184 = vector.extract_strided_slice %181 {offsets = [0, 0, 16], sizes = [5, 32, 8], strides = [1, 1, 1]} : vector<5x32x24xbf16> to vector<5x32x8xbf16>
    "tpu.trace_start"() <{level = 10 : i32, message = "hqc,hkc->hqk"}> : () -> ()
    %cst_76 = arith.constant dense<0.000000e+00> : vector<5x32x32xf32>
    %185 = tpu.matmul %182, %183, %cst_76 {dimension_numbers = #tpu.dot_dimension_numbers<[2], [2], [1], [1], [0, 0, 0, 1, 1, 1], [0], [0]>} : vector<5x32x8xbf16>, vector<5x32x8xbf16>, vector<5x32x32xf32> -> vector<5x32x32xf32>
    "tpu.trace_stop"() : () -> ()
    %cst_77 = arith.constant 0.353553385 : f32
    %186 = vector.broadcast %cst_77 : f32 to vector<5x32x32xf32>
    %187 = arith.mulf %185, %186 : vector<5x32x32xf32>
    %188 = arith.addf %187, %5 : vector<5x32x32xf32>
    %cst_78 = arith.constant dense<0xFF800000> : vector<5x32xf32>
    %189 = vector.multi_reduction <maximumf>, %188, %cst_78 [2] : vector<5x32x32xf32> to vector<5x32xf32>
    %190 = vector.shape_cast %189 : vector<5x32xf32> to vector<5x32x1xf32>
    %191 = vector.broadcast %190 : vector<5x32x1xf32> to vector<5x32x32xf32>
    %192 = arith.subf %188, %191 : vector<5x32x32xf32>
    %193 = math.exp %192 : vector<5x32x32xf32>
    %cst_79 = arith.constant dense<0.000000e+00> : vector<5x32xf32>
    %194 = vector.multi_reduction <add>, %193, %cst_79 [2] : vector<5x32x32xf32> to vector<5x32xf32>
    %195 = vector.shape_cast %194 : vector<5x32xf32> to vector<5x32x1xf32>
    %196 = tpu.reciprocal %195 {approx = true} : vector<5x32x1xf32> -> vector<5x32x1xf32>
    %197 = vector.broadcast %196 : vector<5x32x1xf32> to vector<5x32x32xf32>
    %198 = arith.mulf %193, %197 : vector<5x32x32xf32>
    %199 = arith.truncf %198 : vector<5x32x32xf32> to vector<5x32x32xbf16>
    "tpu.trace_start"() <{level = 10 : i32, message = "hqk,hkc->hqc"}> : () -> ()
    %cst_80 = arith.constant dense<0.000000e+00> : vector<5x32x8xf32>
    %200 = tpu.matmul %199, %184, %cst_80 {dimension_numbers = #tpu.dot_dimension_numbers<[2], [1], [1], [2], [0, 0, 0, 1, 1, 2], [0], [0]>} : vector<5x32x32xbf16>, vector<5x32x8xbf16>, vector<5x32x8xf32> -> vector<5x32x8xf32>
    "tpu.trace_stop"() : () -> ()
    %201 = vector.extract_strided_slice %200 {offsets = [0, 0, 0], sizes = [1, 32, 8], strides = [1, 1, 1]} : vector<5x32x8xf32> to vector<1x32x8xf32>
    %202 = vector.shape_cast %201 : vector<1x32x8xf32> to vector<32x8xf32>
    %203 = vector.extract_strided_slice %200 {offsets = [1, 0, 0], sizes = [1, 32, 8], strides = [1, 1, 1]} : vector<5x32x8xf32> to vector<1x32x8xf32>
    %204 = vector.shape_cast %203 : vector<1x32x8xf32> to vector<32x8xf32>
    %205 = vector.extract_strided_slice %200 {offsets = [2, 0, 0], sizes = [1, 32, 8], strides = [1, 1, 1]} : vector<5x32x8xf32> to vector<1x32x8xf32>
    %206 = vector.shape_cast %205 : vector<1x32x8xf32> to vector<32x8xf32>
    %207 = vector.extract_strided_slice %200 {offsets = [3, 0, 0], sizes = [1, 32, 8], strides = [1, 1, 1]} : vector<5x32x8xf32> to vector<1x32x8xf32>
    %208 = vector.shape_cast %207 : vector<1x32x8xf32> to vector<32x8xf32>
    %209 = vector.extract_strided_slice %200 {offsets = [4, 0, 0], sizes = [1, 32, 8], strides = [1, 1, 1]} : vector<5x32x8xf32> to vector<1x32x8xf32>
    %210 = vector.shape_cast %209 : vector<1x32x8xf32> to vector<32x8xf32>
    %211 = tpu.concatenate %202, %204, %206, %208, %210 in 1 : vector<32x8xf32>, vector<32x8xf32>, vector<32x8xf32>, vector<32x8xf32>, vector<32x8xf32> -> vector<32x40xf32>
    %212 = arith.truncf %211 : vector<32x40xf32> to vector<32x40xbf16>
    %c1_81 = arith.constant 1 : index
    %c0_82 = arith.constant 0 : index
    %c0_83 = arith.constant 0 : index
    %213 = vector.load %arg4[%c1_81, %c0_82, %c0_83] : memref<3x40x40xbf16, #tpu.memory_space<vmem>>, vector<1x40x40xbf16>
    %214 = vector.shape_cast %213 : vector<1x40x40xbf16> to vector<40x40xbf16>
    %cst_84 = arith.constant dense<0.000000e+00> : vector<32x40xf32>
    %215 = tpu.matmul %212, %214, %cst_84 {dimension_numbers = #tpu.dot_dimension_numbers<[1], [0], [0], [1], [0, 0, 1, 1], [], []>} : vector<32x40xbf16>, vector<40x40xbf16>, vector<32x40xf32> -> vector<32x40xf32>
    %c1_85 = arith.constant 1 : index
    %c0_86 = arith.constant 0 : index
    %c0_87 = arith.constant 0 : index
    %216 = vector.load %arg5[%c1_85, %c0_86, %c0_87] : memref<3x1x40xf32, #tpu.memory_space<vmem>>, vector<1x1x40xf32>
    %217 = vector.shape_cast %216 : vector<1x1x40xf32> to vector<1x40xf32>
    %218 = vector.broadcast %217 : vector<1x40xf32> to vector<32x40xf32>
    %219 = arith.addf %215, %218 : vector<32x40xf32>
    %220 = arith.addf %135, %219 : vector<32x40xf32>
    %c1_88 = arith.constant 1 : index
    %c0_89 = arith.constant 0 : index
    %c0_90 = arith.constant 0 : index
    %221 = vector.load %arg8[%c1_88, %c0_89, %c0_90] : memref<3x1x40xf32, #tpu.memory_space<vmem>>, vector<1x1x40xf32>
    %222 = vector.shape_cast %221 : vector<1x1x40xf32> to vector<1x40xf32>
    %c1_91 = arith.constant 1 : index
    %c0_92 = arith.constant 0 : index
    %c0_93 = arith.constant 0 : index
    %223 = vector.load %arg9[%c1_91, %c0_92, %c0_93] : memref<3x1x40xf32, #tpu.memory_space<vmem>>, vector<1x1x40xf32>
    %224 = vector.shape_cast %223 : vector<1x1x40xf32> to vector<1x40xf32>
    %cst_94 = arith.constant dense<0.000000e+00> : vector<32xf32>
    %225 = vector.multi_reduction <add>, %220, %cst_94 [1] : vector<32x40xf32> to vector<32xf32>
    %226 = vector.shape_cast %225 : vector<32xf32> to vector<32x1xf32>
    %cst_95 = arith.constant 4.000000e+01 : f32
    %227 = vector.broadcast %cst_95 : f32 to vector<32x1xf32>
    %228 = arith.divf %226, %227 : vector<32x1xf32>
    %229 = vector.broadcast %228 : vector<32x1xf32> to vector<32x40xf32>
    %230 = arith.subf %220, %229 : vector<32x40xf32>
    %231 = arith.mulf %230, %230 : vector<32x40xf32>
    %cst_96 = arith.constant dense<0.000000e+00> : vector<32xf32>
    %232 = vector.multi_reduction <add>, %231, %cst_96 [1] : vector<32x40xf32> to vector<32xf32>
    %233 = vector.shape_cast %232 : vector<32xf32> to vector<32x1xf32>
    %cst_97 = arith.constant 4.000000e+01 : f32
    %234 = vector.broadcast %cst_97 : f32 to vector<32x1xf32>
    %235 = arith.divf %233, %234 : vector<32x1xf32>
    %236 = vector.broadcast %228 : vector<32x1xf32> to vector<32x40xf32>
    %237 = arith.subf %220, %236 : vector<32x40xf32>
    %cst_98 = arith.constant 9.99999974E-6 : f32
    %238 = vector.broadcast %cst_98 : f32 to vector<32x1xf32>
    %239 = arith.addf %235, %238 : vector<32x1xf32>
    %240 = math.rsqrt %239 : vector<32x1xf32>
    %241 = vector.broadcast %240 : vector<32x1xf32> to vector<32x40xf32>
    %242 = arith.mulf %237, %241 : vector<32x40xf32>
    %243 = vector.broadcast %222 : vector<1x40xf32> to vector<32x40xf32>
    %244 = arith.mulf %242, %243 : vector<32x40xf32>
    %245 = vector.broadcast %224 : vector<1x40xf32> to vector<32x40xf32>
    %246 = arith.addf %244, %245 : vector<32x40xf32>
    %247 = arith.truncf %246 : vector<32x40xf32> to vector<32x40xbf16>
    %c1_99 = arith.constant 1 : index
    %c0_100 = arith.constant 0 : index
    %c0_101 = arith.constant 0 : index
    %248 = vector.load %arg10[%c1_99, %c0_100, %c0_101] : memref<3x40x2048xbf16, #tpu.memory_space<vmem>>, vector<1x40x2048xbf16>
    %249 = vector.shape_cast %248 : vector<1x40x2048xbf16> to vector<40x2048xbf16>
    %cst_102 = arith.constant dense<0.000000e+00> : vector<32x2048xf32>
    %250 = tpu.matmul %247, %249, %cst_102 {dimension_numbers = #tpu.dot_dimension_numbers<[1], [0], [0], [1], [0, 0, 1, 1], [], []>} : vector<32x40xbf16>, vector<40x2048xbf16>, vector<32x2048xf32> -> vector<32x2048xf32>
    %c1_103 = arith.constant 1 : index
    %c0_104 = arith.constant 0 : index
    %c0_105 = arith.constant 0 : index
    %251 = vector.load %arg11[%c1_103, %c0_104, %c0_105] : memref<3x1x2048xf32, #tpu.memory_space<vmem>>, vector<1x1x2048xf32>
    %252 = vector.shape_cast %251 : vector<1x1x2048xf32> to vector<1x2048xf32>
    %253 = vector.broadcast %252 : vector<1x2048xf32> to vector<32x2048xf32>
    %254 = arith.addf %250, %253 : vector<32x2048xf32>
    %cst_106 = arith.constant 0.000000e+00 : f32
    %255 = vector.broadcast %cst_106 : f32 to vector<32x2048xf32>
    %256 = arith.maximumf %254, %255 : vector<32x2048xf32>
    %257 = arith.truncf %256 : vector<32x2048xf32> to vector<32x2048xbf16>
    %c1_107 = arith.constant 1 : index
    %c0_108 = arith.constant 0 : index
    %c0_109 = arith.constant 0 : index
    %258 = vector.load %arg12[%c1_107, %c0_108, %c0_109] : memref<3x2048x40xbf16, #tpu.memory_space<vmem>>, vector<1x2048x40xbf16>
    %259 = vector.shape_cast %258 : vector<1x2048x40xbf16> to vector<2048x40xbf16>
    %cst_110 = arith.constant dense<0.000000e+00> : vector<32x40xf32>
    %260 = tpu.matmul %257, %259, %cst_110 {dimension_numbers = #tpu.dot_dimension_numbers<[1], [0], [0], [1], [0, 0, 1, 1], [], []>} : vector<32x2048xbf16>, vector<2048x40xbf16>, vector<32x40xf32> -> vector<32x40xf32>
    %c1_111 = arith.constant 1 : index
    %c0_112 = arith.constant 0 : index
    %c0_113 = arith.constant 0 : index
    %261 = vector.load %arg13[%c1_111, %c0_112, %c0_113] : memref<3x1x40xf32, #tpu.memory_space<vmem>>, vector<1x1x40xf32>
    %262 = vector.shape_cast %261 : vector<1x1x40xf32> to vector<1x40xf32>
    %263 = vector.broadcast %262 : vector<1x40xf32> to vector<32x40xf32>
    %264 = arith.addf %260, %263 : vector<32x40xf32>
    %265 = arith.addf %220, %264 : vector<32x40xf32>
    %c2 = arith.constant 2 : index
    %c0_114 = arith.constant 0 : index
    %c0_115 = arith.constant 0 : index
    %266 = vector.load %arg6[%c2, %c0_114, %c0_115] : memref<3x1x40xf32, #tpu.memory_space<vmem>>, vector<1x1x40xf32>
    %267 = vector.shape_cast %266 : vector<1x1x40xf32> to vector<1x40xf32>
    %c2_116 = arith.constant 2 : index
    %c0_117 = arith.constant 0 : index
    %c0_118 = arith.constant 0 : index
    %268 = vector.load %arg7[%c2_116, %c0_117, %c0_118] : memref<3x1x40xf32, #tpu.memory_space<vmem>>, vector<1x1x40xf32>
    %269 = vector.shape_cast %268 : vector<1x1x40xf32> to vector<1x40xf32>
    %cst_119 = arith.constant dense<0.000000e+00> : vector<32xf32>
    %270 = vector.multi_reduction <add>, %265, %cst_119 [1] : vector<32x40xf32> to vector<32xf32>
    %271 = vector.shape_cast %270 : vector<32xf32> to vector<32x1xf32>
    %cst_120 = arith.constant 4.000000e+01 : f32
    %272 = vector.broadcast %cst_120 : f32 to vector<32x1xf32>
    %273 = arith.divf %271, %272 : vector<32x1xf32>
    %274 = vector.broadcast %273 : vector<32x1xf32> to vector<32x40xf32>
    %275 = arith.subf %265, %274 : vector<32x40xf32>
    %276 = arith.mulf %275, %275 : vector<32x40xf32>
    %cst_121 = arith.constant dense<0.000000e+00> : vector<32xf32>
    %277 = vector.multi_reduction <add>, %276, %cst_121 [1] : vector<32x40xf32> to vector<32xf32>
    %278 = vector.shape_cast %277 : vector<32xf32> to vector<32x1xf32>
    %cst_122 = arith.constant 4.000000e+01 : f32
    %279 = vector.broadcast %cst_122 : f32 to vector<32x1xf32>
    %280 = arith.divf %278, %279 : vector<32x1xf32>
    %281 = vector.broadcast %273 : vector<32x1xf32> to vector<32x40xf32>
    %282 = arith.subf %265, %281 : vector<32x40xf32>
    %cst_123 = arith.constant 9.99999974E-6 : f32
    %283 = vector.broadcast %cst_123 : f32 to vector<32x1xf32>
    %284 = arith.addf %280, %283 : vector<32x1xf32>
    %285 = math.rsqrt %284 : vector<32x1xf32>
    %286 = vector.broadcast %285 : vector<32x1xf32> to vector<32x40xf32>
    %287 = arith.mulf %282, %286 : vector<32x40xf32>
    %288 = vector.broadcast %267 : vector<1x40xf32> to vector<32x40xf32>
    %289 = arith.mulf %287, %288 : vector<32x40xf32>
    %290 = vector.broadcast %269 : vector<1x40xf32> to vector<32x40xf32>
    %291 = arith.addf %289, %290 : vector<32x40xf32>
    %292 = arith.truncf %291 : vector<32x40xf32> to vector<32x40xbf16>
    %c2_124 = arith.constant 2 : index
    %c0_125 = arith.constant 0 : index
    %c0_126 = arith.constant 0 : index
    %293 = vector.load %arg2[%c2_124, %c0_125, %c0_126] : memref<3x40x120xbf16, #tpu.memory_space<vmem>>, vector<1x40x120xbf16>
    %294 = vector.shape_cast %293 : vector<1x40x120xbf16> to vector<40x120xbf16>
    %cst_127 = arith.constant dense<0.000000e+00> : vector<32x120xf32>
    %295 = tpu.matmul %292, %294, %cst_127 {dimension_numbers = #tpu.dot_dimension_numbers<[1], [0], [0], [1], [0, 0, 1, 1], [], []>} : vector<32x40xbf16>, vector<40x120xbf16>, vector<32x120xf32> -> vector<32x120xf32>
    %c2_128 = arith.constant 2 : index
    %c0_129 = arith.constant 0 : index
    %c0_130 = arith.constant 0 : index
    %296 = vector.load %arg3[%c2_128, %c0_129, %c0_130] : memref<3x1x120xf32, #tpu.memory_space<vmem>>, vector<1x1x120xf32>
    %297 = vector.shape_cast %296 : vector<1x1x120xf32> to vector<1x120xf32>
    %298 = vector.broadcast %297 : vector<1x120xf32> to vector<32x120xf32>
    %299 = arith.addf %295, %298 : vector<32x120xf32>
    %300 = arith.truncf %299 : vector<32x120xf32> to vector<32x120xbf16>
    %301 = vector.extract_strided_slice %300 {offsets = [0, 0], sizes = [32, 24], strides = [1, 1]} : vector<32x120xbf16> to vector<32x24xbf16>
    %302 = vector.extract_strided_slice %300 {offsets = [0, 24], sizes = [32, 24], strides = [1, 1]} : vector<32x120xbf16> to vector<32x24xbf16>
    %303 = vector.extract_strided_slice %300 {offsets = [0, 48], sizes = [32, 24], strides = [1, 1]} : vector<32x120xbf16> to vector<32x24xbf16>
    %304 = vector.extract_strided_slice %300 {offsets = [0, 72], sizes = [32, 24], strides = [1, 1]} : vector<32x120xbf16> to vector<32x24xbf16>
    %305 = vector.extract_strided_slice %300 {offsets = [0, 96], sizes = [32, 24], strides = [1, 1]} : vector<32x120xbf16> to vector<32x24xbf16>
    %306 = vector.shape_cast %301 : vector<32x24xbf16> to vector<1x32x24xbf16>
    %307 = vector.shape_cast %302 : vector<32x24xbf16> to vector<1x32x24xbf16>
    %308 = vector.shape_cast %303 : vector<32x24xbf16> to vector<1x32x24xbf16>
    %309 = vector.shape_cast %304 : vector<32x24xbf16> to vector<1x32x24xbf16>
    %310 = vector.shape_cast %305 : vector<32x24xbf16> to vector<1x32x24xbf16>
    %311 = tpu.concatenate %306, %307, %308, %309, %310 in 0 : vector<1x32x24xbf16>, vector<1x32x24xbf16>, vector<1x32x24xbf16>, vector<1x32x24xbf16>, vector<1x32x24xbf16> -> vector<5x32x24xbf16>
    %312 = vector.extract_strided_slice %311 {offsets = [0, 0, 0], sizes = [5, 32, 8], strides = [1, 1, 1]} : vector<5x32x24xbf16> to vector<5x32x8xbf16>
    %313 = vector.extract_strided_slice %311 {offsets = [0, 0, 8], sizes = [5, 32, 8], strides = [1, 1, 1]} : vector<5x32x24xbf16> to vector<5x32x8xbf16>
    %314 = vector.extract_strided_slice %311 {offsets = [0, 0, 16], sizes = [5, 32, 8], strides = [1, 1, 1]} : vector<5x32x24xbf16> to vector<5x32x8xbf16>
    "tpu.trace_start"() <{level = 10 : i32, message = "hqc,hkc->hqk"}> : () -> ()
    %cst_131 = arith.constant dense<0.000000e+00> : vector<5x32x32xf32>
    %315 = tpu.matmul %312, %313, %cst_131 {dimension_numbers = #tpu.dot_dimension_numbers<[2], [2], [1], [1], [0, 0, 0, 1, 1, 1], [0], [0]>} : vector<5x32x8xbf16>, vector<5x32x8xbf16>, vector<5x32x32xf32> -> vector<5x32x32xf32>
    "tpu.trace_stop"() : () -> ()
    %cst_132 = arith.constant 0.353553385 : f32
    %316 = vector.broadcast %cst_132 : f32 to vector<5x32x32xf32>
    %317 = arith.mulf %315, %316 : vector<5x32x32xf32>
    %318 = arith.addf %317, %5 : vector<5x32x32xf32>
    %cst_133 = arith.constant dense<0xFF800000> : vector<5x32xf32>
    %319 = vector.multi_reduction <maximumf>, %318, %cst_133 [2] : vector<5x32x32xf32> to vector<5x32xf32>
    %320 = vector.shape_cast %319 : vector<5x32xf32> to vector<5x32x1xf32>
    %321 = vector.broadcast %320 : vector<5x32x1xf32> to vector<5x32x32xf32>
    %322 = arith.subf %318, %321 : vector<5x32x32xf32>
    %323 = math.exp %322 : vector<5x32x32xf32>
    %cst_134 = arith.constant dense<0.000000e+00> : vector<5x32xf32>
    %324 = vector.multi_reduction <add>, %323, %cst_134 [2] : vector<5x32x32xf32> to vector<5x32xf32>
    %325 = vector.shape_cast %324 : vector<5x32xf32> to vector<5x32x1xf32>
    %326 = vector.broadcast %325 : vector<5x32x1xf32> to vector<5x32x32xf32>
    %327 = arith.divf %323, %326 : vector<5x32x32xf32>
    %328 = arith.truncf %327 : vector<5x32x32xf32> to vector<5x32x32xbf16>
    "tpu.trace_start"() <{level = 10 : i32, message = "hqk,hkc->hqc"}> : () -> ()
    %cst_135 = arith.constant dense<0.000000e+00> : vector<5x32x8xf32>
    %329 = tpu.matmul %328, %314, %cst_135 {dimension_numbers = #tpu.dot_dimension_numbers<[2], [1], [1], [2], [0, 0, 0, 1, 1, 2], [0], [0]>} : vector<5x32x32xbf16>, vector<5x32x8xbf16>, vector<5x32x8xf32> -> vector<5x32x8xf32>
    "tpu.trace_stop"() : () -> ()
    %330 = vector.extract_strided_slice %329 {offsets = [0, 0, 0], sizes = [1, 32, 8], strides = [1, 1, 1]} : vector<5x32x8xf32> to vector<1x32x8xf32>
    %331 = vector.shape_cast %330 : vector<1x32x8xf32> to vector<32x8xf32>
    %332 = vector.extract_strided_slice %329 {offsets = [1, 0, 0], sizes = [1, 32, 8], strides = [1, 1, 1]} : vector<5x32x8xf32> to vector<1x32x8xf32>
    %333 = vector.shape_cast %332 : vector<1x32x8xf32> to vector<32x8xf32>
    %334 = vector.extract_strided_slice %329 {offsets = [2, 0, 0], sizes = [1, 32, 8], strides = [1, 1, 1]} : vector<5x32x8xf32> to vector<1x32x8xf32>
    %335 = vector.shape_cast %334 : vector<1x32x8xf32> to vector<32x8xf32>
    %336 = vector.extract_strided_slice %329 {offsets = [3, 0, 0], sizes = [1, 32, 8], strides = [1, 1, 1]} : vector<5x32x8xf32> to vector<1x32x8xf32>
    %337 = vector.shape_cast %336 : vector<1x32x8xf32> to vector<32x8xf32>
    %338 = vector.extract_strided_slice %329 {offsets = [4, 0, 0], sizes = [1, 32, 8], strides = [1, 1, 1]} : vector<5x32x8xf32> to vector<1x32x8xf32>
    %339 = vector.shape_cast %338 : vector<1x32x8xf32> to vector<32x8xf32>
    %340 = tpu.concatenate %331, %333, %335, %337, %339 in 1 : vector<32x8xf32>, vector<32x8xf32>, vector<32x8xf32>, vector<32x8xf32>, vector<32x8xf32> -> vector<32x40xf32>
    %341 = arith.truncf %340 : vector<32x40xf32> to vector<32x40xbf16>
    %c2_136 = arith.constant 2 : index
    %c0_137 = arith.constant 0 : index
    %c0_138 = arith.constant 0 : index
    %342 = vector.load %arg4[%c2_136, %c0_137, %c0_138] : memref<3x40x40xbf16, #tpu.memory_space<vmem>>, vector<1x40x40xbf16>
    %343 = vector.shape_cast %342 : vector<1x40x40xbf16> to vector<40x40xbf16>
    %cst_139 = arith.constant dense<0.000000e+00> : vector<32x40xf32>
    %344 = tpu.matmul %341, %343, %cst_139 {dimension_numbers = #tpu.dot_dimension_numbers<[1], [0], [0], [1], [0, 0, 1, 1], [], []>} : vector<32x40xbf16>, vector<40x40xbf16>, vector<32x40xf32> -> vector<32x40xf32>
    %c2_140 = arith.constant 2 : index
    %c0_141 = arith.constant 0 : index
    %c0_142 = arith.constant 0 : index
    %345 = vector.load %arg5[%c2_140, %c0_141, %c0_142] : memref<3x1x40xf32, #tpu.memory_space<vmem>>, vector<1x1x40xf32>
    %346 = vector.shape_cast %345 : vector<1x1x40xf32> to vector<1x40xf32>
    %347 = vector.broadcast %346 : vector<1x40xf32> to vector<32x40xf32>
    %348 = arith.addf %344, %347 : vector<32x40xf32>
    %349 = arith.addf %265, %348 : vector<32x40xf32>
    %350 = vector.extract_strided_slice %327 {offsets = [0, 0, 0], sizes = [5, 16, 16], strides = [1, 1, 1]} : vector<5x32x32xf32> to vector<5x16x16xf32>
    %c0_143 = arith.constant 0 : index
    %c0_144 = arith.constant 0 : index
    %c0_145 = arith.constant 0 : index
    %c0_146 = arith.constant 0 : index
    %351 = vector.load %arg17[%c0_143, %c0_144, %c0_145, %c0_146] : memref<2x5x16x16xf32, #tpu.memory_space<vmem>>, vector<1x5x16x16xf32>
    %352 = vector.shape_cast %351 : vector<1x5x16x16xf32> to vector<5x16x16xf32>
    %353 = vector.shape_cast %350 : vector<5x16x16xf32> to vector<1x5x16x16xf32>
    tpu.vector_store %arg17[%c0_143, %c0_144, %c0_145, %c0_146], %353 {strides = array<i32>} : memref<2x5x16x16xf32, #tpu.memory_space<vmem>>, vector<1x5x16x16xf32>,
    %354 = vector.extract_strided_slice %327 {offsets = [0, 16, 16], sizes = [5, 16, 16], strides = [1, 1, 1]} : vector<5x32x32xf32> to vector<5x16x16xf32>
    %c1_147 = arith.constant 1 : index
    %c0_148 = arith.constant 0 : index
    %c0_149 = arith.constant 0 : index
    %c0_150 = arith.constant 0 : index
    %355 = vector.load %arg17[%c1_147, %c0_148, %c0_149, %c0_150] : memref<2x5x16x16xf32, #tpu.memory_space<vmem>>, vector<1x5x16x16xf32>
    %356 = vector.shape_cast %355 : vector<1x5x16x16xf32> to vector<5x16x16xf32>
    %357 = vector.shape_cast %354 : vector<5x16x16xf32> to vector<1x5x16x16xf32>
    tpu.vector_store %arg17[%c1_147, %c0_148, %c0_149, %c0_150], %357 {strides = array<i32>} : memref<2x5x16x16xf32, #tpu.memory_space<vmem>>, vector<1x5x16x16xf32>,
    %c2_151 = arith.constant 2 : index
    %c0_152 = arith.constant 0 : index
    %c0_153 = arith.constant 0 : index
    %358 = vector.load %arg8[%c2_151, %c0_152, %c0_153] : memref<3x1x40xf32, #tpu.memory_space<vmem>>, vector<1x1x40xf32>
    %359 = vector.shape_cast %358 : vector<1x1x40xf32> to vector<1x40xf32>
    %c2_154 = arith.constant 2 : index
    %c0_155 = arith.constant 0 : index
    %c0_156 = arith.constant 0 : index
    %360 = vector.load %arg9[%c2_154, %c0_155, %c0_156] : memref<3x1x40xf32, #tpu.memory_space<vmem>>, vector<1x1x40xf32>
    %361 = vector.shape_cast %360 : vector<1x1x40xf32> to vector<1x40xf32>
    %cst_157 = arith.constant dense<0.000000e+00> : vector<32xf32>
    %362 = vector.multi_reduction <add>, %349, %cst_157 [1] : vector<32x40xf32> to vector<32xf32>
    %363 = vector.shape_cast %362 : vector<32xf32> to vector<32x1xf32>
    %cst_158 = arith.constant 4.000000e+01 : f32
    %364 = vector.broadcast %cst_158 : f32 to vector<32x1xf32>
    %365 = arith.divf %363, %364 : vector<32x1xf32>
    %366 = vector.broadcast %365 : vector<32x1xf32> to vector<32x40xf32>
    %367 = arith.subf %349, %366 : vector<32x40xf32>
    %368 = arith.mulf %367, %367 : vector<32x40xf32>
    %cst_159 = arith.constant dense<0.000000e+00> : vector<32xf32>
    %369 = vector.multi_reduction <add>, %368, %cst_159 [1] : vector<32x40xf32> to vector<32xf32>
    %370 = vector.shape_cast %369 : vector<32xf32> to vector<32x1xf32>
    %cst_160 = arith.constant 4.000000e+01 : f32
    %371 = vector.broadcast %cst_160 : f32 to vector<32x1xf32>
    %372 = arith.divf %370, %371 : vector<32x1xf32>
    %373 = vector.broadcast %365 : vector<32x1xf32> to vector<32x40xf32>
    %374 = arith.subf %349, %373 : vector<32x40xf32>
    %cst_161 = arith.constant 9.99999974E-6 : f32
    %375 = vector.broadcast %cst_161 : f32 to vector<32x1xf32>
    %376 = arith.addf %372, %375 : vector<32x1xf32>
    %377 = math.rsqrt %376 : vector<32x1xf32>
    %378 = vector.broadcast %377 : vector<32x1xf32> to vector<32x40xf32>
    %379 = arith.mulf %374, %378 : vector<32x40xf32>
    %380 = vector.broadcast %359 : vector<1x40xf32> to vector<32x40xf32>
    %381 = arith.mulf %379, %380 : vector<32x40xf32>
    %382 = vector.broadcast %361 : vector<1x40xf32> to vector<32x40xf32>
    %383 = arith.addf %381, %382 : vector<32x40xf32>
    %384 = arith.truncf %383 : vector<32x40xf32> to vector<32x40xbf16>
    %c2_162 = arith.constant 2 : index
    %c0_163 = arith.constant 0 : index
    %c0_164 = arith.constant 0 : index
    %385 = vector.load %arg10[%c2_162, %c0_163, %c0_164] : memref<3x40x2048xbf16, #tpu.memory_space<vmem>>, vector<1x40x2048xbf16>
    %386 = vector.shape_cast %385 : vector<1x40x2048xbf16> to vector<40x2048xbf16>
    %cst_165 = arith.constant dense<0.000000e+00> : vector<32x2048xf32>
    %387 = tpu.matmul %384, %386, %cst_165 {dimension_numbers = #tpu.dot_dimension_numbers<[1], [0], [0], [1], [0, 0, 1, 1], [], []>} : vector<32x40xbf16>, vector<40x2048xbf16>, vector<32x2048xf32> -> vector<32x2048xf32>
    %c2_166 = arith.constant 2 : index
    %c0_167 = arith.constant 0 : index
    %c0_168 = arith.constant 0 : index
    %388 = vector.load %arg11[%c2_166, %c0_167, %c0_168] : memref<3x1x2048xf32, #tpu.memory_space<vmem>>, vector<1x1x2048xf32>
    %389 = vector.shape_cast %388 : vector<1x1x2048xf32> to vector<1x2048xf32>
    %390 = vector.broadcast %389 : vector<1x2048xf32> to vector<32x2048xf32>
    %391 = arith.addf %387, %390 : vector<32x2048xf32>
    %cst_169 = arith.constant 0.000000e+00 : f32
    %392 = vector.broadcast %cst_169 : f32 to vector<32x2048xf32>
    %393 = arith.maximumf %391, %392 : vector<32x2048xf32>
    %394 = arith.truncf %393 : vector<32x2048xf32> to vector<32x2048xbf16>
    %c2_170 = arith.constant 2 : index
    %c0_171 = arith.constant 0 : index
    %c0_172 = arith.constant 0 : index
    %395 = vector.load %arg12[%c2_170, %c0_171, %c0_172] : memref<3x2048x40xbf16, #tpu.memory_space<vmem>>, vector<1x2048x40xbf16>
    %396 = vector.shape_cast %395 : vector<1x2048x40xbf16> to vector<2048x40xbf16>
    %cst_173 = arith.constant dense<0.000000e+00> : vector<32x40xf32>
    %397 = tpu.matmul %394, %396, %cst_173 {dimension_numbers = #tpu.dot_dimension_numbers<[1], [0], [0], [1], [0, 0, 1, 1], [], []>} : vector<32x2048xbf16>, vector<2048x40xbf16>, vector<32x40xf32> -> vector<32x40xf32>
    %c2_174 = arith.constant 2 : index
    %c0_175 = arith.constant 0 : index
    %c0_176 = arith.constant 0 : index
    %398 = vector.load %arg13[%c2_174, %c0_175, %c0_176] : memref<3x1x40xf32, #tpu.memory_space<vmem>>, vector<1x1x40xf32>
    %399 = vector.shape_cast %398 : vector<1x1x40xf32> to vector<1x40xf32>
    %400 = vector.broadcast %399 : vector<1x40xf32> to vector<32x40xf32>
    %401 = arith.addf %397, %400 : vector<32x40xf32>
    %402 = arith.addf %349, %401 : vector<32x40xf32>
    %c0_177 = arith.constant 0 : index
    %c0_178 = arith.constant 0 : index
    %403 = vector.load %arg14[%c0_177, %c0_178] : memref<1x40xf32, #tpu.memory_space<vmem>>, vector<1x40xf32>
    %c0_179 = arith.constant 0 : index
    %c0_180 = arith.constant 0 : index
    %404 = vector.load %arg15[%c0_179, %c0_180] : memref<1x40xf32, #tpu.memory_space<vmem>>, vector<1x40xf32>
    %cst_181 = arith.constant dense<0.000000e+00> : vector<32xf32>
    %405 = vector.multi_reduction <add>, %402, %cst_181 [1] : vector<32x40xf32> to vector<32xf32>
    %406 = vector.shape_cast %405 : vector<32xf32> to vector<32x1xf32>
    %cst_182 = arith.constant 4.000000e+01 : f32
    %407 = vector.broadcast %cst_182 : f32 to vector<32x1xf32>
    %408 = arith.divf %406, %407 : vector<32x1xf32>
    %409 = vector.broadcast %408 : vector<32x1xf32> to vector<32x40xf32>
    %410 = arith.subf %402, %409 : vector<32x40xf32>
    %411 = arith.mulf %410, %410 : vector<32x40xf32>
    %cst_183 = arith.constant dense<0.000000e+00> : vector<32xf32>
    %412 = vector.multi_reduction <add>, %411, %cst_183 [1] : vector<32x40xf32> to vector<32xf32>
    %413 = vector.shape_cast %412 : vector<32xf32> to vector<32x1xf32>
    %cst_184 = arith.constant 4.000000e+01 : f32
    %414 = vector.broadcast %cst_184 : f32 to vector<32x1xf32>
    %415 = arith.divf %413, %414 : vector<32x1xf32>
    %416 = vector.broadcast %408 : vector<32x1xf32> to vector<32x40xf32>
    %417 = arith.subf %402, %416 : vector<32x40xf32>
    %cst_185 = arith.constant 9.99999974E-6 : f32
    %418 = vector.broadcast %cst_185 : f32 to vector<32x1xf32>
    %419 = arith.addf %415, %418 : vector<32x1xf32>
    %420 = math.rsqrt %419 : vector<32x1xf32>
    %421 = vector.broadcast %420 : vector<32x1xf32> to vector<32x40xf32>
    %422 = arith.mulf %417, %421 : vector<32x40xf32>
    %423 = vector.broadcast %403 : vector<1x40xf32> to vector<32x40xf32>
    %424 = arith.mulf %422, %423 : vector<32x40xf32>
    %425 = vector.broadcast %404 : vector<1x40xf32> to vector<32x40xf32>
    %426 = arith.addf %424, %425 : vector<32x40xf32>
    %427 = vector.shape_cast %426 : vector<32x40xf32> to vector<2x16x40xf32>
    %c0_186 = arith.constant 0 : index
    %c0_187 = arith.constant 0 : index
    %c0_188 = arith.constant 0 : index
    %428 = vector.load %arg16[%c0_186, %c0_187, %c0_188] : memref<2x16x40xf32, #tpu.memory_space<vmem>>, vector<2x16x40xf32>
    tpu.vector_store %arg16[%c0_186, %c0_187, %c0_188], %427 {strides = array<i32>} : memref<2x16x40xf32, #tpu.memory_space<vmem>>, vector<2x16x40xf32>,
    return
  }
}

</mosaic_0001>

<llo_original>
// kernel: encoder_forward.1
$region0: #{encoder_forward.1}
  #allocation0 [shape = 'u32[]', space=smem, size = 0x4, offset = 0x4, fixed_abs, tag = 'smem constant byte address 0x4 - core index']
  #allocation1 [shape = 'u32[144,128]{1,0:T(1,128)}', space=vmem, size = 0x12000, scoped, tag = 'internal scratch']
  %s0 = inlined_call_operand.vmem [shape: f32[2,16,40], index: 0, kind: input, shape index: {}]
  %s1 = inlined_call_operand.vmem [shape: f32[32,32], index: 1, kind: input, shape index: {}]
  %s2 = inlined_call_operand.vmem [shape: bf16[3,40,120], index: 2, kind: input, shape index: {}]
  %s3 = inlined_call_operand.vmem [shape: f32[3,1,120], index: 3, kind: input, shape index: {}]
  %s4 = inlined_call_operand.vmem [shape: bf16[3,40,40], index: 4, kind: input, shape index: {}]
  %s5 = inlined_call_operand.vmem [shape: f32[3,1,40], index: 5, kind: input, shape index: {}]
  %s6 = inlined_call_operand.vmem [shape: f32[3,1,40], index: 6, kind: input, shape index: {}]
  %s7 = inlined_call_operand.vmem [shape: f32[3,1,40], index: 7, kind: input, shape index: {}]
  %s8 = inlined_call_operand.vmem [shape: f32[3,1,40], index: 8, kind: input, shape index: {}]
  %s9 = inlined_call_operand.vmem [shape: f32[3,1,40], index: 9, kind: input, shape index: {}]
  %s10 = inlined_call_operand.vmem [shape: bf16[3,40,2048], index: 10, kind: input, shape index: {}]
  %s11 = inlined_call_operand.vmem [shape: f32[3,1,2048], index: 11, kind: input, shape index: {}]
  %s12 = inlined_call_operand.vmem [shape: bf16[3,2048,40], index: 12, kind: input, shape index: {}]
  %s13 = inlined_call_operand.vmem [shape: f32[3,1,40], index: 13, kind: input, shape index: {}]
  %s14 = inlined_call_operand.vmem [shape: f32[1,40], index: 14, kind: input, shape index: {}]
  %s15 = inlined_call_operand.vmem [shape: f32[1,40], index: 15, kind: input, shape index: {}]
  %s16 = inlined_call_operand.hbm [shape: f32[2,16,40], index: 16, kind: output, shape index: {0}]
  %s17 = inlined_call_operand.hbm [shape: f32[2,5,16,16], index: 17, kind: output, shape index: {1}]
  %18 = xla_tuple %s16, %s17
  %s19 = sld [smem:[#allocation0]]
  $region82: #{encoder_forward.1} parent=0
    _
  %s21 = ssub.s32 1, %s19
  %s22 = scalar_select 0, %s21, %s19
  $region1: #{encoder_forward.1} parent=0
    #allocation2 [shape = 'u8[16384]{0}', space=vmem, size = 0x4000, scoped, tag = 'output window, operand 0, single buffered']
    #allocation3 [shape = 's32[1]{0}', space=sflag, size = 0x4, scoped, tag = 'scoped memory for encoder_forward.1']
    #allocation4 [shape = 'u8[81920]{0}', space=vmem, size = 0x14000, scoped, tag = 'output window, operand 1, single buffered']
    #allocation5 [shape = 's32[1]{0}', space=sflag, size = 0x4, scoped, tag = 'scoped memory for encoder_forward.1']
    %23 = vsyncpa [#allocation3], 0
    %24 = vsyncpa [#allocation5], 0
    // Predicated region
    $region2: #{encoder_forward.1} parent=1 // pred_check
      _
    $region3: #{encoder_forward.1} parent=1 // pred_check_branch
      %26 = sbr.rel (0) target = $region5
    $region4: #{encoder_forward.1} parent=1 // pred_region
      _
    $region5: #{encoder_forward.1} parent=1 // pred_fallthru
      _
    // Predicated region
    $region6: #{encoder_forward.1} parent=1 // pred_check
      _
    $region7: #{encoder_forward.1} parent=1 // pred_check_branch
      %28 = sbr.rel (0) target = $region9
    $region8: #{encoder_forward.1} parent=1 // pred_region
      _
    $region9: #{encoder_forward.1} parent=1 // pred_fallthru
      _
    // Predicated region
    $region10: #{encoder_forward.1} parent=1 // pred_check
      _
    $region11: #{encoder_forward.1} parent=1 // pred_check_branch
      %30 = sbr.rel (0) target = $region13
    $region12: #{encoder_forward.1} parent=1 // pred_region
      _
    $region13: #{encoder_forward.1} parent=1 // pred_fallthru
      _
    // Predicated region
    $region14: #{encoder_forward.1} parent=1 // pred_check
      _
    $region15: #{encoder_forward.1} parent=1 // pred_check_branch
      %32 = sbr.rel (0) target = $region17
    $region16: #{encoder_forward.1} parent=1 // pred_region
      _
    $region17: #{encoder_forward.1} parent=1 // pred_fallthru
      _
    // Predicated region
    $region18: #{encoder_forward.1} parent=1 // pred_check
      _
    $region19: #{encoder_forward.1} parent=1 // pred_check_branch
      %34 = sbr.rel (0) target = $region21
    $region20: #{encoder_forward.1} parent=1 // pred_region
      _
    $region21: #{encoder_forward.1} parent=1 // pred_fallthru
      _
    // Predicated region
    $region22: #{encoder_forward.1} parent=1 // pred_check
      _
    $region23: #{encoder_forward.1} parent=1 // pred_check_branch
      %36 = sbr.rel (0) target = $region25
    $region24: #{encoder_forward.1} parent=1 // pred_region
      _
    $region25: #{encoder_forward.1} parent=1 // pred_fallthru
      _
    // Predicated region
    $region26: #{encoder_forward.1} parent=1 // pred_check
      _
    $region27: #{encoder_forward.1} parent=1 // pred_check_branch
      %38 = sbr.rel (0) target = $region29
    $region28: #{encoder_forward.1} parent=1 // pred_region
      _
    $region29: #{encoder_forward.1} parent=1 // pred_fallthru
      _
    // Predicated region
    $region30: #{encoder_forward.1} parent=1 // pred_check
      _
    $region31: #{encoder_forward.1} parent=1 // pred_check_branch
      %40 = sbr.rel (0) target = $region33
    $region32: #{encoder_forward.1} parent=1 // pred_region
      _
    $region33: #{encoder_forward.1} parent=1 // pred_fallthru
      _
    // Predicated region
    $region34: #{encoder_forward.1} parent=1 // pred_check
      _
    $region35: #{encoder_forward.1} parent=1 // pred_check_branch
      %42 = sbr.rel (0) target = $region37
    $region36: #{encoder_forward.1} parent=1 // pred_region
      _
    $region37: #{encoder_forward.1} parent=1 // pred_fallthru
      _
    // Predicated region
    $region38: #{encoder_forward.1} parent=1 // pred_check
      _
    $region39: #{encoder_forward.1} parent=1 // pred_check_branch
      %44 = sbr.rel (0) target = $region41
    $region40: #{encoder_forward.1} parent=1 // pred_region
      _
    $region41: #{encoder_forward.1} parent=1 // pred_fallthru
      _
    // Predicated region
    $region42: #{encoder_forward.1} parent=1 // pred_check
      _
    $region43: #{encoder_forward.1} parent=1 // pred_check_branch
      %46 = sbr.rel (0) target = $region45
    $region44: #{encoder_forward.1} parent=1 // pred_region
      _
    $region45: #{encoder_forward.1} parent=1 // pred_fallthru
      _
    // Predicated region
    $region46: #{encoder_forward.1} parent=1 // pred_check
      _
    $region47: #{encoder_forward.1} parent=1 // pred_check_branch
      %48 = sbr.rel (0) target = $region49
    $region48: #{encoder_forward.1} parent=1 // pred_region
      _
    $region49: #{encoder_forward.1} parent=1 // pred_fallthru
      _
    // Predicated region
    $region50: #{encoder_forward.1} parent=1 // pred_check
      _
    $region51: #{encoder_forward.1} parent=1 // pred_check_branch
      %50 = sbr.rel (0) target = $region53
    $region52: #{encoder_forward.1} parent=1 // pred_region
      _
    $region53: #{encoder_forward.1} parent=1 // pred_fallthru
      _
    // Predicated region
    $region54: #{encoder_forward.1} parent=1 // pred_check
      _
    $region55: #{encoder_forward.1} parent=1 // pred_check_branch
      %52 = sbr.rel (0) target = $region57
    $region56: #{encoder_forward.1} parent=1 // pred_region
      _
    $region57: #{encoder_forward.1} parent=1 // pred_fallthru
      _
    // Predicated region
    $region58: #{encoder_forward.1} parent=1 // pred_check
      _
    $region59: #{encoder_forward.1} parent=1 // pred_check_branch
      %54 = sbr.rel (0) target = $region61
    $region60: #{encoder_forward.1} parent=1 // pred_region
      _
    $region61: #{encoder_forward.1} parent=1 // pred_fallthru
      _
    // Predicated region
    $region62: #{encoder_forward.1} parent=1 // pred_check
      _
    $region63: #{encoder_forward.1} parent=1 // pred_check_branch
      %56 = sbr.rel (0) target = $region65
    $region64: #{encoder_forward.1} parent=1 // pred_region
      _
    $region65: #{encoder_forward.1} parent=1 // pred_fallthru
      _
    %v58 = vld [vmem:[%s0] sm:$0xff]
    %v59 = vld [vmem:[%s0 + $0x8] sm:$0xff]
    %v60 = vld [vmem:[%s0 + $0x10] sm:$0xff]
    %v61 = vld [vmem:[%s0 + $0x18] sm:$0xff]
    %v62 = vld [vmem:[%s1] sm:$0xff]
    %v63 = vld [vmem:[%s1 + $0x8] sm:$0xff]
    %v64 = vld [vmem:[%s1 + $0x10] sm:$0xff]
    %v65 = vld [vmem:[%s1 + $0x18] sm:$0xff]
    %v66 = vld [vmem:[%s6] sm:$0x1]
    %v67 = vld [vmem:[%s7] sm:$0x1]
    %vm68 = vcmask 326656
    %v69 = vsel %vm68, %v58, 0.0
    %70 = vadd.xlane.f32.xlu0 %v69
    %v71 = vpop.xlane.xlu0 %70
    %v72 = vsel %vm68, %v59, 0.0
    %73 = vadd.xlane.f32.xlu0 %v72
    %v74 = vpop.xlane.xlu0 %73
    %v75 = vsel %vm68, %v60, 0.0
    %76 = vadd.xlane.f32.xlu0 %v75
    %v77 = vpop.xlane.xlu0 %76
    %v78 = vsel %vm68, %v61, 0.0
    %79 = vadd.xlane.f32.xlu0 %v78
    %v80 = vpop.xlane.xlu0 %79
    %v81 = vrcp.pop 40.0
    %v82 = vmul.f32 %v71, %v81
    %v83 = vmul.f32 %v74, %v81
    %v84 = vmul.f32 %v77, %v81
    %v85 = vmul.f32 %v80, %v81
    %v86 = vsub.f32 %v58, %v82
    %v87 = vsub.f32 %v59, %v83
    %v88 = vsub.f32 %v60, %v84
    %v89 = vsub.f32 %v61, %v85
    %v90 = vmul.f32 %v86, %v86
    %v91 = vmul.f32 %v87, %v87
    %v92 = vmul.f32 %v88, %v88
    %v93 = vmul.f32 %v89, %v89
    %v94 = vsel %vm68, %v90, 0.0
    %95 = vadd.xlane.f32.xlu0 %v94
    %v96 = vpop.xlane.xlu0 %95
    %v97 = vsel %vm68, %v91, 0.0
    %98 = vadd.xlane.f32.xlu0 %v97
    %v99 = vpop.xlane.xlu0 %98
    %v100 = vsel %vm68, %v92, 0.0
    %101 = vadd.xlane.f32.xlu0 %v100
    %v102 = vpop.xlane.xlu0 %101
    %v103 = vsel %vm68, %v93, 0.0
    %104 = vadd.xlane.f32.xlu0 %v103
    %v105 = vpop.xlane.xlu0 %104
    %v106 = vmul.f32 %v96, %v81
    %v107 = vmul.f32 %v99, %v81
    %v108 = vmul.f32 %v102, %v81
    %v109 = vmul.f32 %v105, %v81
    %v110 = vadd.f32 %v106, 1e-05
    %v111 = vadd.f32 %v107, 1e-05
    %v112 = vadd.f32 %v108, 1e-05
    %v113 = vadd.f32 %v109, 1e-05
    %v114 = vrsqrt.pop %v110
    %v115 = vrsqrt.pop %v111
    %v116 = vrsqrt.pop %v112
    %v117 = vrsqrt.pop %v113
    %v118 = vmul.f32 %v86, %v114
    %v119 = vmul.f32 %v87, %v115
    %v120 = vmul.f32 %v88, %v116
    %v121 = vmul.f32 %v89, %v117
    %v123 = vlaneseq
    %v124 = vshrl.u32 %v123, 7
    %v125 = vsub.s32 0, %v124
    %v126 = vrot.slane %v66, %v125
    %v128 = vmul.f32 %v118, %v126
    %v129 = vmul.f32 %v119, %v126
    %v130 = vmul.f32 %v120, %v126
    %v131 = vmul.f32 %v121, %v126
    %v133 = vlaneseq
    %v134 = vshrl.u32 %v133, 7
    %v135 = vsub.s32 0, %v134
    %v136 = vrot.slane %v67, %v135
    %v138 = vadd.f32 %v128, %v136
    %v139 = vadd.f32 %v129, %v136
    %v140 = vadd.f32 %v130, %v136
    %v141 = vadd.f32 %v131, %v136
    %v142 = vpack.c.bf16 %v139, %v138
    %v143 = vpack.c.bf16 %v141, %v140
    %v144 = vld [vmem:[%s2] sm:$0xf]
    %v145 = vld [vmem:[%s2 + $0x4] sm:$0xf]
    %v146 = vld [vmem:[%s2 + $0x8] sm:$0xf]
    %v147 = vld [vmem:[%s2 + $0xc] sm:$0xf]
    %v148 = vld [vmem:[%s2 + $0x10] sm:$0xf]
    %v149 = vld [vmem:[%s3] sm:$0x1]
    %v151 = vlaneseq
    %v152 = vshrl.u32 %v151, 7
    %v153 = vsub.s32 0, %v152
    %v154 = vrot.slane %v149, %v153
    %v161 = vunpack.c.l.b16 %v144
    %v162 = vunpack.c.l.b16 %v145
    %v163 = vunpack.c.l.b16 %v146
    %v164 = vunpack.c.l.b16 %v147
    %v165 = vunpack.c.l.b16 %v148
    %v166 = vpack.c.b16 %v162, %v161
    %v167 = vpack.c.b16 %v164, %v163
    %v168 = vpack.c.b16 %v165, %v165
    %v172 = vsel %vm68, %v142, 0
    %v175 = vsel %vm68, %v143, 0
    %vm177 = vcmask 1043456
    %v179 = vsel %vm177, %v168, 0
    %181 = vmatprep.subr.bf16.mxu0 0
    %182 = vmatpush1.bf16.msra.mxu0 %v166
    %183 = vmatprep.subr.bf16.mxu0 0
    %184 = vmatpush1.bf16.msra.mxu0 %v167
    %185 = vmatprep.subr.bf16.mxu0 0
    %186 = vmatpush1.bf16.msra.mxu0 %v179
    %187 = vmatprep.subr.bf16.mxu0 0
    %188 = vmatpush1.bf16.msra.mxu0 0
    %189 = vmatprep.subr.bf16.mxu0 0
    %190 = vmatpush1.bf16.msra.mxu0 0
    %191 = vmatprep.subr.bf16.mxu0 0
    %192 = vmatpush1.bf16.msra.mxu0 0
    %193 = vmatprep.subr.bf16.mxu0 0
    %194 = vmatpush1.bf16.msra.mxu0 0
    %195 = vmatprep.subr.bf16.mxu0 0
    %196 = vmatpush1.bf16.msra.mxu0 0
    %197 = vmatprep.subr.bf16.mxu0 0
    %198 = vmatpush1.bf16.msra.mxu0 0
    %199 = vmatprep.subr.bf16.mxu0 0
    %200 = vmatpush1.bf16.msra.mxu0 0
    %201 = vmatprep.subr.bf16.mxu0 0
    %202 = vmatpush1.bf16.msra.mxu0 0
    %203 = vmatprep.subr.bf16.mxu0 0
    %204 = vmatpush1.bf16.msra.mxu0 0
    %205 = vmatprep.subr.bf16.mxu0 0
    %206 = vmatpush1.bf16.msra.mxu0 0
    %207 = vmatprep.subr.bf16.mxu0 0
    %208 = vmatpush1.bf16.msra.mxu0 0
    %209 = vmatprep.subr.bf16.mxu0 0
    %210 = vmatpush1.bf16.msra.mxu0 0
    %211 = vmatprep.subr.bf16.mxu0 0
    %212 = vmatpush1.bf16.msra.mxu0 0
    %213 = vmatprep.mubr.bf16.mxu0 0
    %214 = vmatmul.mubr.bf16.gmra.mrb[0].mxu0 %v172
    %v215 = vpop.f32.mrb[0].mxu0
    %v216 = vadd.f32 %v154, %v215
    %v217 = vpop.f32.mrb[0].mxu0
    %v218 = vpop.f32.mrb[0].mxu0
    %v219 = vadd.f32 %v154, %v218
    %v220 = vpop.f32.mrb[0].mxu0
    %221 = vmatprep.mubr.bf16.mxu0 0
    %222 = vmatmul.mubr.bf16.gmra.mrb[0].mxu0 %v175
    %v223 = vpop.f32.mrb[0].mxu0
    %v224 = vadd.f32 %v154, %v223
    %v225 = vpop.f32.mrb[0].mxu0
    %v226 = vpop.f32.mrb[0].mxu0
    %v227 = vadd.f32 %v154, %v226
    %v228 = vpop.f32.mrb[0].mxu0
    %229 = vdwg.mxu0
    %v230 = vpack.c.bf16 %v219, %v216
    %v231 = vpack.c.bf16 %v227, %v224
    %234 = vrot.lane.b32.xlu0 %v230, 104
    %v235 = vpop.permute.xlu0 %234
    %236 = vrot.lane.b32.xlu0 %v231, 104
    %v237 = vpop.permute.xlu0 %236
    %238 = vrot.lane.b32.xlu0 %v230, 80
    %v239 = vpop.permute.xlu0 %238
    %240 = vrot.lane.b32.xlu0 %v231, 80
    %v241 = vpop.permute.xlu0 %240
    %242 = vrot.lane.b32.xlu0 %v230, 56
    %v243 = vpop.permute.xlu0 %242
    %244 = vrot.lane.b32.xlu0 %v231, 56
    %v245 = vpop.permute.xlu0 %244
    %246 = vrot.lane.b32.xlu0 %v230, 32
    %v247 = vpop.permute.xlu0 %246
    %248 = vrot.lane.b32.xlu0 %v231, 32
    %v249 = vpop.permute.xlu0 %248
    %250 = vrot.lane.b32.xlu0 %v230, 120
    %v251 = vpop.permute.xlu0 %250
    %252 = vrot.lane.b32.xlu0 %v231, 120
    %v253 = vpop.permute.xlu0 %252
    %vm254 = vcmask 64512
    %v256 = vsel %vm254, %v230, 0
    %v259 = vsel %vm254, %v231, 0
    %v262 = vsel %vm254, %v251, 0
    %v265 = vsel %vm254, %v253, 0
    %267 = vmatprep.subr.bf16.mxu0 0
    %268 = vmatpush1.bf16.xpose.msra.mxu0 %v262
    %269 = vmatprep.subr.bf16.mxu0 0
    %270 = vmatpush1.bf16.xpose.msra.mxu0 %v265
    %271 = vmatprep.subr.bf16.mxu0 0
    %272 = vmatpush1.bf16.xpose.msra.mxu0 0
    %273 = vmatprep.subr.bf16.mxu0 0
    %274 = vmatpush1.bf16.xpose.msra.mxu0 0
    %275 = vmatprep.subr.bf16.mxu0 0
    %276 = vmatpush1.bf16.xpose.msra.mxu0 0
    %277 = vmatprep.subr.bf16.mxu0 0
    %278 = vmatpush1.bf16.xpose.msra.mxu0 0
    %279 = vmatprep.subr.bf16.mxu0 0
    %280 = vmatpush1.bf16.xpose.msra.mxu0 0
    %281 = vmatprep.subr.bf16.mxu0 0
    %282 = vmatpush1.bf16.xpose.msra.mxu0 0
    %283 = vmatprep.subr.bf16.mxu0 0
    %284 = vmatpush1.bf16.xpose.msra.mxu0 0
    %285 = vmatprep.subr.bf16.mxu0 0
    %286 = vmatpush1.bf16.xpose.msra.mxu0 0
    %287 = vmatprep.subr.bf16.mxu0 0
    %288 = vmatpush1.bf16.xpose.msra.mxu0 0
    %289 = vmatprep.subr.bf16.mxu0 0
    %290 = vmatpush1.bf16.xpose.msra.mxu0 0
    %291 = vmatprep.subr.bf16.mxu0 0
    %292 = vmatpush1.bf16.xpose.msra.mxu0 0
    %293 = vmatprep.subr.bf16.mxu0 0
    %294 = vmatpush1.bf16.xpose.msra.mxu0 0
    %295 = vmatprep.subr.bf16.mxu0 0
    %296 = vmatpush1.bf16.xpose.msra.mxu0 0
    %297 = vmatprep.subr.bf16.mxu0 0
    %298 = vmatpush1.bf16.xpose.msra.mxu0 0
    %299 = vmatprep.mubr.bf16.mxu0 0
    %300 = vmatmul.mubr.bf16.gmra.mrb[0].mxu0 %v256
    %v301 = vpop.f32.mrb[0].mxu0
    %v302 = vadd.f32 0.0, %v301
    %v303 = vpop.f32.mrb[0].mxu0
    %v304 = vpop.f32.mrb[0].mxu0
    %v305 = vadd.f32 0.0, %v304
    %v306 = vpop.f32.mrb[0].mxu0
    %307 = vmatprep.mubr.bf16.mxu0 0
    %308 = vmatmul.mubr.bf16.gmra.mrb[0].mxu0 %v259
    %v309 = vpop.f32.mrb[0].mxu0
    %v310 = vadd.f32 0.0, %v309
    %v311 = vpop.f32.mrb[0].mxu0
    %v312 = vpop.f32.mrb[0].mxu0
    %v313 = vadd.f32 0.0, %v312
    %v314 = vpop.f32.mrb[0].mxu0
    %315 = vdwg.mxu0
    %316 = vrot.lane.b32.xlu0 %v235, 120
    %v317 = vpop.permute.xlu0 %316
    %318 = vrot.lane.b32.xlu0 %v237, 120
    %v319 = vpop.permute.xlu0 %318
    %v321 = vsel %vm254, %v235, 0
    %v324 = vsel %vm254, %v237, 0
    %v327 = vsel %vm254, %v317, 0
    %v330 = vsel %vm254, %v319, 0
    %332 = vmatprep.subr.bf16.mxu0 0
    %333 = vmatpush1.bf16.xpose.msra.mxu0 %v327
    %334 = vmatprep.subr.bf16.mxu0 0
    %335 = vmatpush1.bf16.xpose.msra.mxu0 %v330
    %336 = vmatprep.subr.bf16.mxu0 0
    %337 = vmatpush1.bf16.xpose.msra.mxu0 0
    %338 = vmatprep.subr.bf16.mxu0 0
    %339 = vmatpush1.bf16.xpose.msra.mxu0 0
    %340 = vmatprep.subr.bf16.mxu0 0
    %341 = vmatpush1.bf16.xpose.msra.mxu0 0
    %342 = vmatprep.subr.bf16.mxu0 0
    %343 = vmatpush1.bf16.xpose.msra.mxu0 0
    %344 = vmatprep.subr.bf16.mxu0 0
    %345 = vmatpush1.bf16.xpose.msra.mxu0 0
    %346 = vmatprep.subr.bf16.mxu0 0
    %347 = vmatpush1.bf16.xpose.msra.mxu0 0
    %348 = vmatprep.subr.bf16.mxu0 0
    %349 = vmatpush1.bf16.xpose.msra.mxu0 0
    %350 = vmatprep.subr.bf16.mxu0 0
    %351 = vmatpush1.bf16.xpose.msra.mxu0 0
    %352 = vmatprep.subr.bf16.mxu0 0
    %353 = vmatpush1.bf16.xpose.msra.mxu0 0
    %354 = vmatprep.subr.bf16.mxu0 0
    %355 = vmatpush1.bf16.xpose.msra.mxu0 0
    %356 = vmatprep.subr.bf16.mxu0 0
    %357 = vmatpush1.bf16.xpose.msra.mxu0 0
    %358 = vmatprep.subr.bf16.mxu0 0
    %359 = vmatpush1.bf16.xpose.msra.mxu0 0
    %360 = vmatprep.subr.bf16.mxu0 0
    %361 = vmatpush1.bf16.xpose.msra.mxu0 0
    %362 = vmatprep.subr.bf16.mxu0 0
    %363 = vmatpush1.bf16.xpose.msra.mxu0 0
    %364 = vmatprep.mubr.bf16.mxu0 0
    %365 = vmatmul.mubr.bf16.gmra.mrb[0].mxu0 %v321
    %v366 = vpop.f32.mrb[0].mxu0
    %v367 = vadd.f32 0.0, %v366
    %v368 = vpop.f32.mrb[0].mxu0
    %v369 = vpop.f32.mrb[0].mxu0
    %v370 = vadd.f32 0.0, %v369
    %v371 = vpop.f32.mrb[0].mxu0
    %372 = vmatprep.mubr.bf16.mxu0 0
    %373 = vmatmul.mubr.bf16.gmra.mrb[0].mxu0 %v324
    %v374 = vpop.f32.mrb[0].mxu0
    %v375 = vadd.f32 0.0, %v374
    %v376 = vpop.f32.mrb[0].mxu0
    %v377 = vpop.f32.mrb[0].mxu0
    %v378 = vadd.f32 0.0, %v377
    %v379 = vpop.f32.mrb[0].mxu0
    %380 = vdwg.mxu0
    %381 = vrot.lane.b32.xlu0 %v239, 120
    %v382 = vpop.permute.xlu0 %381
    %383 = vrot.lane.b32.xlu0 %v241, 120
    %v384 = vpop.permute.xlu0 %383
    %v386 = vsel %vm254, %v239, 0
    %v389 = vsel %vm254, %v241, 0
    %v392 = vsel %vm254, %v382, 0
    %v395 = vsel %vm254, %v384, 0
    %397 = vmatprep.subr.bf16.mxu0 0
    %398 = vmatpush1.bf16.xpose.msra.mxu0 %v392
    %399 = vmatprep.subr.bf16.mxu0 0
    %400 = vmatpush1.bf16.xpose.msra.mxu0 %v395
    %401 = vmatprep.subr.bf16.mxu0 0
    %402 = vmatpush1.bf16.xpose.msra.mxu0 0
    %403 = vmatprep.subr.bf16.mxu0 0
    %404 = vmatpush1.bf16.xpose.msra.mxu0 0
    %405 = vmatprep.subr.bf16.mxu0 0
    %406 = vmatpush1.bf16.xpose.msra.mxu0 0
    %407 = vmatprep.subr.bf16.mxu0 0
    %408 = vmatpush1.bf16.xpose.msra.mxu0 0
    %409 = vmatprep.subr.bf16.mxu0 0
    %410 = vmatpush1.bf16.xpose.msra.mxu0 0
    %411 = vmatprep.subr.bf16.mxu0 0
    %412 = vmatpush1.bf16.xpose.msra.mxu0 0
    %413 = vmatprep.subr.bf16.mxu0 0
    %414 = vmatpush1.bf16.xpose.msra.mxu0 0
    %415 = vmatprep.subr.bf16.mxu0 0
    %416 = vmatpush1.bf16.xpose.msra.mxu0 0
    %417 = vmatprep.subr.bf16.mxu0 0
    %418 = vmatpush1.bf16.xpose.msra.mxu0 0
    %419 = vmatprep.subr.bf16.mxu0 0
    %420 = vmatpush1.bf16.xpose.msra.mxu0 0
    %421 = vmatprep.subr.bf16.mxu0 0
    %422 = vmatpush1.bf16.xpose.msra.mxu0 0
    %423 = vmatprep.subr.bf16.mxu0 0
    %424 = vmatpush1.bf16.xpose.msra.mxu0 0
    %425 = vmatprep.subr.bf16.mxu0 0
    %426 = vmatpush1.bf16.xpose.msra.mxu0 0
    %427 = vmatprep.subr.bf16.mxu0 0
    %428 = vmatpush1.bf16.xpose.msra.mxu0 0
    %429 = vmatprep.mubr.bf16.mxu0 0
    %430 = vmatmul.mubr.bf16.gmra.mrb[0].mxu0 %v386
    %v431 = vpop.f32.mrb[0].mxu0
    %v432 = vadd.f32 0.0, %v431
    %v433 = vpop.f32.mrb[0].mxu0
    %v434 = vpop.f32.mrb[0].mxu0
    %v435 = vadd.f32 0.0, %v434
    %v436 = vpop.f32.mrb[0].mxu0
    %437 = vmatprep.mubr.bf16.mxu0 0
    %438 = vmatmul.mubr.bf16.gmra.mrb[0].mxu0 %v389
    %v439 = vpop.f32.mrb[0].mxu0
    %v440 = vadd.f32 0.0, %v439
    %v441 = vpop.f32.mrb[0].mxu0
    %v442 = vpop.f32.mrb[0].mxu0
    %v443 = vadd.f32 0.0, %v442
    %v444 = vpop.f32.mrb[0].mxu0
    %445 = vdwg.mxu0
    %446 = vrot.lane.b32.xlu0 %v243, 120
    %v447 = vpop.permute.xlu0 %446
    %448 = vrot.lane.b32.xlu0 %v245, 120
    %v449 = vpop.permute.xlu0 %448
    %v451 = vsel %vm254, %v243, 0
    %v454 = vsel %vm254, %v245, 0
    %v457 = vsel %vm254, %v447, 0
    %v460 = vsel %vm254, %v449, 0
    %462 = vmatprep.subr.bf16.mxu0 0
    %463 = vmatpush1.bf16.xpose.msra.mxu0 %v457
    %464 = vmatprep.subr.bf16.mxu0 0
    %465 = vmatpush1.bf16.xpose.msra.mxu0 %v460
    %466 = vmatprep.subr.bf16.mxu0 0
    %467 = vmatpush1.bf16.xpose.msra.mxu0 0
    %468 = vmatprep.subr.bf16.mxu0 0
    %469 = vmatpush1.bf16.xpose.msra.mxu0 0
    %470 = vmatprep.subr.bf16.mxu0 0
    %471 = vmatpush1.bf16.xpose.msra.mxu0 0
    %472 = vmatprep.subr.bf16.mxu0 0
    %473 = vmatpush1.bf16.xpose.msra.mxu0 0
    %474 = vmatprep.subr.bf16.mxu0 0
    %475 = vmatpush1.bf16.xpose.msra.mxu0 0
    %476 = vmatprep.subr.bf16.mxu0 0
    %477 = vmatpush1.bf16.xpose.msra.mxu0 0
    %478 = vmatprep.subr.bf16.mxu0 0
    %479 = vmatpush1.bf16.xpose.msra.mxu0 0
    %480 = vmatprep.subr.bf16.mxu0 0
    %481 = vmatpush1.bf16.xpose.msra.mxu0 0
    %482 = vmatprep.subr.bf16.mxu0 0
    %483 = vmatpush1.bf16.xpose.msra.mxu0 0
    %484 = vmatprep.subr.bf16.mxu0 0
    %485 = vmatpush1.bf16.xpose.msra.mxu0 0
    %486 = vmatprep.subr.bf16.mxu0 0
    %487 = vmatpush1.bf16.xpose.msra.mxu0 0
    %488 = vmatprep.subr.bf16.mxu0 0
    %489 = vmatpush1.bf16.xpose.msra.mxu0 0
    %490 = vmatprep.subr.bf16.mxu0 0
    %491 = vmatpush1.bf16.xpose.msra.mxu0 0
    %492 = vmatprep.subr.bf16.mxu0 0
    %493 = vmatpush1.bf16.xpose.msra.mxu0 0
    %494 = vmatprep.mubr.bf16.mxu0 0
    %495 = vmatmul.mubr.bf16.gmra.mrb[0].mxu0 %v451
    %v496 = vpop.f32.mrb[0].mxu0
    %v497 = vadd.f32 0.0, %v496
    %v498 = vpop.f32.mrb[0].mxu0
    %v499 = vpop.f32.mrb[0].mxu0
    %v500 = vadd.f32 0.0, %v499
    %v501 = vpop.f32.mrb[0].mxu0
    %502 = vmatprep.mubr.bf16.mxu0 0
    %503 = vmatmul.mubr.bf16.gmra.mrb[0].mxu0 %v454
    %v504 = vpop.f32.mrb[0].mxu0
    %v505 = vadd.f32 0.0, %v504
    %v506 = vpop.f32.mrb[0].mxu0
    %v507 = vpop.f32.mrb[0].mxu0
    %v508 = vadd.f32 0.0, %v507
    %v509 = vpop.f32.mrb[0].mxu0
    %510 = vdwg.mxu0
    %511 = vrot.lane.b32.xlu0 %v247, 120
    %v512 = vpop.permute.xlu0 %511
    %513 = vrot.lane.b32.xlu0 %v249, 120
    %v514 = vpop.permute.xlu0 %513
    %v516 = vsel %vm254, %v247, 0
    %v519 = vsel %vm254, %v249, 0
    %v522 = vsel %vm254, %v512, 0
    %v525 = vsel %vm254, %v514, 0
    %527 = vmatprep.subr.bf16.mxu0 0
    %528 = vmatpush1.bf16.xpose.msra.mxu0 %v522
    %529 = vmatprep.subr.bf16.mxu0 0
    %530 = vmatpush1.bf16.xpose.msra.mxu0 %v525
    %531 = vmatprep.subr.bf16.mxu0 0
    %532 = vmatpush1.bf16.xpose.msra.mxu0 0
    %533 = vmatprep.subr.bf16.mxu0 0
    %534 = vmatpush1.bf16.xpose.msra.mxu0 0
    %535 = vmatprep.subr.bf16.mxu0 0
    %536 = vmatpush1.bf16.xpose.msra.mxu0 0
    %537 = vmatprep.subr.bf16.mxu0 0
    %538 = vmatpush1.bf16.xpose.msra.mxu0 0
    %539 = vmatprep.subr.bf16.mxu0 0
    %540 = vmatpush1.bf16.xpose.msra.mxu0 0
    %541 = vmatprep.subr.bf16.mxu0 0
    %542 = vmatpush1.bf16.xpose.msra.mxu0 0
    %543 = vmatprep.subr.bf16.mxu0 0
    %544 = vmatpush1.bf16.xpose.msra.mxu0 0
    %545 = vmatprep.subr.bf16.mxu0 0
    %546 = vmatpush1.bf16.xpose.msra.mxu0 0
    %547 = vmatprep.subr.bf16.mxu0 0
    %548 = vmatpush1.bf16.xpose.msra.mxu0 0
    %549 = vmatprep.subr.bf16.mxu0 0
    %550 = vmatpush1.bf16.xpose.msra.mxu0 0
    %551 = vmatprep.subr.bf16.mxu0 0
    %552 = vmatpush1.bf16.xpose.msra.mxu0 0
    %553 = vmatprep.subr.bf16.mxu0 0
    %554 = vmatpush1.bf16.xpose.msra.mxu0 0
    %555 = vmatprep.subr.bf16.mxu0 0
    %556 = vmatpush1.bf16.xpose.msra.mxu0 0
    %557 = vmatprep.subr.bf16.mxu0 0
    %558 = vmatpush1.bf16.xpose.msra.mxu0 0
    %559 = vmatprep.mubr.bf16.mxu0 0
    %560 = vmatmul.mubr.bf16.gmra.mrb[0].mxu0 %v516
    %v561 = vpop.f32.mrb[0].mxu0
    %v562 = vadd.f32 0.0, %v561
    %v563 = vpop.f32.mrb[0].mxu0
    %v564 = vpop.f32.mrb[0].mxu0
    %v565 = vadd.f32 0.0, %v564
    %v566 = vpop.f32.mrb[0].mxu0
    %567 = vmatprep.mubr.bf16.mxu0 0
    %568 = vmatmul.mubr.bf16.gmra.mrb[0].mxu0 %v519
    %v569 = vpop.f32.mrb[0].mxu0
    %v570 = vadd.f32 0.0, %v569
    %v571 = vpop.f32.mrb[0].mxu0
    %v572 = vpop.f32.mrb[0].mxu0
    %v573 = vadd.f32 0.0, %v572
    %v574 = vpop.f32.mrb[0].mxu0
    %575 = vdwg.mxu0
    %v576 = vmul.f32 %v302, 0.35355338
    %v577 = vmul.f32 %v305, 0.35355338
    %v578 = vmul.f32 %v310, 0.35355338
    %v579 = vmul.f32 %v313, 0.35355338
    %v580 = vmul.f32 %v367, 0.35355338
    %v581 = vmul.f32 %v370, 0.35355338
    %v582 = vmul.f32 %v375, 0.35355338
    %v583 = vmul.f32 %v378, 0.35355338
    %v584 = vmul.f32 %v432, 0.35355338
    %v585 = vmul.f32 %v435, 0.35355338
    %v586 = vmul.f32 %v440, 0.35355338
    %v587 = vmul.f32 %v443, 0.35355338
    %v588 = vmul.f32 %v497, 0.35355338
    %v589 = vmul.f32 %v500, 0.35355338
    %v590 = vmul.f32 %v505, 0.35355338
    %v591 = vmul.f32 %v508, 0.35355338
    %v592 = vmul.f32 %v562, 0.35355338
    %v593 = vmul.f32 %v565, 0.35355338
    %v594 = vmul.f32 %v570, 0.35355338
    %v595 = vmul.f32 %v573, 0.35355338
    %v596 = vadd.f32 %v576, %v62
    %v597 = vadd.f32 %v577, %v63
    %v598 = vadd.f32 %v578, %v64
    %v599 = vadd.f32 %v579, %v65
    %v600 = vadd.f32 %v580, %v62
    %v601 = vadd.f32 %v581, %v63
    %v602 = vadd.f32 %v582, %v64
    %v603 = vadd.f32 %v583, %v65
    %v604 = vadd.f32 %v584, %v62
    %v605 = vadd.f32 %v585, %v63
    %v606 = vadd.f32 %v586, %v64
    %v607 = vadd.f32 %v587, %v65
    %v608 = vadd.f32 %v588, %v62
    %v609 = vadd.f32 %v589, %v63
    %v610 = vadd.f32 %v590, %v64
    %v611 = vadd.f32 %v591, %v65
    %v612 = vadd.f32 %v592, %v62
    %v613 = vadd.f32 %v593, %v63
    %v614 = vadd.f32 %v594, %v64
    %v615 = vadd.f32 %v595, %v65
    %vm616 = vcmask 261120
    %v617 = vsel %vm616, %v596, -inf
    %618 = vmax.xlane.f32.xlu0 %v617
    %v619 = vpop.xlane.xlu0 %618
    %v620 = vsel %vm616, %v597, -inf
    %621 = vmax.xlane.f32.xlu0 %v620
    %v622 = vpop.xlane.xlu0 %621
    %v623 = vsel %vm616, %v598, -inf
    %624 = vmax.xlane.f32.xlu0 %v623
    %v625 = vpop.xlane.xlu0 %624
    %v626 = vsel %vm616, %v599, -inf
    %627 = vmax.xlane.f32.xlu0 %v626
    %v628 = vpop.xlane.xlu0 %627
    %v629 = vsel %vm616, %v600, -inf
    %630 = vmax.xlane.f32.xlu0 %v629
    %v631 = vpop.xlane.xlu0 %630
    %v632 = vsel %vm616, %v601, -inf
    %633 = vmax.xlane.f32.xlu0 %v632
    %v634 = vpop.xlane.xlu0 %633
    %v635 = vsel %vm616, %v602, -inf
    %636 = vmax.xlane.f32.xlu0 %v635
    %v637 = vpop.xlane.xlu0 %636
    %v638 = vsel %vm616, %v603, -inf
    %639 = vmax.xlane.f32.xlu0 %v638
    %v640 = vpop.xlane.xlu0 %639
    %v641 = vsel %vm616, %v604, -inf
    %642 = vmax.xlane.f32.xlu0 %v641
    %v643 = vpop.xlane.xlu0 %642
    %v644 = vsel %vm616, %v605, -inf
    %645 = vmax.xlane.f32.xlu0 %v644
    %v646 = vpop.xlane.xlu0 %645
    %v647 = vsel %vm616, %v606, -inf
    %648 = vmax.xlane.f32.xlu0 %v647
    %v649 = vpop.xlane.xlu0 %648
    %v650 = vsel %vm616, %v607, -inf
    %651 = vmax.xlane.f32.xlu0 %v650
    %v652 = vpop.xlane.xlu0 %651
    %v653 = vsel %vm616, %v608, -inf
    %654 = vmax.xlane.f32.xlu0 %v653
    %v655 = vpop.xlane.xlu0 %654
    %v656 = vsel %vm616, %v609, -inf
    %657 = vmax.xlane.f32.xlu0 %v656
    %v658 = vpop.xlane.xlu0 %657
    %v659 = vsel %vm616, %v610, -inf
    %660 = vmax.xlane.f32.xlu0 %v659
    %v661 = vpop.xlane.xlu0 %660
    %v662 = vsel %vm616, %v611, -inf
    %663 = vmax.xlane.f32.xlu0 %v662
    %v664 = vpop.xlane.xlu0 %663
    %v665 = vsel %vm616, %v612, -inf
    %666 = vmax.xlane.f32.xlu0 %v665
    %v667 = vpop.xlane.xlu0 %666
    %v668 = vsel %vm616, %v613, -inf
    %669 = vmax.xlane.f32.xlu0 %v668
    %v670 = vpop.xlane.xlu0 %669
    %v671 = vsel %vm616, %v614, -inf
    %672 = vmax.xlane.f32.xlu0 %v671
    %v673 = vpop.xlane.xlu0 %672
    %v674 = vsel %vm616, %v615, -inf
    %675 = vmax.xlane.f32.xlu0 %v674
    %v676 = vpop.xlane.xlu0 %675
    %v677 = vsub.f32 %v596, %v619
    %v678 = vsub.f32 %v597, %v622
    %v679 = vsub.f32 %v598, %v625
    %v680 = vsub.f32 %v599, %v628
    %v681 = vsub.f32 %v600, %v631
    %v682 = vsub.f32 %v601, %v634
    %v683 = vsub.f32 %v602, %v637
    %v684 = vsub.f32 %v603, %v640
    %v685 = vsub.f32 %v604, %v643
    %v686 = vsub.f32 %v605, %v646
    %v687 = vsub.f32 %v606, %v649
    %v688 = vsub.f32 %v607, %v652
    %v689 = vsub.f32 %v608, %v655
    %v690 = vsub.f32 %v609, %v658
    %v691 = vsub.f32 %v610, %v661
    %v692 = vsub.f32 %v611, %v664
    %v693 = vsub.f32 %v612, %v667
    %v694 = vsub.f32 %v613, %v670
    %v695 = vsub.f32 %v614, %v673
    %v696 = vsub.f32 %v615, %v676
    %v697 = vmul.f32 %v677, 1.442695
    %v698 = vpow.pop %v697
    %v699 = vmul.f32 %v678, 1.442695
    %v700 = vpow.pop %v699
    %v701 = vmul.f32 %v679, 1.442695
    %v702 = vpow.pop %v701
    %v703 = vmul.f32 %v680, 1.442695
    %v704 = vpow.pop %v703
    %v705 = vmul.f32 %v681, 1.442695
    %v706 = vpow.pop %v705
    %v707 = vmul.f32 %v682, 1.442695
    %v708 = vpow.pop %v707
    %v709 = vmul.f32 %v683, 1.442695
    %v710 = vpow.pop %v709
    %v711 = vmul.f32 %v684, 1.442695
    %v712 = vpow.pop %v711
    %v713 = vmul.f32 %v685, 1.442695
    %v714 = vpow.pop %v713
    %v715 = vmul.f32 %v686, 1.442695
    %v716 = vpow.pop %v715
    %v717 = vmul.f32 %v687, 1.442695
    %v718 = vpow.pop %v717
    %v719 = vmul.f32 %v688, 1.442695
    %v720 = vpow.pop %v719
    %v721 = vmul.f32 %v689, 1.442695
    %v722 = vpow.pop %v721
    %v723 = vmul.f32 %v690, 1.442695
    %v724 = vpow.pop %v723
    %v725 = vmul.f32 %v691, 1.442695
    %v726 = vpow.pop %v725
    %v727 = vmul.f32 %v692, 1.442695
    %v728 = vpow.pop %v727
    %v729 = vmul.f32 %v693, 1.442695
    %v730 = vpow.pop %v729
    %v731 = vmul.f32 %v694, 1.442695
    %v732 = vpow.pop %v731
    %v733 = vmul.f32 %v695, 1.442695
    %v734 = vpow.pop %v733
    %v735 = vmul.f32 %v696, 1.442695
    %v736 = vpow.pop %v735
    %v737 = vsel %vm616, %v698, 0.0
    %738 = vadd.xlane.f32.xlu0 %v737
    %v739 = vpop.xlane.xlu0 %738
    %v740 = vsel %vm616, %v700, 0.0
    %741 = vadd.xlane.f32.xlu0 %v740
    %v742 = vpop.xlane.xlu0 %741
    %v743 = vsel %vm616, %v702, 0.0
    %744 = vadd.xlane.f32.xlu0 %v743
    %v745 = vpop.xlane.xlu0 %744
    %v746 = vsel %vm616, %v704, 0.0
    %747 = vadd.xlane.f32.xlu0 %v746
    %v748 = vpop.xlane.xlu0 %747
    %v749 = vsel %vm616, %v706, 0.0
    %750 = vadd.xlane.f32.xlu0 %v749
    %v751 = vpop.xlane.xlu0 %750
    %v752 = vsel %vm616, %v708, 0.0
    %753 = vadd.xlane.f32.xlu0 %v752
    %v754 = vpop.xlane.xlu0 %753
    %v755 = vsel %vm616, %v710, 0.0
    %756 = vadd.xlane.f32.xlu0 %v755
    %v757 = vpop.xlane.xlu0 %756
    %v758 = vsel %vm616, %v712, 0.0
    %759 = vadd.xlane.f32.xlu0 %v758
    %v760 = vpop.xlane.xlu0 %759
    %v761 = vsel %vm616, %v714, 0.0
    %762 = vadd.xlane.f32.xlu0 %v761
    %v763 = vpop.xlane.xlu0 %762
    %v764 = vsel %vm616, %v716, 0.0
    %765 = vadd.xlane.f32.xlu0 %v764
    %v766 = vpop.xlane.xlu0 %765
    %v767 = vsel %vm616, %v718, 0.0
    %768 = vadd.xlane.f32.xlu0 %v767
    %v769 = vpop.xlane.xlu0 %768
    %v770 = vsel %vm616, %v720, 0.0
    %771 = vadd.xlane.f32.xlu0 %v770
    %v772 = vpop.xlane.xlu0 %771
    %v773 = vsel %vm616, %v722, 0.0
    %774 = vadd.xlane.f32.xlu0 %v773
    %v775 = vpop.xlane.xlu0 %774
    %v776 = vsel %vm616, %v724, 0.0
    %777 = vadd.xlane.f32.xlu0 %v776
    %v778 = vpop.xlane.xlu0 %777
    %v779 = vsel %vm616, %v726, 0.0
    %780 = vadd.xlane.f32.xlu0 %v779
    %v781 = vpop.xlane.xlu0 %780
    %v782 = vsel %vm616, %v728, 0.0
    %783 = vadd.xlane.f32.xlu0 %v782
    %v784 = vpop.xlane.xlu0 %783
    %v785 = vsel %vm616, %v730, 0.0
    %786 = vadd.xlane.f32.xlu0 %v785
    %v787 = vpop.xlane.xlu0 %786
    %v788 = vsel %vm616, %v732, 0.0
    %789 = vadd.xlane.f32.xlu0 %v788
    %v790 = vpop.xlane.xlu0 %789
    %v791 = vsel %vm616, %v734, 0.0
    %792 = vadd.xlane.f32.xlu0 %v791
    %v793 = vpop.xlane.xlu0 %792
    %v794 = vsel %vm616, %v736, 0.0
    %795 = vadd.xlane.f32.xlu0 %v794
    %v796 = vpop.xlane.xlu0 %795
    %v797 = vrcp.pop %v739
    %v798 = vrcp.pop %v742
    %v799 = vrcp.pop %v745
    %v800 = vrcp.pop %v748
    %v801 = vrcp.pop %v751
    %v802 = vrcp.pop %v754
    %v803 = vrcp.pop %v757
    %v804 = vrcp.pop %v760
    %v805 = vrcp.pop %v763
    %v806 = vrcp.pop %v766
    %v807 = vrcp.pop %v769
    %v808 = vrcp.pop %v772
    %v809 = vrcp.pop %v775
    %v810 = vrcp.pop %v778
    %v811 = vrcp.pop %v781
    %v812 = vrcp.pop %v784
    %v813 = vrcp.pop %v787
    %v814 = vrcp.pop %v790
    %v815 = vrcp.pop %v793
    %v816 = vrcp.pop %v796
    %v817 = vmul.f32 %v698, %v797
    %v818 = vmul.f32 %v700, %v798
    %v819 = vmul.f32 %v702, %v799
    %v820 = vmul.f32 %v704, %v800
    %v821 = vmul.f32 %v706, %v801
    %v822 = vmul.f32 %v708, %v802
    %v823 = vmul.f32 %v710, %v803
    %v824 = vmul.f32 %v712, %v804
    %v825 = vmul.f32 %v714, %v805
    %v826 = vmul.f32 %v716, %v806
    %v827 = vmul.f32 %v718, %v807
    %v828 = vmul.f32 %v720, %v808
    %v829 = vmul.f32 %v722, %v809
    %v830 = vmul.f32 %v724, %v810
    %v831 = vmul.f32 %v726, %v811
    %v832 = vmul.f32 %v728, %v812
    %v833 = vmul.f32 %v730, %v813
    %v834 = vmul.f32 %v732, %v814
    %v835 = vmul.f32 %v734, %v815
    %v836 = vmul.f32 %v736, %v816
    %v837 = vpack.c.bf16 %v818, %v817
    %v838 = vpack.c.bf16 %v820, %v819
    %v839 = vpack.c.bf16 %v822, %v821
    %v840 = vpack.c.bf16 %v824, %v823
    %v841 = vpack.c.bf16 %v826, %v825
    %v842 = vpack.c.bf16 %v828, %v827
    %v843 = vpack.c.bf16 %v830, %v829
    %v844 = vpack.c.bf16 %v832, %v831
    %v845 = vpack.c.bf16 %v834, %v833
    %v846 = vpack.c.bf16 %v836, %v835
    %847 = vrot.lane.b32.xlu0 %v230, 112
    %v848 = vpop.permute.xlu0 %847
    %849 = vrot.lane.b32.xlu0 %v231, 112
    %v850 = vpop.permute.xlu0 %849
    %v854 = vsel %vm616, %v837, 0
    %v857 = vsel %vm616, %v838, 0
    %859 = vmatprep.subr.bf16.mxu0 0
    %860 = vmatpush1.bf16.msra.mxu0 %v848
    %861 = vmatprep.subr.bf16.mxu0 0
    %862 = vmatpush1.bf16.msra.mxu0 %v850
    %863 = vmatprep.subr.bf16.mxu0 0
    %864 = vmatpush1.bf16.msra.mxu0 0
    %865 = vmatprep.subr.bf16.mxu0 0
    %866 = vmatpush1.bf16.msra.mxu0 0
    %867 = vmatprep.subr.bf16.mxu0 0
    %868 = vmatpush1.bf16.msra.mxu0 0
    %869 = vmatprep.subr.bf16.mxu0 0
    %870 = vmatpush1.bf16.msra.mxu0 0
    %871 = vmatprep.subr.bf16.mxu0 0
    %872 = vmatpush1.bf16.msra.mxu0 0
    %873 = vmatprep.subr.bf16.mxu0 0
    %874 = vmatpush1.bf16.msra.mxu0 0
    %875 = vmatprep.subr.bf16.mxu0 0
    %876 = vmatpush1.bf16.msra.mxu0 0
    %877 = vmatprep.subr.bf16.mxu0 0
    %878 = vmatpush1.bf16.msra.mxu0 0
    %879 = vmatprep.subr.bf16.mxu0 0
    %880 = vmatpush1.bf16.msra.mxu0 0
    %881 = vmatprep.subr.bf16.mxu0 0
    %882 = vmatpush1.bf16.msra.mxu0 0
    %883 = vmatprep.subr.bf16.mxu0 0
    %884 = vmatpush1.bf16.msra.mxu0 0
    %885 = vmatprep.subr.bf16.mxu0 0
    %886 = vmatpush1.bf16.msra.mxu0 0
    %887 = vmatprep.subr.bf16.mxu0 0
    %888 = vmatpush1.bf16.msra.mxu0 0
    %889 = vmatprep.subr.bf16.mxu0 0
    %890 = vmatpush1.bf16.msra.mxu0 0
    %891 = vmatprep.mubr.bf16.mxu0 0
    %892 = vmatmul.mubr.bf16.gmra.mrb[0].mxu0 %v854
    %v893 = vpop.f32.mrb[0].mxu0
    %v894 = vadd.f32 0.0, %v893
    %v895 = vpop.f32.mrb[0].mxu0
    %v896 = vpop.f32.mrb[0].mxu0
    %v897 = vadd.f32 0.0, %v896
    %v898 = vpop.f32.mrb[0].mxu0
    %899 = vmatprep.mubr.bf16.mxu0 0
    %900 = vmatmul.mubr.bf16.gmra.mrb[0].mxu0 %v857
    %v901 = vpop.f32.mrb[0].mxu0
    %v902 = vadd.f32 0.0, %v901
    %v903 = vpop.f32.mrb[0].mxu0
    %v904 = vpop.f32.mrb[0].mxu0
    %v905 = vadd.f32 0.0, %v904
    %v906 = vpop.f32.mrb[0].mxu0
    %907 = vdwg.mxu0
    %908 = vrot.lane.b32.xlu0 %v235, 112
    %v909 = vpop.permute.xlu0 %908
    %910 = vrot.lane.b32.xlu0 %v237, 112
    %v911 = vpop.permute.xlu0 %910
    %v915 = vsel %vm616, %v839, 0
    %v918 = vsel %vm616, %v840, 0
    %920 = vmatprep.subr.bf16.mxu0 0
    %921 = vmatpush1.bf16.msra.mxu0 %v909
    %922 = vmatprep.subr.bf16.mxu0 0
    %923 = vmatpush1.bf16.msra.mxu0 %v911
    %924 = vmatprep.subr.bf16.mxu0 0
    %925 = vmatpush1.bf16.msra.mxu0 0
    %926 = vmatprep.subr.bf16.mxu0 0
    %927 = vmatpush1.bf16.msra.mxu0 0
    %928 = vmatprep.subr.bf16.mxu0 0
    %929 = vmatpush1.bf16.msra.mxu0 0
    %930 = vmatprep.subr.bf16.mxu0 0
    %931 = vmatpush1.bf16.msra.mxu0 0
    %932 = vmatprep.subr.bf16.mxu0 0
    %933 = vmatpush1.bf16.msra.mxu0 0
    %934 = vmatprep.subr.bf16.mxu0 0
    %935 = vmatpush1.bf16.msra.mxu0 0
    %936 = vmatprep.subr.bf16.mxu0 0
    %937 = vmatpush1.bf16.msra.mxu0 0
    %938 = vmatprep.subr.bf16.mxu0 0
    %939 = vmatpush1.bf16.msra.mxu0 0
    %940 = vmatprep.subr.bf16.mxu0 0
    %941 = vmatpush1.bf16.msra.mxu0 0
    %942 = vmatprep.subr.bf16.mxu0 0
    %943 = vmatpush1.bf16.msra.mxu0 0
    %944 = vmatprep.subr.bf16.mxu0 0
    %945 = vmatpush1.bf16.msra.mxu0 0
    %946 = vmatprep.subr.bf16.mxu0 0
    %947 = vmatpush1.bf16.msra.mxu0 0
    %948 = vmatprep.subr.bf16.mxu0 0
    %949 = vmatpush1.bf16.msra.mxu0 0
    %950 = vmatprep.subr.bf16.mxu0 0
    %951 = vmatpush1.bf16.msra.mxu0 0
    %952 = vmatprep.mubr.bf16.mxu0 0
    %953 = vmatmul.mubr.bf16.gmra.mrb[0].mxu0 %v915
    %v954 = vpop.f32.mrb[0].mxu0
    %v955 = vadd.f32 0.0, %v954
    %v956 = vpop.f32.mrb[0].mxu0
    %v957 = vpop.f32.mrb[0].mxu0
    %v958 = vadd.f32 0.0, %v957
    %v959 = vpop.f32.mrb[0].mxu0
    %960 = vmatprep.mubr.bf16.mxu0 0
    %961 = vmatmul.mubr.bf16.gmra.mrb[0].mxu0 %v918
    %v962 = vpop.f32.mrb[0].mxu0
    %v963 = vadd.f32 0.0, %v962
    %v964 = vpop.f32.mrb[0].mxu0
    %v965 = vpop.f32.mrb[0].mxu0
    %v966 = vadd.f32 0.0, %v965
    %v967 = vpop.f32.mrb[0].mxu0
    %968 = vdwg.mxu0
    %969 = vrot.lane.b32.xlu0 %v239, 112
    %v970 = vpop.permute.xlu0 %969
    %971 = vrot.lane.b32.xlu0 %v241, 112
    %v972 = vpop.permute.xlu0 %971
    %v976 = vsel %vm616, %v841, 0
    %v979 = vsel %vm616, %v842, 0
    %981 = vmatprep.subr.bf16.mxu0 0
    %982 = vmatpush1.bf16.msra.mxu0 %v970
    %983 = vmatprep.subr.bf16.mxu0 0
    %984 = vmatpush1.bf16.msra.mxu0 %v972
    %985 = vmatprep.subr.bf16.mxu0 0
    %986 = vmatpush1.bf16.msra.mxu0 0
    %987 = vmatprep.subr.bf16.mxu0 0
    %988 = vmatpush1.bf16.msra.mxu0 0
    %989 = vmatprep.subr.bf16.mxu0 0
    %990 = vmatpush1.bf16.msra.mxu0 0
    %991 = vmatprep.subr.bf16.mxu0 0
    %992 = vmatpush1.bf16.msra.mxu0 0
    %993 = vmatprep.subr.bf16.mxu0 0
    %994 = vmatpush1.bf16.msra.mxu0 0
    %995 = vmatprep.subr.bf16.mxu0 0
    %996 = vmatpush1.bf16.msra.mxu0 0
    %997 = vmatprep.subr.bf16.mxu0 0
    %998 = vmatpush1.bf16.msra.mxu0 0
    %999 = vmatprep.subr.bf16.mxu0 0
    %1000 = vmatpush1.bf16.msra.mxu0 0
    %1001 = vmatprep.subr.bf16.mxu0 0
    %1002 = vmatpush1.bf16.msra.mxu0 0
    %1003 = vmatprep.subr.bf16.mxu0 0
    %1004 = vmatpush1.bf16.msra.mxu0 0
    %1005 = vmatprep.subr.bf16.mxu0 0
    %1006 = vmatpush1.bf16.msra.mxu0 0
    %1007 = vmatprep.subr.bf16.mxu0 0
    %1008 = vmatpush1.bf16.msra.mxu0 0
    %1009 = vmatprep.subr.bf16.mxu0 0
    %1010 = vmatpush1.bf16.msra.mxu0 0
    %1011 = vmatprep.subr.bf16.mxu0 0
    %1012 = vmatpush1.bf16.msra.mxu0 0
    %1013 = vmatprep.mubr.bf16.mxu0 0
    %1014 = vmatmul.mubr.bf16.gmra.mrb[0].mxu0 %v976
    %v1015 = vpop.f32.mrb[0].mxu0
    %v1016 = vadd.f32 0.0, %v1015
    %v1017 = vpop.f32.mrb[0].mxu0
    %v1018 = vpop.f32.mrb[0].mxu0
    %v1019 = vadd.f32 0.0, %v1018
    %v1020 = vpop.f32.mrb[0].mxu0
    %1021 = vmatprep.mubr.bf16.mxu0 0
    %1022 = vmatmul.mubr.bf16.gmra.mrb[0].mxu0 %v979
    %v1023 = vpop.f32.mrb[0].mxu0
    %v1024 = vadd.f32 0.0, %v1023
    %v1025 = vpop.f32.mrb[0].mxu0
    %v1026 = vpop.f32.mrb[0].mxu0
    %v1027 = vadd.f32 0.0, %v1026
    %v1028 = vpop.f32.mrb[0].mxu0
    %1029 = vdwg.mxu0
    %1030 = vrot.lane.b32.xlu0 %v243, 112
    %v1031 = vpop.permute.xlu0 %1030
    %1032 = vrot.lane.b32.xlu0 %v245, 112
    %v1033 = vpop.permute.xlu0 %1032
    %v1037 = vsel %vm616, %v843, 0
    %v1040 = vsel %vm616, %v844, 0
    %1042 = vmatprep.subr.bf16.mxu0 0
    %1043 = vmatpush1.bf16.msra.mxu0 %v1031
    %1044 = vmatprep.subr.bf16.mxu0 0
    %1045 = vmatpush1.bf16.msra.mxu0 %v1033
    %1046 = vmatprep.subr.bf16.mxu0 0
    %1047 = vmatpush1.bf16.msra.mxu0 0
    %1048 = vmatprep.subr.bf16.mxu0 0
    %1049 = vmatpush1.bf16.msra.mxu0 0
    %1050 = vmatprep.subr.bf16.mxu0 0
    %1051 = vmatpush1.bf16.msra.mxu0 0
    %1052 = vmatprep.subr.bf16.mxu0 0
    %1053 = vmatpush1.bf16.msra.mxu0 0
    %1054 = vmatprep.subr.bf16.mxu0 0
    %1055 = vmatpush1.bf16.msra.mxu0 0
    %1056 = vmatprep.subr.bf16.mxu0 0
    %1057 = vmatpush1.bf16.msra.mxu0 0
    %1058 = vmatprep.subr.bf16.mxu0 0
    %1059 = vmatpush1.bf16.msra.mxu0 0
    %1060 = vmatprep.subr.bf16.mxu0 0
    %1061 = vmatpush1.bf16.msra.mxu0 0
    %1062 = vmatprep.subr.bf16.mxu0 0
    %1063 = vmatpush1.bf16.msra.mxu0 0
    %1064 = vmatprep.subr.bf16.mxu0 0
    %1065 = vmatpush1.bf16.msra.mxu0 0
    %1066 = vmatprep.subr.bf16.mxu0 0
    %1067 = vmatpush1.bf16.msra.mxu0 0
    %1068 = vmatprep.subr.bf16.mxu0 0
    %1069 = vmatpush1.bf16.msra.mxu0 0
    %1070 = vmatprep.subr.bf16.mxu0 0
    %1071 = vmatpush1.bf16.msra.mxu0 0
    %1072 = vmatprep.subr.bf16.mxu0 0
    %1073 = vmatpush1.bf16.msra.mxu0 0
    %1074 = vmatprep.mubr.bf16.mxu0 0
    %1075 = vmatmul.mubr.bf16.gmra.mrb[0].mxu0 %v1037
    %v1076 = vpop.f32.mrb[0].mxu0
    %v1077 = vadd.f32 0.0, %v1076
    %v1078 = vpop.f32.mrb[0].mxu0
    %v1079 = vpop.f32.mrb[0].mxu0
    %v1080 = vadd.f32 0.0, %v1079
    %v1081 = vpop.f32.mrb[0].mxu0
    %1082 = vmatprep.mubr.bf16.mxu0 0
    %1083 = vmatmul.mubr.bf16.gmra.mrb[0].mxu0 %v1040
    %v1084 = vpop.f32.mrb[0].mxu0
    %v1085 = vadd.f32 0.0, %v1084
    %v1086 = vpop.f32.mrb[0].mxu0
    %v1087 = vpop.f32.mrb[0].mxu0
    %v1088 = vadd.f32 0.0, %v1087
    %v1089 = vpop.f32.mrb[0].mxu0
    %1090 = vdwg.mxu0
    %1091 = vrot.lane.b32.xlu0 %v247, 112
    %v1092 = vpop.permute.xlu0 %1091
    %1093 = vrot.lane.b32.xlu0 %v249, 112
    %v1094 = vpop.permute.xlu0 %1093
    %v1098 = vsel %vm616, %v845, 0
    %v1101 = vsel %vm616, %v846, 0
    %1103 = vmatprep.subr.bf16.mxu0 0
    %1104 = vmatpush1.bf16.msra.mxu0 %v1092
    %1105 = vmatprep.subr.bf16.mxu0 0
    %1106 = vmatpush1.bf16.msra.mxu0 %v1094
    %1107 = vmatprep.subr.bf16.mxu0 0
    %1108 = vmatpush1.bf16.msra.mxu0 0
    %1109 = vmatprep.subr.bf16.mxu0 0
    %1110 = vmatpush1.bf16.msra.mxu0 0
    %1111 = vmatprep.subr.bf16.mxu0 0
    %1112 = vmatpush1.bf16.msra.mxu0 0
    %1113 = vmatprep.subr.bf16.mxu0 0
    %1114 = vmatpush1.bf16.msra.mxu0 0
    %1115 = vmatprep.subr.bf16.mxu0 0
    %1116 = vmatpush1.bf16.msra.mxu0 0
    %1117 = vmatprep.subr.bf16.mxu0 0
    %1118 = vmatpush1.bf16.msra.mxu0 0
    %1119 = vmatprep.subr.bf16.mxu0 0
    %1120 = vmatpush1.bf16.msra.mxu0 0
    %1121 = vmatprep.subr.bf16.mxu0 0
    %1122 = vmatpush1.bf16.msra.mxu0 0
    %1123 = vmatprep.subr.bf16.mxu0 0
    %1124 = vmatpush1.bf16.msra.mxu0 0
    %1125 = vmatprep.subr.bf16.mxu0 0
    %1126 = vmatpush1.bf16.msra.mxu0 0
    %1127 = vmatprep.subr.bf16.mxu0 0
    %1128 = vmatpush1.bf16.msra.mxu0 0
    %1129 = vmatprep.subr.bf16.mxu0 0
    %1130 = vmatpush1.bf16.msra.mxu0 0
    %1131 = vmatprep.subr.bf16.mxu0 0
    %1132 = vmatpush1.bf16.msra.mxu0 0
    %1133 = vmatprep.subr.bf16.mxu0 0
    %1134 = vmatpush1.bf16.msra.mxu0 0
    %1135 = vmatprep.mubr.bf16.mxu0 0
    %1136 = vmatmul.mubr.bf16.gmra.mrb[0].mxu0 %v1098
    %v1137 = vpop.f32.mrb[0].mxu0
    %v1138 = vadd.f32 0.0, %v1137
    %v1139 = vpop.f32.mrb[0].mxu0
    %v1140 = vpop.f32.mrb[0].mxu0
    %v1141 = vadd.f32 0.0, %v1140
    %v1142 = vpop.f32.mrb[0].mxu0
    %1143 = vmatprep.mubr.bf16.mxu0 0
    %1144 = vmatmul.mubr.bf16.gmra.mrb[0].mxu0 %v1101
    %v1145 = vpop.f32.mrb[0].mxu0
    %v1146 = vadd.f32 0.0, %v1145
    %v1147 = vpop.f32.mrb[0].mxu0
    %v1148 = vpop.f32.mrb[0].mxu0
    %v1149 = vadd.f32 0.0, %v1148
    %v1150 = vpop.f32.mrb[0].mxu0
    %1151 = vdwg.mxu0
    %1156 = vrot.lane.b32.xlu0 %v955, 8
    %v1157 = vpop.permute.xlu0 %1156
    %1158 = vrot.lane.b32.xlu0 %v958, 8
    %v1159 = vpop.permute.xlu0 %1158
    %1160 = vrot.lane.b32.xlu0 %v963, 8
    %v1161 = vpop.permute.xlu0 %1160
    %1162 = vrot.lane.b32.xlu0 %v966, 8
    %v1163 = vpop.permute.xlu0 %1162
    %1172 = vrot.lane.b32.xlu0 %v1016, 16
    %v1173 = vpop.permute.xlu0 %1172
    %1174 = vrot.lane.b32.xlu0 %v1019, 16
    %v1175 = vpop.permute.xlu0 %1174
    %1176 = vrot.lane.b32.xlu0 %v1024, 16
    %v1177 = vpop.permute.xlu0 %1176
    %1178 = vrot.lane.b32.xlu0 %v1027, 16
    %v1179 = vpop.permute.xlu0 %1178
    %1188 = vrot.lane.b32.xlu0 %v1077, 24
    %v1189 = vpop.permute.xlu0 %1188
    %1190 = vrot.lane.b32.xlu0 %v1080, 24
    %v1191 = vpop.permute.xlu0 %1190
    %1192 = vrot.lane.b32.xlu0 %v1085, 24
    %v1193 = vpop.permute.xlu0 %1192
    %1194 = vrot.lane.b32.xlu0 %v1088, 24
    %v1195 = vpop.permute.xlu0 %1194
    %1204 = vrot.lane.b32.xlu0 %v1138, 32
    %v1205 = vpop.permute.xlu0 %1204
    %1206 = vrot.lane.b32.xlu0 %v1141, 32
    %v1207 = vpop.permute.xlu0 %1206
    %1208 = vrot.lane.b32.xlu0 %v1146, 32
    %v1209 = vpop.permute.xlu0 %1208
    %1210 = vrot.lane.b32.xlu0 %v1149, 32
    %v1211 = vpop.permute.xlu0 %1210
    %v1216 = vsel %vm254, %v894, %v1157
    %v1217 = vsel %vm254, %v897, %v1159
    %v1218 = vsel %vm254, %v902, %v1161
    %v1219 = vsel %vm254, %v905, %v1163
    %vm1220 = vcmask 130048
    %v1221 = vsel %vm1220, %v1216, %v1173
    %v1222 = vsel %vm1220, %v1217, %v1175
    %v1223 = vsel %vm1220, %v1218, %v1177
    %v1224 = vsel %vm1220, %v1219, %v1179
    %vm1225 = vcmask 195584
    %v1226 = vsel %vm1225, %v1221, %v1189
    %v1227 = vsel %vm1225, %v1222, %v1191
    %v1228 = vsel %vm1225, %v1223, %v1193
    %v1229 = vsel %vm1225, %v1224, %v1195
    %v1230 = vsel %vm616, %v1226, %v1205
    %v1231 = vsel %vm616, %v1227, %v1207
    %v1232 = vsel %vm616, %v1228, %v1209
    %v1233 = vsel %vm616, %v1229, %v1211
    %v1234 = vpack.c.bf16 %v1231, %v1230
    %v1235 = vpack.c.bf16 %v1233, %v1232
    %v1236 = vld [vmem:[%s4] sm:$0xf]
    %v1237 = vld [vmem:[%s4 + $0x4] sm:$0xf]
    %v1238 = vld [vmem:[%s4 + $0x8] sm:$0xf]
    %v1239 = vld [vmem:[%s4 + $0xc] sm:$0xf]
    %v1240 = vld [vmem:[%s4 + $0x10] sm:$0xf]
    %v1241 = vld [vmem:[%s5] sm:$0x1]
    %v1243 = vlaneseq
    %v1244 = vshrl.u32 %v1243, 7
    %v1245 = vsub.s32 0, %v1244
    %v1246 = vrot.slane %v1241, %v1245
    %v1253 = vunpack.c.l.b16 %v1236
    %v1254 = vunpack.c.l.b16 %v1237
    %v1255 = vunpack.c.l.b16 %v1238
    %v1256 = vunpack.c.l.b16 %v1239
    %v1257 = vunpack.c.l.b16 %v1240
    %v1258 = vpack.c.b16 %v1254, %v1253
    %v1259 = vpack.c.b16 %v1256, %v1255
    %v1260 = vpack.c.b16 %v1257, %v1257
    %v1264 = vsel %vm68, %v1234, 0
    %v1267 = vsel %vm68, %v1235, 0
    %v1270 = vsel %vm177, %v1260, 0
    %1272 = vmatprep.subr.bf16.mxu0 0
    %1273 = vmatpush1.bf16.msra.mxu0 %v1258
    %1274 = vmatprep.subr.bf16.mxu0 0
    %1275 = vmatpush1.bf16.msra.mxu0 %v1259
    %1276 = vmatprep.subr.bf16.mxu0 0
    %1277 = vmatpush1.bf16.msra.mxu0 %v1270
    %1278 = vmatprep.subr.bf16.mxu0 0
    %1279 = vmatpush1.bf16.msra.mxu0 0
    %1280 = vmatprep.subr.bf16.mxu0 0
    %1281 = vmatpush1.bf16.msra.mxu0 0
    %1282 = vmatprep.subr.bf16.mxu0 0
    %1283 = vmatpush1.bf16.msra.mxu0 0
    %1284 = vmatprep.subr.bf16.mxu0 0
    %1285 = vmatpush1.bf16.msra.mxu0 0
    %1286 = vmatprep.subr.bf16.mxu0 0
    %1287 = vmatpush1.bf16.msra.mxu0 0
    %1288 = vmatprep.subr.bf16.mxu0 0
    %1289 = vmatpush1.bf16.msra.mxu0 0
    %1290 = vmatprep.subr.bf16.mxu0 0
    %1291 = vmatpush1.bf16.msra.mxu0 0
    %1292 = vmatprep.subr.bf16.mxu0 0
    %1293 = vmatpush1.bf16.msra.mxu0 0
    %1294 = vmatprep.subr.bf16.mxu0 0
    %1295 = vmatpush1.bf16.msra.mxu0 0
    %1296 = vmatprep.subr.bf16.mxu0 0
    %1297 = vmatpush1.bf16.msra.mxu0 0
    %1298 = vmatprep.subr.bf16.mxu0 0
    %1299 = vmatpush1.bf16.msra.mxu0 0
    %1300 = vmatprep.subr.bf16.mxu0 0
    %1301 = vmatpush1.bf16.msra.mxu0 0
    %1302 = vmatprep.subr.bf16.mxu0 0
    %1303 = vmatpush1.bf16.msra.mxu0 0
    %1304 = vmatprep.mubr.bf16.mxu0 0
    %1305 = vmatmul.mubr.bf16.gmra.mrb[0].mxu0 %v1264
    %v1306 = vpop.f32.mrb[0].mxu0
    %v1307 = vadd.f32 %v1246, %v1306
    %v1308 = vpop.f32.mrb[0].mxu0
    %v1309 = vpop.f32.mrb[0].mxu0
    %v1310 = vadd.f32 %v1246, %v1309
    %v1311 = vpop.f32.mrb[0].mxu0
    %1312 = vmatprep.mubr.bf16.mxu0 0
    %1313 = vmatmul.mubr.bf16.gmra.mrb[0].mxu0 %v1267
    %v1314 = vpop.f32.mrb[0].mxu0
    %v1315 = vadd.f32 %v1246, %v1314
    %v1316 = vpop.f32.mrb[0].mxu0
    %v1317 = vpop.f32.mrb[0].mxu0
    %v1318 = vadd.f32 %v1246, %v1317
    %v1319 = vpop.f32.mrb[0].mxu0
    %1320 = vdwg.mxu0
    %v1321 = vadd.f32 %v58, %v1307
    %v1322 = vadd.f32 %v59, %v1310
    %v1323 = vadd.f32 %v60, %v1315
    %v1324 = vadd.f32 %v61, %v1318
    %v1325 = vld [vmem:[%s8] sm:$0x1]
    %v1326 = vld [vmem:[%s9] sm:$0x1]
    %v1327 = vsel %vm68, %v1321, 0.0
    %1328 = vadd.xlane.f32.xlu0 %v1327
    %v1329 = vpop.xlane.xlu0 %1328
    %v1330 = vsel %vm68, %v1322, 0.0
    %1331 = vadd.xlane.f32.xlu0 %v1330
    %v1332 = vpop.xlane.xlu0 %1331
    %v1333 = vsel %vm68, %v1323, 0.0
    %1334 = vadd.xlane.f32.xlu0 %v1333
    %v1335 = vpop.xlane.xlu0 %1334
    %v1336 = vsel %vm68, %v1324, 0.0
    %1337 = vadd.xlane.f32.xlu0 %v1336
    %v1338 = vpop.xlane.xlu0 %1337
    %v1339 = vmul.f32 %v1329, %v81
    %v1340 = vmul.f32 %v1332, %v81
    %v1341 = vmul.f32 %v1335, %v81
    %v1342 = vmul.f32 %v1338, %v81
    %v1343 = vsub.f32 %v1321, %v1339
    %v1344 = vsub.f32 %v1322, %v1340
    %v1345 = vsub.f32 %v1323, %v1341
    %v1346 = vsub.f32 %v1324, %v1342
    %v1347 = vmul.f32 %v1343, %v1343
    %v1348 = vmul.f32 %v1344, %v1344
    %v1349 = vmul.f32 %v1345, %v1345
    %v1350 = vmul.f32 %v1346, %v1346
    %v1351 = vsel %vm68, %v1347, 0.0
    %1352 = vadd.xlane.f32.xlu0 %v1351
    %v1353 = vpop.xlane.xlu0 %1352
    %v1354 = vsel %vm68, %v1348, 0.0
    %1355 = vadd.xlane.f32.xlu0 %v1354
    %v1356 = vpop.xlane.xlu0 %1355
    %v1357 = vsel %vm68, %v1349, 0.0
    %1358 = vadd.xlane.f32.xlu0 %v1357
    %v1359 = vpop.xlane.xlu0 %1358
    %v1360 = vsel %vm68, %v1350, 0.0
    %1361 = vadd.xlane.f32.xlu0 %v1360
    %v1362 = vpop.xlane.xlu0 %1361
    %v1363 = vmul.f32 %v1353, %v81
    %v1364 = vmul.f32 %v1356, %v81
    %v1365 = vmul.f32 %v1359, %v81
    %v1366 = vmul.f32 %v1362, %v81
    %v1367 = vadd.f32 %v1363, 1e-05
    %v1368 = vadd.f32 %v1364, 1e-05
    %v1369 = vadd.f32 %v1365, 1e-05
    %v1370 = vadd.f32 %v1366, 1e-05
    %v1371 = vrsqrt.pop %v1367
    %v1372 = vrsqrt.pop %v1368
    %v1373 = vrsqrt.pop %v1369
    %v1374 = vrsqrt.pop %v1370
    %v1375 = vmul.f32 %v1343, %v1371
    %v1376 = vmul.f32 %v1344, %v1372
    %v1377 = vmul.f32 %v1345, %v1373
    %v1378 = vmul.f32 %v1346, %v1374
    %v1380 = vlaneseq
    %v1381 = vshrl.u32 %v1380, 7
    %v1382 = vsub.s32 0, %v1381
    %v1383 = vrot.slane %v1325, %v1382
    %v1385 = vmul.f32 %v1375, %v1383
    %v1386 = vmul.f32 %v1376, %v1383
    %v1387 = vmul.f32 %v1377, %v1383
    %v1388 = vmul.f32 %v1378, %v1383
    %v1390 = vlaneseq
    %v1391 = vshrl.u32 %v1390, 7
    %v1392 = vsub.s32 0, %v1391
    %v1393 = vrot.slane %v1326, %v1392
    %v1395 = vadd.f32 %v1385, %v1393
    %v1396 = vadd.f32 %v1386, %v1393
    %v1397 = vadd.f32 %v1387, %v1393
    %v1398 = vadd.f32 %v1388, %v1393
    %v1399 = vpack.c.bf16 %v1396, %v1395
    %v1400 = vpack.c.bf16 %v1398, %v1397
    %v1401 = vld [vmem:[%s10] sm:$0xff]
    %v1402 = vld [vmem:[%s10 + $0x8] sm:$0xff]
    %v1403 = vld [vmem:[%s10 + $0x10] sm:$0xff]
    %v1404 = vld [vmem:[%s10 + $0x18] sm:$0xff]
    %v1405 = vld [vmem:[%s10 + $0x20] sm:$0xff]
    %v1406 = vld [vmem:[%s10 + $0x28] sm:$0xff]
    %v1407 = vld [vmem:[%s10 + $0x30] sm:$0xff]
    %v1408 = vld [vmem:[%s10 + $0x38] sm:$0xff]
    %v1409 = vld [vmem:[%s10 + $0x40] sm:$0xff]
    %v1410 = vld [vmem:[%s10 + $0x48] sm:$0xff]
    %v1411 = vld [vmem:[%s10 + $0x50] sm:$0xff]
    %v1412 = vld [vmem:[%s10 + $0x58] sm:$0xff]
    %v1413 = vld [vmem:[%s10 + $0x60] sm:$0xff]
    %v1414 = vld [vmem:[%s10 + $0x68] sm:$0xff]
    %v1415 = vld [vmem:[%s10 + $0x70] sm:$0xff]
    %v1416 = vld [vmem:[%s10 + $0x78] sm:$0xff]
    %v1417 = vld [vmem:[%s10 + $0x80] sm:$0xff]
    %v1418 = vld [vmem:[%s10 + $0x88] sm:$0xff]
    %v1419 = vld [vmem:[%s10 + $0x90] sm:$0xff]
    %v1420 = vld [vmem:[%s10 + $0x98] sm:$0xff]
    %v1421 = vld [vmem:[%s10 + $0xa0] sm:$0xff]
    %v1422 = vld [vmem:[%s10 + $0xa8] sm:$0xff]
    %v1423 = vld [vmem:[%s10 + $0xb0] sm:$0xff]
    %v1424 = vld [vmem:[%s10 + $0xb8] sm:$0xff]
    %v1425 = vld [vmem:[%s10 + $0xc0] sm:$0xff]
    %v1426 = vld [vmem:[%s10 + $0xc8] sm:$0xff]
    %v1427 = vld [vmem:[%s10 + $0xd0] sm:$0xff]
    %v1428 = vld [vmem:[%s10 + $0xd8] sm:$0xff]
    %v1429 = vld [vmem:[%s10 + $0xe0] sm:$0xff]
    %v1430 = vld [vmem:[%s10 + $0xe8] sm:$0xff]
    %v1431 = vld [vmem:[%s10 + $0xf0] sm:$0xff]
    %v1432 = vld [vmem:[%s10 + $0xf8] sm:$0xff]
    %v1433 = vld [vmem:[%s10 + $0x100] sm:$0xff]
    %v1434 = vld [vmem:[%s10 + $0x108] sm:$0xff]
    %v1435 = vld [vmem:[%s10 + $0x110] sm:$0xff]
    %v1436 = vld [vmem:[%s10 + $0x118] sm:$0xff]
    %v1437 = vld [vmem:[%s10 + $0x120] sm:$0xff]
    %v1438 = vld [vmem:[%s10 + $0x128] sm:$0xff]
    %v1439 = vld [vmem:[%s10 + $0x130] sm:$0xff]
    %v1440 = vld [vmem:[%s10 + $0x138] sm:$0xff]
    %v1441 = vld [vmem:[%s11] sm:$0xff]
    %v1442 = vld [vmem:[%s11 + $0x8] sm:$0xff]
    %v1445 = vlaneseq
    %v1446 = vshrl.u32 %v1445, 7
    %v1447 = vsub.s32 0, %v1446
    %v1448 = vrot.slane %v1441, %v1447
    %v1449 = vlaneseq
    %v1450 = vshrl.u32 %v1449, 7
    %v1451 = vsub.s32 1, %v1450
    %v1452 = vrot.slane %v1441, %v1451
    %v1453 = vlaneseq
    %v1454 = vshrl.u32 %v1453, 7
    %v1455 = vsub.s32 2, %v1454
    %v1456 = vrot.slane %v1441, %v1455
    %v1457 = vlaneseq
    %v1458 = vshrl.u32 %v1457, 7
    %v1459 = vsub.s32 3, %v1458
    %v1460 = vrot.slane %v1441, %v1459
    %v1461 = vlaneseq
    %v1462 = vshrl.u32 %v1461, 7
    %v1463 = vsub.s32 4, %v1462
    %v1464 = vrot.slane %v1441, %v1463
    %v1465 = vlaneseq
    %v1466 = vshrl.u32 %v1465, 7
    %v1467 = vsub.s32 5, %v1466
    %v1468 = vrot.slane %v1441, %v1467
    %v1469 = vlaneseq
    %v1470 = vshrl.u32 %v1469, 7
    %v1471 = vsub.s32 6, %v1470
    %v1472 = vrot.slane %v1441, %v1471
    %v1473 = vlaneseq
    %v1474 = vshrl.u32 %v1473, 7
    %v1475 = vsub.s32 7, %v1474
    %v1476 = vrot.slane %v1441, %v1475
    %v1477 = vlaneseq
    %v1478 = vshrl.u32 %v1477, 7
    %v1479 = vsub.s32 0, %v1478
    %v1480 = vrot.slane %v1442, %v1479
    %v1481 = vlaneseq
    %v1482 = vshrl.u32 %v1481, 7
    %v1483 = vsub.s32 1, %v1482
    %v1484 = vrot.slane %v1442, %v1483
    %v1485 = vlaneseq
    %v1486 = vshrl.u32 %v1485, 7
    %v1487 = vsub.s32 2, %v1486
    %v1488 = vrot.slane %v1442, %v1487
    %v1489 = vlaneseq
    %v1490 = vshrl.u32 %v1489, 7
    %v1491 = vsub.s32 3, %v1490
    %v1492 = vrot.slane %v1442, %v1491
    %v1493 = vlaneseq
    %v1494 = vshrl.u32 %v1493, 7
    %v1495 = vsub.s32 4, %v1494
    %v1496 = vrot.slane %v1442, %v1495
    %v1497 = vlaneseq
    %v1498 = vshrl.u32 %v1497, 7
    %v1499 = vsub.s32 5, %v1498
    %v1500 = vrot.slane %v1442, %v1499
    %v1501 = vlaneseq
    %v1502 = vshrl.u32 %v1501, 7
    %v1503 = vsub.s32 6, %v1502
    %v1504 = vrot.slane %v1442, %v1503
    %v1505 = vlaneseq
    %v1506 = vshrl.u32 %v1505, 7
    %v1507 = vsub.s32 7, %v1506
    %v1508 = vrot.slane %v1442, %v1507
    %v1565 = vunpack.c.l.b16 %v1401
    %v1566 = vunpack.c.h.b16 %v1401
    %v1567 = vunpack.c.l.b16 %v1402
    %v1568 = vunpack.c.h.b16 %v1402
    %v1569 = vunpack.c.l.b16 %v1403
    %v1570 = vunpack.c.h.b16 %v1403
    %v1571 = vunpack.c.l.b16 %v1404
    %v1572 = vunpack.c.h.b16 %v1404
    %v1573 = vunpack.c.l.b16 %v1405
    %v1574 = vunpack.c.h.b16 %v1405
    %v1575 = vunpack.c.l.b16 %v1406
    %v1576 = vunpack.c.h.b16 %v1406
    %v1577 = vunpack.c.l.b16 %v1407
    %v1578 = vunpack.c.h.b16 %v1407
    %v1579 = vunpack.c.l.b16 %v1408
    %v1580 = vunpack.c.h.b16 %v1408
    %v1581 = vunpack.c.l.b16 %v1409
    %v1582 = vunpack.c.h.b16 %v1409
    %v1583 = vunpack.c.l.b16 %v1410
    %v1584 = vunpack.c.h.b16 %v1410
    %v1585 = vunpack.c.l.b16 %v1411
    %v1586 = vunpack.c.h.b16 %v1411
    %v1587 = vunpack.c.l.b16 %v1412
    %v1588 = vunpack.c.h.b16 %v1412
    %v1589 = vunpack.c.l.b16 %v1413
    %v1590 = vunpack.c.h.b16 %v1413
    %v1591 = vunpack.c.l.b16 %v1414
    %v1592 = vunpack.c.h.b16 %v1414
    %v1593 = vunpack.c.l.b16 %v1415
    %v1594 = vunpack.c.h.b16 %v1415
    %v1595 = vunpack.c.l.b16 %v1416
    %v1596 = vunpack.c.h.b16 %v1416
    %v1597 = vunpack.c.l.b16 %v1417
    %v1598 = vunpack.c.h.b16 %v1417
    %v1599 = vunpack.c.l.b16 %v1418
    %v1600 = vunpack.c.h.b16 %v1418
    %v1601 = vunpack.c.l.b16 %v1419
    %v1602 = vunpack.c.h.b16 %v1419
    %v1603 = vunpack.c.l.b16 %v1420
    %v1604 = vunpack.c.h.b16 %v1420
    %v1605 = vunpack.c.l.b16 %v1421
    %v1606 = vunpack.c.h.b16 %v1421
    %v1607 = vunpack.c.l.b16 %v1422
    %v1608 = vunpack.c.h.b16 %v1422
    %v1609 = vunpack.c.l.b16 %v1423
    %v1610 = vunpack.c.h.b16 %v1423
    %v1611 = vunpack.c.l.b16 %v1424
    %v1612 = vunpack.c.h.b16 %v1424
    %v1613 = vunpack.c.l.b16 %v1425
    %v1614 = vunpack.c.h.b16 %v1425
    %v1615 = vunpack.c.l.b16 %v1426
    %v1616 = vunpack.c.h.b16 %v1426
    %v1617 = vunpack.c.l.b16 %v1427
    %v1618 = vunpack.c.h.b16 %v1427
    %v1619 = vunpack.c.l.b16 %v1428
    %v1620 = vunpack.c.h.b16 %v1428
    %v1621 = vunpack.c.l.b16 %v1429
    %v1622 = vunpack.c.h.b16 %v1429
    %v1623 = vunpack.c.l.b16 %v1430
    %v1624 = vunpack.c.h.b16 %v1430
    %v1625 = vunpack.c.l.b16 %v1431
    %v1626 = vunpack.c.h.b16 %v1431
    %v1627 = vunpack.c.l.b16 %v1432
    %v1628 = vunpack.c.h.b16 %v1432
    %v1629 = vunpack.c.l.b16 %v1433
    %v1630 = vunpack.c.h.b16 %v1433
    %v1631 = vunpack.c.l.b16 %v1434
    %v1632 = vunpack.c.h.b16 %v1434
    %v1633 = vunpack.c.l.b16 %v1435
    %v1634 = vunpack.c.h.b16 %v1435
    %v1635 = vunpack.c.l.b16 %v1436
    %v1636 = vunpack.c.h.b16 %v1436
    %v1637 = vunpack.c.l.b16 %v1437
    %v1638 = vunpack.c.h.b16 %v1437
    %v1639 = vunpack.c.l.b16 %v1438
    %v1640 = vunpack.c.h.b16 %v1438
    %v1641 = vunpack.c.l.b16 %v1439
    %v1642 = vunpack.c.h.b16 %v1439
    %v1643 = vunpack.c.l.b16 %v1440
    %v1644 = vunpack.c.h.b16 %v1440
    %v1645 = vpack.c.b16 %v1581, %v1565
    %v1646 = vpack.c.b16 %v1582, %v1566
    %v1647 = vpack.c.b16 %v1583, %v1567
    %v1648 = vpack.c.b16 %v1584, %v1568
    %v1649 = vpack.c.b16 %v1585, %v1569
    %v1650 = vpack.c.b16 %v1586, %v1570
    %v1651 = vpack.c.b16 %v1587, %v1571
    %v1652 = vpack.c.b16 %v1588, %v1572
    %v1653 = vpack.c.b16 %v1589, %v1573
    %v1654 = vpack.c.b16 %v1590, %v1574
    %v1655 = vpack.c.b16 %v1591, %v1575
    %v1656 = vpack.c.b16 %v1592, %v1576
    %v1657 = vpack.c.b16 %v1593, %v1577
    %v1658 = vpack.c.b16 %v1594, %v1578
    %v1659 = vpack.c.b16 %v1595, %v1579
    %v1660 = vpack.c.b16 %v1596, %v1580
    %v1661 = vpack.c.b16 %v1613, %v1597
    %v1662 = vpack.c.b16 %v1614, %v1598
    %v1663 = vpack.c.b16 %v1615, %v1599
    %v1664 = vpack.c.b16 %v1616, %v1600
    %v1665 = vpack.c.b16 %v1617, %v1601
    %v1666 = vpack.c.b16 %v1618, %v1602
    %v1667 = vpack.c.b16 %v1619, %v1603
    %v1668 = vpack.c.b16 %v1620, %v1604
    %v1669 = vpack.c.b16 %v1621, %v1605
    %v1670 = vpack.c.b16 %v1622, %v1606
    %v1671 = vpack.c.b16 %v1623, %v1607
    %v1672 = vpack.c.b16 %v1624, %v1608
    %v1673 = vpack.c.b16 %v1625, %v1609
    %v1674 = vpack.c.b16 %v1626, %v1610
    %v1675 = vpack.c.b16 %v1627, %v1611
    %v1676 = vpack.c.b16 %v1628, %v1612
    %v1677 = vpack.c.b16 %v1629, %v1629
    %v1678 = vpack.c.b16 %v1630, %v1630
    %v1679 = vpack.c.b16 %v1631, %v1631
    %v1680 = vpack.c.b16 %v1632, %v1632
    %v1681 = vpack.c.b16 %v1633, %v1633
    %v1682 = vpack.c.b16 %v1634, %v1634
    %v1683 = vpack.c.b16 %v1635, %v1635
    %v1684 = vpack.c.b16 %v1636, %v1636
    %v1685 = vpack.c.b16 %v1637, %v1637
    %v1686 = vpack.c.b16 %v1638, %v1638
    %v1687 = vpack.c.b16 %v1639, %v1639
    %v1688 = vpack.c.b16 %v1640, %v1640
    %v1689 = vpack.c.b16 %v1641, %v1641
    %v1690 = vpack.c.b16 %v1642, %v1642
    %v1691 = vpack.c.b16 %v1643, %v1643
    %v1692 = vpack.c.b16 %v1644, %v1644
    %v1726 = vsel %vm68, %v1399, 0
    %v1729 = vsel %vm68, %v1400, 0
    %v1732 = vsel %vm177, %v1677, 0
    %v1735 = vsel %vm177, %v1678, 0
    %v1738 = vsel %vm177, %v1679, 0
    %v1741 = vsel %vm177, %v1680, 0
    %v1744 = vsel %vm177, %v1681, 0
    %v1747 = vsel %vm177, %v1682, 0
    %v1750 = vsel %vm177, %v1683, 0
    %v1753 = vsel %vm177, %v1684, 0
    %v1756 = vsel %vm177, %v1685, 0
    %v1759 = vsel %vm177, %v1686, 0
    %v1762 = vsel %vm177, %v1687, 0
    %v1765 = vsel %vm177, %v1688, 0
    %v1768 = vsel %vm177, %v1689, 0
    %v1771 = vsel %vm177, %v1690, 0
    %v1774 = vsel %vm177, %v1691, 0
    %v1777 = vsel %vm177, %v1692, 0
    %1779 = vmatprep.subr.bf16.mxu0 %v1646
    %1780 = vmatpush1.bf16.msra.mxu0 %v1645
    %1781 = vmatprep.subr.bf16.mxu0 %v1662
    %1782 = vmatpush1.bf16.msra.mxu0 %v1661
    %1783 = vmatprep.subr.bf16.mxu0 %v1735
    %1784 = vmatpush1.bf16.msra.mxu0 %v1732
    %1785 = vmatprep.subr.bf16.mxu0 0
    %1786 = vmatpush1.bf16.msra.mxu0 0
    %1787 = vmatprep.subr.bf16.mxu0 0
    %1788 = vmatpush1.bf16.msra.mxu0 0
    %1789 = vmatprep.subr.bf16.mxu0 0
    %1790 = vmatpush1.bf16.msra.mxu0 0
    %1791 = vmatprep.subr.bf16.mxu0 0
    %1792 = vmatpush1.bf16.msra.mxu0 0
    %1793 = vmatprep.subr.bf16.mxu0 0
    %1794 = vmatpush1.bf16.msra.mxu0 0
    %1795 = vmatprep.subr.bf16.mxu0 0
    %1796 = vmatpush1.bf16.msra.mxu0 0
    %1797 = vmatprep.subr.bf16.mxu0 0
    %1798 = vmatpush1.bf16.msra.mxu0 0
    %1799 = vmatprep.subr.bf16.mxu0 0
    %1800 = vmatpush1.bf16.msra.mxu0 0
    %1801 = vmatprep.subr.bf16.mxu0 0
    %1802 = vmatpush1.bf16.msra.mxu0 0
    %1803 = vmatprep.subr.bf16.mxu0 0
    %1804 = vmatpush1.bf16.msra.mxu0 0
    %1805 = vmatprep.subr.bf16.mxu0 0
    %1806 = vmatpush1.bf16.msra.mxu0 0
    %1807 = vmatprep.subr.bf16.mxu0 0
    %1808 = vmatpush1.bf16.msra.mxu0 0
    %1809 = vmatprep.subr.bf16.mxu0 0
    %1810 = vmatpush1.bf16.msra.mxu0 0
    %1811 = vmatprep.mubr.bf16.mxu0 0
    %1812 = vmatmul.mubr.bf16.gmra.mrb[0].mxu0 %v1726
    %v1813 = vpop.f32.mrb[0].mxu0
    %v1814 = vadd.f32 %v1448, %v1813
    %v1815 = vpop.f32.mrb[0].mxu0
    %v1816 = vadd.f32 %v1452, %v1815
    %v1817 = vpop.f32.mrb[0].mxu0
    %v1818 = vadd.f32 %v1448, %v1817
    %v1819 = vpop.f32.mrb[0].mxu0
    %v1820 = vadd.f32 %v1452, %v1819
    %1821 = vmatprep.mubr.bf16.mxu0 0
    %1822 = vmatmul.mubr.bf16.gmra.mrb[0].mxu0 %v1729
    %v1823 = vpop.f32.mrb[0].mxu0
    %v1824 = vadd.f32 %v1448, %v1823
    %v1825 = vpop.f32.mrb[0].mxu0
    %v1826 = vadd.f32 %v1452, %v1825
    %v1827 = vpop.f32.mrb[0].mxu0
    %v1828 = vadd.f32 %v1448, %v1827
    %v1829 = vpop.f32.mrb[0].mxu0
    %v1830 = vadd.f32 %v1452, %v1829
    %1831 = vdwg.mxu0
    %1832 = vmatprep.subr.bf16.mxu0 %v1648
    %1833 = vmatpush1.bf16.msra.mxu0 %v1647
    %1834 = vmatprep.subr.bf16.mxu0 %v1664
    %1835 = vmatpush1.bf16.msra.mxu0 %v1663
    %1836 = vmatprep.subr.bf16.mxu0 %v1741
    %1837 = vmatpush1.bf16.msra.mxu0 %v1738
    %1838 = vmatprep.subr.bf16.mxu0 0
    %1839 = vmatpush1.bf16.msra.mxu0 0
    %1840 = vmatprep.subr.bf16.mxu0 0
    %1841 = vmatpush1.bf16.msra.mxu0 0
    %1842 = vmatprep.subr.bf16.mxu0 0
    %1843 = vmatpush1.bf16.msra.mxu0 0
    %1844 = vmatprep.subr.bf16.mxu0 0
    %1845 = vmatpush1.bf16.msra.mxu0 0
    %1846 = vmatprep.subr.bf16.mxu0 0
    %1847 = vmatpush1.bf16.msra.mxu0 0
    %1848 = vmatprep.subr.bf16.mxu0 0
    %1849 = vmatpush1.bf16.msra.mxu0 0
    %1850 = vmatprep.subr.bf16.mxu0 0
    %1851 = vmatpush1.bf16.msra.mxu0 0
    %1852 = vmatprep.subr.bf16.mxu0 0
    %1853 = vmatpush1.bf16.msra.mxu0 0
    %1854 = vmatprep.subr.bf16.mxu0 0
    %1855 = vmatpush1.bf16.msra.mxu0 0
    %1856 = vmatprep.subr.bf16.mxu0 0
    %1857 = vmatpush1.bf16.msra.mxu0 0
    %1858 = vmatprep.subr.bf16.mxu0 0
    %1859 = vmatpush1.bf16.msra.mxu0 0
    %1860 = vmatprep.subr.bf16.mxu0 0
    %1861 = vmatpush1.bf16.msra.mxu0 0
    %1862 = vmatprep.subr.bf16.mxu0 0
    %1863 = vmatpush1.bf16.msra.mxu0 0
    %1864 = vmatprep.mubr.bf16.mxu0 0
    %1865 = vmatmul.mubr.bf16.gmra.mrb[0].mxu0 %v1726
    %v1866 = vpop.f32.mrb[0].mxu0
    %v1867 = vadd.f32 %v1456, %v1866
    %v1868 = vpop.f32.mrb[0].mxu0
    %v1869 = vadd.f32 %v1460, %v1868
    %v1870 = vpop.f32.mrb[0].mxu0
    %v1871 = vadd.f32 %v1456, %v1870
    %v1872 = vpop.f32.mrb[0].mxu0
    %v1873 = vadd.f32 %v1460, %v1872
    %1874 = vmatprep.mubr.bf16.mxu0 0
    %1875 = vmatmul.mubr.bf16.gmra.mrb[0].mxu0 %v1729
    %v1876 = vpop.f32.mrb[0].mxu0
    %v1877 = vadd.f32 %v1456, %v1876
    %v1878 = vpop.f32.mrb[0].mxu0
    %v1879 = vadd.f32 %v1460, %v1878
    %v1880 = vpop.f32.mrb[0].mxu0
    %v1881 = vadd.f32 %v1456, %v1880
    %v1882 = vpop.f32.mrb[0].mxu0
    %v1883 = vadd.f32 %v1460, %v1882
    %1884 = vdwg.mxu0
    %1885 = vmatprep.subr.bf16.mxu0 %v1650
    %1886 = vmatpush1.bf16.msra.mxu0 %v1649
    %1887 = vmatprep.subr.bf16.mxu0 %v1666
    %1888 = vmatpush1.bf16.msra.mxu0 %v1665
    %1889 = vmatprep.subr.bf16.mxu0 %v1747
    %1890 = vmatpush1.bf16.msra.mxu0 %v1744
    %1891 = vmatprep.subr.bf16.mxu0 0
    %1892 = vmatpush1.bf16.msra.mxu0 0
    %1893 = vmatprep.subr.bf16.mxu0 0
    %1894 = vmatpush1.bf16.msra.mxu0 0
    %1895 = vmatprep.subr.bf16.mxu0 0
    %1896 = vmatpush1.bf16.msra.mxu0 0
    %1897 = vmatprep.subr.bf16.mxu0 0
    %1898 = vmatpush1.bf16.msra.mxu0 0
    %1899 = vmatprep.subr.bf16.mxu0 0
    %1900 = vmatpush1.bf16.msra.mxu0 0
    %1901 = vmatprep.subr.bf16.mxu0 0
    %1902 = vmatpush1.bf16.msra.mxu0 0
    %1903 = vmatprep.subr.bf16.mxu0 0
    %1904 = vmatpush1.bf16.msra.mxu0 0
    %1905 = vmatprep.subr.bf16.mxu0 0
    %1906 = vmatpush1.bf16.msra.mxu0 0
    %1907 = vmatprep.subr.bf16.mxu0 0
    %1908 = vmatpush1.bf16.msra.mxu0 0
    %1909 = vmatprep.subr.bf16.mxu0 0
    %1910 = vmatpush1.bf16.msra.mxu0 0
    %1911 = vmatprep.subr.bf16.mxu0 0
    %1912 = vmatpush1.bf16.msra.mxu0 0
    %1913 = vmatprep.subr.bf16.mxu0 0
    %1914 = vmatpush1.bf16.msra.mxu0 0
    %1915 = vmatprep.subr.bf16.mxu0 0
    %1916 = vmatpush1.bf16.msra.mxu0 0
    %1917 = vmatprep.mubr.bf16.mxu0 0
    %1918 = vmatmul.mubr.bf16.gmra.mrb[0].mxu0 %v1726
    %v1919 = vpop.f32.mrb[0].mxu0
    %v1920 = vadd.f32 %v1464, %v1919
    %v1921 = vpop.f32.mrb[0].mxu0
    %v1922 = vadd.f32 %v1468, %v1921
    %v1923 = vpop.f32.mrb[0].mxu0
    %v1924 = vadd.f32 %v1464, %v1923
    %v1925 = vpop.f32.mrb[0].mxu0
    %v1926 = vadd.f32 %v1468, %v1925
    %1927 = vmatprep.mubr.bf16.mxu0 0
    %1928 = vmatmul.mubr.bf16.gmra.mrb[0].mxu0 %v1729
    %v1929 = vpop.f32.mrb[0].mxu0
    %v1930 = vadd.f32 %v1464, %v1929
    %v1931 = vpop.f32.mrb[0].mxu0
    %v1932 = vadd.f32 %v1468, %v1931
    %v1933 = vpop.f32.mrb[0].mxu0
    %v1934 = vadd.f32 %v1464, %v1933
    %v1935 = vpop.f32.mrb[0].mxu0
    %v1936 = vadd.f32 %v1468, %v1935
    %1937 = vdwg.mxu0
    %1938 = vmatprep.subr.bf16.mxu0 %v1652
    %1939 = vmatpush1.bf16.msra.mxu0 %v1651
    %1940 = vmatprep.subr.bf16.mxu0 %v1668
    %1941 = vmatpush1.bf16.msra.mxu0 %v1667
    %1942 = vmatprep.subr.bf16.mxu0 %v1753
    %1943 = vmatpush1.bf16.msra.mxu0 %v1750
    %1944 = vmatprep.subr.bf16.mxu0 0
    %1945 = vmatpush1.bf16.msra.mxu0 0
    %1946 = vmatprep.subr.bf16.mxu0 0
    %1947 = vmatpush1.bf16.msra.mxu0 0
    %1948 = vmatprep.subr.bf16.mxu0 0
    %1949 = vmatpush1.bf16.msra.mxu0 0
    %1950 = vmatprep.subr.bf16.mxu0 0
    %1951 = vmatpush1.bf16.msra.mxu0 0
    %1952 = vmatprep.subr.bf16.mxu0 0
    %1953 = vmatpush1.bf16.msra.mxu0 0
    %1954 = vmatprep.subr.bf16.mxu0 0
    %1955 = vmatpush1.bf16.msra.mxu0 0
    %1956 = vmatprep.subr.bf16.mxu0 0
    %1957 = vmatpush1.bf16.msra.mxu0 0
    %1958 = vmatprep.subr.bf16.mxu0 0
    %1959 = vmatpush1.bf16.msra.mxu0 0
    %1960 = vmatprep.subr.bf16.mxu0 0
    %1961 = vmatpush1.bf16.msra.mxu0 0
    %1962 = vmatprep.subr.bf16.mxu0 0
    %1963 = vmatpush1.bf16.msra.mxu0 0
    %1964 = vmatprep.subr.bf16.mxu0 0
    %1965 = vmatpush1.bf16.msra.mxu0 0
    %1966 = vmatprep.subr.bf16.mxu0 0
    %1967 = vmatpush1.bf16.msra.mxu0 0
    %1968 = vmatprep.subr.bf16.mxu0 0
    %1969 = vmatpush1.bf16.msra.mxu0 0
    %1970 = vmatprep.mubr.bf16.mxu0 0
    %1971 = vmatmul.mubr.bf16.gmra.mrb[0].mxu0 %v1726
    %v1972 = vpop.f32.mrb[0].mxu0
    %v1973 = vadd.f32 %v1472, %v1972
    %v1974 = vpop.f32.mrb[0].mxu0
    %v1975 = vadd.f32 %v1476, %v1974
    %v1976 = vpop.f32.mrb[0].mxu0
    %v1977 = vadd.f32 %v1472, %v1976
    %v1978 = vpop.f32.mrb[0].mxu0
    %v1979 = vadd.f32 %v1476, %v1978
    %1980 = vmatprep.mubr.bf16.mxu0 0
    %1981 = vmatmul.mubr.bf16.gmra.mrb[0].mxu0 %v1729
    %v1982 = vpop.f32.mrb[0].mxu0
    %v1983 = vadd.f32 %v1472, %v1982
    %v1984 = vpop.f32.mrb[0].mxu0
    %v1985 = vadd.f32 %v1476, %v1984
    %v1986 = vpop.f32.mrb[0].mxu0
    %v1987 = vadd.f32 %v1472, %v1986
    %v1988 = vpop.f32.mrb[0].mxu0
    %v1989 = vadd.f32 %v1476, %v1988
    %1990 = vdwg.mxu0
    %1991 = vmatprep.subr.bf16.mxu0 %v1654
    %1992 = vmatpush1.bf16.msra.mxu0 %v1653
    %1993 = vmatprep.subr.bf16.mxu0 %v1670
    %1994 = vmatpush1.bf16.msra.mxu0 %v1669
    %1995 = vmatprep.subr.bf16.mxu0 %v1759
    %1996 = vmatpush1.bf16.msra.mxu0 %v1756
    %1997 = vmatprep.subr.bf16.mxu0 0
    %1998 = vmatpush1.bf16.msra.mxu0 0
    %1999 = vmatprep.subr.bf16.mxu0 0
    %2000 = vmatpush1.bf16.msra.mxu0 0
    %2001 = vmatprep.subr.bf16.mxu0 0
    %2002 = vmatpush1.bf16.msra.mxu0 0
    %2003 = vmatprep.subr.bf16.mxu0 0
    %2004 = vmatpush1.bf16.msra.mxu0 0
    %2005 = vmatprep.subr.bf16.mxu0 0
    %2006 = vmatpush1.bf16.msra.mxu0 0
    %2007 = vmatprep.subr.bf16.mxu0 0
    %2008 = vmatpush1.bf16.msra.mxu0 0
    %2009 = vmatprep.subr.bf16.mxu0 0
    %2010 = vmatpush1.bf16.msra.mxu0 0
    %2011 = vmatprep.subr.bf16.mxu0 0
    %2012 = vmatpush1.bf16.msra.mxu0 0
    %2013 = vmatprep.subr.bf16.mxu0 0
    %2014 = vmatpush1.bf16.msra.mxu0 0
    %2015 = vmatprep.subr.bf16.mxu0 0
    %2016 = vmatpush1.bf16.msra.mxu0 0
    %2017 = vmatprep.subr.bf16.mxu0 0
    %2018 = vmatpush1.bf16.msra.mxu0 0
    %2019 = vmatprep.subr.bf16.mxu0 0
    %2020 = vmatpush1.bf16.msra.mxu0 0
    %2021 = vmatprep.subr.bf16.mxu0 0
    %2022 = vmatpush1.bf16.msra.mxu0 0
    %2023 = vmatprep.mubr.bf16.mxu0 0
    %2024 = vmatmul.mubr.bf16.gmra.mrb[0].mxu0 %v1726
    %v2025 = vpop.f32.mrb[0].mxu0
    %v2026 = vadd.f32 %v1480, %v2025
    %v2027 = vpop.f32.mrb[0].mxu0
    %v2028 = vadd.f32 %v1484, %v2027
    %v2029 = vpop.f32.mrb[0].mxu0
    %v2030 = vadd.f32 %v1480, %v2029
    %v2031 = vpop.f32.mrb[0].mxu0
    %v2032 = vadd.f32 %v1484, %v2031
    %2033 = vmatprep.mubr.bf16.mxu0 0
    %2034 = vmatmul.mubr.bf16.gmra.mrb[0].mxu0 %v1729
    %v2035 = vpop.f32.mrb[0].mxu0
    %v2036 = vadd.f32 %v1480, %v2035
    %v2037 = vpop.f32.mrb[0].mxu0
    %v2038 = vadd.f32 %v1484, %v2037
    %v2039 = vpop.f32.mrb[0].mxu0
    %v2040 = vadd.f32 %v1480, %v2039
    %v2041 = vpop.f32.mrb[0].mxu0
    %v2042 = vadd.f32 %v1484, %v2041
    %2043 = vdwg.mxu0
    %2044 = vmatprep.subr.bf16.mxu0 %v1656
    %2045 = vmatpush1.bf16.msra.mxu0 %v1655
    %2046 = vmatprep.subr.bf16.mxu0 %v1672
    %2047 = vmatpush1.bf16.msra.mxu0 %v1671
    %2048 = vmatprep.subr.bf16.mxu0 %v1765
    %2049 = vmatpush1.bf16.msra.mxu0 %v1762
    %2050 = vmatprep.subr.bf16.mxu0 0
    %2051 = vmatpush1.bf16.msra.mxu0 0
    %2052 = vmatprep.subr.bf16.mxu0 0
    %2053 = vmatpush1.bf16.msra.mxu0 0
    %2054 = vmatprep.subr.bf16.mxu0 0
    %2055 = vmatpush1.bf16.msra.mxu0 0
    %2056 = vmatprep.subr.bf16.mxu0 0
    %2057 = vmatpush1.bf16.msra.mxu0 0
    %2058 = vmatprep.subr.bf16.mxu0 0
    %2059 = vmatpush1.bf16.msra.mxu0 0
    %2060 = vmatprep.subr.bf16.mxu0 0
    %2061 = vmatpush1.bf16.msra.mxu0 0
    %2062 = vmatprep.subr.bf16.mxu0 0
    %2063 = vmatpush1.bf16.msra.mxu0 0
    %2064 = vmatprep.subr.bf16.mxu0 0
    %2065 = vmatpush1.bf16.msra.mxu0 0
    %2066 = vmatprep.subr.bf16.mxu0 0
    %2067 = vmatpush1.bf16.msra.mxu0 0
    %2068 = vmatprep.subr.bf16.mxu0 0
    %2069 = vmatpush1.bf16.msra.mxu0 0
    %2070 = vmatprep.subr.bf16.mxu0 0
    %2071 = vmatpush1.bf16.msra.mxu0 0
    %2072 = vmatprep.subr.bf16.mxu0 0
    %2073 = vmatpush1.bf16.msra.mxu0 0
    %2074 = vmatprep.subr.bf16.mxu0 0
    %2075 = vmatpush1.bf16.msra.mxu0 0
    %2076 = vmatprep.mubr.bf16.mxu0 0
    %2077 = vmatmul.mubr.bf16.gmra.mrb[0].mxu0 %v1726
    %v2078 = vpop.f32.mrb[0].mxu0
    %v2079 = vadd.f32 %v1488, %v2078
    %v2080 = vpop.f32.mrb[0].mxu0
    %v2081 = vadd.f32 %v1492, %v2080
    %v2082 = vpop.f32.mrb[0].mxu0
    %v2083 = vadd.f32 %v1488, %v2082
    %v2084 = vpop.f32.mrb[0].mxu0
    %v2085 = vadd.f32 %v1492, %v2084
    %2086 = vmatprep.mubr.bf16.mxu0 0
    %2087 = vmatmul.mubr.bf16.gmra.mrb[0].mxu0 %v1729
    %v2088 = vpop.f32.mrb[0].mxu0
    %v2089 = vadd.f32 %v1488, %v2088
    %v2090 = vpop.f32.mrb[0].mxu0
    %v2091 = vadd.f32 %v1492, %v2090
    %v2092 = vpop.f32.mrb[0].mxu0
    %v2093 = vadd.f32 %v1488, %v2092
    %v2094 = vpop.f32.mrb[0].mxu0
    %v2095 = vadd.f32 %v1492, %v2094
    %2096 = vdwg.mxu0
    %2097 = vmatprep.subr.bf16.mxu0 %v1658
    %2098 = vmatpush1.bf16.msra.mxu0 %v1657
    %2099 = vmatprep.subr.bf16.mxu0 %v1674
    %2100 = vmatpush1.bf16.msra.mxu0 %v1673
    %2101 = vmatprep.subr.bf16.mxu0 %v1771
    %2102 = vmatpush1.bf16.msra.mxu0 %v1768
    %2103 = vmatprep.subr.bf16.mxu0 0
    %2104 = vmatpush1.bf16.msra.mxu0 0
    %2105 = vmatprep.subr.bf16.mxu0 0
    %2106 = vmatpush1.bf16.msra.mxu0 0
    %2107 = vmatprep.subr.bf16.mxu0 0
    %2108 = vmatpush1.bf16.msra.mxu0 0
    %2109 = vmatprep.subr.bf16.mxu0 0
    %2110 = vmatpush1.bf16.msra.mxu0 0
    %2111 = vmatprep.subr.bf16.mxu0 0
    %2112 = vmatpush1.bf16.msra.mxu0 0
    %2113 = vmatprep.subr.bf16.mxu0 0
    %2114 = vmatpush1.bf16.msra.mxu0 0
    %2115 = vmatprep.subr.bf16.mxu0 0
    %2116 = vmatpush1.bf16.msra.mxu0 0
    %2117 = vmatprep.subr.bf16.mxu0 0
    %2118 = vmatpush1.bf16.msra.mxu0 0
    %2119 = vmatprep.subr.bf16.mxu0 0
    %2120 = vmatpush1.bf16.msra.mxu0 0
    %2121 = vmatprep.subr.bf16.mxu0 0
    %2122 = vmatpush1.bf16.msra.mxu0 0
    %2123 = vmatprep.subr.bf16.mxu0 0
    %2124 = vmatpush1.bf16.msra.mxu0 0
    %2125 = vmatprep.subr.bf16.mxu0 0
    %2126 = vmatpush1.bf16.msra.mxu0 0
    %2127 = vmatprep.subr.bf16.mxu0 0
    %2128 = vmatpush1.bf16.msra.mxu0 0
    %2129 = vmatprep.mubr.bf16.mxu0 0
    %2130 = vmatmul.mubr.bf16.gmra.mrb[0].mxu0 %v1726
    %v2131 = vpop.f32.mrb[0].mxu0
    %v2132 = vadd.f32 %v1496, %v2131
    %v2133 = vpop.f32.mrb[0].mxu0
    %v2134 = vadd.f32 %v1500, %v2133
    %v2135 = vpop.f32.mrb[0].mxu0
    %v2136 = vadd.f32 %v1496, %v2135
    %v2137 = vpop.f32.mrb[0].mxu0
    %v2138 = vadd.f32 %v1500, %v2137
    %2139 = vmatprep.mubr.bf16.mxu0 0
    %2140 = vmatmul.mubr.bf16.gmra.mrb[0].mxu0 %v1729
    %v2141 = vpop.f32.mrb[0].mxu0
    %v2142 = vadd.f32 %v1496, %v2141
    %v2143 = vpop.f32.mrb[0].mxu0
    %v2144 = vadd.f32 %v1500, %v2143
    %v2145 = vpop.f32.mrb[0].mxu0
    %v2146 = vadd.f32 %v1496, %v2145
    %v2147 = vpop.f32.mrb[0].mxu0
    %v2148 = vadd.f32 %v1500, %v2147
    %2149 = vdwg.mxu0
    %2150 = vmatprep.subr.bf16.mxu0 %v1660
    %2151 = vmatpush1.bf16.msra.mxu0 %v1659
    %2152 = vmatprep.subr.bf16.mxu0 %v1676
    %2153 = vmatpush1.bf16.msra.mxu0 %v1675
    %2154 = vmatprep.subr.bf16.mxu0 %v1777
    %2155 = vmatpush1.bf16.msra.mxu0 %v1774
    %2156 = vmatprep.subr.bf16.mxu0 0
    %2157 = vmatpush1.bf16.msra.mxu0 0
    %2158 = vmatprep.subr.bf16.mxu0 0
    %2159 = vmatpush1.bf16.msra.mxu0 0
    %2160 = vmatprep.subr.bf16.mxu0 0
    %2161 = vmatpush1.bf16.msra.mxu0 0
    %2162 = vmatprep.subr.bf16.mxu0 0
    %2163 = vmatpush1.bf16.msra.mxu0 0
    %2164 = vmatprep.subr.bf16.mxu0 0
    %2165 = vmatpush1.bf16.msra.mxu0 0
    %2166 = vmatprep.subr.bf16.mxu0 0
    %2167 = vmatpush1.bf16.msra.mxu0 0
    %2168 = vmatprep.subr.bf16.mxu0 0
    %2169 = vmatpush1.bf16.msra.mxu0 0
    %2170 = vmatprep.subr.bf16.mxu0 0
    %2171 = vmatpush1.bf16.msra.mxu0 0
    %2172 = vmatprep.subr.bf16.mxu0 0
    %2173 = vmatpush1.bf16.msra.mxu0 0
    %2174 = vmatprep.subr.bf16.mxu0 0
    %2175 = vmatpush1.bf16.msra.mxu0 0
    %2176 = vmatprep.subr.bf16.mxu0 0
    %2177 = vmatpush1.bf16.msra.mxu0 0
    %2178 = vmatprep.subr.bf16.mxu0 0
    %2179 = vmatpush1.bf16.msra.mxu0 0
    %2180 = vmatprep.subr.bf16.mxu0 0
    %2181 = vmatpush1.bf16.msra.mxu0 0
    %2182 = vmatprep.mubr.bf16.mxu0 0
    %2183 = vmatmul.mubr.bf16.gmra.mrb[0].mxu0 %v1726
    %v2184 = vpop.f32.mrb[0].mxu0
    %v2185 = vadd.f32 %v1504, %v2184
    %v2186 = vpop.f32.mrb[0].mxu0
    %v2187 = vadd.f32 %v1508, %v2186
    %v2188 = vpop.f32.mrb[0].mxu0
    %v2189 = vadd.f32 %v1504, %v2188
    %v2190 = vpop.f32.mrb[0].mxu0
    %v2191 = vadd.f32 %v1508, %v2190
    %2192 = vmatprep.mubr.bf16.mxu0 0
    %2193 = vmatmul.mubr.bf16.gmra.mrb[0].mxu0 %v1729
    %v2194 = vpop.f32.mrb[0].mxu0
    %v2195 = vadd.f32 %v1504, %v2194
    %v2196 = vpop.f32.mrb[0].mxu0
    %v2197 = vadd.f32 %v1508, %v2196
    %v2198 = vpop.f32.mrb[0].mxu0
    %v2199 = vadd.f32 %v1504, %v2198
    %v2200 = vpop.f32.mrb[0].mxu0
    %v2201 = vadd.f32 %v1508, %v2200
    %2202 = vdwg.mxu0
    %v2203 = vmax.f32 %v1814, 0.0
    %v2204 = vmax.f32 %v1816, 0.0
    %v2205 = vmax.f32 %v1867, 0.0
    %v2206 = vmax.f32 %v1869, 0.0
    %v2207 = vmax.f32 %v1920, 0.0
    %v2208 = vmax.f32 %v1922, 0.0
    %v2209 = vmax.f32 %v1973, 0.0
    %v2210 = vmax.f32 %v1975, 0.0
    %v2211 = vmax.f32 %v2026, 0.0
    %v2212 = vmax.f32 %v2028, 0.0
    %v2213 = vmax.f32 %v2079, 0.0
    %v2214 = vmax.f32 %v2081, 0.0
    %v2215 = vmax.f32 %v2132, 0.0
    %v2216 = vmax.f32 %v2134, 0.0
    %v2217 = vmax.f32 %v2185, 0.0
    %v2218 = vmax.f32 %v2187, 0.0
    %v2219 = vmax.f32 %v1818, 0.0
    %v2220 = vmax.f32 %v1820, 0.0
    %v2221 = vmax.f32 %v1871, 0.0
    %v2222 = vmax.f32 %v1873, 0.0
    %v2223 = vmax.f32 %v1924, 0.0
    %v2224 = vmax.f32 %v1926, 0.0
    %v2225 = vmax.f32 %v1977, 0.0
    %v2226 = vmax.f32 %v1979, 0.0
    %v2227 = vmax.f32 %v2030, 0.0
    %v2228 = vmax.f32 %v2032, 0.0
    %v2229 = vmax.f32 %v2083, 0.0
    %v2230 = vmax.f32 %v2085, 0.0
    %v2231 = vmax.f32 %v2136, 0.0
    %v2232 = vmax.f32 %v2138, 0.0
    %v2233 = vmax.f32 %v2189, 0.0
    %v2234 = vmax.f32 %v2191, 0.0
    %v2235 = vmax.f32 %v1824, 0.0
    %v2236 = vmax.f32 %v1826, 0.0
    %v2237 = vmax.f32 %v1877, 0.0
    %v2238 = vmax.f32 %v1879, 0.0
    %v2239 = vmax.f32 %v1930, 0.0
    %v2240 = vmax.f32 %v1932, 0.0
    %v2241 = vmax.f32 %v1983, 0.0
    %v2242 = vmax.f32 %v1985, 0.0
    %v2243 = vmax.f32 %v2036, 0.0
    %v2244 = vmax.f32 %v2038, 0.0
    %v2245 = vmax.f32 %v2089, 0.0
    %v2246 = vmax.f32 %v2091, 0.0
    %v2247 = vmax.f32 %v2142, 0.0
    %v2248 = vmax.f32 %v2144, 0.0
    %v2249 = vmax.f32 %v2195, 0.0
    %v2250 = vmax.f32 %v2197, 0.0
    %v2251 = vmax.f32 %v1828, 0.0
    %v2252 = vmax.f32 %v1830, 0.0
    %v2253 = vmax.f32 %v1881, 0.0
    %v2254 = vmax.f32 %v1883, 0.0
    %v2255 = vmax.f32 %v1934, 0.0
    %v2256 = vmax.f32 %v1936, 0.0
    %v2257 = vmax.f32 %v1987, 0.0
    %v2258 = vmax.f32 %v1989, 0.0
    %v2259 = vmax.f32 %v2040, 0.0
    %v2260 = vmax.f32 %v2042, 0.0
    %v2261 = vmax.f32 %v2093, 0.0
    %v2262 = vmax.f32 %v2095, 0.0
    %v2263 = vmax.f32 %v2146, 0.0
    %v2264 = vmax.f32 %v2148, 0.0
    %v2265 = vmax.f32 %v2199, 0.0
    %v2266 = vmax.f32 %v2201, 0.0
    %v2267 = vpack.c.bf16 %v2219, %v2203
    %v2268 = vpack.c.bf16 %v2220, %v2204
    %v2269 = vpack.c.bf16 %v2221, %v2205
    %v2270 = vpack.c.bf16 %v2222, %v2206
    %v2271 = vpack.c.bf16 %v2223, %v2207
    %v2272 = vpack.c.bf16 %v2224, %v2208
    %v2273 = vpack.c.bf16 %v2225, %v2209
    %v2274 = vpack.c.bf16 %v2226, %v2210
    %v2275 = vpack.c.bf16 %v2227, %v2211
    %v2276 = vpack.c.bf16 %v2228, %v2212
    %v2277 = vpack.c.bf16 %v2229, %v2213
    %v2278 = vpack.c.bf16 %v2230, %v2214
    %v2279 = vpack.c.bf16 %v2231, %v2215
    %v2280 = vpack.c.bf16 %v2232, %v2216
    %v2281 = vpack.c.bf16 %v2233, %v2217
    %v2282 = vpack.c.bf16 %v2234, %v2218
    %v2283 = vpack.c.bf16 %v2251, %v2235
    %v2284 = vpack.c.bf16 %v2252, %v2236
    %v2285 = vpack.c.bf16 %v2253, %v2237
    %v2286 = vpack.c.bf16 %v2254, %v2238
    %v2287 = vpack.c.bf16 %v2255, %v2239
    %v2288 = vpack.c.bf16 %v2256, %v2240
    %v2289 = vpack.c.bf16 %v2257, %v2241
    %v2290 = vpack.c.bf16 %v2258, %v2242
    %v2291 = vpack.c.bf16 %v2259, %v2243
    %v2292 = vpack.c.bf16 %v2260, %v2244
    %v2293 = vpack.c.bf16 %v2261, %v2245
    %v2294 = vpack.c.bf16 %v2262, %v2246
    %v2295 = vpack.c.bf16 %v2263, %v2247
    %v2296 = vpack.c.bf16 %v2264, %v2248
    %v2297 = vpack.c.bf16 %v2265, %v2249
    %v2298 = vpack.c.bf16 %v2266, %v2250
    %v2299 = vld [vmem:[%s12] sm:$0xf]
    %v2300 = vld [vmem:[%s12 + $0x4] sm:$0xf]
    %v2301 = vld [vmem:[%s12 + $0x8] sm:$0xf]
    %v2302 = vld [vmem:[%s12 + $0xc] sm:$0xf]
    %v2303 = vld [vmem:[%s12 + $0x10] sm:$0xf]
    %v2304 = vld [vmem:[%s12 + $0x14] sm:$0xf]
    %v2305 = vld [vmem:[%s12 + $0x18] sm:$0xf]
    %v2306 = vld [vmem:[%s12 + $0x1c] sm:$0xf]
    %v2307 = vld [vmem:[%s12 + $0x20] sm:$0xf]
    %v2308 = vld [vmem:[%s12 + $0x24] sm:$0xf]
    %v2309 = vld [vmem:[%s12 + $0x28] sm:$0xf]
    %v2310 = vld [vmem:[%s12 + $0x2c] sm:$0xf]
    %v2311 = vld [vmem:[%s12 + $0x30] sm:$0xf]
    %v2312 = vld [vmem:[%s12 + $0x34] sm:$0xf]
    %v2313 = vld [vmem:[%s12 + $0x38] sm:$0xf]
    %v2314 = vld [vmem:[%s12 + $0x3c] sm:$0xf]
    %v2315 = vld [vmem:[%s12 + $0x40] sm:$0xf]
    %v2316 = vld [vmem:[%s12 + $0x44] sm:$0xf]
    %v2317 = vld [vmem:[%s12 + $0x48] sm:$0xf]
    %v2318 = vld [vmem:[%s12 + $0x4c] sm:$0xf]
    %v2319 = vld [vmem:[%s12 + $0x50] sm:$0xf]
    %v2320 = vld [vmem:[%s12 + $0x54] sm:$0xf]
    %v2321 = vld [vmem:[%s12 + $0x58] sm:$0xf]
    %v2322 = vld [vmem:[%s12 + $0x5c] sm:$0xf]
    %v2323 = vld [vmem:[%s12 + $0x60] sm:$0xf]
    %v2324 = vld [vmem:[%s12 + $0x64] sm:$0xf]
    %v2325 = vld [vmem:[%s12 + $0x68] sm:$0xf]
    %v2326 = vld [vmem:[%s12 + $0x6c] sm:$0xf]
    %v2327 = vld [vmem:[%s12 + $0x70] sm:$0xf]
    %v2328 = vld [vmem:[%s12 + $0x74] sm:$0xf]
    %v2329 = vld [vmem:[%s12 + $0x78] sm:$0xf]
    %v2330 = vld [vmem:[%s12 + $0x7c] sm:$0xf]
    %v2331 = vld [vmem:[%s12 + $0x80] sm:$0xf]
    %v2332 = vld [vmem:[%s12 + $0x84] sm:$0xf]
    %v2333 = vld [vmem:[%s12 + $0x88] sm:$0xf]
    %v2334 = vld [vmem:[%s12 + $0x8c] sm:$0xf]
    %v2335 = vld [vmem:[%s12 + $0x90] sm:$0xf]
    %v2336 = vld [vmem:[%s12 + $0x94] sm:$0xf]
    %v2337 = vld [vmem:[%s12 + $0x98] sm:$0xf]
    %v2338 = vld [vmem:[%s12 + $0x9c] sm:$0xf]
    %v2339 = vld [vmem:[%s12 + $0xa0] sm:$0xf]
    %v2340 = vld [vmem:[%s12 + $0xa4] sm:$0xf]
    %v2341 = vld [vmem:[%s12 + $0xa8] sm:$0xf]
    %v2342 = vld [vmem:[%s12 + $0xac] sm:$0xf]
    %v2343 = vld [vmem:[%s12 + $0xb0] sm:$0xf]
    %v2344 = vld [vmem:[%s12 + $0xb4] sm:$0xf]
    %v2345 = vld [vmem:[%s12 + $0xb8] sm:$0xf]
    %v2346 = vld [vmem:[%s12 + $0xbc] sm:$0xf]
    %v2347 = vld [vmem:[%s12 + $0xc0] sm:$0xf]
    %v2348 = vld [vmem:[%s12 + $0xc4] sm:$0xf]
    %v2349 = vld [vmem:[%s12 + $0xc8] sm:$0xf]
    %v2350 = vld [vmem:[%s12 + $0xcc] sm:$0xf]
    %v2351 = vld [vmem:[%s12 + $0xd0] sm:$0xf]
    %v2352 = vld [vmem:[%s12 + $0xd4] sm:$0xf]
    %v2353 = vld [vmem:[%s12 + $0xd8] sm:$0xf]
    %v2354 = vld [vmem:[%s12 + $0xdc] sm:$0xf]
    %v2355 = vld [vmem:[%s12 + $0xe0] sm:$0xf]
    %v2356 = vld [vmem:[%s12 + $0xe4] sm:$0xf]
    %v2357 = vld [vmem:[%s12 + $0xe8] sm:$0xf]
    %v2358 = vld [vmem:[%s12 + $0xec] sm:$0xf]
    %v2359 = vld [vmem:[%s12 + $0xf0] sm:$0xf]
    %v2360 = vld [vmem:[%s12 + $0xf4] sm:$0xf]
    %v2361 = vld [vmem:[%s12 + $0xf8] sm:$0xf]
    %v2362 = vld [vmem:[%s12 + $0xfc] sm:$0xf]
    %v2363 = vld [vmem:[%s12 + $0x100] sm:$0xf]
    %v2364 = vld [vmem:[%s12 + $0x104] sm:$0xf]
    %v2365 = vld [vmem:[%s12 + $0x108] sm:$0xf]
    %v2366 = vld [vmem:[%s12 + $0x10c] sm:$0xf]
    %v2367 = vld [vmem:[%s12 + $0x110] sm:$0xf]
    %v2368 = vld [vmem:[%s12 + $0x114] sm:$0xf]
    %v2369 = vld [vmem:[%s12 + $0x118] sm:$0xf]
    %v2370 = vld [vmem:[%s12 + $0x11c] sm:$0xf]
    %v2371 = vld [vmem:[%s12 + $0x120] sm:$0xf]
    %v2372 = vld [vmem:[%s12 + $0x124] sm:$0xf]
    %v2373 = vld [vmem:[%s12 + $0x128] sm:$0xf]
    %v2374 = vld [vmem:[%s12 + $0x12c] sm:$0xf]
    %v2375 = vld [vmem:[%s12 + $0x130] sm:$0xf]
    %v2376 = vld [vmem:[%s12 + $0x134] sm:$0xf]
    %v2377 = vld [vmem:[%s12 + $0x138] sm:$0xf]
    %v2378 = vld [vmem:[%s12 + $0x13c] sm:$0xf]
    %v2379 = vld [vmem:[%s12 + $0x140] sm:$0xf]
    %v2380 = vld [vmem:[%s12 + $0x144] sm:$0xf]
    %v2381 = vld [vmem:[%s12 + $0x148] sm:$0xf]
    %v2382 = vld [vmem:[%s12 + $0x14c] sm:$0xf]
    %v2383 = vld [vmem:[%s12 + $0x150] sm:$0xf]
    %v2384 = vld [vmem:[%s12 + $0x154] sm:$0xf]
    %v2385 = vld [vmem:[%s12 + $0x158] sm:$0xf]
    %v2386 = vld [vmem:[%s12 + $0x15c] sm:$0xf]
    %v2387 = vld [vmem:[%s12 + $0x160] sm:$0xf]
    %v2388 = vld [vmem:[%s12 + $0x164] sm:$0xf]
    %v2389 = vld [vmem:[%s12 + $0x168] sm:$0xf]
    %v2390 = vld [vmem:[%s12 + $0x16c] sm:$0xf]
    %v2391 = vld [vmem:[%s12 + $0x170] sm:$0xf]
    %v2392 = vld [vmem:[%s12 + $0x174] sm:$0xf]
    %v2393 = vld [vmem:[%s12 + $0x178] sm:$0xf]
    %v2394 = vld [vmem:[%s12 + $0x17c] sm:$0xf]
    %v2395 = vld [vmem:[%s12 + $0x180] sm:$0xf]
    %v2396 = vld [vmem:[%s12 + $0x184] sm:$0xf]
    %v2397 = vld [vmem:[%s12 + $0x188] sm:$0xf]
    %v2398 = vld [vmem:[%s12 + $0x18c] sm:$0xf]
    %v2399 = vld [vmem:[%s12 + $0x190] sm:$0xf]
    %v2400 = vld [vmem:[%s12 + $0x194] sm:$0xf]
    %v2401 = vld [vmem:[%s12 + $0x198] sm:$0xf]
    %v2402 = vld [vmem:[%s12 + $0x19c] sm:$0xf]
    %v2403 = vld [vmem:[%s12 + $0x1a0] sm:$0xf]
    %v2404 = vld [vmem:[%s12 + $0x1a4] sm:$0xf]
    %v2405 = vld [vmem:[%s12 + $0x1a8] sm:$0xf]
    %v2406 = vld [vmem:[%s12 + $0x1ac] sm:$0xf]
    %v2407 = vld [vmem:[%s12 + $0x1b0] sm:$0xf]
    %v2408 = vld [vmem:[%s12 + $0x1b4] sm:$0xf]
    %v2409 = vld [vmem:[%s12 + $0x1b8] sm:$0xf]
    %v2410 = vld [vmem:[%s12 + $0x1bc] sm:$0xf]
    %v2411 = vld [vmem:[%s12 + $0x1c0] sm:$0xf]
    %v2412 = vld [vmem:[%s12 + $0x1c4] sm:$0xf]
    %v2413 = vld [vmem:[%s12 + $0x1c8] sm:$0xf]
    %v2414 = vld [vmem:[%s12 + $0x1cc] sm:$0xf]
    %v2415 = vld [vmem:[%s12 + $0x1d0] sm:$0xf]
    %v2416 = vld [vmem:[%s12 + $0x1d4] sm:$0xf]
    %v2417 = vld [vmem:[%s12 + $0x1d8] sm:$0xf]
    %v2418 = vld [vmem:[%s12 + $0x1dc] sm:$0xf]
    %v2419 = vld [vmem:[%s12 + $0x1e0] sm:$0xf]
    %v2420 = vld [vmem:[%s12 + $0x1e4] sm:$0xf]
    %v2421 = vld [vmem:[%s12 + $0x1e8] sm:$0xf]
    %v2422 = vld [vmem:[%s12 + $0x1ec] sm:$0xf]
    %v2423 = vld [vmem:[%s12 + $0x1f0] sm:$0xf]
    %v2424 = vld [vmem:[%s12 + $0x1f4] sm:$0xf]
    %v2425 = vld [vmem:[%s12 + $0x1f8] sm:$0xf]
    %v2426 = vld [vmem:[%s12 + $0x1fc] sm:$0xf]
    %v2427 = vld [vmem:[%s12 + $0x200] sm:$0xf]
    %v2428 = vld [vmem:[%s12 + $0x204] sm:$0xf]
    %v2429 = vld [vmem:[%s12 + $0x208] sm:$0xf]
    %v2430 = vld [vmem:[%s12 + $0x20c] sm:$0xf]
    %v2431 = vld [vmem:[%s12 + $0x210] sm:$0xf]
    %v2432 = vld [vmem:[%s12 + $0x214] sm:$0xf]
    %v2433 = vld [vmem:[%s12 + $0x218] sm:$0xf]
    %v2434 = vld [vmem:[%s12 + $0x21c] sm:$0xf]
    %v2435 = vld [vmem:[%s12 + $0x220] sm:$0xf]
    %v2436 = vld [vmem:[%s12 + $0x224] sm:$0xf]
    %v2437 = vld [vmem:[%s12 + $0x228] sm:$0xf]
    %v2438 = vld [vmem:[%s12 + $0x22c] sm:$0xf]
    %v2439 = vld [vmem:[%s12 + $0x230] sm:$0xf]
    %v2440 = vld [vmem:[%s12 + $0x234] sm:$0xf]
    %v2441 = vld [vmem:[%s12 + $0x238] sm:$0xf]
    %v2442 = vld [vmem:[%s12 + $0x23c] sm:$0xf]
    %v2443 = vld [vmem:[%s12 + $0x240] sm:$0xf]
    %v2444 = vld [vmem:[%s12 + $0x244] sm:$0xf]
    %v2445 = vld [vmem:[%s12 + $0x248] sm:$0xf]
    %v2446 = vld [vmem:[%s12 + $0x24c] sm:$0xf]
    %v2447 = vld [vmem:[%s12 + $0x250] sm:$0xf]
    %v2448 = vld [vmem:[%s12 + $0x254] sm:$0xf]
    %v2449 = vld [vmem:[%s12 + $0x258] sm:$0xf]
    %v2450 = vld [vmem:[%s12 + $0x25c] sm:$0xf]
    %v2451 = vld [vmem:[%s12 + $0x260] sm:$0xf]
    %v2452 = vld [vmem:[%s12 + $0x264] sm:$0xf]
    %v2453 = vld [vmem:[%s12 + $0x268] sm:$0xf]
    %v2454 = vld [vmem:[%s12 + $0x26c] sm:$0xf]
    %v2455 = vld [vmem:[%s12 + $0x270] sm:$0xf]
    %v2456 = vld [vmem:[%s12 + $0x274] sm:$0xf]
    %v2457 = vld [vmem:[%s12 + $0x278] sm:$0xf]
    %v2458 = vld [vmem:[%s12 + $0x27c] sm:$0xf]
    %v2459 = vld [vmem:[%s12 + $0x280] sm:$0xf]
    %v2460 = vld [vmem:[%s12 + $0x284] sm:$0xf]
    %v2461 = vld [vmem:[%s12 + $0x288] sm:$0xf]
    %v2462 = vld [vmem:[%s12 + $0x28c] sm:$0xf]
    %v2463 = vld [vmem:[%s12 + $0x290] sm:$0xf]
    %v2464 = vld [vmem:[%s12 + $0x294] sm:$0xf]
    %v2465 = vld [vmem:[%s12 + $0x298] sm:$0xf]
    %v2466 = vld [vmem:[%s12 + $0x29c] sm:$0xf]
    %v2467 = vld [vmem:[%s12 + $0x2a0] sm:$0xf]
    %v2468 = vld [vmem:[%s12 + $0x2a4] sm:$0xf]
    %v2469 = vld [vmem:[%s12 + $0x2a8] sm:$0xf]
    %v2470 = vld [vmem:[%s12 + $0x2ac] sm:$0xf]
    %v2471 = vld [vmem:[%s12 + $0x2b0] sm:$0xf]
    %v2472 = vld [vmem:[%s12 + $0x2b4] sm:$0xf]
    %v2473 = vld [vmem:[%s12 + $0x2b8] sm:$0xf]
    %v2474 = vld [vmem:[%s12 + $0x2bc] sm:$0xf]
    %v2475 = vld [vmem:[%s12 + $0x2c0] sm:$0xf]
    %v2476 = vld [vmem:[%s12 + $0x2c4] sm:$0xf]
    %v2477 = vld [vmem:[%s12 + $0x2c8] sm:$0xf]
    %v2478 = vld [vmem:[%s12 + $0x2cc] sm:$0xf]
    %v2479 = vld [vmem:[%s12 + $0x2d0] sm:$0xf]
    %v2480 = vld [vmem:[%s12 + $0x2d4] sm:$0xf]
    %v2481 = vld [vmem:[%s12 + $0x2d8] sm:$0xf]
    %v2482 = vld [vmem:[%s12 + $0x2dc] sm:$0xf]
    %v2483 = vld [vmem:[%s12 + $0x2e0] sm:$0xf]
    %v2484 = vld [vmem:[%s12 + $0x2e4] sm:$0xf]
    %v2485 = vld [vmem:[%s12 + $0x2e8] sm:$0xf]
    %v2486 = vld [vmem:[%s12 + $0x2ec] sm:$0xf]
    %v2487 = vld [vmem:[%s12 + $0x2f0] sm:$0xf]
    %v2488 = vld [vmem:[%s12 + $0x2f4] sm:$0xf]
    %v2489 = vld [vmem:[%s12 + $0x2f8] sm:$0xf]
    %v2490 = vld [vmem:[%s12 + $0x2fc] sm:$0xf]
    %v2491 = vld [vmem:[%s12 + $0x300] sm:$0xf]
    %v2492 = vld [vmem:[%s12 + $0x304] sm:$0xf]
    %v2493 = vld [vmem:[%s12 + $0x308] sm:$0xf]
    %v2494 = vld [vmem:[%s12 + $0x30c] sm:$0xf]
    %v2495 = vld [vmem:[%s12 + $0x310] sm:$0xf]
    %v2496 = vld [vmem:[%s12 + $0x314] sm:$0xf]
    %v2497 = vld [vmem:[%s12 + $0x318] sm:$0xf]
    %v2498 = vld [vmem:[%s12 + $0x31c] sm:$0xf]
    %v2499 = vld [vmem:[%s12 + $0x320] sm:$0xf]
    %v2500 = vld [vmem:[%s12 + $0x324] sm:$0xf]
    %v2501 = vld [vmem:[%s12 + $0x328] sm:$0xf]
    %v2502 = vld [vmem:[%s12 + $0x32c] sm:$0xf]
    %v2503 = vld [vmem:[%s12 + $0x330] sm:$0xf]
    %v2504 = vld [vmem:[%s12 + $0x334] sm:$0xf]
    %v2505 = vld [vmem:[%s12 + $0x338] sm:$0xf]
    %v2506 = vld [vmem:[%s12 + $0x33c] sm:$0xf]
    %v2507 = vld [vmem:[%s12 + $0x340] sm:$0xf]
    %v2508 = vld [vmem:[%s12 + $0x344] sm:$0xf]
    %v2509 = vld [vmem:[%s12 + $0x348] sm:$0xf]
    %v2510 = vld [vmem:[%s12 + $0x34c] sm:$0xf]
    %v2511 = vld [vmem:[%s12 + $0x350] sm:$0xf]
    %v2512 = vld [vmem:[%s12 + $0x354] sm:$0xf]
    %v2513 = vld [vmem:[%s12 + $0x358] sm:$0xf]
    %v2514 = vld [vmem:[%s12 + $0x35c] sm:$0xf]
    %v2515 = vld [vmem:[%s12 + $0x360] sm:$0xf]
    %v2516 = vld [vmem:[%s12 + $0x364] sm:$0xf]
    %v2517 = vld [vmem:[%s12 + $0x368] sm:$0xf]
    %v2518 = vld [vmem:[%s12 + $0x36c] sm:$0xf]
    %v2519 = vld [vmem:[%s12 + $0x370] sm:$0xf]
    %v2520 = vld [vmem:[%s12 + $0x374] sm:$0xf]
    %v2521 = vld [vmem:[%s12 + $0x378] sm:$0xf]
    %v2522 = vld [vmem:[%s12 + $0x37c] sm:$0xf]
    %v2523 = vld [vmem:[%s12 + $0x380] sm:$0xf]
    %v2524 = vld [vmem:[%s12 + $0x384] sm:$0xf]
    %v2525 = vld [vmem:[%s12 + $0x388] sm:$0xf]
    %v2526 = vld [vmem:[%s12 + $0x38c] sm:$0xf]
    %v2527 = vld [vmem:[%s12 + $0x390] sm:$0xf]
    %v2528 = vld [vmem:[%s12 + $0x394] sm:$0xf]
    %v2529 = vld [vmem:[%s12 + $0x398] sm:$0xf]
    %v2530 = vld [vmem:[%s12 + $0x39c] sm:$0xf]
    %v2531 = vld [vmem:[%s12 + $0x3a0] sm:$0xf]
    %v2532 = vld [vmem:[%s12 + $0x3a4] sm:$0xf]
    %v2533 = vld [vmem:[%s12 + $0x3a8] sm:$0xf]
    %v2534 = vld [vmem:[%s12 + $0x3ac] sm:$0xf]
    %v2535 = vld [vmem:[%s12 + $0x3b0] sm:$0xf]
    %v2536 = vld [vmem:[%s12 + $0x3b4] sm:$0xf]
    %v2537 = vld [vmem:[%s12 + $0x3b8] sm:$0xf]
    %v2538 = vld [vmem:[%s12 + $0x3bc] sm:$0xf]
    %v2539 = vld [vmem:[%s12 + $0x3c0] sm:$0xf]
    %v2540 = vld [vmem:[%s12 + $0x3c4] sm:$0xf]
    %v2541 = vld [vmem:[%s12 + $0x3c8] sm:$0xf]
    %v2542 = vld [vmem:[%s12 + $0x3cc] sm:$0xf]
    %v2543 = vld [vmem:[%s12 + $0x3d0] sm:$0xf]
    %v2544 = vld [vmem:[%s12 + $0x3d4] sm:$0xf]
    %v2545 = vld [vmem:[%s12 + $0x3d8] sm:$0xf]
    %v2546 = vld [vmem:[%s12 + $0x3dc] sm:$0xf]
    %v2547 = vld [vmem:[%s12 + $0x3e0] sm:$0xf]
    %v2548 = vld [vmem:[%s12 + $0x3e4] sm:$0xf]
    %v2549 = vld [vmem:[%s12 + $0x3e8] sm:$0xf]
    %v2550 = vld [vmem:[%s12 + $0x3ec] sm:$0xf]
    %v2551 = vld [vmem:[%s12 + $0x3f0] sm:$0xf]
    %v2552 = vld [vmem:[%s12 + $0x3f4] sm:$0xf]
    %v2553 = vld [vmem:[%s12 + $0x3f8] sm:$0xf]
    %v2554 = vld [vmem:[%s12 + $0x3fc] sm:$0xf]
    %v2555 = vld [vmem:[%s13] sm:$0x1]
    %v2557 = vlaneseq
    %v2558 = vshrl.u32 %v2557, 7
    %v2559 = vsub.s32 0, %v2558
    %v2560 = vrot.slane %v2555, %v2559
    %v2818 = vunpack.c.l.b16 %v2299
    %v2819 = vunpack.c.l.b16 %v2300
    %v2820 = vunpack.c.l.b16 %v2301
    %v2821 = vunpack.c.l.b16 %v2302
    %v2822 = vunpack.c.l.b16 %v2303
    %v2823 = vunpack.c.l.b16 %v2304
    %v2824 = vunpack.c.l.b16 %v2305
    %v2825 = vunpack.c.l.b16 %v2306
    %v2826 = vunpack.c.l.b16 %v2307
    %v2827 = vunpack.c.l.b16 %v2308
    %v2828 = vunpack.c.l.b16 %v2309
    %v2829 = vunpack.c.l.b16 %v2310
    %v2830 = vunpack.c.l.b16 %v2311
    %v2831 = vunpack.c.l.b16 %v2312
    %v2832 = vunpack.c.l.b16 %v2313
    %v2833 = vunpack.c.l.b16 %v2314
    %v2834 = vunpack.c.l.b16 %v2315
    %v2835 = vunpack.c.l.b16 %v2316
    %v2836 = vunpack.c.l.b16 %v2317
    %v2837 = vunpack.c.l.b16 %v2318
    %v2838 = vunpack.c.l.b16 %v2319
    %v2839 = vunpack.c.l.b16 %v2320
    %v2840 = vunpack.c.l.b16 %v2321
    %v2841 = vunpack.c.l.b16 %v2322
    %v2842 = vunpack.c.l.b16 %v2323
    %v2843 = vunpack.c.l.b16 %v2324
    %v2844 = vunpack.c.l.b16 %v2325
    %v2845 = vunpack.c.l.b16 %v2326
    %v2846 = vunpack.c.l.b16 %v2327
    %v2847 = vunpack.c.l.b16 %v2328
    %v2848 = vunpack.c.l.b16 %v2329
    %v2849 = vunpack.c.l.b16 %v2330
    %v2850 = vunpack.c.l.b16 %v2331
    %v2851 = vunpack.c.l.b16 %v2332
    %v2852 = vunpack.c.l.b16 %v2333
    %v2853 = vunpack.c.l.b16 %v2334
    %v2854 = vunpack.c.l.b16 %v2335
    %v2855 = vunpack.c.l.b16 %v2336
    %v2856 = vunpack.c.l.b16 %v2337
    %v2857 = vunpack.c.l.b16 %v2338
    %v2858 = vunpack.c.l.b16 %v2339
    %v2859 = vunpack.c.l.b16 %v2340
    %v2860 = vunpack.c.l.b16 %v2341
    %v2861 = vunpack.c.l.b16 %v2342
    %v2862 = vunpack.c.l.b16 %v2343
    %v2863 = vunpack.c.l.b16 %v2344
    %v2864 = vunpack.c.l.b16 %v2345
    %v2865 = vunpack.c.l.b16 %v2346
    %v2866 = vunpack.c.l.b16 %v2347
    %v2867 = vunpack.c.l.b16 %v2348
    %v2868 = vunpack.c.l.b16 %v2349
    %v2869 = vunpack.c.l.b16 %v2350
    %v2870 = vunpack.c.l.b16 %v2351
    %v2871 = vunpack.c.l.b16 %v2352
    %v2872 = vunpack.c.l.b16 %v2353
    %v2873 = vunpack.c.l.b16 %v2354
    %v2874 = vunpack.c.l.b16 %v2355
    %v2875 = vunpack.c.l.b16 %v2356
    %v2876 = vunpack.c.l.b16 %v2357
    %v2877 = vunpack.c.l.b16 %v2358
    %v2878 = vunpack.c.l.b16 %v2359
    %v2879 = vunpack.c.l.b16 %v2360
    %v2880 = vunpack.c.l.b16 %v2361
    %v2881 = vunpack.c.l.b16 %v2362
    %v2882 = vunpack.c.l.b16 %v2363
    %v2883 = vunpack.c.l.b16 %v2364
    %v2884 = vunpack.c.l.b16 %v2365
    %v2885 = vunpack.c.l.b16 %v2366
    %v2886 = vunpack.c.l.b16 %v2367
    %v2887 = vunpack.c.l.b16 %v2368
    %v2888 = vunpack.c.l.b16 %v2369
    %v2889 = vunpack.c.l.b16 %v2370
    %v2890 = vunpack.c.l.b16 %v2371
    %v2891 = vunpack.c.l.b16 %v2372
    %v2892 = vunpack.c.l.b16 %v2373
    %v2893 = vunpack.c.l.b16 %v2374
    %v2894 = vunpack.c.l.b16 %v2375
    %v2895 = vunpack.c.l.b16 %v2376
    %v2896 = vunpack.c.l.b16 %v2377
    %v2897 = vunpack.c.l.b16 %v2378
    %v2898 = vunpack.c.l.b16 %v2379
    %v2899 = vunpack.c.l.b16 %v2380
    %v2900 = vunpack.c.l.b16 %v2381
    %v2901 = vunpack.c.l.b16 %v2382
    %v2902 = vunpack.c.l.b16 %v2383
    %v2903 = vunpack.c.l.b16 %v2384
    %v2904 = vunpack.c.l.b16 %v2385
    %v2905 = vunpack.c.l.b16 %v2386
    %v2906 = vunpack.c.l.b16 %v2387
    %v2907 = vunpack.c.l.b16 %v2388
    %v2908 = vunpack.c.l.b16 %v2389
    %v2909 = vunpack.c.l.b16 %v2390
    %v2910 = vunpack.c.l.b16 %v2391
    %v2911 = vunpack.c.l.b16 %v2392
    %v2912 = vunpack.c.l.b16 %v2393
    %v2913 = vunpack.c.l.b16 %v2394
    %v2914 = vunpack.c.l.b16 %v2395
    %v2915 = vunpack.c.l.b16 %v2396
    %v2916 = vunpack.c.l.b16 %v2397
    %v2917 = vunpack.c.l.b16 %v2398
    %v2918 = vunpack.c.l.b16 %v2399
    %v2919 = vunpack.c.l.b16 %v2400
    %v2920 = vunpack.c.l.b16 %v2401
    %v2921 = vunpack.c.l.b16 %v2402
    %v2922 = vunpack.c.l.b16 %v2403
    %v2923 = vunpack.c.l.b16 %v2404
    %v2924 = vunpack.c.l.b16 %v2405
    %v2925 = vunpack.c.l.b16 %v2406
    %v2926 = vunpack.c.l.b16 %v2407
    %v2927 = vunpack.c.l.b16 %v2408
    %v2928 = vunpack.c.l.b16 %v2409
    %v2929 = vunpack.c.l.b16 %v2410
    %v2930 = vunpack.c.l.b16 %v2411
    %v2931 = vunpack.c.l.b16 %v2412
    %v2932 = vunpack.c.l.b16 %v2413
    %v2933 = vunpack.c.l.b16 %v2414
    %v2934 = vunpack.c.l.b16 %v2415
    %v2935 = vunpack.c.l.b16 %v2416
    %v2936 = vunpack.c.l.b16 %v2417
    %v2937 = vunpack.c.l.b16 %v2418
    %v2938 = vunpack.c.l.b16 %v2419
    %v2939 = vunpack.c.l.b16 %v2420
    %v2940 = vunpack.c.l.b16 %v2421
    %v2941 = vunpack.c.l.b16 %v2422
    %v2942 = vunpack.c.l.b16 %v2423
    %v2943 = vunpack.c.l.b16 %v2424
    %v2944 = vunpack.c.l.b16 %v2425
    %v2945 = vunpack.c.l.b16 %v2426
    %v2946 = vunpack.c.l.b16 %v2427
    %v2947 = vunpack.c.l.b16 %v2428
    %v2948 = vunpack.c.l.b16 %v2429
    %v2949 = vunpack.c.l.b16 %v2430
    %v2950 = vunpack.c.l.b16 %v2431
    %v2951 = vunpack.c.l.b16 %v2432
    %v2952 = vunpack.c.l.b16 %v2433
    %v2953 = vunpack.c.l.b16 %v2434
    %v2954 = vunpack.c.l.b16 %v2435
    %v2955 = vunpack.c.l.b16 %v2436
    %v2956 = vunpack.c.l.b16 %v2437
    %v2957 = vunpack.c.l.b16 %v2438
    %v2958 = vunpack.c.l.b16 %v2439
    %v2959 = vunpack.c.l.b16 %v2440
    %v2960 = vunpack.c.l.b16 %v2441
    %v2961 = vunpack.c.l.b16 %v2442
    %v2962 = vunpack.c.l.b16 %v2443
    %v2963 = vunpack.c.l.b16 %v2444
    %v2964 = vunpack.c.l.b16 %v2445
    %v2965 = vunpack.c.l.b16 %v2446
    %v2966 = vunpack.c.l.b16 %v2447
    %v2967 = vunpack.c.l.b16 %v2448
    %v2968 = vunpack.c.l.b16 %v2449
    %v2969 = vunpack.c.l.b16 %v2450
    %v2970 = vunpack.c.l.b16 %v2451
    %v2971 = vunpack.c.l.b16 %v2452
    %v2972 = vunpack.c.l.b16 %v2453
    %v2973 = vunpack.c.l.b16 %v2454
    %v2974 = vunpack.c.l.b16 %v2455
    %v2975 = vunpack.c.l.b16 %v2456
    %v2976 = vunpack.c.l.b16 %v2457
    %v2977 = vunpack.c.l.b16 %v2458
    %v2978 = vunpack.c.l.b16 %v2459
    %v2979 = vunpack.c.l.b16 %v2460
    %v2980 = vunpack.c.l.b16 %v2461
    %v2981 = vunpack.c.l.b16 %v2462
    %v2982 = vunpack.c.l.b16 %v2463
    %v2983 = vunpack.c.l.b16 %v2464
    %v2984 = vunpack.c.l.b16 %v2465
    %v2985 = vunpack.c.l.b16 %v2466
    %v2986 = vunpack.c.l.b16 %v2467
    %v2987 = vunpack.c.l.b16 %v2468
    %v2988 = vunpack.c.l.b16 %v2469
    %v2989 = vunpack.c.l.b16 %v2470
    %v2990 = vunpack.c.l.b16 %v2471
    %v2991 = vunpack.c.l.b16 %v2472
    %v2992 = vunpack.c.l.b16 %v2473
    %v2993 = vunpack.c.l.b16 %v2474
    %v2994 = vunpack.c.l.b16 %v2475
    %v2995 = vunpack.c.l.b16 %v2476
    %v2996 = vunpack.c.l.b16 %v2477
    %v2997 = vunpack.c.l.b16 %v2478
    %v2998 = vunpack.c.l.b16 %v2479
    %v2999 = vunpack.c.l.b16 %v2480
    %v3000 = vunpack.c.l.b16 %v2481
    %v3001 = vunpack.c.l.b16 %v2482
    %v3002 = vunpack.c.l.b16 %v2483
    %v3003 = vunpack.c.l.b16 %v2484
    %v3004 = vunpack.c.l.b16 %v2485
    %v3005 = vunpack.c.l.b16 %v2486
    %v3006 = vunpack.c.l.b16 %v2487
    %v3007 = vunpack.c.l.b16 %v2488
    %v3008 = vunpack.c.l.b16 %v2489
    %v3009 = vunpack.c.l.b16 %v2490
    %v3010 = vunpack.c.l.b16 %v2491
    %v3011 = vunpack.c.l.b16 %v2492
    %v3012 = vunpack.c.l.b16 %v2493
    %v3013 = vunpack.c.l.b16 %v2494
    %v3014 = vunpack.c.l.b16 %v2495
    %v3015 = vunpack.c.l.b16 %v2496
    %v3016 = vunpack.c.l.b16 %v2497
    %v3017 = vunpack.c.l.b16 %v2498
    %v3018 = vunpack.c.l.b16 %v2499
    %v3019 = vunpack.c.l.b16 %v2500
    %v3020 = vunpack.c.l.b16 %v2501
    %v3021 = vunpack.c.l.b16 %v2502
    %v3022 = vunpack.c.l.b16 %v2503
    %v3023 = vunpack.c.l.b16 %v2504
    %v3024 = vunpack.c.l.b16 %v2505
    %v3025 = vunpack.c.l.b16 %v2506
    %v3026 = vunpack.c.l.b16 %v2507
    %v3027 = vunpack.c.l.b16 %v2508
    %v3028 = vunpack.c.l.b16 %v2509
    %v3029 = vunpack.c.l.b16 %v2510
    %v3030 = vunpack.c.l.b16 %v2511
    %v3031 = vunpack.c.l.b16 %v2512
    %v3032 = vunpack.c.l.b16 %v2513
    %v3033 = vunpack.c.l.b16 %v2514
    %v3034 = vunpack.c.l.b16 %v2515
    %v3035 = vunpack.c.l.b16 %v2516
    %v3036 = vunpack.c.l.b16 %v2517
    %v3037 = vunpack.c.l.b16 %v2518
    %v3038 = vunpack.c.l.b16 %v2519
    %v3039 = vunpack.c.l.b16 %v2520
    %v3040 = vunpack.c.l.b16 %v2521
    %v3041 = vunpack.c.l.b16 %v2522
    %v3042 = vunpack.c.l.b16 %v2523
    %v3043 = vunpack.c.l.b16 %v2524
    %v3044 = vunpack.c.l.b16 %v2525
    %v3045 = vunpack.c.l.b16 %v2526
    %v3046 = vunpack.c.l.b16 %v2527
    %v3047 = vunpack.c.l.b16 %v2528
    %v3048 = vunpack.c.l.b16 %v2529
    %v3049 = vunpack.c.l.b16 %v2530
    %v3050 = vunpack.c.l.b16 %v2531
    %v3051 = vunpack.c.l.b16 %v2532
    %v3052 = vunpack.c.l.b16 %v2533
    %v3053 = vunpack.c.l.b16 %v2534
    %v3054 = vunpack.c.l.b16 %v2535
    %v3055 = vunpack.c.l.b16 %v2536
    %v3056 = vunpack.c.l.b16 %v2537
    %v3057 = vunpack.c.l.b16 %v2538
    %v3058 = vunpack.c.l.b16 %v2539
    %v3059 = vunpack.c.l.b16 %v2540
    %v3060 = vunpack.c.l.b16 %v2541
    %v3061 = vunpack.c.l.b16 %v2542
    %v3062 = vunpack.c.l.b16 %v2543
    %v3063 = vunpack.c.l.b16 %v2544
    %v3064 = vunpack.c.l.b16 %v2545
    %v3065 = vunpack.c.l.b16 %v2546
    %v3066 = vunpack.c.l.b16 %v2547
    %v3067 = vunpack.c.l.b16 %v2548
    %v3068 = vunpack.c.l.b16 %v2549
    %v3069 = vunpack.c.l.b16 %v2550
    %v3070 = vunpack.c.l.b16 %v2551
    %v3071 = vunpack.c.l.b16 %v2552
    %v3072 = vunpack.c.l.b16 %v2553
    %v3073 = vunpack.c.l.b16 %v2554
    %v3074 = vpack.c.b16 %v2819, %v2818
    %v3075 = vpack.c.b16 %v2821, %v2820
    %v3076 = vpack.c.b16 %v2823, %v2822
    %v3077 = vpack.c.b16 %v2825, %v2824
    %v3078 = vpack.c.b16 %v2827, %v2826
    %v3079 = vpack.c.b16 %v2829, %v2828
    %v3080 = vpack.c.b16 %v2831, %v2830
    %v3081 = vpack.c.b16 %v2833, %v2832
    %v3082 = vpack.c.b16 %v2835, %v2834
    %v3083 = vpack.c.b16 %v2837, %v2836
    %v3084 = vpack.c.b16 %v2839, %v2838
    %v3085 = vpack.c.b16 %v2841, %v2840
    %v3086 = vpack.c.b16 %v2843, %v2842
    %v3087 = vpack.c.b16 %v2845, %v2844
    %v3088 = vpack.c.b16 %v2847, %v2846
    %v3089 = vpack.c.b16 %v2849, %v2848
    %v3090 = vpack.c.b16 %v2851, %v2850
    %v3091 = vpack.c.b16 %v2853, %v2852
    %v3092 = vpack.c.b16 %v2855, %v2854
    %v3093 = vpack.c.b16 %v2857, %v2856
    %v3094 = vpack.c.b16 %v2859, %v2858
    %v3095 = vpack.c.b16 %v2861, %v2860
    %v3096 = vpack.c.b16 %v2863, %v2862
    %v3097 = vpack.c.b16 %v2865, %v2864
    %v3098 = vpack.c.b16 %v2867, %v2866
    %v3099 = vpack.c.b16 %v2869, %v2868
    %v3100 = vpack.c.b16 %v2871, %v2870
    %v3101 = vpack.c.b16 %v2873, %v2872
    %v3102 = vpack.c.b16 %v2875, %v2874
    %v3103 = vpack.c.b16 %v2877, %v2876
    %v3104 = vpack.c.b16 %v2879, %v2878
    %v3105 = vpack.c.b16 %v2881, %v2880
    %v3106 = vpack.c.b16 %v2883, %v2882
    %v3107 = vpack.c.b16 %v2885, %v2884
    %v3108 = vpack.c.b16 %v2887, %v2886
    %v3109 = vpack.c.b16 %v2889, %v2888
    %v3110 = vpack.c.b16 %v2891, %v2890
    %v3111 = vpack.c.b16 %v2893, %v2892
    %v3112 = vpack.c.b16 %v2895, %v2894
    %v3113 = vpack.c.b16 %v2897, %v2896
    %v3114 = vpack.c.b16 %v2899, %v2898
    %v3115 = vpack.c.b16 %v2901, %v2900
    %v3116 = vpack.c.b16 %v2903, %v2902
    %v3117 = vpack.c.b16 %v2905, %v2904
    %v3118 = vpack.c.b16 %v2907, %v2906
    %v3119 = vpack.c.b16 %v2909, %v2908
    %v3120 = vpack.c.b16 %v2911, %v2910
    %v3121 = vpack.c.b16 %v2913, %v2912
    %v3122 = vpack.c.b16 %v2915, %v2914
    %v3123 = vpack.c.b16 %v2917, %v2916
    %v3124 = vpack.c.b16 %v2919, %v2918
    %v3125 = vpack.c.b16 %v2921, %v2920
    %v3126 = vpack.c.b16 %v2923, %v2922
    %v3127 = vpack.c.b16 %v2925, %v2924
    %v3128 = vpack.c.b16 %v2927, %v2926
    %v3129 = vpack.c.b16 %v2929, %v2928
    %v3130 = vpack.c.b16 %v2931, %v2930
    %v3131 = vpack.c.b16 %v2933, %v2932
    %v3132 = vpack.c.b16 %v2935, %v2934
    %v3133 = vpack.c.b16 %v2937, %v2936
    %v3134 = vpack.c.b16 %v2939, %v2938
    %v3135 = vpack.c.b16 %v2941, %v2940
    %v3136 = vpack.c.b16 %v2943, %v2942
    %v3137 = vpack.c.b16 %v2945, %v2944
    %v3138 = vpack.c.b16 %v2947, %v2946
    %v3139 = vpack.c.b16 %v2949, %v2948
    %v3140 = vpack.c.b16 %v2951, %v2950
    %v3141 = vpack.c.b16 %v2953, %v2952
    %v3142 = vpack.c.b16 %v2955, %v2954
    %v3143 = vpack.c.b16 %v2957, %v2956
    %v3144 = vpack.c.b16 %v2959, %v2958
    %v3145 = vpack.c.b16 %v2961, %v2960
    %v3146 = vpack.c.b16 %v2963, %v2962
    %v3147 = vpack.c.b16 %v2965, %v2964
    %v3148 = vpack.c.b16 %v2967, %v2966
    %v3149 = vpack.c.b16 %v2969, %v2968
    %v3150 = vpack.c.b16 %v2971, %v2970
    %v3151 = vpack.c.b16 %v2973, %v2972
    %v3152 = vpack.c.b16 %v2975, %v2974
    %v3153 = vpack.c.b16 %v2977, %v2976
    %v3154 = vpack.c.b16 %v2979, %v2978
    %v3155 = vpack.c.b16 %v2981, %v2980
    %v3156 = vpack.c.b16 %v2983, %v2982
    %v3157 = vpack.c.b16 %v2985, %v2984
    %v3158 = vpack.c.b16 %v2987, %v2986
    %v3159 = vpack.c.b16 %v2989, %v2988
    %v3160 = vpack.c.b16 %v2991, %v2990
    %v3161 = vpack.c.b16 %v2993, %v2992
    %v3162 = vpack.c.b16 %v2995, %v2994
    %v3163 = vpack.c.b16 %v2997, %v2996
    %v3164 = vpack.c.b16 %v2999, %v2998
    %v3165 = vpack.c.b16 %v3001, %v3000
    %v3166 = vpack.c.b16 %v3003, %v3002
    %v3167 = vpack.c.b16 %v3005, %v3004
    %v3168 = vpack.c.b16 %v3007, %v3006
    %v3169 = vpack.c.b16 %v3009, %v3008
    %v3170 = vpack.c.b16 %v3011, %v3010
    %v3171 = vpack.c.b16 %v3013, %v3012
    %v3172 = vpack.c.b16 %v3015, %v3014
    %v3173 = vpack.c.b16 %v3017, %v3016
    %v3174 = vpack.c.b16 %v3019, %v3018
    %v3175 = vpack.c.b16 %v3021, %v3020
    %v3176 = vpack.c.b16 %v3023, %v3022
    %v3177 = vpack.c.b16 %v3025, %v3024
    %v3178 = vpack.c.b16 %v3027, %v3026
    %v3179 = vpack.c.b16 %v3029, %v3028
    %v3180 = vpack.c.b16 %v3031, %v3030
    %v3181 = vpack.c.b16 %v3033, %v3032
    %v3182 = vpack.c.b16 %v3035, %v3034
    %v3183 = vpack.c.b16 %v3037, %v3036
    %v3184 = vpack.c.b16 %v3039, %v3038
    %v3185 = vpack.c.b16 %v3041, %v3040
    %v3186 = vpack.c.b16 %v3043, %v3042
    %v3187 = vpack.c.b16 %v3045, %v3044
    %v3188 = vpack.c.b16 %v3047, %v3046
    %v3189 = vpack.c.b16 %v3049, %v3048
    %v3190 = vpack.c.b16 %v3051, %v3050
    %v3191 = vpack.c.b16 %v3053, %v3052
    %v3192 = vpack.c.b16 %v3055, %v3054
    %v3193 = vpack.c.b16 %v3057, %v3056
    %v3194 = vpack.c.b16 %v3059, %v3058
    %v3195 = vpack.c.b16 %v3061, %v3060
    %v3196 = vpack.c.b16 %v3063, %v3062
    %v3197 = vpack.c.b16 %v3065, %v3064
    %v3198 = vpack.c.b16 %v3067, %v3066
    %v3199 = vpack.c.b16 %v3069, %v3068
    %v3200 = vpack.c.b16 %v3071, %v3070
    %v3201 = vpack.c.b16 %v3073, %v3072
    %3330 = vmatprep.subr.bf16.mxu0 0
    %3331 = vmatpush1.bf16.msra.mxu0 %v3074
    %3332 = vmatprep.subr.bf16.mxu0 0
    %3333 = vmatpush1.bf16.msra.mxu0 %v3075
    %3334 = vmatprep.subr.bf16.mxu0 0
    %3335 = vmatpush1.bf16.msra.mxu0 %v3076
    %3336 = vmatprep.subr.bf16.mxu0 0
    %3337 = vmatpush1.bf16.msra.mxu0 %v3077
    %3338 = vmatprep.subr.bf16.mxu0 0
    %3339 = vmatpush1.bf16.msra.mxu0 %v3078
    %3340 = vmatprep.subr.bf16.mxu0 0
    %3341 = vmatpush1.bf16.msra.mxu0 %v3079
    %3342 = vmatprep.subr.bf16.mxu0 0
    %3343 = vmatpush1.bf16.msra.mxu0 %v3080
    %3344 = vmatprep.subr.bf16.mxu0 0
    %3345 = vmatpush1.bf16.msra.mxu0 %v3081
    %3346 = vmatprep.subr.bf16.mxu0 0
    %3347 = vmatpush1.bf16.msra.mxu0 %v3082
    %3348 = vmatprep.subr.bf16.mxu0 0
    %3349 = vmatpush1.bf16.msra.mxu0 %v3083
    %3350 = vmatprep.subr.bf16.mxu0 0
    %3351 = vmatpush1.bf16.msra.mxu0 %v3084
    %3352 = vmatprep.subr.bf16.mxu0 0
    %3353 = vmatpush1.bf16.msra.mxu0 %v3085
    %3354 = vmatprep.subr.bf16.mxu0 0
    %3355 = vmatpush1.bf16.msra.mxu0 %v3086
    %3356 = vmatprep.subr.bf16.mxu0 0
    %3357 = vmatpush1.bf16.msra.mxu0 %v3087
    %3358 = vmatprep.subr.bf16.mxu0 0
    %3359 = vmatpush1.bf16.msra.mxu0 %v3088
    %3360 = vmatprep.subr.bf16.mxu0 0
    %3361 = vmatpush1.bf16.msra.mxu0 %v3089
    %3362 = vmatprep.mubr.bf16.mxu0 %v2268
    %3363 = vmatmul.mubr.bf16.gmra.mrb[0].mxu0 %v2267
    %v3364 = vpop.f32.mrb[0].mxu0
    %v3365 = vadd.f32 %v2560, %v3364
    %v3366 = vpop.f32.mrb[0].mxu0
    %v3367 = vpop.f32.mrb[0].mxu0
    %v3368 = vadd.f32 %v2560, %v3367
    %v3369 = vpop.f32.mrb[0].mxu0
    %3370 = vmatprep.mubr.bf16.mxu0 %v2284
    %3371 = vmatmul.mubr.bf16.gmra.mrb[0].mxu0 %v2283
    %v3372 = vpop.f32.mrb[0].mxu0
    %v3373 = vadd.f32 %v2560, %v3372
    %v3374 = vpop.f32.mrb[0].mxu0
    %v3375 = vpop.f32.mrb[0].mxu0
    %v3376 = vadd.f32 %v2560, %v3375
    %v3377 = vpop.f32.mrb[0].mxu0
    %3378 = vdwg.mxu0
    %3379 = vmatprep.subr.bf16.mxu0 0
    %3380 = vmatpush1.bf16.msra.mxu0 %v3090
    %3381 = vmatprep.subr.bf16.mxu0 0
    %3382 = vmatpush1.bf16.msra.mxu0 %v3091
    %3383 = vmatprep.subr.bf16.mxu0 0
    %3384 = vmatpush1.bf16.msra.mxu0 %v3092
    %3385 = vmatprep.subr.bf16.mxu0 0
    %3386 = vmatpush1.bf16.msra.mxu0 %v3093
    %3387 = vmatprep.subr.bf16.mxu0 0
    %3388 = vmatpush1.bf16.msra.mxu0 %v3094
    %3389 = vmatprep.subr.bf16.mxu0 0
    %3390 = vmatpush1.bf16.msra.mxu0 %v3095
    %3391 = vmatprep.subr.bf16.mxu0 0
    %3392 = vmatpush1.bf16.msra.mxu0 %v3096
    %3393 = vmatprep.subr.bf16.mxu0 0
    %3394 = vmatpush1.bf16.msra.mxu0 %v3097
    %3395 = vmatprep.subr.bf16.mxu0 0
    %3396 = vmatpush1.bf16.msra.mxu0 %v3098
    %3397 = vmatprep.subr.bf16.mxu0 0
    %3398 = vmatpush1.bf16.msra.mxu0 %v3099
    %3399 = vmatprep.subr.bf16.mxu0 0
    %3400 = vmatpush1.bf16.msra.mxu0 %v3100
    %3401 = vmatprep.subr.bf16.mxu0 0
    %3402 = vmatpush1.bf16.msra.mxu0 %v3101
    %3403 = vmatprep.subr.bf16.mxu0 0
    %3404 = vmatpush1.bf16.msra.mxu0 %v3102
    %3405 = vmatprep.subr.bf16.mxu0 0
    %3406 = vmatpush1.bf16.msra.mxu0 %v3103
    %3407 = vmatprep.subr.bf16.mxu0 0
    %3408 = vmatpush1.bf16.msra.mxu0 %v3104
    %3409 = vmatprep.subr.bf16.mxu0 0
    %3410 = vmatpush1.bf16.msra.mxu0 %v3105
    %3411 = vmatprep.mubr.bf16.mxu0 %v2270
    %3412 = vmatmul.mubr.bf16.gmra.mrb[0].mxu0 %v2269
    %v3413 = vpop.f32.mrb[0].mxu0
    %v3414 = vadd.f32 %v3365, %v3413
    %v3415 = vpop.f32.mrb[0].mxu0
    %v3416 = vpop.f32.mrb[0].mxu0
    %v3417 = vadd.f32 %v3368, %v3416
    %v3418 = vpop.f32.mrb[0].mxu0
    %3419 = vmatprep.mubr.bf16.mxu0 %v2286
    %3420 = vmatmul.mubr.bf16.gmra.mrb[0].mxu0 %v2285
    %v3421 = vpop.f32.mrb[0].mxu0
    %v3422 = vadd.f32 %v3373, %v3421
    %v3423 = vpop.f32.mrb[0].mxu0
    %v3424 = vpop.f32.mrb[0].mxu0
    %v3425 = vadd.f32 %v3376, %v3424
    %v3426 = vpop.f32.mrb[0].mxu0
    %3427 = vdwg.mxu0
    %3428 = vmatprep.subr.bf16.mxu0 0
    %3429 = vmatpush1.bf16.msra.mxu0 %v3106
    %3430 = vmatprep.subr.bf16.mxu0 0
    %3431 = vmatpush1.bf16.msra.mxu0 %v3107
    %3432 = vmatprep.subr.bf16.mxu0 0
    %3433 = vmatpush1.bf16.msra.mxu0 %v3108
    %3434 = vmatprep.subr.bf16.mxu0 0
    %3435 = vmatpush1.bf16.msra.mxu0 %v3109
    %3436 = vmatprep.subr.bf16.mxu0 0
    %3437 = vmatpush1.bf16.msra.mxu0 %v3110
    %3438 = vmatprep.subr.bf16.mxu0 0
    %3439 = vmatpush1.bf16.msra.mxu0 %v3111
    %3440 = vmatprep.subr.bf16.mxu0 0
    %3441 = vmatpush1.bf16.msra.mxu0 %v3112
    %3442 = vmatprep.subr.bf16.mxu0 0
    %3443 = vmatpush1.bf16.msra.mxu0 %v3113
    %3444 = vmatprep.subr.bf16.mxu0 0
    %3445 = vmatpush1.bf16.msra.mxu0 %v3114
    %3446 = vmatprep.subr.bf16.mxu0 0
    %3447 = vmatpush1.bf16.msra.mxu0 %v3115
    %3448 = vmatprep.subr.bf16.mxu0 0
    %3449 = vmatpush1.bf16.msra.mxu0 %v3116
    %3450 = vmatprep.subr.bf16.mxu0 0
    %3451 = vmatpush1.bf16.msra.mxu0 %v3117
    %3452 = vmatprep.subr.bf16.mxu0 0
    %3453 = vmatpush1.bf16.msra.mxu0 %v3118
    %3454 = vmatprep.subr.bf16.mxu0 0
    %3455 = vmatpush1.bf16.msra.mxu0 %v3119
    %3456 = vmatprep.subr.bf16.mxu0 0
    %3457 = vmatpush1.bf16.msra.mxu0 %v3120
    %3458 = vmatprep.subr.bf16.mxu0 0
    %3459 = vmatpush1.bf16.msra.mxu0 %v3121
    %3460 = vmatprep.mubr.bf16.mxu0 %v2272
    %3461 = vmatmul.mubr.bf16.gmra.mrb[0].mxu0 %v2271
    %v3462 = vpop.f32.mrb[0].mxu0
    %v3463 = vadd.f32 %v3414, %v3462
    %v3464 = vpop.f32.mrb[0].mxu0
    %v3465 = vpop.f32.mrb[0].mxu0
    %v3466 = vadd.f32 %v3417, %v3465
    %v3467 = vpop.f32.mrb[0].mxu0
    %3468 = vmatprep.mubr.bf16.mxu0 %v2288
    %3469 = vmatmul.mubr.bf16.gmra.mrb[0].mxu0 %v2287
    %v3470 = vpop.f32.mrb[0].mxu0
    %v3471 = vadd.f32 %v3422, %v3470
    %v3472 = vpop.f32.mrb[0].mxu0
    %v3473 = vpop.f32.mrb[0].mxu0
    %v3474 = vadd.f32 %v3425, %v3473
    %v3475 = vpop.f32.mrb[0].mxu0
    %3476 = vdwg.mxu0
    %3477 = vmatprep.subr.bf16.mxu0 0
    %3478 = vmatpush1.bf16.msra.mxu0 %v3122
    %3479 = vmatprep.subr.bf16.mxu0 0
    %3480 = vmatpush1.bf16.msra.mxu0 %v3123
    %3481 = vmatprep.subr.bf16.mxu0 0
    %3482 = vmatpush1.bf16.msra.mxu0 %v3124
    %3483 = vmatprep.subr.bf16.mxu0 0
    %3484 = vmatpush1.bf16.msra.mxu0 %v3125
    %3485 = vmatprep.subr.bf16.mxu0 0
    %3486 = vmatpush1.bf16.msra.mxu0 %v3126
    %3487 = vmatprep.subr.bf16.mxu0 0
    %3488 = vmatpush1.bf16.msra.mxu0 %v3127
    %3489 = vmatprep.subr.bf16.mxu0 0
    %3490 = vmatpush1.bf16.msra.mxu0 %v3128
    %3491 = vmatprep.subr.bf16.mxu0 0
    %3492 = vmatpush1.bf16.msra.mxu0 %v3129
    %3493 = vmatprep.subr.bf16.mxu0 0
    %3494 = vmatpush1.bf16.msra.mxu0 %v3130
    %3495 = vmatprep.subr.bf16.mxu0 0
    %3496 = vmatpush1.bf16.msra.mxu0 %v3131
    %3497 = vmatprep.subr.bf16.mxu0 0
    %3498 = vmatpush1.bf16.msra.mxu0 %v3132
    %3499 = vmatprep.subr.bf16.mxu0 0
    %3500 = vmatpush1.bf16.msra.mxu0 %v3133
    %3501 = vmatprep.subr.bf16.mxu0 0
    %3502 = vmatpush1.bf16.msra.mxu0 %v3134
    %3503 = vmatprep.subr.bf16.mxu0 0
    %3504 = vmatpush1.bf16.msra.mxu0 %v3135
    %3505 = vmatprep.subr.bf16.mxu0 0
    %3506 = vmatpush1.bf16.msra.mxu0 %v3136
    %3507 = vmatprep.subr.bf16.mxu0 0
    %3508 = vmatpush1.bf16.msra.mxu0 %v3137
    %3509 = vmatprep.mubr.bf16.mxu0 %v2274
    %3510 = vmatmul.mubr.bf16.gmra.mrb[0].mxu0 %v2273
    %v3511 = vpop.f32.mrb[0].mxu0
    %v3512 = vadd.f32 %v3463, %v3511
    %v3513 = vpop.f32.mrb[0].mxu0
    %v3514 = vpop.f32.mrb[0].mxu0
    %v3515 = vadd.f32 %v3466, %v3514
    %v3516 = vpop.f32.mrb[0].mxu0
    %3517 = vmatprep.mubr.bf16.mxu0 %v2290
    %3518 = vmatmul.mubr.bf16.gmra.mrb[0].mxu0 %v2289
    %v3519 = vpop.f32.mrb[0].mxu0
    %v3520 = vadd.f32 %v3471, %v3519
    %v3521 = vpop.f32.mrb[0].mxu0
    %v3522 = vpop.f32.mrb[0].mxu0
    %v3523 = vadd.f32 %v3474, %v3522
    %v3524 = vpop.f32.mrb[0].mxu0
    %3525 = vdwg.mxu0
    %3526 = vmatprep.subr.bf16.mxu0 0
    %3527 = vmatpush1.bf16.msra.mxu0 %v3138
    %3528 = vmatprep.subr.bf16.mxu0 0
    %3529 = vmatpush1.bf16.msra.mxu0 %v3139
    %3530 = vmatprep.subr.bf16.mxu0 0
    %3531 = vmatpush1.bf16.msra.mxu0 %v3140
    %3532 = vmatprep.subr.bf16.mxu0 0
    %3533 = vmatpush1.bf16.msra.mxu0 %v3141
    %3534 = vmatprep.subr.bf16.mxu0 0
    %3535 = vmatpush1.bf16.msra.mxu0 %v3142
    %3536 = vmatprep.subr.bf16.mxu0 0
    %3537 = vmatpush1.bf16.msra.mxu0 %v3143
    %3538 = vmatprep.subr.bf16.mxu0 0
    %3539 = vmatpush1.bf16.msra.mxu0 %v3144
    %3540 = vmatprep.subr.bf16.mxu0 0
    %3541 = vmatpush1.bf16.msra.mxu0 %v3145
    %3542 = vmatprep.subr.bf16.mxu0 0
    %3543 = vmatpush1.bf16.msra.mxu0 %v3146
    %3544 = vmatprep.subr.bf16.mxu0 0
    %3545 = vmatpush1.bf16.msra.mxu0 %v3147
    %3546 = vmatprep.subr.bf16.mxu0 0
    %3547 = vmatpush1.bf16.msra.mxu0 %v3148
    %3548 = vmatprep.subr.bf16.mxu0 0
    %3549 = vmatpush1.bf16.msra.mxu0 %v3149
    %3550 = vmatprep.subr.bf16.mxu0 0
    %3551 = vmatpush1.bf16.msra.mxu0 %v3150
    %3552 = vmatprep.subr.bf16.mxu0 0
    %3553 = vmatpush1.bf16.msra.mxu0 %v3151
    %3554 = vmatprep.subr.bf16.mxu0 0
    %3555 = vmatpush1.bf16.msra.mxu0 %v3152
    %3556 = vmatprep.subr.bf16.mxu0 0
    %3557 = vmatpush1.bf16.msra.mxu0 %v3153
    %3558 = vmatprep.mubr.bf16.mxu0 %v2276
    %3559 = vmatmul.mubr.bf16.gmra.mrb[0].mxu0 %v2275
    %v3560 = vpop.f32.mrb[0].mxu0
    %v3561 = vadd.f32 %v3512, %v3560
    %v3562 = vpop.f32.mrb[0].mxu0
    %v3563 = vpop.f32.mrb[0].mxu0
    %v3564 = vadd.f32 %v3515, %v3563
    %v3565 = vpop.f32.mrb[0].mxu0
    %3566 = vmatprep.mubr.bf16.mxu0 %v2292
    %3567 = vmatmul.mubr.bf16.gmra.mrb[0].mxu0 %v2291
    %v3568 = vpop.f32.mrb[0].mxu0
    %v3569 = vadd.f32 %v3520, %v3568
    %v3570 = vpop.f32.mrb[0].mxu0
    %v3571 = vpop.f32.mrb[0].mxu0
    %v3572 = vadd.f32 %v3523, %v3571
    %v3573 = vpop.f32.mrb[0].mxu0
    %3574 = vdwg.mxu0
    %3575 = vmatprep.subr.bf16.mxu0 0
    %3576 = vmatpush1.bf16.msra.mxu0 %v3154
    %3577 = vmatprep.subr.bf16.mxu0 0
    %3578 = vmatpush1.bf16.msra.mxu0 %v3155
    %3579 = vmatprep.subr.bf16.mxu0 0
    %3580 = vmatpush1.bf16.msra.mxu0 %v3156
    %3581 = vmatprep.subr.bf16.mxu0 0
    %3582 = vmatpush1.bf16.msra.mxu0 %v3157
    %3583 = vmatprep.subr.bf16.mxu0 0
    %3584 = vmatpush1.bf16.msra.mxu0 %v3158
    %3585 = vmatprep.subr.bf16.mxu0 0
    %3586 = vmatpush1.bf16.msra.mxu0 %v3159
    %3587 = vmatprep.subr.bf16.mxu0 0
    %3588 = vmatpush1.bf16.msra.mxu0 %v3160
    %3589 = vmatprep.subr.bf16.mxu0 0
    %3590 = vmatpush1.bf16.msra.mxu0 %v3161
    %3591 = vmatprep.subr.bf16.mxu0 0
    %3592 = vmatpush1.bf16.msra.mxu0 %v3162
    %3593 = vmatprep.subr.bf16.mxu0 0
    %3594 = vmatpush1.bf16.msra.mxu0 %v3163
    %3595 = vmatprep.subr.bf16.mxu0 0
    %3596 = vmatpush1.bf16.msra.mxu0 %v3164
    %3597 = vmatprep.subr.bf16.mxu0 0
    %3598 = vmatpush1.bf16.msra.mxu0 %v3165
    %3599 = vmatprep.subr.bf16.mxu0 0
    %3600 = vmatpush1.bf16.msra.mxu0 %v3166
    %3601 = vmatprep.subr.bf16.mxu0 0
    %3602 = vmatpush1.bf16.msra.mxu0 %v3167
    %3603 = vmatprep.subr.bf16.mxu0 0
    %3604 = vmatpush1.bf16.msra.mxu0 %v3168
    %3605 = vmatprep.subr.bf16.mxu0 0
    %3606 = vmatpush1.bf16.msra.mxu0 %v3169
    %3607 = vmatprep.mubr.bf16.mxu0 %v2278
    %3608 = vmatmul.mubr.bf16.gmra.mrb[0].mxu0 %v2277
    %v3609 = vpop.f32.mrb[0].mxu0
    %v3610 = vadd.f32 %v3561, %v3609
    %v3611 = vpop.f32.mrb[0].mxu0
    %v3612 = vpop.f32.mrb[0].mxu0
    %v3613 = vadd.f32 %v3564, %v3612
    %v3614 = vpop.f32.mrb[0].mxu0
    %3615 = vmatprep.mubr.bf16.mxu0 %v2294
    %3616 = vmatmul.mubr.bf16.gmra.mrb[0].mxu0 %v2293
    %v3617 = vpop.f32.mrb[0].mxu0
    %v3618 = vadd.f32 %v3569, %v3617
    %v3619 = vpop.f32.mrb[0].mxu0
    %v3620 = vpop.f32.mrb[0].mxu0
    %v3621 = vadd.f32 %v3572, %v3620
    %v3622 = vpop.f32.mrb[0].mxu0
    %3623 = vdwg.mxu0
    %3624 = vmatprep.subr.bf16.mxu0 0
    %3625 = vmatpush1.bf16.msra.mxu0 %v3170
    %3626 = vmatprep.subr.bf16.mxu0 0
    %3627 = vmatpush1.bf16.msra.mxu0 %v3171
    %3628 = vmatprep.subr.bf16.mxu0 0
    %3629 = vmatpush1.bf16.msra.mxu0 %v3172
    %3630 = vmatprep.subr.bf16.mxu0 0
    %3631 = vmatpush1.bf16.msra.mxu0 %v3173
    %3632 = vmatprep.subr.bf16.mxu0 0
    %3633 = vmatpush1.bf16.msra.mxu0 %v3174
    %3634 = vmatprep.subr.bf16.mxu0 0
    %3635 = vmatpush1.bf16.msra.mxu0 %v3175
    %3636 = vmatprep.subr.bf16.mxu0 0
    %3637 = vmatpush1.bf16.msra.mxu0 %v3176
    %3638 = vmatprep.subr.bf16.mxu0 0
    %3639 = vmatpush1.bf16.msra.mxu0 %v3177
    %3640 = vmatprep.subr.bf16.mxu0 0
    %3641 = vmatpush1.bf16.msra.mxu0 %v3178
    %3642 = vmatprep.subr.bf16.mxu0 0
    %3643 = vmatpush1.bf16.msra.mxu0 %v3179
    %3644 = vmatprep.subr.bf16.mxu0 0
    %3645 = vmatpush1.bf16.msra.mxu0 %v3180
    %3646 = vmatprep.subr.bf16.mxu0 0
    %3647 = vmatpush1.bf16.msra.mxu0 %v3181
    %3648 = vmatprep.subr.bf16.mxu0 0
    %3649 = vmatpush1.bf16.msra.mxu0 %v3182
    %3650 = vmatprep.subr.bf16.mxu0 0
    %3651 = vmatpush1.bf16.msra.mxu0 %v3183
    %3652 = vmatprep.subr.bf16.mxu0 0
    %3653 = vmatpush1.bf16.msra.mxu0 %v3184
    %3654 = vmatprep.subr.bf16.mxu0 0
    %3655 = vmatpush1.bf16.msra.mxu0 %v3185
    %3656 = vmatprep.mubr.bf16.mxu0 %v2280
    %3657 = vmatmul.mubr.bf16.gmra.mrb[0].mxu0 %v2279
    %v3658 = vpop.f32.mrb[0].mxu0
    %v3659 = vadd.f32 %v3610, %v3658
    %v3660 = vpop.f32.mrb[0].mxu0
    %v3661 = vpop.f32.mrb[0].mxu0
    %v3662 = vadd.f32 %v3613, %v3661
    %v3663 = vpop.f32.mrb[0].mxu0
    %3664 = vmatprep.mubr.bf16.mxu0 %v2296
    %3665 = vmatmul.mubr.bf16.gmra.mrb[0].mxu0 %v2295
    %v3666 = vpop.f32.mrb[0].mxu0
    %v3667 = vadd.f32 %v3618, %v3666
    %v3668 = vpop.f32.mrb[0].mxu0
    %v3669 = vpop.f32.mrb[0].mxu0
    %v3670 = vadd.f32 %v3621, %v3669
    %v3671 = vpop.f32.mrb[0].mxu0
    %3672 = vdwg.mxu0
    %3673 = vmatprep.subr.bf16.mxu0 0
    %3674 = vmatpush1.bf16.msra.mxu0 %v3186
    %3675 = vmatprep.subr.bf16.mxu0 0
    %3676 = vmatpush1.bf16.msra.mxu0 %v3187
    %3677 = vmatprep.subr.bf16.mxu0 0
    %3678 = vmatpush1.bf16.msra.mxu0 %v3188
    %3679 = vmatprep.subr.bf16.mxu0 0
    %3680 = vmatpush1.bf16.msra.mxu0 %v3189
    %3681 = vmatprep.subr.bf16.mxu0 0
    %3682 = vmatpush1.bf16.msra.mxu0 %v3190
    %3683 = vmatprep.subr.bf16.mxu0 0
    %3684 = vmatpush1.bf16.msra.mxu0 %v3191
    %3685 = vmatprep.subr.bf16.mxu0 0
    %3686 = vmatpush1.bf16.msra.mxu0 %v3192
    %3687 = vmatprep.subr.bf16.mxu0 0
    %3688 = vmatpush1.bf16.msra.mxu0 %v3193
    %3689 = vmatprep.subr.bf16.mxu0 0
    %3690 = vmatpush1.bf16.msra.mxu0 %v3194
    %3691 = vmatprep.subr.bf16.mxu0 0
    %3692 = vmatpush1.bf16.msra.mxu0 %v3195
    %3693 = vmatprep.subr.bf16.mxu0 0
    %3694 = vmatpush1.bf16.msra.mxu0 %v3196
    %3695 = vmatprep.subr.bf16.mxu0 0
    %3696 = vmatpush1.bf16.msra.mxu0 %v3197
    %3697 = vmatprep.subr.bf16.mxu0 0
    %3698 = vmatpush1.bf16.msra.mxu0 %v3198
    %3699 = vmatprep.subr.bf16.mxu0 0
    %3700 = vmatpush1.bf16.msra.mxu0 %v3199
    %3701 = vmatprep.subr.bf16.mxu0 0
    %3702 = vmatpush1.bf16.msra.mxu0 %v3200
    %3703 = vmatprep.subr.bf16.mxu0 0
    %3704 = vmatpush1.bf16.msra.mxu0 %v3201
    %3705 = vmatprep.mubr.bf16.mxu0 %v2282
    %3706 = vmatmul.mubr.bf16.gmra.mrb[0].mxu0 %v2281
    %v3707 = vpop.f32.mrb[0].mxu0
    %v3708 = vadd.f32 %v3659, %v3707
    %v3709 = vpop.f32.mrb[0].mxu0
    %v3710 = vpop.f32.mrb[0].mxu0
    %v3711 = vadd.f32 %v3662, %v3710
    %v3712 = vpop.f32.mrb[0].mxu0
    %3713 = vmatprep.mubr.bf16.mxu0 %v2298
    %3714 = vmatmul.mubr.bf16.gmra.mrb[0].mxu0 %v2297
    %v3715 = vpop.f32.mrb[0].mxu0
    %v3716 = vadd.f32 %v3667, %v3715
    %v3717 = vpop.f32.mrb[0].mxu0
    %v3718 = vpop.f32.mrb[0].mxu0
    %v3719 = vadd.f32 %v3670, %v3718
    %v3720 = vpop.f32.mrb[0].mxu0
    %3721 = vdwg.mxu0
    %v3722 = vadd.f32 %v1321, %v3708
    %v3723 = vadd.f32 %v1322, %v3711
    %v3724 = vadd.f32 %v1323, %v3716
    %v3725 = vadd.f32 %v1324, %v3719
    %s3726 = scalar_lea.vmem %s6, 1
    %v3727 = vld [vmem:[%s3726] sm:$0x1]
    %s3728 = scalar_lea.vmem %s7, 1
    %v3729 = vld [vmem:[%s3728] sm:$0x1]
    %v3730 = vsel %vm68, %v3722, 0.0
    %3731 = vadd.xlane.f32.xlu0 %v3730
    %v3732 = vpop.xlane.xlu0 %3731
    %v3733 = vsel %vm68, %v3723, 0.0
    %3734 = vadd.xlane.f32.xlu0 %v3733
    %v3735 = vpop.xlane.xlu0 %3734
    %v3736 = vsel %vm68, %v3724, 0.0
    %3737 = vadd.xlane.f32.xlu0 %v3736
    %v3738 = vpop.xlane.xlu0 %3737
    %v3739 = vsel %vm68, %v3725, 0.0
    %3740 = vadd.xlane.f32.xlu0 %v3739
    %v3741 = vpop.xlane.xlu0 %3740
    %v3742 = vmul.f32 %v3732, %v81
    %v3743 = vmul.f32 %v3735, %v81
    %v3744 = vmul.f32 %v3738, %v81
    %v3745 = vmul.f32 %v3741, %v81
    %v3746 = vsub.f32 %v3722, %v3742
    %v3747 = vsub.f32 %v3723, %v3743
    %v3748 = vsub.f32 %v3724, %v3744
    %v3749 = vsub.f32 %v3725, %v3745
    %v3750 = vmul.f32 %v3746, %v3746
    %v3751 = vmul.f32 %v3747, %v3747
    %v3752 = vmul.f32 %v3748, %v3748
    %v3753 = vmul.f32 %v3749, %v3749
    %v3754 = vsel %vm68, %v3750, 0.0
    %3755 = vadd.xlane.f32.xlu0 %v3754
    %v3756 = vpop.xlane.xlu0 %3755
    %v3757 = vsel %vm68, %v3751, 0.0
    %3758 = vadd.xlane.f32.xlu0 %v3757
    %v3759 = vpop.xlane.xlu0 %3758
    %v3760 = vsel %vm68, %v3752, 0.0
    %3761 = vadd.xlane.f32.xlu0 %v3760
    %v3762 = vpop.xlane.xlu0 %3761
    %v3763 = vsel %vm68, %v3753, 0.0
    %3764 = vadd.xlane.f32.xlu0 %v3763
    %v3765 = vpop.xlane.xlu0 %3764
    %v3766 = vmul.f32 %v3756, %v81
    %v3767 = vmul.f32 %v3759, %v81
    %v3768 = vmul.f32 %v3762, %v81
    %v3769 = vmul.f32 %v3765, %v81
    %v3770 = vadd.f32 %v3766, 1e-05
    %v3771 = vadd.f32 %v3767, 1e-05
    %v3772 = vadd.f32 %v3768, 1e-05
    %v3773 = vadd.f32 %v3769, 1e-05
    %v3774 = vrsqrt.pop %v3770
    %v3775 = vrsqrt.pop %v3771
    %v3776 = vrsqrt.pop %v3772
    %v3777 = vrsqrt.pop %v3773
    %v3778 = vmul.f32 %v3746, %v3774
    %v3779 = vmul.f32 %v3747, %v3775
    %v3780 = vmul.f32 %v3748, %v3776
    %v3781 = vmul.f32 %v3749, %v3777
    %v3783 = vlaneseq
    %v3784 = vshrl.u32 %v3783, 7
    %v3785 = vsub.s32 0, %v3784
    %v3786 = vrot.slane %v3727, %v3785
    %v3788 = vmul.f32 %v3778, %v3786
    %v3789 = vmul.f32 %v3779, %v3786
    %v3790 = vmul.f32 %v3780, %v3786
    %v3791 = vmul.f32 %v3781, %v3786
    %v3793 = vlaneseq
    %v3794 = vshrl.u32 %v3793, 7
    %v3795 = vsub.s32 0, %v3794
    %v3796 = vrot.slane %v3729, %v3795
    %v3798 = vadd.f32 %v3788, %v3796
    %v3799 = vadd.f32 %v3789, %v3796
    %v3800 = vadd.f32 %v3790, %v3796
    %v3801 = vadd.f32 %v3791, %v3796
    %v3802 = vpack.c.bf16 %v3799, %v3798
    %v3803 = vpack.c.bf16 %v3801, %v3800
    %s3804 = scalar_lea.vmem %s2, 20
    %v3805 = vld [vmem:[%s3804] sm:$0xf]
    %v3806 = vld [vmem:[%s3804 + $0x4] sm:$0xf]
    %v3807 = vld [vmem:[%s3804 + $0x8] sm:$0xf]
    %v3808 = vld [vmem:[%s3804 + $0xc] sm:$0xf]
    %v3809 = vld [vmem:[%s3804 + $0x10] sm:$0xf]
    %s3810 = scalar_lea.vmem %s3, 1
    %v3811 = vld [vmem:[%s3810] sm:$0x1]
    %v3813 = vlaneseq
    %v3814 = vshrl.u32 %v3813, 7
    %v3815 = vsub.s32 0, %v3814
    %v3816 = vrot.slane %v3811, %v3815
    %v3823 = vunpack.c.l.b16 %v3805
    %v3824 = vunpack.c.l.b16 %v3806
    %v3825 = vunpack.c.l.b16 %v3807
    %v3826 = vunpack.c.l.b16 %v3808
    %v3827 = vunpack.c.l.b16 %v3809
    %v3828 = vpack.c.b16 %v3824, %v3823
    %v3829 = vpack.c.b16 %v3826, %v3825
    %v3830 = vpack.c.b16 %v3827, %v3827
    %v3834 = vsel %vm68, %v3802, 0
    %v3837 = vsel %vm68, %v3803, 0
    %v3840 = vsel %vm177, %v3830, 0
    %3842 = vmatprep.subr.bf16.mxu0 0
    %3843 = vmatpush1.bf16.msra.mxu0 %v3828
    %3844 = vmatprep.subr.bf16.mxu0 0
    %3845 = vmatpush1.bf16.msra.mxu0 %v3829
    %3846 = vmatprep.subr.bf16.mxu0 0
    %3847 = vmatpush1.bf16.msra.mxu0 %v3840
    %3848 = vmatprep.subr.bf16.mxu0 0
    %3849 = vmatpush1.bf16.msra.mxu0 0
    %3850 = vmatprep.subr.bf16.mxu0 0
    %3851 = vmatpush1.bf16.msra.mxu0 0
    %3852 = vmatprep.subr.bf16.mxu0 0
    %3853 = vmatpush1.bf16.msra.mxu0 0
    %3854 = vmatprep.subr.bf16.mxu0 0
    %3855 = vmatpush1.bf16.msra.mxu0 0
    %3856 = vmatprep.subr.bf16.mxu0 0
    %3857 = vmatpush1.bf16.msra.mxu0 0
    %3858 = vmatprep.subr.bf16.mxu0 0
    %3859 = vmatpush1.bf16.msra.mxu0 0
    %3860 = vmatprep.subr.bf16.mxu0 0
    %3861 = vmatpush1.bf16.msra.mxu0 0
    %3862 = vmatprep.subr.bf16.mxu0 0
    %3863 = vmatpush1.bf16.msra.mxu0 0
    %3864 = vmatprep.subr.bf16.mxu0 0
    %3865 = vmatpush1.bf16.msra.mxu0 0
    %3866 = vmatprep.subr.bf16.mxu0 0
    %3867 = vmatpush1.bf16.msra.mxu0 0
    %3868 = vmatprep.subr.bf16.mxu0 0
    %3869 = vmatpush1.bf16.msra.mxu0 0
    %3870 = vmatprep.subr.bf16.mxu0 0
    %3871 = vmatpush1.bf16.msra.mxu0 0
    %3872 = vmatprep.subr.bf16.mxu0 0
    %3873 = vmatpush1.bf16.msra.mxu0 0
    %3874 = vmatprep.mubr.bf16.mxu0 0
    %3875 = vmatmul.mubr.bf16.gmra.mrb[0].mxu0 %v3834
    %v3876 = vpop.f32.mrb[0].mxu0
    %v3877 = vadd.f32 %v3816, %v3876
    %v3878 = vpop.f32.mrb[0].mxu0
    %v3879 = vpop.f32.mrb[0].mxu0
    %v3880 = vadd.f32 %v3816, %v3879
    %v3881 = vpop.f32.mrb[0].mxu0
    %3882 = vmatprep.mubr.bf16.mxu0 0
    %3883 = vmatmul.mubr.bf16.gmra.mrb[0].mxu0 %v3837
    %v3884 = vpop.f32.mrb[0].mxu0
    %v3885 = vadd.f32 %v3816, %v3884
    %v3886 = vpop.f32.mrb[0].mxu0
    %v3887 = vpop.f32.mrb[0].mxu0
    %v3888 = vadd.f32 %v3816, %v3887
    %v3889 = vpop.f32.mrb[0].mxu0
    %3890 = vdwg.mxu0
    %v3891 = vpack.c.bf16 %v3880, %v3877
    %v3892 = vpack.c.bf16 %v3888, %v3885
    %3895 = vrot.lane.b32.xlu0 %v3891, 104
    %v3896 = vpop.permute.xlu0 %3895
    %3897 = vrot.lane.b32.xlu0 %v3892, 104
    %v3898 = vpop.permute.xlu0 %3897
    %3899 = vrot.lane.b32.xlu0 %v3891, 80
    %v3900 = vpop.permute.xlu0 %3899
    %3901 = vrot.lane.b32.xlu0 %v3892, 80
    %v3902 = vpop.permute.xlu0 %3901
    %3903 = vrot.lane.b32.xlu0 %v3891, 56
    %v3904 = vpop.permute.xlu0 %3903
    %3905 = vrot.lane.b32.xlu0 %v3892, 56
    %v3906 = vpop.permute.xlu0 %3905
    %3907 = vrot.lane.b32.xlu0 %v3891, 32
    %v3908 = vpop.permute.xlu0 %3907
    %3909 = vrot.lane.b32.xlu0 %v3892, 32
    %v3910 = vpop.permute.xlu0 %3909
    %3911 = vrot.lane.b32.xlu0 %v3891, 120
    %v3912 = vpop.permute.xlu0 %3911
    %3913 = vrot.lane.b32.xlu0 %v3892, 120
    %v3914 = vpop.permute.xlu0 %3913
    %v3916 = vsel %vm254, %v3891, 0
    %v3919 = vsel %vm254, %v3892, 0
    %v3922 = vsel %vm254, %v3912, 0
    %v3925 = vsel %vm254, %v3914, 0
    %3927 = vmatprep.subr.bf16.mxu0 0
    %3928 = vmatpush1.bf16.xpose.msra.mxu0 %v3922
    %3929 = vmatprep.subr.bf16.mxu0 0
    %3930 = vmatpush1.bf16.xpose.msra.mxu0 %v3925
    %3931 = vmatprep.subr.bf16.mxu0 0
    %3932 = vmatpush1.bf16.xpose.msra.mxu0 0
    %3933 = vmatprep.subr.bf16.mxu0 0
    %3934 = vmatpush1.bf16.xpose.msra.mxu0 0
    %3935 = vmatprep.subr.bf16.mxu0 0
    %3936 = vmatpush1.bf16.xpose.msra.mxu0 0
    %3937 = vmatprep.subr.bf16.mxu0 0
    %3938 = vmatpush1.bf16.xpose.msra.mxu0 0
    %3939 = vmatprep.subr.bf16.mxu0 0
    %3940 = vmatpush1.bf16.xpose.msra.mxu0 0
    %3941 = vmatprep.subr.bf16.mxu0 0
    %3942 = vmatpush1.bf16.xpose.msra.mxu0 0
    %3943 = vmatprep.subr.bf16.mxu0 0
    %3944 = vmatpush1.bf16.xpose.msra.mxu0 0
    %3945 = vmatprep.subr.bf16.mxu0 0
    %3946 = vmatpush1.bf16.xpose.msra.mxu0 0
    %3947 = vmatprep.subr.bf16.mxu0 0
    %3948 = vmatpush1.bf16.xpose.msra.mxu0 0
    %3949 = vmatprep.subr.bf16.mxu0 0
    %3950 = vmatpush1.bf16.xpose.msra.mxu0 0
    %3951 = vmatprep.subr.bf16.mxu0 0
    %3952 = vmatpush1.bf16.xpose.msra.mxu0 0
    %3953 = vmatprep.subr.bf16.mxu0 0
    %3954 = vmatpush1.bf16.xpose.msra.mxu0 0
    %3955 = vmatprep.subr.bf16.mxu0 0
    %3956 = vmatpush1.bf16.xpose.msra.mxu0 0
    %3957 = vmatprep.subr.bf16.mxu0 0
    %3958 = vmatpush1.bf16.xpose.msra.mxu0 0
    %3959 = vmatprep.mubr.bf16.mxu0 0
    %3960 = vmatmul.mubr.bf16.gmra.mrb[0].mxu0 %v3916
    %v3961 = vpop.f32.mrb[0].mxu0
    %v3962 = vadd.f32 0.0, %v3961
    %v3963 = vpop.f32.mrb[0].mxu0
    %v3964 = vpop.f32.mrb[0].mxu0
    %v3965 = vadd.f32 0.0, %v3964
    %v3966 = vpop.f32.mrb[0].mxu0
    %3967 = vmatprep.mubr.bf16.mxu0 0
    %3968 = vmatmul.mubr.bf16.gmra.mrb[0].mxu0 %v3919
    %v3969 = vpop.f32.mrb[0].mxu0
    %v3970 = vadd.f32 0.0, %v3969
    %v3971 = vpop.f32.mrb[0].mxu0
    %v3972 = vpop.f32.mrb[0].mxu0
    %v3973 = vadd.f32 0.0, %v3972
    %v3974 = vpop.f32.mrb[0].mxu0
    %3975 = vdwg.mxu0
    %3976 = vrot.lane.b32.xlu0 %v3896, 120
    %v3977 = vpop.permute.xlu0 %3976
    %3978 = vrot.lane.b32.xlu0 %v3898, 120
    %v3979 = vpop.permute.xlu0 %3978
    %v3981 = vsel %vm254, %v3896, 0
    %v3984 = vsel %vm254, %v3898, 0
    %v3987 = vsel %vm254, %v3977, 0
    %v3990 = vsel %vm254, %v3979, 0
    %3992 = vmatprep.subr.bf16.mxu0 0
    %3993 = vmatpush1.bf16.xpose.msra.mxu0 %v3987
    %3994 = vmatprep.subr.bf16.mxu0 0
    %3995 = vmatpush1.bf16.xpose.msra.mxu0 %v3990
    %3996 = vmatprep.subr.bf16.mxu0 0
    %3997 = vmatpush1.bf16.xpose.msra.mxu0 0
    %3998 = vmatprep.subr.bf16.mxu0 0
    %3999 = vmatpush1.bf16.xpose.msra.mxu0 0
    %4000 = vmatprep.subr.bf16.mxu0 0
    %4001 = vmatpush1.bf16.xpose.msra.mxu0 0
    %4002 = vmatprep.subr.bf16.mxu0 0
    %4003 = vmatpush1.bf16.xpose.msra.mxu0 0
    %4004 = vmatprep.subr.bf16.mxu0 0
    %4005 = vmatpush1.bf16.xpose.msra.mxu0 0
    %4006 = vmatprep.subr.bf16.mxu0 0
    %4007 = vmatpush1.bf16.xpose.msra.mxu0 0
    %4008 = vmatprep.subr.bf16.mxu0 0
    %4009 = vmatpush1.bf16.xpose.msra.mxu0 0
    %4010 = vmatprep.subr.bf16.mxu0 0
    %4011 = vmatpush1.bf16.xpose.msra.mxu0 0
    %4012 = vmatprep.subr.bf16.mxu0 0
    %4013 = vmatpush1.bf16.xpose.msra.mxu0 0
    %4014 = vmatprep.subr.bf16.mxu0 0
    %4015 = vmatpush1.bf16.xpose.msra.mxu0 0
    %4016 = vmatprep.subr.bf16.mxu0 0
    %4017 = vmatpush1.bf16.xpose.msra.mxu0 0
    %4018 = vmatprep.subr.bf16.mxu0 0
    %4019 = vmatpush1.bf16.xpose.msra.mxu0 0
    %4020 = vmatprep.subr.bf16.mxu0 0
    %4021 = vmatpush1.bf16.xpose.msra.mxu0 0
    %4022 = vmatprep.subr.bf16.mxu0 0
    %4023 = vmatpush1.bf16.xpose.msra.mxu0 0
    %4024 = vmatprep.mubr.bf16.mxu0 0
    %4025 = vmatmul.mubr.bf16.gmra.mrb[0].mxu0 %v3981
    %v4026 = vpop.f32.mrb[0].mxu0
    %v4027 = vadd.f32 0.0, %v4026
    %v4028 = vpop.f32.mrb[0].mxu0
    %v4029 = vpop.f32.mrb[0].mxu0
    %v4030 = vadd.f32 0.0, %v4029
    %v4031 = vpop.f32.mrb[0].mxu0
    %4032 = vmatprep.mubr.bf16.mxu0 0
    %4033 = vmatmul.mubr.bf16.gmra.mrb[0].mxu0 %v3984
    %v4034 = vpop.f32.mrb[0].mxu0
    %v4035 = vadd.f32 0.0, %v4034
    %v4036 = vpop.f32.mrb[0].mxu0
    %v4037 = vpop.f32.mrb[0].mxu0
    %v4038 = vadd.f32 0.0, %v4037
    %v4039 = vpop.f32.mrb[0].mxu0
    %4040 = vdwg.mxu0
    %4041 = vrot.lane.b32.xlu0 %v3900, 120
    %v4042 = vpop.permute.xlu0 %4041
    %4043 = vrot.lane.b32.xlu0 %v3902, 120
    %v4044 = vpop.permute.xlu0 %4043
    %v4046 = vsel %vm254, %v3900, 0
    %v4049 = vsel %vm254, %v3902, 0
    %v4052 = vsel %vm254, %v4042, 0
    %v4055 = vsel %vm254, %v4044, 0
    %4057 = vmatprep.subr.bf16.mxu0 0
    %4058 = vmatpush1.bf16.xpose.msra.mxu0 %v4052
    %4059 = vmatprep.subr.bf16.mxu0 0
    %4060 = vmatpush1.bf16.xpose.msra.mxu0 %v4055
    %4061 = vmatprep.subr.bf16.mxu0 0
    %4062 = vmatpush1.bf16.xpose.msra.mxu0 0
    %4063 = vmatprep.subr.bf16.mxu0 0
    %4064 = vmatpush1.bf16.xpose.msra.mxu0 0
    %4065 = vmatprep.subr.bf16.mxu0 0
    %4066 = vmatpush1.bf16.xpose.msra.mxu0 0
    %4067 = vmatprep.subr.bf16.mxu0 0
    %4068 = vmatpush1.bf16.xpose.msra.mxu0 0
    %4069 = vmatprep.subr.bf16.mxu0 0
    %4070 = vmatpush1.bf16.xpose.msra.mxu0 0
    %4071 = vmatprep.subr.bf16.mxu0 0
    %4072 = vmatpush1.bf16.xpose.msra.mxu0 0
    %4073 = vmatprep.subr.bf16.mxu0 0
    %4074 = vmatpush1.bf16.xpose.msra.mxu0 0
    %4075 = vmatprep.subr.bf16.mxu0 0
    %4076 = vmatpush1.bf16.xpose.msra.mxu0 0
    %4077 = vmatprep.subr.bf16.mxu0 0
    %4078 = vmatpush1.bf16.xpose.msra.mxu0 0
    %4079 = vmatprep.subr.bf16.mxu0 0
    %4080 = vmatpush1.bf16.xpose.msra.mxu0 0
    %4081 = vmatprep.subr.bf16.mxu0 0
    %4082 = vmatpush1.bf16.xpose.msra.mxu0 0
    %4083 = vmatprep.subr.bf16.mxu0 0
    %4084 = vmatpush1.bf16.xpose.msra.mxu0 0
    %4085 = vmatprep.subr.bf16.mxu0 0
    %4086 = vmatpush1.bf16.xpose.msra.mxu0 0
    %4087 = vmatprep.subr.bf16.mxu0 0
    %4088 = vmatpush1.bf16.xpose.msra.mxu0 0
    %4089 = vmatprep.mubr.bf16.mxu0 0
    %4090 = vmatmul.mubr.bf16.gmra.mrb[0].mxu0 %v4046
    %v4091 = vpop.f32.mrb[0].mxu0
    %v4092 = vadd.f32 0.0, %v4091
    %v4093 = vpop.f32.mrb[0].mxu0
    %v4094 = vpop.f32.mrb[0].mxu0
    %v4095 = vadd.f32 0.0, %v4094
    %v4096 = vpop.f32.mrb[0].mxu0
    %4097 = vmatprep.mubr.bf16.mxu0 0
    %4098 = vmatmul.mubr.bf16.gmra.mrb[0].mxu0 %v4049
    %v4099 = vpop.f32.mrb[0].mxu0
    %v4100 = vadd.f32 0.0, %v4099
    %v4101 = vpop.f32.mrb[0].mxu0
    %v4102 = vpop.f32.mrb[0].mxu0
    %v4103 = vadd.f32 0.0, %v4102
    %v4104 = vpop.f32.mrb[0].mxu0
    %4105 = vdwg.mxu0
    %4106 = vrot.lane.b32.xlu0 %v3904, 120
    %v4107 = vpop.permute.xlu0 %4106
    %4108 = vrot.lane.b32.xlu0 %v3906, 120
    %v4109 = vpop.permute.xlu0 %4108
    %v4111 = vsel %vm254, %v3904, 0
    %v4114 = vsel %vm254, %v3906, 0
    %v4117 = vsel %vm254, %v4107, 0
    %v4120 = vsel %vm254, %v4109, 0
    %4122 = vmatprep.subr.bf16.mxu0 0
    %4123 = vmatpush1.bf16.xpose.msra.mxu0 %v4117
    %4124 = vmatprep.subr.bf16.mxu0 0
    %4125 = vmatpush1.bf16.xpose.msra.mxu0 %v4120
    %4126 = vmatprep.subr.bf16.mxu0 0
    %4127 = vmatpush1.bf16.xpose.msra.mxu0 0
    %4128 = vmatprep.subr.bf16.mxu0 0
    %4129 = vmatpush1.bf16.xpose.msra.mxu0 0
    %4130 = vmatprep.subr.bf16.mxu0 0
    %4131 = vmatpush1.bf16.xpose.msra.mxu0 0
    %4132 = vmatprep.subr.bf16.mxu0 0
    %4133 = vmatpush1.bf16.xpose.msra.mxu0 0
    %4134 = vmatprep.subr.bf16.mxu0 0
    %4135 = vmatpush1.bf16.xpose.msra.mxu0 0
    %4136 = vmatprep.subr.bf16.mxu0 0
    %4137 = vmatpush1.bf16.xpose.msra.mxu0 0
    %4138 = vmatprep.subr.bf16.mxu0 0
    %4139 = vmatpush1.bf16.xpose.msra.mxu0 0
    %4140 = vmatprep.subr.bf16.mxu0 0
    %4141 = vmatpush1.bf16.xpose.msra.mxu0 0
    %4142 = vmatprep.subr.bf16.mxu0 0
    %4143 = vmatpush1.bf16.xpose.msra.mxu0 0
    %4144 = vmatprep.subr.bf16.mxu0 0
    %4145 = vmatpush1.bf16.xpose.msra.mxu0 0
    %4146 = vmatprep.subr.bf16.mxu0 0
    %4147 = vmatpush1.bf16.xpose.msra.mxu0 0
    %4148 = vmatprep.subr.bf16.mxu0 0
    %4149 = vmatpush1.bf16.xpose.msra.mxu0 0
    %4150 = vmatprep.subr.bf16.mxu0 0
    %4151 = vmatpush1.bf16.xpose.msra.mxu0 0
    %4152 = vmatprep.subr.bf16.mxu0 0
    %4153 = vmatpush1.bf16.xpose.msra.mxu0 0
    %4154 = vmatprep.mubr.bf16.mxu0 0
    %4155 = vmatmul.mubr.bf16.gmra.mrb[0].mxu0 %v4111
    %v4156 = vpop.f32.mrb[0].mxu0
    %v4157 = vadd.f32 0.0, %v4156
    %v4158 = vpop.f32.mrb[0].mxu0
    %v4159 = vpop.f32.mrb[0].mxu0
    %v4160 = vadd.f32 0.0, %v4159
    %v4161 = vpop.f32.mrb[0].mxu0
    %4162 = vmatprep.mubr.bf16.mxu0 0
    %4163 = vmatmul.mubr.bf16.gmra.mrb[0].mxu0 %v4114
    %v4164 = vpop.f32.mrb[0].mxu0
    %v4165 = vadd.f32 0.0, %v4164
    %v4166 = vpop.f32.mrb[0].mxu0
    %v4167 = vpop.f32.mrb[0].mxu0
    %v4168 = vadd.f32 0.0, %v4167
    %v4169 = vpop.f32.mrb[0].mxu0
    %4170 = vdwg.mxu0
    %4171 = vrot.lane.b32.xlu0 %v3908, 120
    %v4172 = vpop.permute.xlu0 %4171
    %4173 = vrot.lane.b32.xlu0 %v3910, 120
    %v4174 = vpop.permute.xlu0 %4173
    %v4176 = vsel %vm254, %v3908, 0
    %v4179 = vsel %vm254, %v3910, 0
    %v4182 = vsel %vm254, %v4172, 0
    %v4185 = vsel %vm254, %v4174, 0
    %4187 = vmatprep.subr.bf16.mxu0 0
    %4188 = vmatpush1.bf16.xpose.msra.mxu0 %v4182
    %4189 = vmatprep.subr.bf16.mxu0 0
    %4190 = vmatpush1.bf16.xpose.msra.mxu0 %v4185
    %4191 = vmatprep.subr.bf16.mxu0 0
    %4192 = vmatpush1.bf16.xpose.msra.mxu0 0
    %4193 = vmatprep.subr.bf16.mxu0 0
    %4194 = vmatpush1.bf16.xpose.msra.mxu0 0
    %4195 = vmatprep.subr.bf16.mxu0 0
    %4196 = vmatpush1.bf16.xpose.msra.mxu0 0
    %4197 = vmatprep.subr.bf16.mxu0 0
    %4198 = vmatpush1.bf16.xpose.msra.mxu0 0
    %4199 = vmatprep.subr.bf16.mxu0 0
    %4200 = vmatpush1.bf16.xpose.msra.mxu0 0
    %4201 = vmatprep.subr.bf16.mxu0 0
    %4202 = vmatpush1.bf16.xpose.msra.mxu0 0
    %4203 = vmatprep.subr.bf16.mxu0 0
    %4204 = vmatpush1.bf16.xpose.msra.mxu0 0
    %4205 = vmatprep.subr.bf16.mxu0 0
    %4206 = vmatpush1.bf16.xpose.msra.mxu0 0
    %4207 = vmatprep.subr.bf16.mxu0 0
    %4208 = vmatpush1.bf16.xpose.msra.mxu0 0
    %4209 = vmatprep.subr.bf16.mxu0 0
    %4210 = vmatpush1.bf16.xpose.msra.mxu0 0
    %4211 = vmatprep.subr.bf16.mxu0 0
    %4212 = vmatpush1.bf16.xpose.msra.mxu0 0
    %4213 = vmatprep.subr.bf16.mxu0 0
    %4214 = vmatpush1.bf16.xpose.msra.mxu0 0
    %4215 = vmatprep.subr.bf16.mxu0 0
    %4216 = vmatpush1.bf16.xpose.msra.mxu0 0
    %4217 = vmatprep.subr.bf16.mxu0 0
    %4218 = vmatpush1.bf16.xpose.msra.mxu0 0
    %4219 = vmatprep.mubr.bf16.mxu0 0
    %4220 = vmatmul.mubr.bf16.gmra.mrb[0].mxu0 %v4176
    %v4221 = vpop.f32.mrb[0].mxu0
    %v4222 = vadd.f32 0.0, %v4221
    %v4223 = vpop.f32.mrb[0].mxu0
    %v4224 = vpop.f32.mrb[0].mxu0
    %v4225 = vadd.f32 0.0, %v4224
    %v4226 = vpop.f32.mrb[0].mxu0
    %4227 = vmatprep.mubr.bf16.mxu0 0
    %4228 = vmatmul.mubr.bf16.gmra.mrb[0].mxu0 %v4179
    %v4229 = vpop.f32.mrb[0].mxu0
    %v4230 = vadd.f32 0.0, %v4229
    %v4231 = vpop.f32.mrb[0].mxu0
    %v4232 = vpop.f32.mrb[0].mxu0
    %v4233 = vadd.f32 0.0, %v4232
    %v4234 = vpop.f32.mrb[0].mxu0
    %4235 = vdwg.mxu0
    %v4236 = vmul.f32 %v3962, 0.35355338
    %v4237 = vmul.f32 %v3965, 0.35355338
    %v4238 = vmul.f32 %v3970, 0.35355338
    %v4239 = vmul.f32 %v3973, 0.35355338
    %v4240 = vmul.f32 %v4027, 0.35355338
    %v4241 = vmul.f32 %v4030, 0.35355338
    %v4242 = vmul.f32 %v4035, 0.35355338
    %v4243 = vmul.f32 %v4038, 0.35355338
    %v4244 = vmul.f32 %v4092, 0.35355338
    %v4245 = vmul.f32 %v4095, 0.35355338
    %v4246 = vmul.f32 %v4100, 0.35355338
    %v4247 = vmul.f32 %v4103, 0.35355338
    %v4248 = vmul.f32 %v4157, 0.35355338
    %v4249 = vmul.f32 %v4160, 0.35355338
    %v4250 = vmul.f32 %v4165, 0.35355338
    %v4251 = vmul.f32 %v4168, 0.35355338
    %v4252 = vmul.f32 %v4222, 0.35355338
    %v4253 = vmul.f32 %v4225, 0.35355338
    %v4254 = vmul.f32 %v4230, 0.35355338
    %v4255 = vmul.f32 %v4233, 0.35355338
    %v4256 = vadd.f32 %v4236, %v62
    %v4257 = vadd.f32 %v4237, %v63
    %v4258 = vadd.f32 %v4238, %v64
    %v4259 = vadd.f32 %v4239, %v65
    %v4260 = vadd.f32 %v4240, %v62
    %v4261 = vadd.f32 %v4241, %v63
    %v4262 = vadd.f32 %v4242, %v64
    %v4263 = vadd.f32 %v4243, %v65
    %v4264 = vadd.f32 %v4244, %v62
    %v4265 = vadd.f32 %v4245, %v63
    %v4266 = vadd.f32 %v4246, %v64
    %v4267 = vadd.f32 %v4247, %v65
    %v4268 = vadd.f32 %v4248, %v62
    %v4269 = vadd.f32 %v4249, %v63
    %v4270 = vadd.f32 %v4250, %v64
    %v4271 = vadd.f32 %v4251, %v65
    %v4272 = vadd.f32 %v4252, %v62
    %v4273 = vadd.f32 %v4253, %v63
    %v4274 = vadd.f32 %v4254, %v64
    %v4275 = vadd.f32 %v4255, %v65
    %v4276 = vsel %vm616, %v4256, -inf
    %4277 = vmax.xlane.f32.xlu0 %v4276
    %v4278 = vpop.xlane.xlu0 %4277
    %v4279 = vsel %vm616, %v4257, -inf
    %4280 = vmax.xlane.f32.xlu0 %v4279
    %v4281 = vpop.xlane.xlu0 %4280
    %v4282 = vsel %vm616, %v4258, -inf
    %4283 = vmax.xlane.f32.xlu0 %v4282
    %v4284 = vpop.xlane.xlu0 %4283
    %v4285 = vsel %vm616, %v4259, -inf
    %4286 = vmax.xlane.f32.xlu0 %v4285
    %v4287 = vpop.xlane.xlu0 %4286
    %v4288 = vsel %vm616, %v4260, -inf
    %4289 = vmax.xlane.f32.xlu0 %v4288
    %v4290 = vpop.xlane.xlu0 %4289
    %v4291 = vsel %vm616, %v4261, -inf
    %4292 = vmax.xlane.f32.xlu0 %v4291
    %v4293 = vpop.xlane.xlu0 %4292
    %v4294 = vsel %vm616, %v4262, -inf
    %4295 = vmax.xlane.f32.xlu0 %v4294
    %v4296 = vpop.xlane.xlu0 %4295
    %v4297 = vsel %vm616, %v4263, -inf
    %4298 = vmax.xlane.f32.xlu0 %v4297
    %v4299 = vpop.xlane.xlu0 %4298
    %v4300 = vsel %vm616, %v4264, -inf
    %4301 = vmax.xlane.f32.xlu0 %v4300
    %v4302 = vpop.xlane.xlu0 %4301
    %v4303 = vsel %vm616, %v4265, -inf
    %4304 = vmax.xlane.f32.xlu0 %v4303
    %v4305 = vpop.xlane.xlu0 %4304
    %v4306 = vsel %vm616, %v4266, -inf
    %4307 = vmax.xlane.f32.xlu0 %v4306
    %v4308 = vpop.xlane.xlu0 %4307
    %v4309 = vsel %vm616, %v4267, -inf
    %4310 = vmax.xlane.f32.xlu0 %v4309
    %v4311 = vpop.xlane.xlu0 %4310
    %v4312 = vsel %vm616, %v4268, -inf
    %4313 = vmax.xlane.f32.xlu0 %v4312
    %v4314 = vpop.xlane.xlu0 %4313
    %v4315 = vsel %vm616, %v4269, -inf
    %4316 = vmax.xlane.f32.xlu0 %v4315
    %v4317 = vpop.xlane.xlu0 %4316
    %v4318 = vsel %vm616, %v4270, -inf
    %4319 = vmax.xlane.f32.xlu0 %v4318
    %v4320 = vpop.xlane.xlu0 %4319
    %v4321 = vsel %vm616, %v4271, -inf
    %4322 = vmax.xlane.f32.xlu0 %v4321
    %v4323 = vpop.xlane.xlu0 %4322
    %v4324 = vsel %vm616, %v4272, -inf
    %4325 = vmax.xlane.f32.xlu0 %v4324
    %v4326 = vpop.xlane.xlu0 %4325
    %v4327 = vsel %vm616, %v4273, -inf
    %4328 = vmax.xlane.f32.xlu0 %v4327
    %v4329 = vpop.xlane.xlu0 %4328
    %v4330 = vsel %vm616, %v4274, -inf
    %4331 = vmax.xlane.f32.xlu0 %v4330
    %v4332 = vpop.xlane.xlu0 %4331
    %v4333 = vsel %vm616, %v4275, -inf
    %4334 = vmax.xlane.f32.xlu0 %v4333
    %v4335 = vpop.xlane.xlu0 %4334
    %v4336 = vsub.f32 %v4256, %v4278
    %v4337 = vsub.f32 %v4257, %v4281
    %v4338 = vsub.f32 %v4258, %v4284
    %v4339 = vsub.f32 %v4259, %v4287
    %v4340 = vsub.f32 %v4260, %v4290
    %v4341 = vsub.f32 %v4261, %v4293
    %v4342 = vsub.f32 %v4262, %v4296
    %v4343 = vsub.f32 %v4263, %v4299
    %v4344 = vsub.f32 %v4264, %v4302
    %v4345 = vsub.f32 %v4265, %v4305
    %v4346 = vsub.f32 %v4266, %v4308
    %v4347 = vsub.f32 %v4267, %v4311
    %v4348 = vsub.f32 %v4268, %v4314
    %v4349 = vsub.f32 %v4269, %v4317
    %v4350 = vsub.f32 %v4270, %v4320
    %v4351 = vsub.f32 %v4271, %v4323
    %v4352 = vsub.f32 %v4272, %v4326
    %v4353 = vsub.f32 %v4273, %v4329
    %v4354 = vsub.f32 %v4274, %v4332
    %v4355 = vsub.f32 %v4275, %v4335
    %v4356 = vmul.f32 %v4336, 1.442695
    %v4357 = vpow.pop %v4356
    %v4358 = vmul.f32 %v4337, 1.442695
    %v4359 = vpow.pop %v4358
    %v4360 = vmul.f32 %v4338, 1.442695
    %v4361 = vpow.pop %v4360
    %v4362 = vmul.f32 %v4339, 1.442695
    %v4363 = vpow.pop %v4362
    %v4364 = vmul.f32 %v4340, 1.442695
    %v4365 = vpow.pop %v4364
    %v4366 = vmul.f32 %v4341, 1.442695
    %v4367 = vpow.pop %v4366
    %v4368 = vmul.f32 %v4342, 1.442695
    %v4369 = vpow.pop %v4368
    %v4370 = vmul.f32 %v4343, 1.442695
    %v4371 = vpow.pop %v4370
    %v4372 = vmul.f32 %v4344, 1.442695
    %v4373 = vpow.pop %v4372
    %v4374 = vmul.f32 %v4345, 1.442695
    %v4375 = vpow.pop %v4374
    %v4376 = vmul.f32 %v4346, 1.442695
    %v4377 = vpow.pop %v4376
    %v4378 = vmul.f32 %v4347, 1.442695
    %v4379 = vpow.pop %v4378
    %v4380 = vmul.f32 %v4348, 1.442695
    %v4381 = vpow.pop %v4380
    %v4382 = vmul.f32 %v4349, 1.442695
    %v4383 = vpow.pop %v4382
    %v4384 = vmul.f32 %v4350, 1.442695
    %v4385 = vpow.pop %v4384
    %v4386 = vmul.f32 %v4351, 1.442695
    %v4387 = vpow.pop %v4386
    %v4388 = vmul.f32 %v4352, 1.442695
    %v4389 = vpow.pop %v4388
    %v4390 = vmul.f32 %v4353, 1.442695
    %v4391 = vpow.pop %v4390
    %v4392 = vmul.f32 %v4354, 1.442695
    %v4393 = vpow.pop %v4392
    %v4394 = vmul.f32 %v4355, 1.442695
    %v4395 = vpow.pop %v4394
    %v4396 = vsel %vm616, %v4357, 0.0
    %4397 = vadd.xlane.f32.xlu0 %v4396
    %v4398 = vpop.xlane.xlu0 %4397
    %v4399 = vsel %vm616, %v4359, 0.0
    %4400 = vadd.xlane.f32.xlu0 %v4399
    %v4401 = vpop.xlane.xlu0 %4400
    %v4402 = vsel %vm616, %v4361, 0.0
    %4403 = vadd.xlane.f32.xlu0 %v4402
    %v4404 = vpop.xlane.xlu0 %4403
    %v4405 = vsel %vm616, %v4363, 0.0
    %4406 = vadd.xlane.f32.xlu0 %v4405
    %v4407 = vpop.xlane.xlu0 %4406
    %v4408 = vsel %vm616, %v4365, 0.0
    %4409 = vadd.xlane.f32.xlu0 %v4408
    %v4410 = vpop.xlane.xlu0 %4409
    %v4411 = vsel %vm616, %v4367, 0.0
    %4412 = vadd.xlane.f32.xlu0 %v4411
    %v4413 = vpop.xlane.xlu0 %4412
    %v4414 = vsel %vm616, %v4369, 0.0
    %4415 = vadd.xlane.f32.xlu0 %v4414
    %v4416 = vpop.xlane.xlu0 %4415
    %v4417 = vsel %vm616, %v4371, 0.0
    %4418 = vadd.xlane.f32.xlu0 %v4417
    %v4419 = vpop.xlane.xlu0 %4418
    %v4420 = vsel %vm616, %v4373, 0.0
    %4421 = vadd.xlane.f32.xlu0 %v4420
    %v4422 = vpop.xlane.xlu0 %4421
    %v4423 = vsel %vm616, %v4375, 0.0
    %4424 = vadd.xlane.f32.xlu0 %v4423
    %v4425 = vpop.xlane.xlu0 %4424
    %v4426 = vsel %vm616, %v4377, 0.0
    %4427 = vadd.xlane.f32.xlu0 %v4426
    %v4428 = vpop.xlane.xlu0 %4427
    %v4429 = vsel %vm616, %v4379, 0.0
    %4430 = vadd.xlane.f32.xlu0 %v4429
    %v4431 = vpop.xlane.xlu0 %4430
    %v4432 = vsel %vm616, %v4381, 0.0
    %4433 = vadd.xlane.f32.xlu0 %v4432
    %v4434 = vpop.xlane.xlu0 %4433
    %v4435 = vsel %vm616, %v4383, 0.0
    %4436 = vadd.xlane.f32.xlu0 %v4435
    %v4437 = vpop.xlane.xlu0 %4436
    %v4438 = vsel %vm616, %v4385, 0.0
    %4439 = vadd.xlane.f32.xlu0 %v4438
    %v4440 = vpop.xlane.xlu0 %4439
    %v4441 = vsel %vm616, %v4387, 0.0
    %4442 = vadd.xlane.f32.xlu0 %v4441
    %v4443 = vpop.xlane.xlu0 %4442
    %v4444 = vsel %vm616, %v4389, 0.0
    %4445 = vadd.xlane.f32.xlu0 %v4444
    %v4446 = vpop.xlane.xlu0 %4445
    %v4447 = vsel %vm616, %v4391, 0.0
    %4448 = vadd.xlane.f32.xlu0 %v4447
    %v4449 = vpop.xlane.xlu0 %4448
    %v4450 = vsel %vm616, %v4393, 0.0
    %4451 = vadd.xlane.f32.xlu0 %v4450
    %v4452 = vpop.xlane.xlu0 %4451
    %v4453 = vsel %vm616, %v4395, 0.0
    %4454 = vadd.xlane.f32.xlu0 %v4453
    %v4455 = vpop.xlane.xlu0 %4454
    %v4456 = vrcp.pop %v4398
    %v4457 = vrcp.pop %v4401
    %v4458 = vrcp.pop %v4404
    %v4459 = vrcp.pop %v4407
    %v4460 = vrcp.pop %v4410
    %v4461 = vrcp.pop %v4413
    %v4462 = vrcp.pop %v4416
    %v4463 = vrcp.pop %v4419
    %v4464 = vrcp.pop %v4422
    %v4465 = vrcp.pop %v4425
    %v4466 = vrcp.pop %v4428
    %v4467 = vrcp.pop %v4431
    %v4468 = vrcp.pop %v4434
    %v4469 = vrcp.pop %v4437
    %v4470 = vrcp.pop %v4440
    %v4471 = vrcp.pop %v4443
    %v4472 = vrcp.pop %v4446
    %v4473 = vrcp.pop %v4449
    %v4474 = vrcp.pop %v4452
    %v4475 = vrcp.pop %v4455
    %v4476 = vmul.f32 %v4357, %v4456
    %v4477 = vmul.f32 %v4359, %v4457
    %v4478 = vmul.f32 %v4361, %v4458
    %v4479 = vmul.f32 %v4363, %v4459
    %v4480 = vmul.f32 %v4365, %v4460
    %v4481 = vmul.f32 %v4367, %v4461
    %v4482 = vmul.f32 %v4369, %v4462
    %v4483 = vmul.f32 %v4371, %v4463
    %v4484 = vmul.f32 %v4373, %v4464
    %v4485 = vmul.f32 %v4375, %v4465
    %v4486 = vmul.f32 %v4377, %v4466
    %v4487 = vmul.f32 %v4379, %v4467
    %v4488 = vmul.f32 %v4381, %v4468
    %v4489 = vmul.f32 %v4383, %v4469
    %v4490 = vmul.f32 %v4385, %v4470
    %v4491 = vmul.f32 %v4387, %v4471
    %v4492 = vmul.f32 %v4389, %v4472
    %v4493 = vmul.f32 %v4391, %v4473
    %v4494 = vmul.f32 %v4393, %v4474
    %v4495 = vmul.f32 %v4395, %v4475
    %v4496 = vpack.c.bf16 %v4477, %v4476
    %v4497 = vpack.c.bf16 %v4479, %v4478
    %v4498 = vpack.c.bf16 %v4481, %v4480
    %v4499 = vpack.c.bf16 %v4483, %v4482
    %v4500 = vpack.c.bf16 %v4485, %v4484
    %v4501 = vpack.c.bf16 %v4487, %v4486
    %v4502 = vpack.c.bf16 %v4489, %v4488
    %v4503 = vpack.c.bf16 %v4491, %v4490
    %v4504 = vpack.c.bf16 %v4493, %v4492
    %v4505 = vpack.c.bf16 %v4495, %v4494
    %4506 = vrot.lane.b32.xlu0 %v3891, 112
    %v4507 = vpop.permute.xlu0 %4506
    %4508 = vrot.lane.b32.xlu0 %v3892, 112
    %v4509 = vpop.permute.xlu0 %4508
    %v4513 = vsel %vm616, %v4496, 0
    %v4516 = vsel %vm616, %v4497, 0
    %4518 = vmatprep.subr.bf16.mxu0 0
    %4519 = vmatpush1.bf16.msra.mxu0 %v4507
    %4520 = vmatprep.subr.bf16.mxu0 0
    %4521 = vmatpush1.bf16.msra.mxu0 %v4509
    %4522 = vmatprep.subr.bf16.mxu0 0
    %4523 = vmatpush1.bf16.msra.mxu0 0
    %4524 = vmatprep.subr.bf16.mxu0 0
    %4525 = vmatpush1.bf16.msra.mxu0 0
    %4526 = vmatprep.subr.bf16.mxu0 0
    %4527 = vmatpush1.bf16.msra.mxu0 0
    %4528 = vmatprep.subr.bf16.mxu0 0
    %4529 = vmatpush1.bf16.msra.mxu0 0
    %4530 = vmatprep.subr.bf16.mxu0 0
    %4531 = vmatpush1.bf16.msra.mxu0 0
    %4532 = vmatprep.subr.bf16.mxu0 0
    %4533 = vmatpush1.bf16.msra.mxu0 0
    %4534 = vmatprep.subr.bf16.mxu0 0
    %4535 = vmatpush1.bf16.msra.mxu0 0
    %4536 = vmatprep.subr.bf16.mxu0 0
    %4537 = vmatpush1.bf16.msra.mxu0 0
    %4538 = vmatprep.subr.bf16.mxu0 0
    %4539 = vmatpush1.bf16.msra.mxu0 0
    %4540 = vmatprep.subr.bf16.mxu0 0
    %4541 = vmatpush1.bf16.msra.mxu0 0
    %4542 = vmatprep.subr.bf16.mxu0 0
    %4543 = vmatpush1.bf16.msra.mxu0 0
    %4544 = vmatprep.subr.bf16.mxu0 0
    %4545 = vmatpush1.bf16.msra.mxu0 0
    %4546 = vmatprep.subr.bf16.mxu0 0
    %4547 = vmatpush1.bf16.msra.mxu0 0
    %4548 = vmatprep.subr.bf16.mxu0 0
    %4549 = vmatpush1.bf16.msra.mxu0 0
    %4550 = vmatprep.mubr.bf16.mxu0 0
    %4551 = vmatmul.mubr.bf16.gmra.mrb[0].mxu0 %v4513
    %v4552 = vpop.f32.mrb[0].mxu0
    %v4553 = vadd.f32 0.0, %v4552
    %v4554 = vpop.f32.mrb[0].mxu0
    %v4555 = vpop.f32.mrb[0].mxu0
    %v4556 = vadd.f32 0.0, %v4555
    %v4557 = vpop.f32.mrb[0].mxu0
    %4558 = vmatprep.mubr.bf16.mxu0 0
    %4559 = vmatmul.mubr.bf16.gmra.mrb[0].mxu0 %v4516
    %v4560 = vpop.f32.mrb[0].mxu0
    %v4561 = vadd.f32 0.0, %v4560
    %v4562 = vpop.f32.mrb[0].mxu0
    %v4563 = vpop.f32.mrb[0].mxu0
    %v4564 = vadd.f32 0.0, %v4563
    %v4565 = vpop.f32.mrb[0].mxu0
    %4566 = vdwg.mxu0
    %4567 = vrot.lane.b32.xlu0 %v3896, 112
    %v4568 = vpop.permute.xlu0 %4567
    %4569 = vrot.lane.b32.xlu0 %v3898, 112
    %v4570 = vpop.permute.xlu0 %4569
    %v4574 = vsel %vm616, %v4498, 0
    %v4577 = vsel %vm616, %v4499, 0
    %4579 = vmatprep.subr.bf16.mxu0 0
    %4580 = vmatpush1.bf16.msra.mxu0 %v4568
    %4581 = vmatprep.subr.bf16.mxu0 0
    %4582 = vmatpush1.bf16.msra.mxu0 %v4570
    %4583 = vmatprep.subr.bf16.mxu0 0
    %4584 = vmatpush1.bf16.msra.mxu0 0
    %4585 = vmatprep.subr.bf16.mxu0 0
    %4586 = vmatpush1.bf16.msra.mxu0 0
    %4587 = vmatprep.subr.bf16.mxu0 0
    %4588 = vmatpush1.bf16.msra.mxu0 0
    %4589 = vmatprep.subr.bf16.mxu0 0
    %4590 = vmatpush1.bf16.msra.mxu0 0
    %4591 = vmatprep.subr.bf16.mxu0 0
    %4592 = vmatpush1.bf16.msra.mxu0 0
    %4593 = vmatprep.subr.bf16.mxu0 0
    %4594 = vmatpush1.bf16.msra.mxu0 0
    %4595 = vmatprep.subr.bf16.mxu0 0
    %4596 = vmatpush1.bf16.msra.mxu0 0
    %4597 = vmatprep.subr.bf16.mxu0 0
    %4598 = vmatpush1.bf16.msra.mxu0 0
    %4599 = vmatprep.subr.bf16.mxu0 0
    %4600 = vmatpush1.bf16.msra.mxu0 0
    %4601 = vmatprep.subr.bf16.mxu0 0
    %4602 = vmatpush1.bf16.msra.mxu0 0
    %4603 = vmatprep.subr.bf16.mxu0 0
    %4604 = vmatpush1.bf16.msra.mxu0 0
    %4605 = vmatprep.subr.bf16.mxu0 0
    %4606 = vmatpush1.bf16.msra.mxu0 0
    %4607 = vmatprep.subr.bf16.mxu0 0
    %4608 = vmatpush1.bf16.msra.mxu0 0
    %4609 = vmatprep.subr.bf16.mxu0 0
    %4610 = vmatpush1.bf16.msra.mxu0 0
    %4611 = vmatprep.mubr.bf16.mxu0 0
    %4612 = vmatmul.mubr.bf16.gmra.mrb[0].mxu0 %v4574
    %v4613 = vpop.f32.mrb[0].mxu0
    %v4614 = vadd.f32 0.0, %v4613
    %v4615 = vpop.f32.mrb[0].mxu0
    %v4616 = vpop.f32.mrb[0].mxu0
    %v4617 = vadd.f32 0.0, %v4616
    %v4618 = vpop.f32.mrb[0].mxu0
    %4619 = vmatprep.mubr.bf16.mxu0 0
    %4620 = vmatmul.mubr.bf16.gmra.mrb[0].mxu0 %v4577
    %v4621 = vpop.f32.mrb[0].mxu0
    %v4622 = vadd.f32 0.0, %v4621
    %v4623 = vpop.f32.mrb[0].mxu0
    %v4624 = vpop.f32.mrb[0].mxu0
    %v4625 = vadd.f32 0.0, %v4624
    %v4626 = vpop.f32.mrb[0].mxu0
    %4627 = vdwg.mxu0
    %4628 = vrot.lane.b32.xlu0 %v3900, 112
    %v4629 = vpop.permute.xlu0 %4628
    %4630 = vrot.lane.b32.xlu0 %v3902, 112
    %v4631 = vpop.permute.xlu0 %4630
    %v4635 = vsel %vm616, %v4500, 0
    %v4638 = vsel %vm616, %v4501, 0
    %4640 = vmatprep.subr.bf16.mxu0 0
    %4641 = vmatpush1.bf16.msra.mxu0 %v4629
    %4642 = vmatprep.subr.bf16.mxu0 0
    %4643 = vmatpush1.bf16.msra.mxu0 %v4631
    %4644 = vmatprep.subr.bf16.mxu0 0
    %4645 = vmatpush1.bf16.msra.mxu0 0
    %4646 = vmatprep.subr.bf16.mxu0 0
    %4647 = vmatpush1.bf16.msra.mxu0 0
    %4648 = vmatprep.subr.bf16.mxu0 0
    %4649 = vmatpush1.bf16.msra.mxu0 0
    %4650 = vmatprep.subr.bf16.mxu0 0
    %4651 = vmatpush1.bf16.msra.mxu0 0
    %4652 = vmatprep.subr.bf16.mxu0 0
    %4653 = vmatpush1.bf16.msra.mxu0 0
    %4654 = vmatprep.subr.bf16.mxu0 0
    %4655 = vmatpush1.bf16.msra.mxu0 0
    %4656 = vmatprep.subr.bf16.mxu0 0
    %4657 = vmatpush1.bf16.msra.mxu0 0
    %4658 = vmatprep.subr.bf16.mxu0 0
    %4659 = vmatpush1.bf16.msra.mxu0 0
    %4660 = vmatprep.subr.bf16.mxu0 0
    %4661 = vmatpush1.bf16.msra.mxu0 0
    %4662 = vmatprep.subr.bf16.mxu0 0
    %4663 = vmatpush1.bf16.msra.mxu0 0
    %4664 = vmatprep.subr.bf16.mxu0 0
    %4665 = vmatpush1.bf16.msra.mxu0 0
    %4666 = vmatprep.subr.bf16.mxu0 0
    %4667 = vmatpush1.bf16.msra.mxu0 0
    %4668 = vmatprep.subr.bf16.mxu0 0
    %4669 = vmatpush1.bf16.msra.mxu0 0
    %4670 = vmatprep.subr.bf16.mxu0 0
    %4671 = vmatpush1.bf16.msra.mxu0 0
    %4672 = vmatprep.mubr.bf16.mxu0 0
    %4673 = vmatmul.mubr.bf16.gmra.mrb[0].mxu0 %v4635
    %v4674 = vpop.f32.mrb[0].mxu0
    %v4675 = vadd.f32 0.0, %v4674
    %v4676 = vpop.f32.mrb[0].mxu0
    %v4677 = vpop.f32.mrb[0].mxu0
    %v4678 = vadd.f32 0.0, %v4677
    %v4679 = vpop.f32.mrb[0].mxu0
    %4680 = vmatprep.mubr.bf16.mxu0 0
    %4681 = vmatmul.mubr.bf16.gmra.mrb[0].mxu0 %v4638
    %v4682 = vpop.f32.mrb[0].mxu0
    %v4683 = vadd.f32 0.0, %v4682
    %v4684 = vpop.f32.mrb[0].mxu0
    %v4685 = vpop.f32.mrb[0].mxu0
    %v4686 = vadd.f32 0.0, %v4685
    %v4687 = vpop.f32.mrb[0].mxu0
    %4688 = vdwg.mxu0
    %4689 = vrot.lane.b32.xlu0 %v3904, 112
    %v4690 = vpop.permute.xlu0 %4689
    %4691 = vrot.lane.b32.xlu0 %v3906, 112
    %v4692 = vpop.permute.xlu0 %4691
    %v4696 = vsel %vm616, %v4502, 0
    %v4699 = vsel %vm616, %v4503, 0
    %4701 = vmatprep.subr.bf16.mxu0 0
    %4702 = vmatpush1.bf16.msra.mxu0 %v4690
    %4703 = vmatprep.subr.bf16.mxu0 0
    %4704 = vmatpush1.bf16.msra.mxu0 %v4692
    %4705 = vmatprep.subr.bf16.mxu0 0
    %4706 = vmatpush1.bf16.msra.mxu0 0
    %4707 = vmatprep.subr.bf16.mxu0 0
    %4708 = vmatpush1.bf16.msra.mxu0 0
    %4709 = vmatprep.subr.bf16.mxu0 0
    %4710 = vmatpush1.bf16.msra.mxu0 0
    %4711 = vmatprep.subr.bf16.mxu0 0
    %4712 = vmatpush1.bf16.msra.mxu0 0
    %4713 = vmatprep.subr.bf16.mxu0 0
    %4714 = vmatpush1.bf16.msra.mxu0 0
    %4715 = vmatprep.subr.bf16.mxu0 0
    %4716 = vmatpush1.bf16.msra.mxu0 0
    %4717 = vmatprep.subr.bf16.mxu0 0
    %4718 = vmatpush1.bf16.msra.mxu0 0
    %4719 = vmatprep.subr.bf16.mxu0 0
    %4720 = vmatpush1.bf16.msra.mxu0 0
    %4721 = vmatprep.subr.bf16.mxu0 0
    %4722 = vmatpush1.bf16.msra.mxu0 0
    %4723 = vmatprep.subr.bf16.mxu0 0
    %4724 = vmatpush1.bf16.msra.mxu0 0
    %4725 = vmatprep.subr.bf16.mxu0 0
    %4726 = vmatpush1.bf16.msra.mxu0 0
    %4727 = vmatprep.subr.bf16.mxu0 0
    %4728 = vmatpush1.bf16.msra.mxu0 0
    %4729 = vmatprep.subr.bf16.mxu0 0
    %4730 = vmatpush1.bf16.msra.mxu0 0
    %4731 = vmatprep.subr.bf16.mxu0 0
    %4732 = vmatpush1.bf16.msra.mxu0 0
    %4733 = vmatprep.mubr.bf16.mxu0 0
    %4734 = vmatmul.mubr.bf16.gmra.mrb[0].mxu0 %v4696
    %v4735 = vpop.f32.mrb[0].mxu0
    %v4736 = vadd.f32 0.0, %v4735
    %v4737 = vpop.f32.mrb[0].mxu0
    %v4738 = vpop.f32.mrb[0].mxu0
    %v4739 = vadd.f32 0.0, %v4738
    %v4740 = vpop.f32.mrb[0].mxu0
    %4741 = vmatprep.mubr.bf16.mxu0 0
    %4742 = vmatmul.mubr.bf16.gmra.mrb[0].mxu0 %v4699
    %v4743 = vpop.f32.mrb[0].mxu0
    %v4744 = vadd.f32 0.0, %v4743
    %v4745 = vpop.f32.mrb[0].mxu0
    %v4746 = vpop.f32.mrb[0].mxu0
    %v4747 = vadd.f32 0.0, %v4746
    %v4748 = vpop.f32.mrb[0].mxu0
    %4749 = vdwg.mxu0
    %4750 = vrot.lane.b32.xlu0 %v3908, 112
    %v4751 = vpop.permute.xlu0 %4750
    %4752 = vrot.lane.b32.xlu0 %v3910, 112
    %v4753 = vpop.permute.xlu0 %4752
    %v4757 = vsel %vm616, %v4504, 0
    %v4760 = vsel %vm616, %v4505, 0
    %4762 = vmatprep.subr.bf16.mxu0 0
    %4763 = vmatpush1.bf16.msra.mxu0 %v4751
    %4764 = vmatprep.subr.bf16.mxu0 0
    %4765 = vmatpush1.bf16.msra.mxu0 %v4753
    %4766 = vmatprep.subr.bf16.mxu0 0
    %4767 = vmatpush1.bf16.msra.mxu0 0
    %4768 = vmatprep.subr.bf16.mxu0 0
    %4769 = vmatpush1.bf16.msra.mxu0 0
    %4770 = vmatprep.subr.bf16.mxu0 0
    %4771 = vmatpush1.bf16.msra.mxu0 0
    %4772 = vmatprep.subr.bf16.mxu0 0
    %4773 = vmatpush1.bf16.msra.mxu0 0
    %4774 = vmatprep.subr.bf16.mxu0 0
    %4775 = vmatpush1.bf16.msra.mxu0 0
    %4776 = vmatprep.subr.bf16.mxu0 0
    %4777 = vmatpush1.bf16.msra.mxu0 0
    %4778 = vmatprep.subr.bf16.mxu0 0
    %4779 = vmatpush1.bf16.msra.mxu0 0
    %4780 = vmatprep.subr.bf16.mxu0 0
    %4781 = vmatpush1.bf16.msra.mxu0 0
    %4782 = vmatprep.subr.bf16.mxu0 0
    %4783 = vmatpush1.bf16.msra.mxu0 0
    %4784 = vmatprep.subr.bf16.mxu0 0
    %4785 = vmatpush1.bf16.msra.mxu0 0
    %4786 = vmatprep.subr.bf16.mxu0 0
    %4787 = vmatpush1.bf16.msra.mxu0 0
    %4788 = vmatprep.subr.bf16.mxu0 0
    %4789 = vmatpush1.bf16.msra.mxu0 0
    %4790 = vmatprep.subr.bf16.mxu0 0
    %4791 = vmatpush1.bf16.msra.mxu0 0
    %4792 = vmatprep.subr.bf16.mxu0 0
    %4793 = vmatpush1.bf16.msra.mxu0 0
    %4794 = vmatprep.mubr.bf16.mxu0 0
    %4795 = vmatmul.mubr.bf16.gmra.mrb[0].mxu0 %v4757
    %v4796 = vpop.f32.mrb[0].mxu0
    %v4797 = vadd.f32 0.0, %v4796
    %v4798 = vpop.f32.mrb[0].mxu0
    %v4799 = vpop.f32.mrb[0].mxu0
    %v4800 = vadd.f32 0.0, %v4799
    %v4801 = vpop.f32.mrb[0].mxu0
    %4802 = vmatprep.mubr.bf16.mxu0 0
    %4803 = vmatmul.mubr.bf16.gmra.mrb[0].mxu0 %v4760
    %v4804 = vpop.f32.mrb[0].mxu0
    %v4805 = vadd.f32 0.0, %v4804
    %v4806 = vpop.f32.mrb[0].mxu0
    %v4807 = vpop.f32.mrb[0].mxu0
    %v4808 = vadd.f32 0.0, %v4807
    %v4809 = vpop.f32.mrb[0].mxu0
    %4810 = vdwg.mxu0
    %4815 = vrot.lane.b32.xlu0 %v4614, 8
    %v4816 = vpop.permute.xlu0 %4815
    %4817 = vrot.lane.b32.xlu0 %v4617, 8
    %v4818 = vpop.permute.xlu0 %4817
    %4819 = vrot.lane.b32.xlu0 %v4622, 8
    %v4820 = vpop.permute.xlu0 %4819
    %4821 = vrot.lane.b32.xlu0 %v4625, 8
    %v4822 = vpop.permute.xlu0 %4821
    %4831 = vrot.lane.b32.xlu0 %v4675, 16
    %v4832 = vpop.permute.xlu0 %4831
    %4833 = vrot.lane.b32.xlu0 %v4678, 16
    %v4834 = vpop.permute.xlu0 %4833
    %4835 = vrot.lane.b32.xlu0 %v4683, 16
    %v4836 = vpop.permute.xlu0 %4835
    %4837 = vrot.lane.b32.xlu0 %v4686, 16
    %v4838 = vpop.permute.xlu0 %4837
    %4847 = vrot.lane.b32.xlu0 %v4736, 24
    %v4848 = vpop.permute.xlu0 %4847
    %4849 = vrot.lane.b32.xlu0 %v4739, 24
    %v4850 = vpop.permute.xlu0 %4849
    %4851 = vrot.lane.b32.xlu0 %v4744, 24
    %v4852 = vpop.permute.xlu0 %4851
    %4853 = vrot.lane.b32.xlu0 %v4747, 24
    %v4854 = vpop.permute.xlu0 %4853
    %4863 = vrot.lane.b32.xlu0 %v4797, 32
    %v4864 = vpop.permute.xlu0 %4863
    %4865 = vrot.lane.b32.xlu0 %v4800, 32
    %v4866 = vpop.permute.xlu0 %4865
    %4867 = vrot.lane.b32.xlu0 %v4805, 32
    %v4868 = vpop.permute.xlu0 %4867
    %4869 = vrot.lane.b32.xlu0 %v4808, 32
    %v4870 = vpop.permute.xlu0 %4869
    %v4875 = vsel %vm254, %v4553, %v4816
    %v4876 = vsel %vm254, %v4556, %v4818
    %v4877 = vsel %vm254, %v4561, %v4820
    %v4878 = vsel %vm254, %v4564, %v4822
    %v4879 = vsel %vm1220, %v4875, %v4832
    %v4880 = vsel %vm1220, %v4876, %v4834
    %v4881 = vsel %vm1220, %v4877, %v4836
    %v4882 = vsel %vm1220, %v4878, %v4838
    %v4883 = vsel %vm1225, %v4879, %v4848
    %v4884 = vsel %vm1225, %v4880, %v4850
    %v4885 = vsel %vm1225, %v4881, %v4852
    %v4886 = vsel %vm1225, %v4882, %v4854
    %v4887 = vsel %vm616, %v4883, %v4864
    %v4888 = vsel %vm616, %v4884, %v4866
    %v4889 = vsel %vm616, %v4885, %v4868
    %v4890 = vsel %vm616, %v4886, %v4870
    %v4891 = vpack.c.bf16 %v4888, %v4887
    %v4892 = vpack.c.bf16 %v4890, %v4889
    %s4893 = scalar_lea.vmem %s4, 20
    %v4894 = vld [vmem:[%s4893] sm:$0xf]
    %v4895 = vld [vmem:[%s4893 + $0x4] sm:$0xf]
    %v4896 = vld [vmem:[%s4893 + $0x8] sm:$0xf]
    %v4897 = vld [vmem:[%s4893 + $0xc] sm:$0xf]
    %v4898 = vld [vmem:[%s4893 + $0x10] sm:$0xf]
    %s4899 = scalar_lea.vmem %s5, 1
    %v4900 = vld [vmem:[%s4899] sm:$0x1]
    %v4902 = vlaneseq
    %v4903 = vshrl.u32 %v4902, 7
    %v4904 = vsub.s32 0, %v4903
    %v4905 = vrot.slane %v4900, %v4904
    %v4912 = vunpack.c.l.b16 %v4894
    %v4913 = vunpack.c.l.b16 %v4895
    %v4914 = vunpack.c.l.b16 %v4896
    %v4915 = vunpack.c.l.b16 %v4897
    %v4916 = vunpack.c.l.b16 %v4898
    %v4917 = vpack.c.b16 %v4913, %v4912
    %v4918 = vpack.c.b16 %v4915, %v4914
    %v4919 = vpack.c.b16 %v4916, %v4916
    %v4923 = vsel %vm68, %v4891, 0
    %v4926 = vsel %vm68, %v4892, 0
    %v4929 = vsel %vm177, %v4919, 0
    %4931 = vmatprep.subr.bf16.mxu0 0
    %4932 = vmatpush1.bf16.msra.mxu0 %v4917
    %4933 = vmatprep.subr.bf16.mxu0 0
    %4934 = vmatpush1.bf16.msra.mxu0 %v4918
    %4935 = vmatprep.subr.bf16.mxu0 0
    %4936 = vmatpush1.bf16.msra.mxu0 %v4929
    %4937 = vmatprep.subr.bf16.mxu0 0
    %4938 = vmatpush1.bf16.msra.mxu0 0
    %4939 = vmatprep.subr.bf16.mxu0 0
    %4940 = vmatpush1.bf16.msra.mxu0 0
    %4941 = vmatprep.subr.bf16.mxu0 0
    %4942 = vmatpush1.bf16.msra.mxu0 0
    %4943 = vmatprep.subr.bf16.mxu0 0
    %4944 = vmatpush1.bf16.msra.mxu0 0
    %4945 = vmatprep.subr.bf16.mxu0 0
    %4946 = vmatpush1.bf16.msra.mxu0 0
    %4947 = vmatprep.subr.bf16.mxu0 0
    %4948 = vmatpush1.bf16.msra.mxu0 0
    %4949 = vmatprep.subr.bf16.mxu0 0
    %4950 = vmatpush1.bf16.msra.mxu0 0
    %4951 = vmatprep.subr.bf16.mxu0 0
    %4952 = vmatpush1.bf16.msra.mxu0 0
    %4953 = vmatprep.subr.bf16.mxu0 0
    %4954 = vmatpush1.bf16.msra.mxu0 0
    %4955 = vmatprep.subr.bf16.mxu0 0
    %4956 = vmatpush1.bf16.msra.mxu0 0
    %4957 = vmatprep.subr.bf16.mxu0 0
    %4958 = vmatpush1.bf16.msra.mxu0 0
    %4959 = vmatprep.subr.bf16.mxu0 0
    %4960 = vmatpush1.bf16.msra.mxu0 0
    %4961 = vmatprep.subr.bf16.mxu0 0
    %4962 = vmatpush1.bf16.msra.mxu0 0
    %4963 = vmatprep.mubr.bf16.mxu0 0
    %4964 = vmatmul.mubr.bf16.gmra.mrb[0].mxu0 %v4923
    %v4965 = vpop.f32.mrb[0].mxu0
    %v4966 = vadd.f32 %v4905, %v4965
    %v4967 = vpop.f32.mrb[0].mxu0
    %v4968 = vpop.f32.mrb[0].mxu0
    %v4969 = vadd.f32 %v4905, %v4968
    %v4970 = vpop.f32.mrb[0].mxu0
    %4971 = vmatprep.mubr.bf16.mxu0 0
    %4972 = vmatmul.mubr.bf16.gmra.mrb[0].mxu0 %v4926
    %v4973 = vpop.f32.mrb[0].mxu0
    %v4974 = vadd.f32 %v4905, %v4973
    %v4975 = vpop.f32.mrb[0].mxu0
    %v4976 = vpop.f32.mrb[0].mxu0
    %v4977 = vadd.f32 %v4905, %v4976
    %v4978 = vpop.f32.mrb[0].mxu0
    %4979 = vdwg.mxu0
    %v4980 = vadd.f32 %v3722, %v4966
    %v4981 = vadd.f32 %v3723, %v4969
    %v4982 = vadd.f32 %v3724, %v4974
    %v4983 = vadd.f32 %v3725, %v4977
    %s4984 = scalar_lea.vmem %s8, 1
    %v4985 = vld [vmem:[%s4984] sm:$0x1]
    %s4986 = scalar_lea.vmem %s9, 1
    %v4987 = vld [vmem:[%s4986] sm:$0x1]
    %v4988 = vsel %vm68, %v4980, 0.0
    %4989 = vadd.xlane.f32.xlu0 %v4988
    %v4990 = vpop.xlane.xlu0 %4989
    %v4991 = vsel %vm68, %v4981, 0.0
    %4992 = vadd.xlane.f32.xlu0 %v4991
    %v4993 = vpop.xlane.xlu0 %4992
    %v4994 = vsel %vm68, %v4982, 0.0
    %4995 = vadd.xlane.f32.xlu0 %v4994
    %v4996 = vpop.xlane.xlu0 %4995
    %v4997 = vsel %vm68, %v4983, 0.0
    %4998 = vadd.xlane.f32.xlu0 %v4997
    %v4999 = vpop.xlane.xlu0 %4998
    %v5000 = vmul.f32 %v4990, %v81
    %v5001 = vmul.f32 %v4993, %v81
    %v5002 = vmul.f32 %v4996, %v81
    %v5003 = vmul.f32 %v4999, %v81
    %v5004 = vsub.f32 %v4980, %v5000
    %v5005 = vsub.f32 %v4981, %v5001
    %v5006 = vsub.f32 %v4982, %v5002
    %v5007 = vsub.f32 %v4983, %v5003
    %v5008 = vmul.f32 %v5004, %v5004
    %v5009 = vmul.f32 %v5005, %v5005
    %v5010 = vmul.f32 %v5006, %v5006
    %v5011 = vmul.f32 %v5007, %v5007
    %v5012 = vsel %vm68, %v5008, 0.0
    %5013 = vadd.xlane.f32.xlu0 %v5012
    %v5014 = vpop.xlane.xlu0 %5013
    %v5015 = vsel %vm68, %v5009, 0.0
    %5016 = vadd.xlane.f32.xlu0 %v5015
    %v5017 = vpop.xlane.xlu0 %5016
    %v5018 = vsel %vm68, %v5010, 0.0
    %5019 = vadd.xlane.f32.xlu0 %v5018
    %v5020 = vpop.xlane.xlu0 %5019
    %v5021 = vsel %vm68, %v5011, 0.0
    %5022 = vadd.xlane.f32.xlu0 %v5021
    %v5023 = vpop.xlane.xlu0 %5022
    %v5024 = vmul.f32 %v5014, %v81
    %v5025 = vmul.f32 %v5017, %v81
    %v5026 = vmul.f32 %v5020, %v81
    %v5027 = vmul.f32 %v5023, %v81
    %v5028 = vadd.f32 %v5024, 1e-05
    %v5029 = vadd.f32 %v5025, 1e-05
    %v5030 = vadd.f32 %v5026, 1e-05
    %v5031 = vadd.f32 %v5027, 1e-05
    %v5032 = vrsqrt.pop %v5028
    %v5033 = vrsqrt.pop %v5029
    %v5034 = vrsqrt.pop %v5030
    %v5035 = vrsqrt.pop %v5031
    %v5036 = vmul.f32 %v5004, %v5032
    %v5037 = vmul.f32 %v5005, %v5033
    %v5038 = vmul.f32 %v5006, %v5034
    %v5039 = vmul.f32 %v5007, %v5035
    %v5041 = vlaneseq
    %v5042 = vshrl.u32 %v5041, 7
    %v5043 = vsub.s32 0, %v5042
    %v5044 = vrot.slane %v4985, %v5043
    %v5046 = vmul.f32 %v5036, %v5044
    %v5047 = vmul.f32 %v5037, %v5044
    %v5048 = vmul.f32 %v5038, %v5044
    %v5049 = vmul.f32 %v5039, %v5044
    %v5051 = vlaneseq
    %v5052 = vshrl.u32 %v5051, 7
    %v5053 = vsub.s32 0, %v5052
    %v5054 = vrot.slane %v4987, %v5053
    %v5056 = vadd.f32 %v5046, %v5054
    %v5057 = vadd.f32 %v5047, %v5054
    %v5058 = vadd.f32 %v5048, %v5054
    %v5059 = vadd.f32 %v5049, %v5054
    %v5060 = vpack.c.bf16 %v5057, %v5056
    %v5061 = vpack.c.bf16 %v5059, %v5058
    %s5062 = scalar_lea.vmem %s10, 320
    %v5063 = vld [vmem:[%s5062] sm:$0xff]
    %v5064 = vld [vmem:[%s5062 + $0x8] sm:$0xff]
    %v5065 = vld [vmem:[%s5062 + $0x10] sm:$0xff]
    %v5066 = vld [vmem:[%s5062 + $0x18] sm:$0xff]
    %v5067 = vld [vmem:[%s5062 + $0x20] sm:$0xff]
    %v5068 = vld [vmem:[%s5062 + $0x28] sm:$0xff]
    %v5069 = vld [vmem:[%s5062 + $0x30] sm:$0xff]
    %v5070 = vld [vmem:[%s5062 + $0x38] sm:$0xff]
    %v5071 = vld [vmem:[%s5062 + $0x40] sm:$0xff]
    %v5072 = vld [vmem:[%s5062 + $0x48] sm:$0xff]
    %v5073 = vld [vmem:[%s5062 + $0x50] sm:$0xff]
    %v5074 = vld [vmem:[%s5062 + $0x58] sm:$0xff]
    %v5075 = vld [vmem:[%s5062 + $0x60] sm:$0xff]
    %v5076 = vld [vmem:[%s5062 + $0x68] sm:$0xff]
    %v5077 = vld [vmem:[%s5062 + $0x70] sm:$0xff]
    %v5078 = vld [vmem:[%s5062 + $0x78] sm:$0xff]
    %v5079 = vld [vmem:[%s5062 + $0x80] sm:$0xff]
    %v5080 = vld [vmem:[%s5062 + $0x88] sm:$0xff]
    %v5081 = vld [vmem:[%s5062 + $0x90] sm:$0xff]
    %v5082 = vld [vmem:[%s5062 + $0x98] sm:$0xff]
    %v5083 = vld [vmem:[%s5062 + $0xa0] sm:$0xff]
    %v5084 = vld [vmem:[%s5062 + $0xa8] sm:$0xff]
    %v5085 = vld [vmem:[%s5062 + $0xb0] sm:$0xff]
    %v5086 = vld [vmem:[%s5062 + $0xb8] sm:$0xff]
    %v5087 = vld [vmem:[%s5062 + $0xc0] sm:$0xff]
    %v5088 = vld [vmem:[%s5062 + $0xc8] sm:$0xff]
    %v5089 = vld [vmem:[%s5062 + $0xd0] sm:$0xff]
    %v5090 = vld [vmem:[%s5062 + $0xd8] sm:$0xff]
    %v5091 = vld [vmem:[%s5062 + $0xe0] sm:$0xff]
    %v5092 = vld [vmem:[%s5062 + $0xe8] sm:$0xff]
    %v5093 = vld [vmem:[%s5062 + $0xf0] sm:$0xff]
    %v5094 = vld [vmem:[%s5062 + $0xf8] sm:$0xff]
    %v5095 = vld [vmem:[%s5062 + $0x100] sm:$0xff]
    %v5096 = vld [vmem:[%s5062 + $0x108] sm:$0xff]
    %v5097 = vld [vmem:[%s5062 + $0x110] sm:$0xff]
    %v5098 = vld [vmem:[%s5062 + $0x118] sm:$0xff]
    %v5099 = vld [vmem:[%s5062 + $0x120] sm:$0xff]
    %v5100 = vld [vmem:[%s5062 + $0x128] sm:$0xff]
    %v5101 = vld [vmem:[%s5062 + $0x130] sm:$0xff]
    %v5102 = vld [vmem:[%s5062 + $0x138] sm:$0xff]
    %s5103 = scalar_lea.vmem %s11, 16
    %v5104 = vld [vmem:[%s5103] sm:$0xff]
    %v5105 = vld [vmem:[%s5103 + $0x8] sm:$0xff]
    %v5108 = vlaneseq
    %v5109 = vshrl.u32 %v5108, 7
    %v5110 = vsub.s32 0, %v5109
    %v5111 = vrot.slane %v5104, %v5110
    %v5112 = vlaneseq
    %v5113 = vshrl.u32 %v5112, 7
    %v5114 = vsub.s32 1, %v5113
    %v5115 = vrot.slane %v5104, %v5114
    %v5116 = vlaneseq
    %v5117 = vshrl.u32 %v5116, 7
    %v5118 = vsub.s32 2, %v5117
    %v5119 = vrot.slane %v5104, %v5118
    %v5120 = vlaneseq
    %v5121 = vshrl.u32 %v5120, 7
    %v5122 = vsub.s32 3, %v5121
    %v5123 = vrot.slane %v5104, %v5122
    %v5124 = vlaneseq
    %v5125 = vshrl.u32 %v5124, 7
    %v5126 = vsub.s32 4, %v5125
    %v5127 = vrot.slane %v5104, %v5126
    %v5128 = vlaneseq
    %v5129 = vshrl.u32 %v5128, 7
    %v5130 = vsub.s32 5, %v5129
    %v5131 = vrot.slane %v5104, %v5130
    %v5132 = vlaneseq
    %v5133 = vshrl.u32 %v5132, 7
    %v5134 = vsub.s32 6, %v5133
    %v5135 = vrot.slane %v5104, %v5134
    %v5136 = vlaneseq
    %v5137 = vshrl.u32 %v5136, 7
    %v5138 = vsub.s32 7, %v5137
    %v5139 = vrot.slane %v5104, %v5138
    %v5140 = vlaneseq
    %v5141 = vshrl.u32 %v5140, 7
    %v5142 = vsub.s32 0, %v5141
    %v5143 = vrot.slane %v5105, %v5142
    %v5144 = vlaneseq
    %v5145 = vshrl.u32 %v5144, 7
    %v5146 = vsub.s32 1, %v5145
    %v5147 = vrot.slane %v5105, %v5146
    %v5148 = vlaneseq
    %v5149 = vshrl.u32 %v5148, 7
    %v5150 = vsub.s32 2, %v5149
    %v5151 = vrot.slane %v5105, %v5150
    %v5152 = vlaneseq
    %v5153 = vshrl.u32 %v5152, 7
    %v5154 = vsub.s32 3, %v5153
    %v5155 = vrot.slane %v5105, %v5154
    %v5156 = vlaneseq
    %v5157 = vshrl.u32 %v5156, 7
    %v5158 = vsub.s32 4, %v5157
    %v5159 = vrot.slane %v5105, %v5158
    %v5160 = vlaneseq
    %v5161 = vshrl.u32 %v5160, 7
    %v5162 = vsub.s32 5, %v5161
    %v5163 = vrot.slane %v5105, %v5162
    %v5164 = vlaneseq
    %v5165 = vshrl.u32 %v5164, 7
    %v5166 = vsub.s32 6, %v5165
    %v5167 = vrot.slane %v5105, %v5166
    %v5168 = vlaneseq
    %v5169 = vshrl.u32 %v5168, 7
    %v5170 = vsub.s32 7, %v5169
    %v5171 = vrot.slane %v5105, %v5170
    %v5228 = vunpack.c.l.b16 %v5063
    %v5229 = vunpack.c.h.b16 %v5063
    %v5230 = vunpack.c.l.b16 %v5064
    %v5231 = vunpack.c.h.b16 %v5064
    %v5232 = vunpack.c.l.b16 %v5065
    %v5233 = vunpack.c.h.b16 %v5065
    %v5234 = vunpack.c.l.b16 %v5066
    %v5235 = vunpack.c.h.b16 %v5066
    %v5236 = vunpack.c.l.b16 %v5067
    %v5237 = vunpack.c.h.b16 %v5067
    %v5238 = vunpack.c.l.b16 %v5068
    %v5239 = vunpack.c.h.b16 %v5068
    %v5240 = vunpack.c.l.b16 %v5069
    %v5241 = vunpack.c.h.b16 %v5069
    %v5242 = vunpack.c.l.b16 %v5070
    %v5243 = vunpack.c.h.b16 %v5070
    %v5244 = vunpack.c.l.b16 %v5071
    %v5245 = vunpack.c.h.b16 %v5071
    %v5246 = vunpack.c.l.b16 %v5072
    %v5247 = vunpack.c.h.b16 %v5072
    %v5248 = vunpack.c.l.b16 %v5073
    %v5249 = vunpack.c.h.b16 %v5073
    %v5250 = vunpack.c.l.b16 %v5074
    %v5251 = vunpack.c.h.b16 %v5074
    %v5252 = vunpack.c.l.b16 %v5075
    %v5253 = vunpack.c.h.b16 %v5075
    %v5254 = vunpack.c.l.b16 %v5076
    %v5255 = vunpack.c.h.b16 %v5076
    %v5256 = vunpack.c.l.b16 %v5077
    %v5257 = vunpack.c.h.b16 %v5077
    %v5258 = vunpack.c.l.b16 %v5078
    %v5259 = vunpack.c.h.b16 %v5078
    %v5260 = vunpack.c.l.b16 %v5079
    %v5261 = vunpack.c.h.b16 %v5079
    %v5262 = vunpack.c.l.b16 %v5080
    %v5263 = vunpack.c.h.b16 %v5080
    %v5264 = vunpack.c.l.b16 %v5081
    %v5265 = vunpack.c.h.b16 %v5081
    %v5266 = vunpack.c.l.b16 %v5082
    %v5267 = vunpack.c.h.b16 %v5082
    %v5268 = vunpack.c.l.b16 %v5083
    %v5269 = vunpack.c.h.b16 %v5083
    %v5270 = vunpack.c.l.b16 %v5084
    %v5271 = vunpack.c.h.b16 %v5084
    %v5272 = vunpack.c.l.b16 %v5085
    %v5273 = vunpack.c.h.b16 %v5085
    %v5274 = vunpack.c.l.b16 %v5086
    %v5275 = vunpack.c.h.b16 %v5086
    %v5276 = vunpack.c.l.b16 %v5087
    %v5277 = vunpack.c.h.b16 %v5087
    %v5278 = vunpack.c.l.b16 %v5088
    %v5279 = vunpack.c.h.b16 %v5088
    %v5280 = vunpack.c.l.b16 %v5089
    %v5281 = vunpack.c.h.b16 %v5089
    %v5282 = vunpack.c.l.b16 %v5090
    %v5283 = vunpack.c.h.b16 %v5090
    %v5284 = vunpack.c.l.b16 %v5091
    %v5285 = vunpack.c.h.b16 %v5091
    %v5286 = vunpack.c.l.b16 %v5092
    %v5287 = vunpack.c.h.b16 %v5092
    %v5288 = vunpack.c.l.b16 %v5093
    %v5289 = vunpack.c.h.b16 %v5093
    %v5290 = vunpack.c.l.b16 %v5094
    %v5291 = vunpack.c.h.b16 %v5094
    %v5292 = vunpack.c.l.b16 %v5095
    %v5293 = vunpack.c.h.b16 %v5095
    %v5294 = vunpack.c.l.b16 %v5096
    %v5295 = vunpack.c.h.b16 %v5096
    %v5296 = vunpack.c.l.b16 %v5097
    %v5297 = vunpack.c.h.b16 %v5097
    %v5298 = vunpack.c.l.b16 %v5098
    %v5299 = vunpack.c.h.b16 %v5098
    %v5300 = vunpack.c.l.b16 %v5099
    %v5301 = vunpack.c.h.b16 %v5099
    %v5302 = vunpack.c.l.b16 %v5100
    %v5303 = vunpack.c.h.b16 %v5100
    %v5304 = vunpack.c.l.b16 %v5101
    %v5305 = vunpack.c.h.b16 %v5101
    %v5306 = vunpack.c.l.b16 %v5102
    %v5307 = vunpack.c.h.b16 %v5102
    %v5308 = vpack.c.b16 %v5244, %v5228
    %v5309 = vpack.c.b16 %v5245, %v5229
    %v5310 = vpack.c.b16 %v5246, %v5230
    %v5311 = vpack.c.b16 %v5247, %v5231
    %v5312 = vpack.c.b16 %v5248, %v5232
    %v5313 = vpack.c.b16 %v5249, %v5233
    %v5314 = vpack.c.b16 %v5250, %v5234
    %v5315 = vpack.c.b16 %v5251, %v5235
    %v5316 = vpack.c.b16 %v5252, %v5236
    %v5317 = vpack.c.b16 %v5253, %v5237
    %v5318 = vpack.c.b16 %v5254, %v5238
    %v5319 = vpack.c.b16 %v5255, %v5239
    %v5320 = vpack.c.b16 %v5256, %v5240
    %v5321 = vpack.c.b16 %v5257, %v5241
    %v5322 = vpack.c.b16 %v5258, %v5242
    %v5323 = vpack.c.b16 %v5259, %v5243
    %v5324 = vpack.c.b16 %v5276, %v5260
    %v5325 = vpack.c.b16 %v5277, %v5261
    %v5326 = vpack.c.b16 %v5278, %v5262
    %v5327 = vpack.c.b16 %v5279, %v5263
    %v5328 = vpack.c.b16 %v5280, %v5264
    %v5329 = vpack.c.b16 %v5281, %v5265
    %v5330 = vpack.c.b16 %v5282, %v5266
    %v5331 = vpack.c.b16 %v5283, %v5267
    %v5332 = vpack.c.b16 %v5284, %v5268
    %v5333 = vpack.c.b16 %v5285, %v5269
    %v5334 = vpack.c.b16 %v5286, %v5270
    %v5335 = vpack.c.b16 %v5287, %v5271
    %v5336 = vpack.c.b16 %v5288, %v5272
    %v5337 = vpack.c.b16 %v5289, %v5273
    %v5338 = vpack.c.b16 %v5290, %v5274
    %v5339 = vpack.c.b16 %v5291, %v5275
    %v5340 = vpack.c.b16 %v5292, %v5292
    %v5341 = vpack.c.b16 %v5293, %v5293
    %v5342 = vpack.c.b16 %v5294, %v5294
    %v5343 = vpack.c.b16 %v5295, %v5295
    %v5344 = vpack.c.b16 %v5296, %v5296
    %v5345 = vpack.c.b16 %v5297, %v5297
    %v5346 = vpack.c.b16 %v5298, %v5298
    %v5347 = vpack.c.b16 %v5299, %v5299
    %v5348 = vpack.c.b16 %v5300, %v5300
    %v5349 = vpack.c.b16 %v5301, %v5301
    %v5350 = vpack.c.b16 %v5302, %v5302
    %v5351 = vpack.c.b16 %v5303, %v5303
    %v5352 = vpack.c.b16 %v5304, %v5304
    %v5353 = vpack.c.b16 %v5305, %v5305
    %v5354 = vpack.c.b16 %v5306, %v5306
    %v5355 = vpack.c.b16 %v5307, %v5307
    %v5389 = vsel %vm68, %v5060, 0
    %v5392 = vsel %vm68, %v5061, 0
    %v5395 = vsel %vm177, %v5340, 0
    %v5398 = vsel %vm177, %v5341, 0
    %v5401 = vsel %vm177, %v5342, 0
    %v5404 = vsel %vm177, %v5343, 0
    %v5407 = vsel %vm177, %v5344, 0
    %v5410 = vsel %vm177, %v5345, 0
    %v5413 = vsel %vm177, %v5346, 0
    %v5416 = vsel %vm177, %v5347, 0
    %v5419 = vsel %vm177, %v5348, 0
    %v5422 = vsel %vm177, %v5349, 0
    %v5425 = vsel %vm177, %v5350, 0
    %v5428 = vsel %vm177, %v5351, 0
    %v5431 = vsel %vm177, %v5352, 0
    %v5434 = vsel %vm177, %v5353, 0
    %v5437 = vsel %vm177, %v5354, 0
    %v5440 = vsel %vm177, %v5355, 0
    %5442 = vmatprep.subr.bf16.mxu0 %v5309
    %5443 = vmatpush1.bf16.msra.mxu0 %v5308
    %5444 = vmatprep.subr.bf16.mxu0 %v5325
    %5445 = vmatpush1.bf16.msra.mxu0 %v5324
    %5446 = vmatprep.subr.bf16.mxu0 %v5398
    %5447 = vmatpush1.bf16.msra.mxu0 %v5395
    %5448 = vmatprep.subr.bf16.mxu0 0
    %5449 = vmatpush1.bf16.msra.mxu0 0
    %5450 = vmatprep.subr.bf16.mxu0 0
    %5451 = vmatpush1.bf16.msra.mxu0 0
    %5452 = vmatprep.subr.bf16.mxu0 0
    %5453 = vmatpush1.bf16.msra.mxu0 0
    %5454 = vmatprep.subr.bf16.mxu0 0
    %5455 = vmatpush1.bf16.msra.mxu0 0
    %5456 = vmatprep.subr.bf16.mxu0 0
    %5457 = vmatpush1.bf16.msra.mxu0 0
    %5458 = vmatprep.subr.bf16.mxu0 0
    %5459 = vmatpush1.bf16.msra.mxu0 0
    %5460 = vmatprep.subr.bf16.mxu0 0
    %5461 = vmatpush1.bf16.msra.mxu0 0
    %5462 = vmatprep.subr.bf16.mxu0 0
    %5463 = vmatpush1.bf16.msra.mxu0 0
    %5464 = vmatprep.subr.bf16.mxu0 0
    %5465 = vmatpush1.bf16.msra.mxu0 0
    %5466 = vmatprep.subr.bf16.mxu0 0
    %5467 = vmatpush1.bf16.msra.mxu0 0
    %5468 = vmatprep.subr.bf16.mxu0 0
    %5469 = vmatpush1.bf16.msra.mxu0 0
    %5470 = vmatprep.subr.bf16.mxu0 0
    %5471 = vmatpush1.bf16.msra.mxu0 0
    %5472 = vmatprep.subr.bf16.mxu0 0
    %5473 = vmatpush1.bf16.msra.mxu0 0
    %5474 = vmatprep.mubr.bf16.mxu0 0
    %5475 = vmatmul.mubr.bf16.gmra.mrb[0].mxu0 %v5389
    %v5476 = vpop.f32.mrb[0].mxu0
    %v5477 = vadd.f32 %v5111, %v5476
    %v5478 = vpop.f32.mrb[0].mxu0
    %v5479 = vadd.f32 %v5115, %v5478
    %v5480 = vpop.f32.mrb[0].mxu0
    %v5481 = vadd.f32 %v5111, %v5480
    %v5482 = vpop.f32.mrb[0].mxu0
    %v5483 = vadd.f32 %v5115, %v5482
    %5484 = vmatprep.mubr.bf16.mxu0 0
    %5485 = vmatmul.mubr.bf16.gmra.mrb[0].mxu0 %v5392
    %v5486 = vpop.f32.mrb[0].mxu0
    %v5487 = vadd.f32 %v5111, %v5486
    %v5488 = vpop.f32.mrb[0].mxu0
    %v5489 = vadd.f32 %v5115, %v5488
    %v5490 = vpop.f32.mrb[0].mxu0
    %v5491 = vadd.f32 %v5111, %v5490
    %v5492 = vpop.f32.mrb[0].mxu0
    %v5493 = vadd.f32 %v5115, %v5492
    %5494 = vdwg.mxu0
    %5495 = vmatprep.subr.bf16.mxu0 %v5311
    %5496 = vmatpush1.bf16.msra.mxu0 %v5310
    %5497 = vmatprep.subr.bf16.mxu0 %v5327
    %5498 = vmatpush1.bf16.msra.mxu0 %v5326
    %5499 = vmatprep.subr.bf16.mxu0 %v5404
    %5500 = vmatpush1.bf16.msra.mxu0 %v5401
    %5501 = vmatprep.subr.bf16.mxu0 0
    %5502 = vmatpush1.bf16.msra.mxu0 0
    %5503 = vmatprep.subr.bf16.mxu0 0
    %5504 = vmatpush1.bf16.msra.mxu0 0
    %5505 = vmatprep.subr.bf16.mxu0 0
    %5506 = vmatpush1.bf16.msra.mxu0 0
    %5507 = vmatprep.subr.bf16.mxu0 0
    %5508 = vmatpush1.bf16.msra.mxu0 0
    %5509 = vmatprep.subr.bf16.mxu0 0
    %5510 = vmatpush1.bf16.msra.mxu0 0
    %5511 = vmatprep.subr.bf16.mxu0 0
    %5512 = vmatpush1.bf16.msra.mxu0 0
    %5513 = vmatprep.subr.bf16.mxu0 0
    %5514 = vmatpush1.bf16.msra.mxu0 0
    %5515 = vmatprep.subr.bf16.mxu0 0
    %5516 = vmatpush1.bf16.msra.mxu0 0
    %5517 = vmatprep.subr.bf16.mxu0 0
    %5518 = vmatpush1.bf16.msra.mxu0 0
    %5519 = vmatprep.subr.bf16.mxu0 0
    %5520 = vmatpush1.bf16.msra.mxu0 0
    %5521 = vmatprep.subr.bf16.mxu0 0
    %5522 = vmatpush1.bf16.msra.mxu0 0
    %5523 = vmatprep.subr.bf16.mxu0 0
    %5524 = vmatpush1.bf16.msra.mxu0 0
    %5525 = vmatprep.subr.bf16.mxu0 0
    %5526 = vmatpush1.bf16.msra.mxu0 0
    %5527 = vmatprep.mubr.bf16.mxu0 0
    %5528 = vmatmul.mubr.bf16.gmra.mrb[0].mxu0 %v5389
    %v5529 = vpop.f32.mrb[0].mxu0
    %v5530 = vadd.f32 %v5119, %v5529
    %v5531 = vpop.f32.mrb[0].mxu0
    %v5532 = vadd.f32 %v5123, %v5531
    %v5533 = vpop.f32.mrb[0].mxu0
    %v5534 = vadd.f32 %v5119, %v5533
    %v5535 = vpop.f32.mrb[0].mxu0
    %v5536 = vadd.f32 %v5123, %v5535
    %5537 = vmatprep.mubr.bf16.mxu0 0
    %5538 = vmatmul.mubr.bf16.gmra.mrb[0].mxu0 %v5392
    %v5539 = vpop.f32.mrb[0].mxu0
    %v5540 = vadd.f32 %v5119, %v5539
    %v5541 = vpop.f32.mrb[0].mxu0
    %v5542 = vadd.f32 %v5123, %v5541
    %v5543 = vpop.f32.mrb[0].mxu0
    %v5544 = vadd.f32 %v5119, %v5543
    %v5545 = vpop.f32.mrb[0].mxu0
    %v5546 = vadd.f32 %v5123, %v5545
    %5547 = vdwg.mxu0
    %5548 = vmatprep.subr.bf16.mxu0 %v5313
    %5549 = vmatpush1.bf16.msra.mxu0 %v5312
    %5550 = vmatprep.subr.bf16.mxu0 %v5329
    %5551 = vmatpush1.bf16.msra.mxu0 %v5328
    %5552 = vmatprep.subr.bf16.mxu0 %v5410
    %5553 = vmatpush1.bf16.msra.mxu0 %v5407
    %5554 = vmatprep.subr.bf16.mxu0 0
    %5555 = vmatpush1.bf16.msra.mxu0 0
    %5556 = vmatprep.subr.bf16.mxu0 0
    %5557 = vmatpush1.bf16.msra.mxu0 0
    %5558 = vmatprep.subr.bf16.mxu0 0
    %5559 = vmatpush1.bf16.msra.mxu0 0
    %5560 = vmatprep.subr.bf16.mxu0 0
    %5561 = vmatpush1.bf16.msra.mxu0 0
    %5562 = vmatprep.subr.bf16.mxu0 0
    %5563 = vmatpush1.bf16.msra.mxu0 0
    %5564 = vmatprep.subr.bf16.mxu0 0
    %5565 = vmatpush1.bf16.msra.mxu0 0
    %5566 = vmatprep.subr.bf16.mxu0 0
    %5567 = vmatpush1.bf16.msra.mxu0 0
    %5568 = vmatprep.subr.bf16.mxu0 0
    %5569 = vmatpush1.bf16.msra.mxu0 0
    %5570 = vmatprep.subr.bf16.mxu0 0
    %5571 = vmatpush1.bf16.msra.mxu0 0
    %5572 = vmatprep.subr.bf16.mxu0 0
    %5573 = vmatpush1.bf16.msra.mxu0 0
    %5574 = vmatprep.subr.bf16.mxu0 0
    %5575 = vmatpush1.bf16.msra.mxu0 0
    %5576 = vmatprep.subr.bf16.mxu0 0
    %5577 = vmatpush1.bf16.msra.mxu0 0
    %5578 = vmatprep.subr.bf16.mxu0 0
    %5579 = vmatpush1.bf16.msra.mxu0 0
    %5580 = vmatprep.mubr.bf16.mxu0 0
    %5581 = vmatmul.mubr.bf16.gmra.mrb[0].mxu0 %v5389
    %v5582 = vpop.f32.mrb[0].mxu0
    %v5583 = vadd.f32 %v5127, %v5582
    %v5584 = vpop.f32.mrb[0].mxu0
    %v5585 = vadd.f32 %v5131, %v5584
    %v5586 = vpop.f32.mrb[0].mxu0
    %v5587 = vadd.f32 %v5127, %v5586
    %v5588 = vpop.f32.mrb[0].mxu0
    %v5589 = vadd.f32 %v5131, %v5588
    %5590 = vmatprep.mubr.bf16.mxu0 0
    %5591 = vmatmul.mubr.bf16.gmra.mrb[0].mxu0 %v5392
    %v5592 = vpop.f32.mrb[0].mxu0
    %v5593 = vadd.f32 %v5127, %v5592
    %v5594 = vpop.f32.mrb[0].mxu0
    %v5595 = vadd.f32 %v5131, %v5594
    %v5596 = vpop.f32.mrb[0].mxu0
    %v5597 = vadd.f32 %v5127, %v5596
    %v5598 = vpop.f32.mrb[0].mxu0
    %v5599 = vadd.f32 %v5131, %v5598
    %5600 = vdwg.mxu0
    %5601 = vmatprep.subr.bf16.mxu0 %v5315
    %5602 = vmatpush1.bf16.msra.mxu0 %v5314
    %5603 = vmatprep.subr.bf16.mxu0 %v5331
    %5604 = vmatpush1.bf16.msra.mxu0 %v5330
    %5605 = vmatprep.subr.bf16.mxu0 %v5416
    %5606 = vmatpush1.bf16.msra.mxu0 %v5413
    %5607 = vmatprep.subr.bf16.mxu0 0
    %5608 = vmatpush1.bf16.msra.mxu0 0
    %5609 = vmatprep.subr.bf16.mxu0 0
    %5610 = vmatpush1.bf16.msra.mxu0 0
    %5611 = vmatprep.subr.bf16.mxu0 0
    %5612 = vmatpush1.bf16.msra.mxu0 0
    %5613 = vmatprep.subr.bf16.mxu0 0
    %5614 = vmatpush1.bf16.msra.mxu0 0
    %5615 = vmatprep.subr.bf16.mxu0 0
    %5616 = vmatpush1.bf16.msra.mxu0 0
    %5617 = vmatprep.subr.bf16.mxu0 0
    %5618 = vmatpush1.bf16.msra.mxu0 0
    %5619 = vmatprep.subr.bf16.mxu0 0
    %5620 = vmatpush1.bf16.msra.mxu0 0
    %5621 = vmatprep.subr.bf16.mxu0 0
    %5622 = vmatpush1.bf16.msra.mxu0 0
    %5623 = vmatprep.subr.bf16.mxu0 0
    %5624 = vmatpush1.bf16.msra.mxu0 0
    %5625 = vmatprep.subr.bf16.mxu0 0
    %5626 = vmatpush1.bf16.msra.mxu0 0
    %5627 = vmatprep.subr.bf16.mxu0 0
    %5628 = vmatpush1.bf16.msra.mxu0 0
    %5629 = vmatprep.subr.bf16.mxu0 0
    %5630 = vmatpush1.bf16.msra.mxu0 0
    %5631 = vmatprep.subr.bf16.mxu0 0
    %5632 = vmatpush1.bf16.msra.mxu0 0
    %5633 = vmatprep.mubr.bf16.mxu0 0
    %5634 = vmatmul.mubr.bf16.gmra.mrb[0].mxu0 %v5389
    %v5635 = vpop.f32.mrb[0].mxu0
    %v5636 = vadd.f32 %v5135, %v5635
    %v5637 = vpop.f32.mrb[0].mxu0
    %v5638 = vadd.f32 %v5139, %v5637
    %v5639 = vpop.f32.mrb[0].mxu0
    %v5640 = vadd.f32 %v5135, %v5639
    %v5641 = vpop.f32.mrb[0].mxu0
    %v5642 = vadd.f32 %v5139, %v5641
    %5643 = vmatprep.mubr.bf16.mxu0 0
    %5644 = vmatmul.mubr.bf16.gmra.mrb[0].mxu0 %v5392
    %v5645 = vpop.f32.mrb[0].mxu0
    %v5646 = vadd.f32 %v5135, %v5645
    %v5647 = vpop.f32.mrb[0].mxu0
    %v5648 = vadd.f32 %v5139, %v5647
    %v5649 = vpop.f32.mrb[0].mxu0
    %v5650 = vadd.f32 %v5135, %v5649
    %v5651 = vpop.f32.mrb[0].mxu0
    %v5652 = vadd.f32 %v5139, %v5651
    %5653 = vdwg.mxu0
    %5654 = vmatprep.subr.bf16.mxu0 %v5317
    %5655 = vmatpush1.bf16.msra.mxu0 %v5316
    %5656 = vmatprep.subr.bf16.mxu0 %v5333
    %5657 = vmatpush1.bf16.msra.mxu0 %v5332
    %5658 = vmatprep.subr.bf16.mxu0 %v5422
    %5659 = vmatpush1.bf16.msra.mxu0 %v5419
    %5660 = vmatprep.subr.bf16.mxu0 0
    %5661 = vmatpush1.bf16.msra.mxu0 0
    %5662 = vmatprep.subr.bf16.mxu0 0
    %5663 = vmatpush1.bf16.msra.mxu0 0
    %5664 = vmatprep.subr.bf16.mxu0 0
    %5665 = vmatpush1.bf16.msra.mxu0 0
    %5666 = vmatprep.subr.bf16.mxu0 0
    %5667 = vmatpush1.bf16.msra.mxu0 0
    %5668 = vmatprep.subr.bf16.mxu0 0
    %5669 = vmatpush1.bf16.msra.mxu0 0
    %5670 = vmatprep.subr.bf16.mxu0 0
    %5671 = vmatpush1.bf16.msra.mxu0 0
    %5672 = vmatprep.subr.bf16.mxu0 0
    %5673 = vmatpush1.bf16.msra.mxu0 0
    %5674 = vmatprep.subr.bf16.mxu0 0
    %5675 = vmatpush1.bf16.msra.mxu0 0
    %5676 = vmatprep.subr.bf16.mxu0 0
    %5677 = vmatpush1.bf16.msra.mxu0 0
    %5678 = vmatprep.subr.bf16.mxu0 0
    %5679 = vmatpush1.bf16.msra.mxu0 0
    %5680 = vmatprep.subr.bf16.mxu0 0
    %5681 = vmatpush1.bf16.msra.mxu0 0
    %5682 = vmatprep.subr.bf16.mxu0 0
    %5683 = vmatpush1.bf16.msra.mxu0 0
    %5684 = vmatprep.subr.bf16.mxu0 0
    %5685 = vmatpush1.bf16.msra.mxu0 0
    %5686 = vmatprep.mubr.bf16.mxu0 0
    %5687 = vmatmul.mubr.bf16.gmra.mrb[0].mxu0 %v5389
    %v5688 = vpop.f32.mrb[0].mxu0
    %v5689 = vadd.f32 %v5143, %v5688
    %v5690 = vpop.f32.mrb[0].mxu0
    %v5691 = vadd.f32 %v5147, %v5690
    %v5692 = vpop.f32.mrb[0].mxu0
    %v5693 = vadd.f32 %v5143, %v5692
    %v5694 = vpop.f32.mrb[0].mxu0
    %v5695 = vadd.f32 %v5147, %v5694
    %5696 = vmatprep.mubr.bf16.mxu0 0
    %5697 = vmatmul.mubr.bf16.gmra.mrb[0].mxu0 %v5392
    %v5698 = vpop.f32.mrb[0].mxu0
    %v5699 = vadd.f32 %v5143, %v5698
    %v5700 = vpop.f32.mrb[0].mxu0
    %v5701 = vadd.f32 %v5147, %v5700
    %v5702 = vpop.f32.mrb[0].mxu0
    %v5703 = vadd.f32 %v5143, %v5702
    %v5704 = vpop.f32.mrb[0].mxu0
    %v5705 = vadd.f32 %v5147, %v5704
    %5706 = vdwg.mxu0
    %5707 = vmatprep.subr.bf16.mxu0 %v5319
    %5708 = vmatpush1.bf16.msra.mxu0 %v5318
    %5709 = vmatprep.subr.bf16.mxu0 %v5335
    %5710 = vmatpush1.bf16.msra.mxu0 %v5334
    %5711 = vmatprep.subr.bf16.mxu0 %v5428
    %5712 = vmatpush1.bf16.msra.mxu0 %v5425
    %5713 = vmatprep.subr.bf16.mxu0 0
    %5714 = vmatpush1.bf16.msra.mxu0 0
    %5715 = vmatprep.subr.bf16.mxu0 0
    %5716 = vmatpush1.bf16.msra.mxu0 0
    %5717 = vmatprep.subr.bf16.mxu0 0
    %5718 = vmatpush1.bf16.msra.mxu0 0
    %5719 = vmatprep.subr.bf16.mxu0 0
    %5720 = vmatpush1.bf16.msra.mxu0 0
    %5721 = vmatprep.subr.bf16.mxu0 0
    %5722 = vmatpush1.bf16.msra.mxu0 0
    %5723 = vmatprep.subr.bf16.mxu0 0
    %5724 = vmatpush1.bf16.msra.mxu0 0
    %5725 = vmatprep.subr.bf16.mxu0 0
    %5726 = vmatpush1.bf16.msra.mxu0 0
    %5727 = vmatprep.subr.bf16.mxu0 0
    %5728 = vmatpush1.bf16.msra.mxu0 0
    %5729 = vmatprep.subr.bf16.mxu0 0
    %5730 = vmatpush1.bf16.msra.mxu0 0
    %5731 = vmatprep.subr.bf16.mxu0 0
    %5732 = vmatpush1.bf16.msra.mxu0 0
    %5733 = vmatprep.subr.bf16.mxu0 0
    %5734 = vmatpush1.bf16.msra.mxu0 0
    %5735 = vmatprep.subr.bf16.mxu0 0
    %5736 = vmatpush1.bf16.msra.mxu0 0
    %5737 = vmatprep.subr.bf16.mxu0 0
    %5738 = vmatpush1.bf16.msra.mxu0 0
    %5739 = vmatprep.mubr.bf16.mxu0 0
    %5740 = vmatmul.mubr.bf16.gmra.mrb[0].mxu0 %v5389
    %v5741 = vpop.f32.mrb[0].mxu0
    %v5742 = vadd.f32 %v5151, %v5741
    %v5743 = vpop.f32.mrb[0].mxu0
    %v5744 = vadd.f32 %v5155, %v5743
    %v5745 = vpop.f32.mrb[0].mxu0
    %v5746 = vadd.f32 %v5151, %v5745
    %v5747 = vpop.f32.mrb[0].mxu0
    %v5748 = vadd.f32 %v5155, %v5747
    %5749 = vmatprep.mubr.bf16.mxu0 0
    %5750 = vmatmul.mubr.bf16.gmra.mrb[0].mxu0 %v5392
    %v5751 = vpop.f32.mrb[0].mxu0
    %v5752 = vadd.f32 %v5151, %v5751
    %v5753 = vpop.f32.mrb[0].mxu0
    %v5754 = vadd.f32 %v5155, %v5753
    %v5755 = vpop.f32.mrb[0].mxu0
    %v5756 = vadd.f32 %v5151, %v5755
    %v5757 = vpop.f32.mrb[0].mxu0
    %v5758 = vadd.f32 %v5155, %v5757
    %5759 = vdwg.mxu0
    %5760 = vmatprep.subr.bf16.mxu0 %v5321
    %5761 = vmatpush1.bf16.msra.mxu0 %v5320
    %5762 = vmatprep.subr.bf16.mxu0 %v5337
    %5763 = vmatpush1.bf16.msra.mxu0 %v5336
    %5764 = vmatprep.subr.bf16.mxu0 %v5434
    %5765 = vmatpush1.bf16.msra.mxu0 %v5431
    %5766 = vmatprep.subr.bf16.mxu0 0
    %5767 = vmatpush1.bf16.msra.mxu0 0
    %5768 = vmatprep.subr.bf16.mxu0 0
    %5769 = vmatpush1.bf16.msra.mxu0 0
    %5770 = vmatprep.subr.bf16.mxu0 0
    %5771 = vmatpush1.bf16.msra.mxu0 0
    %5772 = vmatprep.subr.bf16.mxu0 0
    %5773 = vmatpush1.bf16.msra.mxu0 0
    %5774 = vmatprep.subr.bf16.mxu0 0
    %5775 = vmatpush1.bf16.msra.mxu0 0
    %5776 = vmatprep.subr.bf16.mxu0 0
    %5777 = vmatpush1.bf16.msra.mxu0 0
    %5778 = vmatprep.subr.bf16.mxu0 0
    %5779 = vmatpush1.bf16.msra.mxu0 0
    %5780 = vmatprep.subr.bf16.mxu0 0
    %5781 = vmatpush1.bf16.msra.mxu0 0
    %5782 = vmatprep.subr.bf16.mxu0 0
    %5783 = vmatpush1.bf16.msra.mxu0 0
    %5784 = vmatprep.subr.bf16.mxu0 0
    %5785 = vmatpush1.bf16.msra.mxu0 0
    %5786 = vmatprep.subr.bf16.mxu0 0
    %5787 = vmatpush1.bf16.msra.mxu0 0
    %5788 = vmatprep.subr.bf16.mxu0 0
    %5789 = vmatpush1.bf16.msra.mxu0 0
    %5790 = vmatprep.subr.bf16.mxu0 0
    %5791 = vmatpush1.bf16.msra.mxu0 0
    %5792 = vmatprep.mubr.bf16.mxu0 0
    %5793 = vmatmul.mubr.bf16.gmra.mrb[0].mxu0 %v5389
    %v5794 = vpop.f32.mrb[0].mxu0
    %v5795 = vadd.f32 %v5159, %v5794
    %v5796 = vpop.f32.mrb[0].mxu0
    %v5797 = vadd.f32 %v5163, %v5796
    %v5798 = vpop.f32.mrb[0].mxu0
    %v5799 = vadd.f32 %v5159, %v5798
    %v5800 = vpop.f32.mrb[0].mxu0
    %v5801 = vadd.f32 %v5163, %v5800
    %5802 = vmatprep.mubr.bf16.mxu0 0
    %5803 = vmatmul.mubr.bf16.gmra.mrb[0].mxu0 %v5392
    %v5804 = vpop.f32.mrb[0].mxu0
    %v5805 = vadd.f32 %v5159, %v5804
    %v5806 = vpop.f32.mrb[0].mxu0
    %v5807 = vadd.f32 %v5163, %v5806
    %v5808 = vpop.f32.mrb[0].mxu0
    %v5809 = vadd.f32 %v5159, %v5808
    %v5810 = vpop.f32.mrb[0].mxu0
    %v5811 = vadd.f32 %v5163, %v5810
    %5812 = vdwg.mxu0
    %5813 = vmatprep.subr.bf16.mxu0 %v5323
    %5814 = vmatpush1.bf16.msra.mxu0 %v5322
    %5815 = vmatprep.subr.bf16.mxu0 %v5339
    %5816 = vmatpush1.bf16.msra.mxu0 %v5338
    %5817 = vmatprep.subr.bf16.mxu0 %v5440
    %5818 = vmatpush1.bf16.msra.mxu0 %v5437
    %5819 = vmatprep.subr.bf16.mxu0 0
    %5820 = vmatpush1.bf16.msra.mxu0 0
    %5821 = vmatprep.subr.bf16.mxu0 0
    %5822 = vmatpush1.bf16.msra.mxu0 0
    %5823 = vmatprep.subr.bf16.mxu0 0
    %5824 = vmatpush1.bf16.msra.mxu0 0
    %5825 = vmatprep.subr.bf16.mxu0 0
    %5826 = vmatpush1.bf16.msra.mxu0 0
    %5827 = vmatprep.subr.bf16.mxu0 0
    %5828 = vmatpush1.bf16.msra.mxu0 0
    %5829 = vmatprep.subr.bf16.mxu0 0
    %5830 = vmatpush1.bf16.msra.mxu0 0
    %5831 = vmatprep.subr.bf16.mxu0 0
    %5832 = vmatpush1.bf16.msra.mxu0 0
    %5833 = vmatprep.subr.bf16.mxu0 0
    %5834 = vmatpush1.bf16.msra.mxu0 0
    %5835 = vmatprep.subr.bf16.mxu0 0
    %5836 = vmatpush1.bf16.msra.mxu0 0
    %5837 = vmatprep.subr.bf16.mxu0 0
    %5838 = vmatpush1.bf16.msra.mxu0 0
    %5839 = vmatprep.subr.bf16.mxu0 0
    %5840 = vmatpush1.bf16.msra.mxu0 0
    %5841 = vmatprep.subr.bf16.mxu0 0
    %5842 = vmatpush1.bf16.msra.mxu0 0
    %5843 = vmatprep.subr.bf16.mxu0 0
    %5844 = vmatpush1.bf16.msra.mxu0 0
    %5845 = vmatprep.mubr.bf16.mxu0 0
    %5846 = vmatmul.mubr.bf16.gmra.mrb[0].mxu0 %v5389
    %v5847 = vpop.f32.mrb[0].mxu0
    %v5848 = vadd.f32 %v5167, %v5847
    %v5849 = vpop.f32.mrb[0].mxu0
    %v5850 = vadd.f32 %v5171, %v5849
    %v5851 = vpop.f32.mrb[0].mxu0
    %v5852 = vadd.f32 %v5167, %v5851
    %v5853 = vpop.f32.mrb[0].mxu0
    %v5854 = vadd.f32 %v5171, %v5853
    %5855 = vmatprep.mubr.bf16.mxu0 0
    %5856 = vmatmul.mubr.bf16.gmra.mrb[0].mxu0 %v5392
    %v5857 = vpop.f32.mrb[0].mxu0
    %v5858 = vadd.f32 %v5167, %v5857
    %v5859 = vpop.f32.mrb[0].mxu0
    %v5860 = vadd.f32 %v5171, %v5859
    %v5861 = vpop.f32.mrb[0].mxu0
    %v5862 = vadd.f32 %v5167, %v5861
    %v5863 = vpop.f32.mrb[0].mxu0
    %v5864 = vadd.f32 %v5171, %v5863
    %5865 = vdwg.mxu0
    %v5866 = vmax.f32 %v5477, 0.0
    %v5867 = vmax.f32 %v5479, 0.0
    %v5868 = vmax.f32 %v5530, 0.0
    %v5869 = vmax.f32 %v5532, 0.0
    %v5870 = vmax.f32 %v5583, 0.0
    %v5871 = vmax.f32 %v5585, 0.0
    %v5872 = vmax.f32 %v5636, 0.0
    %v5873 = vmax.f32 %v5638, 0.0
    %v5874 = vmax.f32 %v5689, 0.0
    %v5875 = vmax.f32 %v5691, 0.0
    %v5876 = vmax.f32 %v5742, 0.0
    %v5877 = vmax.f32 %v5744, 0.0
    %v5878 = vmax.f32 %v5795, 0.0
    %v5879 = vmax.f32 %v5797, 0.0
    %v5880 = vmax.f32 %v5848, 0.0
    %v5881 = vmax.f32 %v5850, 0.0
    %v5882 = vmax.f32 %v5481, 0.0
    %v5883 = vmax.f32 %v5483, 0.0
    %v5884 = vmax.f32 %v5534, 0.0
    %v5885 = vmax.f32 %v5536, 0.0
    %v5886 = vmax.f32 %v5587, 0.0
    %v5887 = vmax.f32 %v5589, 0.0
    %v5888 = vmax.f32 %v5640, 0.0
    %v5889 = vmax.f32 %v5642, 0.0
    %v5890 = vmax.f32 %v5693, 0.0
    %v5891 = vmax.f32 %v5695, 0.0
    %v5892 = vmax.f32 %v5746, 0.0
    %v5893 = vmax.f32 %v5748, 0.0
    %v5894 = vmax.f32 %v5799, 0.0
    %v5895 = vmax.f32 %v5801, 0.0
    %v5896 = vmax.f32 %v5852, 0.0
    %v5897 = vmax.f32 %v5854, 0.0
    %v5898 = vmax.f32 %v5487, 0.0
    %v5899 = vmax.f32 %v5489, 0.0
    %v5900 = vmax.f32 %v5540, 0.0
    %v5901 = vmax.f32 %v5542, 0.0
    %v5902 = vmax.f32 %v5593, 0.0
    %v5903 = vmax.f32 %v5595, 0.0
    %v5904 = vmax.f32 %v5646, 0.0
    %v5905 = vmax.f32 %v5648, 0.0
    %v5906 = vmax.f32 %v5699, 0.0
    %v5907 = vmax.f32 %v5701, 0.0
    %v5908 = vmax.f32 %v5752, 0.0
    %v5909 = vmax.f32 %v5754, 0.0
    %v5910 = vmax.f32 %v5805, 0.0
    %v5911 = vmax.f32 %v5807, 0.0
    %v5912 = vmax.f32 %v5858, 0.0
    %v5913 = vmax.f32 %v5860, 0.0
    %v5914 = vmax.f32 %v5491, 0.0
    %v5915 = vmax.f32 %v5493, 0.0
    %v5916 = vmax.f32 %v5544, 0.0
    %v5917 = vmax.f32 %v5546, 0.0
    %v5918 = vmax.f32 %v5597, 0.0
    %v5919 = vmax.f32 %v5599, 0.0
    %v5920 = vmax.f32 %v5650, 0.0
    %v5921 = vmax.f32 %v5652, 0.0
    %v5922 = vmax.f32 %v5703, 0.0
    %v5923 = vmax.f32 %v5705, 0.0
    %v5924 = vmax.f32 %v5756, 0.0
    %v5925 = vmax.f32 %v5758, 0.0
    %v5926 = vmax.f32 %v5809, 0.0
    %v5927 = vmax.f32 %v5811, 0.0
    %v5928 = vmax.f32 %v5862, 0.0
    %v5929 = vmax.f32 %v5864, 0.0
    %v5930 = vpack.c.bf16 %v5882, %v5866
    %v5931 = vpack.c.bf16 %v5883, %v5867
    %v5932 = vpack.c.bf16 %v5884, %v5868
    %v5933 = vpack.c.bf16 %v5885, %v5869
    %v5934 = vpack.c.bf16 %v5886, %v5870
    %v5935 = vpack.c.bf16 %v5887, %v5871
    %v5936 = vpack.c.bf16 %v5888, %v5872
    %v5937 = vpack.c.bf16 %v5889, %v5873
    %v5938 = vpack.c.bf16 %v5890, %v5874
    %v5939 = vpack.c.bf16 %v5891, %v5875
    %v5940 = vpack.c.bf16 %v5892, %v5876
    %v5941 = vpack.c.bf16 %v5893, %v5877
    %v5942 = vpack.c.bf16 %v5894, %v5878
    %v5943 = vpack.c.bf16 %v5895, %v5879
    %v5944 = vpack.c.bf16 %v5896, %v5880
    %v5945 = vpack.c.bf16 %v5897, %v5881
    %v5946 = vpack.c.bf16 %v5914, %v5898
    %v5947 = vpack.c.bf16 %v5915, %v5899
    %v5948 = vpack.c.bf16 %v5916, %v5900
    %v5949 = vpack.c.bf16 %v5917, %v5901
    %v5950 = vpack.c.bf16 %v5918, %v5902
    %v5951 = vpack.c.bf16 %v5919, %v5903
    %v5952 = vpack.c.bf16 %v5920, %v5904
    %v5953 = vpack.c.bf16 %v5921, %v5905
    %v5954 = vpack.c.bf16 %v5922, %v5906
    %v5955 = vpack.c.bf16 %v5923, %v5907
    %v5956 = vpack.c.bf16 %v5924, %v5908
    %v5957 = vpack.c.bf16 %v5925, %v5909
    %v5958 = vpack.c.bf16 %v5926, %v5910
    %v5959 = vpack.c.bf16 %v5927, %v5911
    %v5960 = vpack.c.bf16 %v5928, %v5912
    %v5961 = vpack.c.bf16 %v5929, %v5913
    %s5962 = scalar_lea.vmem %s12, 1024
    %v5963 = vld [vmem:[%s5962] sm:$0xf]
    %v5964 = vld [vmem:[%s5962 + $0x4] sm:$0xf]
    %v5965 = vld [vmem:[%s5962 + $0x8] sm:$0xf]
    %v5966 = vld [vmem:[%s5962 + $0xc] sm:$0xf]
    %v5967 = vld [vmem:[%s5962 + $0x10] sm:$0xf]
    %v5968 = vld [vmem:[%s5962 + $0x14] sm:$0xf]
    %v5969 = vld [vmem:[%s5962 + $0x18] sm:$0xf]
    %v5970 = vld [vmem:[%s5962 + $0x1c] sm:$0xf]
    %v5971 = vld [vmem:[%s5962 + $0x20] sm:$0xf]
    %v5972 = vld [vmem:[%s5962 + $0x24] sm:$0xf]
    %v5973 = vld [vmem:[%s5962 + $0x28] sm:$0xf]
    %v5974 = vld [vmem:[%s5962 + $0x2c] sm:$0xf]
    %v5975 = vld [vmem:[%s5962 + $0x30] sm:$0xf]
    %v5976 = vld [vmem:[%s5962 + $0x34] sm:$0xf]
    %v5977 = vld [vmem:[%s5962 + $0x38] sm:$0xf]
    %v5978 = vld [vmem:[%s5962 + $0x3c] sm:$0xf]
    %v5979 = vld [vmem:[%s5962 + $0x40] sm:$0xf]
    %v5980 = vld [vmem:[%s5962 + $0x44] sm:$0xf]
    %v5981 = vld [vmem:[%s5962 + $0x48] sm:$0xf]
    %v5982 = vld [vmem:[%s5962 + $0x4c] sm:$0xf]
    %v5983 = vld [vmem:[%s5962 + $0x50] sm:$0xf]
    %v5984 = vld [vmem:[%s5962 + $0x54] sm:$0xf]
    %v5985 = vld [vmem:[%s5962 + $0x58] sm:$0xf]
    %v5986 = vld [vmem:[%s5962 + $0x5c] sm:$0xf]
    %v5987 = vld [vmem:[%s5962 + $0x60] sm:$0xf]
    %v5988 = vld [vmem:[%s5962 + $0x64] sm:$0xf]
    %v5989 = vld [vmem:[%s5962 + $0x68] sm:$0xf]
    %v5990 = vld [vmem:[%s5962 + $0x6c] sm:$0xf]
    %v5991 = vld [vmem:[%s5962 + $0x70] sm:$0xf]
    %v5992 = vld [vmem:[%s5962 + $0x74] sm:$0xf]
    %v5993 = vld [vmem:[%s5962 + $0x78] sm:$0xf]
    %v5994 = vld [vmem:[%s5962 + $0x7c] sm:$0xf]
    %v5995 = vld [vmem:[%s5962 + $0x80] sm:$0xf]
    %v5996 = vld [vmem:[%s5962 + $0x84] sm:$0xf]
    %v5997 = vld [vmem:[%s5962 + $0x88] sm:$0xf]
    %v5998 = vld [vmem:[%s5962 + $0x8c] sm:$0xf]
    %v5999 = vld [vmem:[%s5962 + $0x90] sm:$0xf]
    %v6000 = vld [vmem:[%s5962 + $0x94] sm:$0xf]
    %v6001 = vld [vmem:[%s5962 + $0x98] sm:$0xf]
    %v6002 = vld [vmem:[%s5962 + $0x9c] sm:$0xf]
    %v6003 = vld [vmem:[%s5962 + $0xa0] sm:$0xf]
    %v6004 = vld [vmem:[%s5962 + $0xa4] sm:$0xf]
    %v6005 = vld [vmem:[%s5962 + $0xa8] sm:$0xf]
    %v6006 = vld [vmem:[%s5962 + $0xac] sm:$0xf]
    %v6007 = vld [vmem:[%s5962 + $0xb0] sm:$0xf]
    %v6008 = vld [vmem:[%s5962 + $0xb4] sm:$0xf]
    %v6009 = vld [vmem:[%s5962 + $0xb8] sm:$0xf]
    %v6010 = vld [vmem:[%s5962 + $0xbc] sm:$0xf]
    %v6011 = vld [vmem:[%s5962 + $0xc0] sm:$0xf]
    %v6012 = vld [vmem:[%s5962 + $0xc4] sm:$0xf]
    %v6013 = vld [vmem:[%s5962 + $0xc8] sm:$0xf]
    %v6014 = vld [vmem:[%s5962 + $0xcc] sm:$0xf]
    %v6015 = vld [vmem:[%s5962 + $0xd0] sm:$0xf]
    %v6016 = vld [vmem:[%s5962 + $0xd4] sm:$0xf]
    %v6017 = vld [vmem:[%s5962 + $0xd8] sm:$0xf]
    %v6018 = vld [vmem:[%s5962 + $0xdc] sm:$0xf]
    %v6019 = vld [vmem:[%s5962 + $0xe0] sm:$0xf]
    %v6020 = vld [vmem:[%s5962 + $0xe4] sm:$0xf]
    %v6021 = vld [vmem:[%s5962 + $0xe8] sm:$0xf]
    %v6022 = vld [vmem:[%s5962 + $0xec] sm:$0xf]
    %v6023 = vld [vmem:[%s5962 + $0xf0] sm:$0xf]
    %v6024 = vld [vmem:[%s5962 + $0xf4] sm:$0xf]
    %v6025 = vld [vmem:[%s5962 + $0xf8] sm:$0xf]
    %v6026 = vld [vmem:[%s5962 + $0xfc] sm:$0xf]
    %v6027 = vld [vmem:[%s5962 + $0x100] sm:$0xf]
    %v6028 = vld [vmem:[%s5962 + $0x104] sm:$0xf]
    %v6029 = vld [vmem:[%s5962 + $0x108] sm:$0xf]
    %v6030 = vld [vmem:[%s5962 + $0x10c] sm:$0xf]
    %v6031 = vld [vmem:[%s5962 + $0x110] sm:$0xf]
    %v6032 = vld [vmem:[%s5962 + $0x114] sm:$0xf]
    %v6033 = vld [vmem:[%s5962 + $0x118] sm:$0xf]
    %v6034 = vld [vmem:[%s5962 + $0x11c] sm:$0xf]
    %v6035 = vld [vmem:[%s5962 + $0x120] sm:$0xf]
    %v6036 = vld [vmem:[%s5962 + $0x124] sm:$0xf]
    %v6037 = vld [vmem:[%s5962 + $0x128] sm:$0xf]
    %v6038 = vld [vmem:[%s5962 + $0x12c] sm:$0xf]
    %v6039 = vld [vmem:[%s5962 + $0x130] sm:$0xf]
    %v6040 = vld [vmem:[%s5962 + $0x134] sm:$0xf]
    %v6041 = vld [vmem:[%s5962 + $0x138] sm:$0xf]
    %v6042 = vld [vmem:[%s5962 + $0x13c] sm:$0xf]
    %v6043 = vld [vmem:[%s5962 + $0x140] sm:$0xf]
    %v6044 = vld [vmem:[%s5962 + $0x144] sm:$0xf]
    %v6045 = vld [vmem:[%s5962 + $0x148] sm:$0xf]
    %v6046 = vld [vmem:[%s5962 + $0x14c] sm:$0xf]
    %v6047 = vld [vmem:[%s5962 + $0x150] sm:$0xf]
    %v6048 = vld [vmem:[%s5962 + $0x154] sm:$0xf]
    %v6049 = vld [vmem:[%s5962 + $0x158] sm:$0xf]
    %v6050 = vld [vmem:[%s5962 + $0x15c] sm:$0xf]
    %v6051 = vld [vmem:[%s5962 + $0x160] sm:$0xf]
    %v6052 = vld [vmem:[%s5962 + $0x164] sm:$0xf]
    %v6053 = vld [vmem:[%s5962 + $0x168] sm:$0xf]
    %v6054 = vld [vmem:[%s5962 + $0x16c] sm:$0xf]
    %v6055 = vld [vmem:[%s5962 + $0x170] sm:$0xf]
    %v6056 = vld [vmem:[%s5962 + $0x174] sm:$0xf]
    %v6057 = vld [vmem:[%s5962 + $0x178] sm:$0xf]
    %v6058 = vld [vmem:[%s5962 + $0x17c] sm:$0xf]
    %v6059 = vld [vmem:[%s5962 + $0x180] sm:$0xf]
    %v6060 = vld [vmem:[%s5962 + $0x184] sm:$0xf]
    %v6061 = vld [vmem:[%s5962 + $0x188] sm:$0xf]
    %v6062 = vld [vmem:[%s5962 + $0x18c] sm:$0xf]
    %v6063 = vld [vmem:[%s5962 + $0x190] sm:$0xf]
    %v6064 = vld [vmem:[%s5962 + $0x194] sm:$0xf]
    %v6065 = vld [vmem:[%s5962 + $0x198] sm:$0xf]
    %v6066 = vld [vmem:[%s5962 + $0x19c] sm:$0xf]
    %v6067 = vld [vmem:[%s5962 + $0x1a0] sm:$0xf]
    %v6068 = vld [vmem:[%s5962 + $0x1a4] sm:$0xf]
    %v6069 = vld [vmem:[%s5962 + $0x1a8] sm:$0xf]
    %v6070 = vld [vmem:[%s5962 + $0x1ac] sm:$0xf]
    %v6071 = vld [vmem:[%s5962 + $0x1b0] sm:$0xf]
    %v6072 = vld [vmem:[%s5962 + $0x1b4] sm:$0xf]
    %v6073 = vld [vmem:[%s5962 + $0x1b8] sm:$0xf]
    %v6074 = vld [vmem:[%s5962 + $0x1bc] sm:$0xf]
    %v6075 = vld [vmem:[%s5962 + $0x1c0] sm:$0xf]
    %v6076 = vld [vmem:[%s5962 + $0x1c4] sm:$0xf]
    %v6077 = vld [vmem:[%s5962 + $0x1c8] sm:$0xf]
    %v6078 = vld [vmem:[%s5962 + $0x1cc] sm:$0xf]
    %v6079 = vld [vmem:[%s5962 + $0x1d0] sm:$0xf]
    %v6080 = vld [vmem:[%s5962 + $0x1d4] sm:$0xf]
    %v6081 = vld [vmem:[%s5962 + $0x1d8] sm:$0xf]
    %v6082 = vld [vmem:[%s5962 + $0x1dc] sm:$0xf]
    %v6083 = vld [vmem:[%s5962 + $0x1e0] sm:$0xf]
    %v6084 = vld [vmem:[%s5962 + $0x1e4] sm:$0xf]
    %v6085 = vld [vmem:[%s5962 + $0x1e8] sm:$0xf]
    %v6086 = vld [vmem:[%s5962 + $0x1ec] sm:$0xf]
    %v6087 = vld [vmem:[%s5962 + $0x1f0] sm:$0xf]
    %v6088 = vld [vmem:[%s5962 + $0x1f4] sm:$0xf]
    %v6089 = vld [vmem:[%s5962 + $0x1f8] sm:$0xf]
    %v6090 = vld [vmem:[%s5962 + $0x1fc] sm:$0xf]
    %v6091 = vld [vmem:[%s5962 + $0x200] sm:$0xf]
    %v6092 = vld [vmem:[%s5962 + $0x204] sm:$0xf]
    %v6093 = vld [vmem:[%s5962 + $0x208] sm:$0xf]
    %v6094 = vld [vmem:[%s5962 + $0x20c] sm:$0xf]
    %v6095 = vld [vmem:[%s5962 + $0x210] sm:$0xf]
    %v6096 = vld [vmem:[%s5962 + $0x214] sm:$0xf]
    %v6097 = vld [vmem:[%s5962 + $0x218] sm:$0xf]
    %v6098 = vld [vmem:[%s5962 + $0x21c] sm:$0xf]
    %v6099 = vld [vmem:[%s5962 + $0x220] sm:$0xf]
    %v6100 = vld [vmem:[%s5962 + $0x224] sm:$0xf]
    %v6101 = vld [vmem:[%s5962 + $0x228] sm:$0xf]
    %v6102 = vld [vmem:[%s5962 + $0x22c] sm:$0xf]
    %v6103 = vld [vmem:[%s5962 + $0x230] sm:$0xf]
    %v6104 = vld [vmem:[%s5962 + $0x234] sm:$0xf]
    %v6105 = vld [vmem:[%s5962 + $0x238] sm:$0xf]
    %v6106 = vld [vmem:[%s5962 + $0x23c] sm:$0xf]
    %v6107 = vld [vmem:[%s5962 + $0x240] sm:$0xf]
    %v6108 = vld [vmem:[%s5962 + $0x244] sm:$0xf]
    %v6109 = vld [vmem:[%s5962 + $0x248] sm:$0xf]
    %v6110 = vld [vmem:[%s5962 + $0x24c] sm:$0xf]
    %v6111 = vld [vmem:[%s5962 + $0x250] sm:$0xf]
    %v6112 = vld [vmem:[%s5962 + $0x254] sm:$0xf]
    %v6113 = vld [vmem:[%s5962 + $0x258] sm:$0xf]
    %v6114 = vld [vmem:[%s5962 + $0x25c] sm:$0xf]
    %v6115 = vld [vmem:[%s5962 + $0x260] sm:$0xf]
    %v6116 = vld [vmem:[%s5962 + $0x264] sm:$0xf]
    %v6117 = vld [vmem:[%s5962 + $0x268] sm:$0xf]
    %v6118 = vld [vmem:[%s5962 + $0x26c] sm:$0xf]
    %v6119 = vld [vmem:[%s5962 + $0x270] sm:$0xf]
    %v6120 = vld [vmem:[%s5962 + $0x274] sm:$0xf]
    %v6121 = vld [vmem:[%s5962 + $0x278] sm:$0xf]
    %v6122 = vld [vmem:[%s5962 + $0x27c] sm:$0xf]
    %v6123 = vld [vmem:[%s5962 + $0x280] sm:$0xf]
    %v6124 = vld [vmem:[%s5962 + $0x284] sm:$0xf]
    %v6125 = vld [vmem:[%s5962 + $0x288] sm:$0xf]
    %v6126 = vld [vmem:[%s5962 + $0x28c] sm:$0xf]
    %v6127 = vld [vmem:[%s5962 + $0x290] sm:$0xf]
    %v6128 = vld [vmem:[%s5962 + $0x294] sm:$0xf]
    %v6129 = vld [vmem:[%s5962 + $0x298] sm:$0xf]
    %v6130 = vld [vmem:[%s5962 + $0x29c] sm:$0xf]
    %v6131 = vld [vmem:[%s5962 + $0x2a0] sm:$0xf]
    %v6132 = vld [vmem:[%s5962 + $0x2a4] sm:$0xf]
    %v6133 = vld [vmem:[%s5962 + $0x2a8] sm:$0xf]
    %v6134 = vld [vmem:[%s5962 + $0x2ac] sm:$0xf]
    %v6135 = vld [vmem:[%s5962 + $0x2b0] sm:$0xf]
    %v6136 = vld [vmem:[%s5962 + $0x2b4] sm:$0xf]
    %v6137 = vld [vmem:[%s5962 + $0x2b8] sm:$0xf]
    %v6138 = vld [vmem:[%s5962 + $0x2bc] sm:$0xf]
    %v6139 = vld [vmem:[%s5962 + $0x2c0] sm:$0xf]
    %v6140 = vld [vmem:[%s5962 + $0x2c4] sm:$0xf]
    %v6141 = vld [vmem:[%s5962 + $0x2c8] sm:$0xf]
    %v6142 = vld [vmem:[%s5962 + $0x2cc] sm:$0xf]
    %v6143 = vld [vmem:[%s5962 + $0x2d0] sm:$0xf]
    %v6144 = vld [vmem:[%s5962 + $0x2d4] sm:$0xf]
    %v6145 = vld [vmem:[%s5962 + $0x2d8] sm:$0xf]
    %v6146 = vld [vmem:[%s5962 + $0x2dc] sm:$0xf]
    %v6147 = vld [vmem:[%s5962 + $0x2e0] sm:$0xf]
    %v6148 = vld [vmem:[%s5962 + $0x2e4] sm:$0xf]
    %v6149 = vld [vmem:[%s5962 + $0x2e8] sm:$0xf]
    %v6150 = vld [vmem:[%s5962 + $0x2ec] sm:$0xf]
    %v6151 = vld [vmem:[%s5962 + $0x2f0] sm:$0xf]
    %v6152 = vld [vmem:[%s5962 + $0x2f4] sm:$0xf]
    %v6153 = vld [vmem:[%s5962 + $0x2f8] sm:$0xf]
    %v6154 = vld [vmem:[%s5962 + $0x2fc] sm:$0xf]
    %v6155 = vld [vmem:[%s5962 + $0x300] sm:$0xf]
    %v6156 = vld [vmem:[%s5962 + $0x304] sm:$0xf]
    %v6157 = vld [vmem:[%s5962 + $0x308] sm:$0xf]
    %v6158 = vld [vmem:[%s5962 + $0x30c] sm:$0xf]
    %v6159 = vld [vmem:[%s5962 + $0x310] sm:$0xf]
    %v6160 = vld [vmem:[%s5962 + $0x314] sm:$0xf]
    %v6161 = vld [vmem:[%s5962 + $0x318] sm:$0xf]
    %v6162 = vld [vmem:[%s5962 + $0x31c] sm:$0xf]
    %v6163 = vld [vmem:[%s5962 + $0x320] sm:$0xf]
    %v6164 = vld [vmem:[%s5962 + $0x324] sm:$0xf]
    %v6165 = vld [vmem:[%s5962 + $0x328] sm:$0xf]
    %v6166 = vld [vmem:[%s5962 + $0x32c] sm:$0xf]
    %v6167 = vld [vmem:[%s5962 + $0x330] sm:$0xf]
    %v6168 = vld [vmem:[%s5962 + $0x334] sm:$0xf]
    %v6169 = vld [vmem:[%s5962 + $0x338] sm:$0xf]
    %v6170 = vld [vmem:[%s5962 + $0x33c] sm:$0xf]
    %v6171 = vld [vmem:[%s5962 + $0x340] sm:$0xf]
    %v6172 = vld [vmem:[%s5962 + $0x344] sm:$0xf]
    %v6173 = vld [vmem:[%s5962 + $0x348] sm:$0xf]
    %v6174 = vld [vmem:[%s5962 + $0x34c] sm:$0xf]
    %v6175 = vld [vmem:[%s5962 + $0x350] sm:$0xf]
    %v6176 = vld [vmem:[%s5962 + $0x354] sm:$0xf]
    %v6177 = vld [vmem:[%s5962 + $0x358] sm:$0xf]
    %v6178 = vld [vmem:[%s5962 + $0x35c] sm:$0xf]
    %v6179 = vld [vmem:[%s5962 + $0x360] sm:$0xf]
    %v6180 = vld [vmem:[%s5962 + $0x364] sm:$0xf]
    %v6181 = vld [vmem:[%s5962 + $0x368] sm:$0xf]
    %v6182 = vld [vmem:[%s5962 + $0x36c] sm:$0xf]
    %v6183 = vld [vmem:[%s5962 + $0x370] sm:$0xf]
    %v6184 = vld [vmem:[%s5962 + $0x374] sm:$0xf]
    %v6185 = vld [vmem:[%s5962 + $0x378] sm:$0xf]
    %v6186 = vld [vmem:[%s5962 + $0x37c] sm:$0xf]
    %v6187 = vld [vmem:[%s5962 + $0x380] sm:$0xf]
    %v6188 = vld [vmem:[%s5962 + $0x384] sm:$0xf]
    %v6189 = vld [vmem:[%s5962 + $0x388] sm:$0xf]
    %v6190 = vld [vmem:[%s5962 + $0x38c] sm:$0xf]
    %v6191 = vld [vmem:[%s5962 + $0x390] sm:$0xf]
    %v6192 = vld [vmem:[%s5962 + $0x394] sm:$0xf]
    %v6193 = vld [vmem:[%s5962 + $0x398] sm:$0xf]
    %v6194 = vld [vmem:[%s5962 + $0x39c] sm:$0xf]
    %v6195 = vld [vmem:[%s5962 + $0x3a0] sm:$0xf]
    %v6196 = vld [vmem:[%s5962 + $0x3a4] sm:$0xf]
    %v6197 = vld [vmem:[%s5962 + $0x3a8] sm:$0xf]
    %v6198 = vld [vmem:[%s5962 + $0x3ac] sm:$0xf]
    %v6199 = vld [vmem:[%s5962 + $0x3b0] sm:$0xf]
    %v6200 = vld [vmem:[%s5962 + $0x3b4] sm:$0xf]
    %v6201 = vld [vmem:[%s5962 + $0x3b8] sm:$0xf]
    %v6202 = vld [vmem:[%s5962 + $0x3bc] sm:$0xf]
    %v6203 = vld [vmem:[%s5962 + $0x3c0] sm:$0xf]
    %v6204 = vld [vmem:[%s5962 + $0x3c4] sm:$0xf]
    %v6205 = vld [vmem:[%s5962 + $0x3c8] sm:$0xf]
    %v6206 = vld [vmem:[%s5962 + $0x3cc] sm:$0xf]
    %v6207 = vld [vmem:[%s5962 + $0x3d0] sm:$0xf]
    %v6208 = vld [vmem:[%s5962 + $0x3d4] sm:$0xf]
    %v6209 = vld [vmem:[%s5962 + $0x3d8] sm:$0xf]
    %v6210 = vld [vmem:[%s5962 + $0x3dc] sm:$0xf]
    %v6211 = vld [vmem:[%s5962 + $0x3e0] sm:$0xf]
    %v6212 = vld [vmem:[%s5962 + $0x3e4] sm:$0xf]
    %v6213 = vld [vmem:[%s5962 + $0x3e8] sm:$0xf]
    %v6214 = vld [vmem:[%s5962 + $0x3ec] sm:$0xf]
    %v6215 = vld [vmem:[%s5962 + $0x3f0] sm:$0xf]
    %v6216 = vld [vmem:[%s5962 + $0x3f4] sm:$0xf]
    %v6217 = vld [vmem:[%s5962 + $0x3f8] sm:$0xf]
    %v6218 = vld [vmem:[%s5962 + $0x3fc] sm:$0xf]
    %s6219 = scalar_lea.vmem %s13, 1
    %v6220 = vld [vmem:[%s6219] sm:$0x1]
    %v6222 = vlaneseq
    %v6223 = vshrl.u32 %v6222, 7
    %v6224 = vsub.s32 0, %v6223
    %v6225 = vrot.slane %v6220, %v6224
    %v6483 = vunpack.c.l.b16 %v5963
    %v6484 = vunpack.c.l.b16 %v5964
    %v6485 = vunpack.c.l.b16 %v5965
    %v6486 = vunpack.c.l.b16 %v5966
    %v6487 = vunpack.c.l.b16 %v5967
    %v6488 = vunpack.c.l.b16 %v5968
    %v6489 = vunpack.c.l.b16 %v5969
    %v6490 = vunpack.c.l.b16 %v5970
    %v6491 = vunpack.c.l.b16 %v5971
    %v6492 = vunpack.c.l.b16 %v5972
    %v6493 = vunpack.c.l.b16 %v5973
    %v6494 = vunpack.c.l.b16 %v5974
    %v6495 = vunpack.c.l.b16 %v5975
    %v6496 = vunpack.c.l.b16 %v5976
    %v6497 = vunpack.c.l.b16 %v5977
    %v6498 = vunpack.c.l.b16 %v5978
    %v6499 = vunpack.c.l.b16 %v5979
    %v6500 = vunpack.c.l.b16 %v5980
    %v6501 = vunpack.c.l.b16 %v5981
    %v6502 = vunpack.c.l.b16 %v5982
    %v6503 = vunpack.c.l.b16 %v5983
    %v6504 = vunpack.c.l.b16 %v5984
    %v6505 = vunpack.c.l.b16 %v5985
    %v6506 = vunpack.c.l.b16 %v5986
    %v6507 = vunpack.c.l.b16 %v5987
    %v6508 = vunpack.c.l.b16 %v5988
    %v6509 = vunpack.c.l.b16 %v5989
    %v6510 = vunpack.c.l.b16 %v5990
    %v6511 = vunpack.c.l.b16 %v5991
    %v6512 = vunpack.c.l.b16 %v5992
    %v6513 = vunpack.c.l.b16 %v5993
    %v6514 = vunpack.c.l.b16 %v5994
    %v6515 = vunpack.c.l.b16 %v5995
    %v6516 = vunpack.c.l.b16 %v5996
    %v6517 = vunpack.c.l.b16 %v5997
    %v6518 = vunpack.c.l.b16 %v5998
    %v6519 = vunpack.c.l.b16 %v5999
    %v6520 = vunpack.c.l.b16 %v6000
    %v6521 = vunpack.c.l.b16 %v6001
    %v6522 = vunpack.c.l.b16 %v6002
    %v6523 = vunpack.c.l.b16 %v6003
    %v6524 = vunpack.c.l.b16 %v6004
    %v6525 = vunpack.c.l.b16 %v6005
    %v6526 = vunpack.c.l.b16 %v6006
    %v6527 = vunpack.c.l.b16 %v6007
    %v6528 = vunpack.c.l.b16 %v6008
    %v6529 = vunpack.c.l.b16 %v6009
    %v6530 = vunpack.c.l.b16 %v6010
    %v6531 = vunpack.c.l.b16 %v6011
    %v6532 = vunpack.c.l.b16 %v6012
    %v6533 = vunpack.c.l.b16 %v6013
    %v6534 = vunpack.c.l.b16 %v6014
    %v6535 = vunpack.c.l.b16 %v6015
    %v6536 = vunpack.c.l.b16 %v6016
    %v6537 = vunpack.c.l.b16 %v6017
    %v6538 = vunpack.c.l.b16 %v6018
    %v6539 = vunpack.c.l.b16 %v6019
    %v6540 = vunpack.c.l.b16 %v6020
    %v6541 = vunpack.c.l.b16 %v6021
    %v6542 = vunpack.c.l.b16 %v6022
    %v6543 = vunpack.c.l.b16 %v6023
    %v6544 = vunpack.c.l.b16 %v6024
    %v6545 = vunpack.c.l.b16 %v6025
    %v6546 = vunpack.c.l.b16 %v6026
    %v6547 = vunpack.c.l.b16 %v6027
    %v6548 = vunpack.c.l.b16 %v6028
    %v6549 = vunpack.c.l.b16 %v6029
    %v6550 = vunpack.c.l.b16 %v6030
    %v6551 = vunpack.c.l.b16 %v6031
    %v6552 = vunpack.c.l.b16 %v6032
    %v6553 = vunpack.c.l.b16 %v6033
    %v6554 = vunpack.c.l.b16 %v6034
    %v6555 = vunpack.c.l.b16 %v6035
    %v6556 = vunpack.c.l.b16 %v6036
    %v6557 = vunpack.c.l.b16 %v6037
    %v6558 = vunpack.c.l.b16 %v6038
    %v6559 = vunpack.c.l.b16 %v6039
    %v6560 = vunpack.c.l.b16 %v6040
    %v6561 = vunpack.c.l.b16 %v6041
    %v6562 = vunpack.c.l.b16 %v6042
    %v6563 = vunpack.c.l.b16 %v6043
    %v6564 = vunpack.c.l.b16 %v6044
    %v6565 = vunpack.c.l.b16 %v6045
    %v6566 = vunpack.c.l.b16 %v6046
    %v6567 = vunpack.c.l.b16 %v6047
    %v6568 = vunpack.c.l.b16 %v6048
    %v6569 = vunpack.c.l.b16 %v6049
    %v6570 = vunpack.c.l.b16 %v6050
    %v6571 = vunpack.c.l.b16 %v6051
    %v6572 = vunpack.c.l.b16 %v6052
    %v6573 = vunpack.c.l.b16 %v6053
    %v6574 = vunpack.c.l.b16 %v6054
    %v6575 = vunpack.c.l.b16 %v6055
    %v6576 = vunpack.c.l.b16 %v6056
    %v6577 = vunpack.c.l.b16 %v6057
    %v6578 = vunpack.c.l.b16 %v6058
    %v6579 = vunpack.c.l.b16 %v6059
    %v6580 = vunpack.c.l.b16 %v6060
    %v6581 = vunpack.c.l.b16 %v6061
    %v6582 = vunpack.c.l.b16 %v6062
    %v6583 = vunpack.c.l.b16 %v6063
    %v6584 = vunpack.c.l.b16 %v6064
    %v6585 = vunpack.c.l.b16 %v6065
    %v6586 = vunpack.c.l.b16 %v6066
    %v6587 = vunpack.c.l.b16 %v6067
    %v6588 = vunpack.c.l.b16 %v6068
    %v6589 = vunpack.c.l.b16 %v6069
    %v6590 = vunpack.c.l.b16 %v6070
    %v6591 = vunpack.c.l.b16 %v6071
    %v6592 = vunpack.c.l.b16 %v6072
    %v6593 = vunpack.c.l.b16 %v6073
    %v6594 = vunpack.c.l.b16 %v6074
    %v6595 = vunpack.c.l.b16 %v6075
    %v6596 = vunpack.c.l.b16 %v6076
    %v6597 = vunpack.c.l.b16 %v6077
    %v6598 = vunpack.c.l.b16 %v6078
    %v6599 = vunpack.c.l.b16 %v6079
    %v6600 = vunpack.c.l.b16 %v6080
    %v6601 = vunpack.c.l.b16 %v6081
    %v6602 = vunpack.c.l.b16 %v6082
    %v6603 = vunpack.c.l.b16 %v6083
    %v6604 = vunpack.c.l.b16 %v6084
    %v6605 = vunpack.c.l.b16 %v6085
    %v6606 = vunpack.c.l.b16 %v6086
    %v6607 = vunpack.c.l.b16 %v6087
    %v6608 = vunpack.c.l.b16 %v6088
    %v6609 = vunpack.c.l.b16 %v6089
    %v6610 = vunpack.c.l.b16 %v6090
    %v6611 = vunpack.c.l.b16 %v6091
    %v6612 = vunpack.c.l.b16 %v6092
    %v6613 = vunpack.c.l.b16 %v6093
    %v6614 = vunpack.c.l.b16 %v6094
    %v6615 = vunpack.c.l.b16 %v6095
    %v6616 = vunpack.c.l.b16 %v6096
    %v6617 = vunpack.c.l.b16 %v6097
    %v6618 = vunpack.c.l.b16 %v6098
    %v6619 = vunpack.c.l.b16 %v6099
    %v6620 = vunpack.c.l.b16 %v6100
    %v6621 = vunpack.c.l.b16 %v6101
    %v6622 = vunpack.c.l.b16 %v6102
    %v6623 = vunpack.c.l.b16 %v6103
    %v6624 = vunpack.c.l.b16 %v6104
    %v6625 = vunpack.c.l.b16 %v6105
    %v6626 = vunpack.c.l.b16 %v6106
    %v6627 = vunpack.c.l.b16 %v6107
    %v6628 = vunpack.c.l.b16 %v6108
    %v6629 = vunpack.c.l.b16 %v6109
    %v6630 = vunpack.c.l.b16 %v6110
    %v6631 = vunpack.c.l.b16 %v6111
    %v6632 = vunpack.c.l.b16 %v6112
    %v6633 = vunpack.c.l.b16 %v6113
    %v6634 = vunpack.c.l.b16 %v6114
    %v6635 = vunpack.c.l.b16 %v6115
    %v6636 = vunpack.c.l.b16 %v6116
    %v6637 = vunpack.c.l.b16 %v6117
    %v6638 = vunpack.c.l.b16 %v6118
    %v6639 = vunpack.c.l.b16 %v6119
    %v6640 = vunpack.c.l.b16 %v6120
    %v6641 = vunpack.c.l.b16 %v6121
    %v6642 = vunpack.c.l.b16 %v6122
    %v6643 = vunpack.c.l.b16 %v6123
    %v6644 = vunpack.c.l.b16 %v6124
    %v6645 = vunpack.c.l.b16 %v6125
    %v6646 = vunpack.c.l.b16 %v6126
    %v6647 = vunpack.c.l.b16 %v6127
    %v6648 = vunpack.c.l.b16 %v6128
    %v6649 = vunpack.c.l.b16 %v6129
    %v6650 = vunpack.c.l.b16 %v6130
    %v6651 = vunpack.c.l.b16 %v6131
    %v6652 = vunpack.c.l.b16 %v6132
    %v6653 = vunpack.c.l.b16 %v6133
    %v6654 = vunpack.c.l.b16 %v6134
    %v6655 = vunpack.c.l.b16 %v6135
    %v6656 = vunpack.c.l.b16 %v6136
    %v6657 = vunpack.c.l.b16 %v6137
    %v6658 = vunpack.c.l.b16 %v6138
    %v6659 = vunpack.c.l.b16 %v6139
    %v6660 = vunpack.c.l.b16 %v6140
    %v6661 = vunpack.c.l.b16 %v6141
    %v6662 = vunpack.c.l.b16 %v6142
    %v6663 = vunpack.c.l.b16 %v6143
    %v6664 = vunpack.c.l.b16 %v6144
    %v6665 = vunpack.c.l.b16 %v6145
    %v6666 = vunpack.c.l.b16 %v6146
    %v6667 = vunpack.c.l.b16 %v6147
    %v6668 = vunpack.c.l.b16 %v6148
    %v6669 = vunpack.c.l.b16 %v6149
    %v6670 = vunpack.c.l.b16 %v6150
    %v6671 = vunpack.c.l.b16 %v6151
    %v6672 = vunpack.c.l.b16 %v6152
    %v6673 = vunpack.c.l.b16 %v6153
    %v6674 = vunpack.c.l.b16 %v6154
    %v6675 = vunpack.c.l.b16 %v6155
    %v6676 = vunpack.c.l.b16 %v6156
    %v6677 = vunpack.c.l.b16 %v6157
    %v6678 = vunpack.c.l.b16 %v6158
    %v6679 = vunpack.c.l.b16 %v6159
    %v6680 = vunpack.c.l.b16 %v6160
    %v6681 = vunpack.c.l.b16 %v6161
    %v6682 = vunpack.c.l.b16 %v6162
    %v6683 = vunpack.c.l.b16 %v6163
    %v6684 = vunpack.c.l.b16 %v6164
    %v6685 = vunpack.c.l.b16 %v6165
    %v6686 = vunpack.c.l.b16 %v6166
    %v6687 = vunpack.c.l.b16 %v6167
    %v6688 = vunpack.c.l.b16 %v6168
    %v6689 = vunpack.c.l.b16 %v6169
    %v6690 = vunpack.c.l.b16 %v6170
    %v6691 = vunpack.c.l.b16 %v6171
    %v6692 = vunpack.c.l.b16 %v6172
    %v6693 = vunpack.c.l.b16 %v6173
    %v6694 = vunpack.c.l.b16 %v6174
    %v6695 = vunpack.c.l.b16 %v6175
    %v6696 = vunpack.c.l.b16 %v6176
    %v6697 = vunpack.c.l.b16 %v6177
    %v6698 = vunpack.c.l.b16 %v6178
    %v6699 = vunpack.c.l.b16 %v6179
    %v6700 = vunpack.c.l.b16 %v6180
    %v6701 = vunpack.c.l.b16 %v6181
    %v6702 = vunpack.c.l.b16 %v6182
    %v6703 = vunpack.c.l.b16 %v6183
    %v6704 = vunpack.c.l.b16 %v6184
    %v6705 = vunpack.c.l.b16 %v6185
    %v6706 = vunpack.c.l.b16 %v6186
    %v6707 = vunpack.c.l.b16 %v6187
    %v6708 = vunpack.c.l.b16 %v6188
    %v6709 = vunpack.c.l.b16 %v6189
    %v6710 = vunpack.c.l.b16 %v6190
    %v6711 = vunpack.c.l.b16 %v6191
    %v6712 = vunpack.c.l.b16 %v6192
    %v6713 = vunpack.c.l.b16 %v6193
    %v6714 = vunpack.c.l.b16 %v6194
    %v6715 = vunpack.c.l.b16 %v6195
    %v6716 = vunpack.c.l.b16 %v6196
    %v6717 = vunpack.c.l.b16 %v6197
    %v6718 = vunpack.c.l.b16 %v6198
    %v6719 = vunpack.c.l.b16 %v6199
    %v6720 = vunpack.c.l.b16 %v6200
    %v6721 = vunpack.c.l.b16 %v6201
    %v6722 = vunpack.c.l.b16 %v6202
    %v6723 = vunpack.c.l.b16 %v6203
    %v6724 = vunpack.c.l.b16 %v6204
    %v6725 = vunpack.c.l.b16 %v6205
    %v6726 = vunpack.c.l.b16 %v6206
    %v6727 = vunpack.c.l.b16 %v6207
    %v6728 = vunpack.c.l.b16 %v6208
    %v6729 = vunpack.c.l.b16 %v6209
    %v6730 = vunpack.c.l.b16 %v6210
    %v6731 = vunpack.c.l.b16 %v6211
    %v6732 = vunpack.c.l.b16 %v6212
    %v6733 = vunpack.c.l.b16 %v6213
    %v6734 = vunpack.c.l.b16 %v6214
    %v6735 = vunpack.c.l.b16 %v6215
    %v6736 = vunpack.c.l.b16 %v6216
    %v6737 = vunpack.c.l.b16 %v6217
    %v6738 = vunpack.c.l.b16 %v6218
    %v6739 = vpack.c.b16 %v6484, %v6483
    %v6740 = vpack.c.b16 %v6486, %v6485
    %v6741 = vpack.c.b16 %v6488, %v6487
    %v6742 = vpack.c.b16 %v6490, %v6489
    %v6743 = vpack.c.b16 %v6492, %v6491
    %v6744 = vpack.c.b16 %v6494, %v6493
    %v6745 = vpack.c.b16 %v6496, %v6495
    %v6746 = vpack.c.b16 %v6498, %v6497
    %v6747 = vpack.c.b16 %v6500, %v6499
    %v6748 = vpack.c.b16 %v6502, %v6501
    %v6749 = vpack.c.b16 %v6504, %v6503
    %v6750 = vpack.c.b16 %v6506, %v6505
    %v6751 = vpack.c.b16 %v6508, %v6507
    %v6752 = vpack.c.b16 %v6510, %v6509
    %v6753 = vpack.c.b16 %v6512, %v6511
    %v6754 = vpack.c.b16 %v6514, %v6513
    %v6755 = vpack.c.b16 %v6516, %v6515
    %v6756 = vpack.c.b16 %v6518, %v6517
    %v6757 = vpack.c.b16 %v6520, %v6519
    %v6758 = vpack.c.b16 %v6522, %v6521
    %v6759 = vpack.c.b16 %v6524, %v6523
    %v6760 = vpack.c.b16 %v6526, %v6525
    %v6761 = vpack.c.b16 %v6528, %v6527
    %v6762 = vpack.c.b16 %v6530, %v6529
    %v6763 = vpack.c.b16 %v6532, %v6531
    %v6764 = vpack.c.b16 %v6534, %v6533
    %v6765 = vpack.c.b16 %v6536, %v6535
    %v6766 = vpack.c.b16 %v6538, %v6537
    %v6767 = vpack.c.b16 %v6540, %v6539
    %v6768 = vpack.c.b16 %v6542, %v6541
    %v6769 = vpack.c.b16 %v6544, %v6543
    %v6770 = vpack.c.b16 %v6546, %v6545
    %v6771 = vpack.c.b16 %v6548, %v6547
    %v6772 = vpack.c.b16 %v6550, %v6549
    %v6773 = vpack.c.b16 %v6552, %v6551
    %v6774 = vpack.c.b16 %v6554, %v6553
    %v6775 = vpack.c.b16 %v6556, %v6555
    %v6776 = vpack.c.b16 %v6558, %v6557
    %v6777 = vpack.c.b16 %v6560, %v6559
    %v6778 = vpack.c.b16 %v6562, %v6561
    %v6779 = vpack.c.b16 %v6564, %v6563
    %v6780 = vpack.c.b16 %v6566, %v6565
    %v6781 = vpack.c.b16 %v6568, %v6567
    %v6782 = vpack.c.b16 %v6570, %v6569
    %v6783 = vpack.c.b16 %v6572, %v6571
    %v6784 = vpack.c.b16 %v6574, %v6573
    %v6785 = vpack.c.b16 %v6576, %v6575
    %v6786 = vpack.c.b16 %v6578, %v6577
    %v6787 = vpack.c.b16 %v6580, %v6579
    %v6788 = vpack.c.b16 %v6582, %v6581
    %v6789 = vpack.c.b16 %v6584, %v6583
    %v6790 = vpack.c.b16 %v6586, %v6585
    %v6791 = vpack.c.b16 %v6588, %v6587
    %v6792 = vpack.c.b16 %v6590, %v6589
    %v6793 = vpack.c.b16 %v6592, %v6591
    %v6794 = vpack.c.b16 %v6594, %v6593
    %v6795 = vpack.c.b16 %v6596, %v6595
    %v6796 = vpack.c.b16 %v6598, %v6597
    %v6797 = vpack.c.b16 %v6600, %v6599
    %v6798 = vpack.c.b16 %v6602, %v6601
    %v6799 = vpack.c.b16 %v6604, %v6603
    %v6800 = vpack.c.b16 %v6606, %v6605
    %v6801 = vpack.c.b16 %v6608, %v6607
    %v6802 = vpack.c.b16 %v6610, %v6609
    %v6803 = vpack.c.b16 %v6612, %v6611
    %v6804 = vpack.c.b16 %v6614, %v6613
    %v6805 = vpack.c.b16 %v6616, %v6615
    %v6806 = vpack.c.b16 %v6618, %v6617
    %v6807 = vpack.c.b16 %v6620, %v6619
    %v6808 = vpack.c.b16 %v6622, %v6621
    %v6809 = vpack.c.b16 %v6624, %v6623
    %v6810 = vpack.c.b16 %v6626, %v6625
    %v6811 = vpack.c.b16 %v6628, %v6627
    %v6812 = vpack.c.b16 %v6630, %v6629
    %v6813 = vpack.c.b16 %v6632, %v6631
    %v6814 = vpack.c.b16 %v6634, %v6633
    %v6815 = vpack.c.b16 %v6636, %v6635
    %v6816 = vpack.c.b16 %v6638, %v6637
    %v6817 = vpack.c.b16 %v6640, %v6639
    %v6818 = vpack.c.b16 %v6642, %v6641
    %v6819 = vpack.c.b16 %v6644, %v6643
    %v6820 = vpack.c.b16 %v6646, %v6645
    %v6821 = vpack.c.b16 %v6648, %v6647
    %v6822 = vpack.c.b16 %v6650, %v6649
    %v6823 = vpack.c.b16 %v6652, %v6651
    %v6824 = vpack.c.b16 %v6654, %v6653
    %v6825 = vpack.c.b16 %v6656, %v6655
    %v6826 = vpack.c.b16 %v6658, %v6657
    %v6827 = vpack.c.b16 %v6660, %v6659
    %v6828 = vpack.c.b16 %v6662, %v6661
    %v6829 = vpack.c.b16 %v6664, %v6663
    %v6830 = vpack.c.b16 %v6666, %v6665
    %v6831 = vpack.c.b16 %v6668, %v6667
    %v6832 = vpack.c.b16 %v6670, %v6669
    %v6833 = vpack.c.b16 %v6672, %v6671
    %v6834 = vpack.c.b16 %v6674, %v6673
    %v6835 = vpack.c.b16 %v6676, %v6675
    %v6836 = vpack.c.b16 %v6678, %v6677
    %v6837 = vpack.c.b16 %v6680, %v6679
    %v6838 = vpack.c.b16 %v6682, %v6681
    %v6839 = vpack.c.b16 %v6684, %v6683
    %v6840 = vpack.c.b16 %v6686, %v6685
    %v6841 = vpack.c.b16 %v6688, %v6687
    %v6842 = vpack.c.b16 %v6690, %v6689
    %v6843 = vpack.c.b16 %v6692, %v6691
    %v6844 = vpack.c.b16 %v6694, %v6693
    %v6845 = vpack.c.b16 %v6696, %v6695
    %v6846 = vpack.c.b16 %v6698, %v6697
    %v6847 = vpack.c.b16 %v6700, %v6699
    %v6848 = vpack.c.b16 %v6702, %v6701
    %v6849 = vpack.c.b16 %v6704, %v6703
    %v6850 = vpack.c.b16 %v6706, %v6705
    %v6851 = vpack.c.b16 %v6708, %v6707
    %v6852 = vpack.c.b16 %v6710, %v6709
    %v6853 = vpack.c.b16 %v6712, %v6711
    %v6854 = vpack.c.b16 %v6714, %v6713
    %v6855 = vpack.c.b16 %v6716, %v6715
    %v6856 = vpack.c.b16 %v6718, %v6717
    %v6857 = vpack.c.b16 %v6720, %v6719
    %v6858 = vpack.c.b16 %v6722, %v6721
    %v6859 = vpack.c.b16 %v6724, %v6723
    %v6860 = vpack.c.b16 %v6726, %v6725
    %v6861 = vpack.c.b16 %v6728, %v6727
    %v6862 = vpack.c.b16 %v6730, %v6729
    %v6863 = vpack.c.b16 %v6732, %v6731
    %v6864 = vpack.c.b16 %v6734, %v6733
    %v6865 = vpack.c.b16 %v6736, %v6735
    %v6866 = vpack.c.b16 %v6738, %v6737
    %6995 = vmatprep.subr.bf16.mxu0 0
    %6996 = vmatpush1.bf16.msra.mxu0 %v6739
    %6997 = vmatprep.subr.bf16.mxu0 0
    %6998 = vmatpush1.bf16.msra.mxu0 %v6740
    %6999 = vmatprep.subr.bf16.mxu0 0
    %7000 = vmatpush1.bf16.msra.mxu0 %v6741
    %7001 = vmatprep.subr.bf16.mxu0 0
    %7002 = vmatpush1.bf16.msra.mxu0 %v6742
    %7003 = vmatprep.subr.bf16.mxu0 0
    %7004 = vmatpush1.bf16.msra.mxu0 %v6743
    %7005 = vmatprep.subr.bf16.mxu0 0
    %7006 = vmatpush1.bf16.msra.mxu0 %v6744
    %7007 = vmatprep.subr.bf16.mxu0 0
    %7008 = vmatpush1.bf16.msra.mxu0 %v6745
    %7009 = vmatprep.subr.bf16.mxu0 0
    %7010 = vmatpush1.bf16.msra.mxu0 %v6746
    %7011 = vmatprep.subr.bf16.mxu0 0
    %7012 = vmatpush1.bf16.msra.mxu0 %v6747
    %7013 = vmatprep.subr.bf16.mxu0 0
    %7014 = vmatpush1.bf16.msra.mxu0 %v6748
    %7015 = vmatprep.subr.bf16.mxu0 0
    %7016 = vmatpush1.bf16.msra.mxu0 %v6749
    %7017 = vmatprep.subr.bf16.mxu0 0
    %7018 = vmatpush1.bf16.msra.mxu0 %v6750
    %7019 = vmatprep.subr.bf16.mxu0 0
    %7020 = vmatpush1.bf16.msra.mxu0 %v6751
    %7021 = vmatprep.subr.bf16.mxu0 0
    %7022 = vmatpush1.bf16.msra.mxu0 %v6752
    %7023 = vmatprep.subr.bf16.mxu0 0
    %7024 = vmatpush1.bf16.msra.mxu0 %v6753
    %7025 = vmatprep.subr.bf16.mxu0 0
    %7026 = vmatpush1.bf16.msra.mxu0 %v6754
    %7027 = vmatprep.mubr.bf16.mxu0 %v5931
    %7028 = vmatmul.mubr.bf16.gmra.mrb[0].mxu0 %v5930
    %v7029 = vpop.f32.mrb[0].mxu0
    %v7030 = vadd.f32 %v6225, %v7029
    %v7031 = vpop.f32.mrb[0].mxu0
    %v7032 = vpop.f32.mrb[0].mxu0
    %v7033 = vadd.f32 %v6225, %v7032
    %v7034 = vpop.f32.mrb[0].mxu0
    %7035 = vmatprep.mubr.bf16.mxu0 %v5947
    %7036 = vmatmul.mubr.bf16.gmra.mrb[0].mxu0 %v5946
    %v7037 = vpop.f32.mrb[0].mxu0
    %v7038 = vadd.f32 %v6225, %v7037
    %v7039 = vpop.f32.mrb[0].mxu0
    %v7040 = vpop.f32.mrb[0].mxu0
    %v7041 = vadd.f32 %v6225, %v7040
    %v7042 = vpop.f32.mrb[0].mxu0
    %7043 = vdwg.mxu0
    %7044 = vmatprep.subr.bf16.mxu0 0
    %7045 = vmatpush1.bf16.msra.mxu0 %v6755
    %7046 = vmatprep.subr.bf16.mxu0 0
    %7047 = vmatpush1.bf16.msra.mxu0 %v6756
    %7048 = vmatprep.subr.bf16.mxu0 0
    %7049 = vmatpush1.bf16.msra.mxu0 %v6757
    %7050 = vmatprep.subr.bf16.mxu0 0
    %7051 = vmatpush1.bf16.msra.mxu0 %v6758
    %7052 = vmatprep.subr.bf16.mxu0 0
    %7053 = vmatpush1.bf16.msra.mxu0 %v6759
    %7054 = vmatprep.subr.bf16.mxu0 0
    %7055 = vmatpush1.bf16.msra.mxu0 %v6760
    %7056 = vmatprep.subr.bf16.mxu0 0
    %7057 = vmatpush1.bf16.msra.mxu0 %v6761
    %7058 = vmatprep.subr.bf16.mxu0 0
    %7059 = vmatpush1.bf16.msra.mxu0 %v6762
    %7060 = vmatprep.subr.bf16.mxu0 0
    %7061 = vmatpush1.bf16.msra.mxu0 %v6763
    %7062 = vmatprep.subr.bf16.mxu0 0
    %7063 = vmatpush1.bf16.msra.mxu0 %v6764
    %7064 = vmatprep.subr.bf16.mxu0 0
    %7065 = vmatpush1.bf16.msra.mxu0 %v6765
    %7066 = vmatprep.subr.bf16.mxu0 0
    %7067 = vmatpush1.bf16.msra.mxu0 %v6766
    %7068 = vmatprep.subr.bf16.mxu0 0
    %7069 = vmatpush1.bf16.msra.mxu0 %v6767
    %7070 = vmatprep.subr.bf16.mxu0 0
    %7071 = vmatpush1.bf16.msra.mxu0 %v6768
    %7072 = vmatprep.subr.bf16.mxu0 0
    %7073 = vmatpush1.bf16.msra.mxu0 %v6769
    %7074 = vmatprep.subr.bf16.mxu0 0
    %7075 = vmatpush1.bf16.msra.mxu0 %v6770
    %7076 = vmatprep.mubr.bf16.mxu0 %v5933
    %7077 = vmatmul.mubr.bf16.gmra.mrb[0].mxu0 %v5932
    %v7078 = vpop.f32.mrb[0].mxu0
    %v7079 = vadd.f32 %v7030, %v7078
    %v7080 = vpop.f32.mrb[0].mxu0
    %v7081 = vpop.f32.mrb[0].mxu0
    %v7082 = vadd.f32 %v7033, %v7081
    %v7083 = vpop.f32.mrb[0].mxu0
    %7084 = vmatprep.mubr.bf16.mxu0 %v5949
    %7085 = vmatmul.mubr.bf16.gmra.mrb[0].mxu0 %v5948
    %v7086 = vpop.f32.mrb[0].mxu0
    %v7087 = vadd.f32 %v7038, %v7086
    %v7088 = vpop.f32.mrb[0].mxu0
    %v7089 = vpop.f32.mrb[0].mxu0
    %v7090 = vadd.f32 %v7041, %v7089
    %v7091 = vpop.f32.mrb[0].mxu0
    %7092 = vdwg.mxu0
    %7093 = vmatprep.subr.bf16.mxu0 0
    %7094 = vmatpush1.bf16.msra.mxu0 %v6771
    %7095 = vmatprep.subr.bf16.mxu0 0
    %7096 = vmatpush1.bf16.msra.mxu0 %v6772
    %7097 = vmatprep.subr.bf16.mxu0 0
    %7098 = vmatpush1.bf16.msra.mxu0 %v6773
    %7099 = vmatprep.subr.bf16.mxu0 0
    %7100 = vmatpush1.bf16.msra.mxu0 %v6774
    %7101 = vmatprep.subr.bf16.mxu0 0
    %7102 = vmatpush1.bf16.msra.mxu0 %v6775
    %7103 = vmatprep.subr.bf16.mxu0 0
    %7104 = vmatpush1.bf16.msra.mxu0 %v6776
    %7105 = vmatprep.subr.bf16.mxu0 0
    %7106 = vmatpush1.bf16.msra.mxu0 %v6777
    %7107 = vmatprep.subr.bf16.mxu0 0
    %7108 = vmatpush1.bf16.msra.mxu0 %v6778
    %7109 = vmatprep.subr.bf16.mxu0 0
    %7110 = vmatpush1.bf16.msra.mxu0 %v6779
    %7111 = vmatprep.subr.bf16.mxu0 0
    %7112 = vmatpush1.bf16.msra.mxu0 %v6780
    %7113 = vmatprep.subr.bf16.mxu0 0
    %7114 = vmatpush1.bf16.msra.mxu0 %v6781
    %7115 = vmatprep.subr.bf16.mxu0 0
    %7116 = vmatpush1.bf16.msra.mxu0 %v6782
    %7117 = vmatprep.subr.bf16.mxu0 0
    %7118 = vmatpush1.bf16.msra.mxu0 %v6783
    %7119 = vmatprep.subr.bf16.mxu0 0
    %7120 = vmatpush1.bf16.msra.mxu0 %v6784
    %7121 = vmatprep.subr.bf16.mxu0 0
    %7122 = vmatpush1.bf16.msra.mxu0 %v6785
    %7123 = vmatprep.subr.bf16.mxu0 0
    %7124 = vmatpush1.bf16.msra.mxu0 %v6786
    %7125 = vmatprep.mubr.bf16.mxu0 %v5935
    %7126 = vmatmul.mubr.bf16.gmra.mrb[0].mxu0 %v5934
    %v7127 = vpop.f32.mrb[0].mxu0
    %v7128 = vadd.f32 %v7079, %v7127
    %v7129 = vpop.f32.mrb[0].mxu0
    %v7130 = vpop.f32.mrb[0].mxu0
    %v7131 = vadd.f32 %v7082, %v7130
    %v7132 = vpop.f32.mrb[0].mxu0
    %7133 = vmatprep.mubr.bf16.mxu0 %v5951
    %7134 = vmatmul.mubr.bf16.gmra.mrb[0].mxu0 %v5950
    %v7135 = vpop.f32.mrb[0].mxu0
    %v7136 = vadd.f32 %v7087, %v7135
    %v7137 = vpop.f32.mrb[0].mxu0
    %v7138 = vpop.f32.mrb[0].mxu0
    %v7139 = vadd.f32 %v7090, %v7138
    %v7140 = vpop.f32.mrb[0].mxu0
    %7141 = vdwg.mxu0
    %7142 = vmatprep.subr.bf16.mxu0 0
    %7143 = vmatpush1.bf16.msra.mxu0 %v6787
    %7144 = vmatprep.subr.bf16.mxu0 0
    %7145 = vmatpush1.bf16.msra.mxu0 %v6788
    %7146 = vmatprep.subr.bf16.mxu0 0
    %7147 = vmatpush1.bf16.msra.mxu0 %v6789
    %7148 = vmatprep.subr.bf16.mxu0 0
    %7149 = vmatpush1.bf16.msra.mxu0 %v6790
    %7150 = vmatprep.subr.bf16.mxu0 0
    %7151 = vmatpush1.bf16.msra.mxu0 %v6791
    %7152 = vmatprep.subr.bf16.mxu0 0
    %7153 = vmatpush1.bf16.msra.mxu0 %v6792
    %7154 = vmatprep.subr.bf16.mxu0 0
    %7155 = vmatpush1.bf16.msra.mxu0 %v6793
    %7156 = vmatprep.subr.bf16.mxu0 0
    %7157 = vmatpush1.bf16.msra.mxu0 %v6794
    %7158 = vmatprep.subr.bf16.mxu0 0
    %7159 = vmatpush1.bf16.msra.mxu0 %v6795
    %7160 = vmatprep.subr.bf16.mxu0 0
    %7161 = vmatpush1.bf16.msra.mxu0 %v6796
    %7162 = vmatprep.subr.bf16.mxu0 0
    %7163 = vmatpush1.bf16.msra.mxu0 %v6797
    %7164 = vmatprep.subr.bf16.mxu0 0
    %7165 = vmatpush1.bf16.msra.mxu0 %v6798
    %7166 = vmatprep.subr.bf16.mxu0 0
    %7167 = vmatpush1.bf16.msra.mxu0 %v6799
    %7168 = vmatprep.subr.bf16.mxu0 0
    %7169 = vmatpush1.bf16.msra.mxu0 %v6800
    %7170 = vmatprep.subr.bf16.mxu0 0
    %7171 = vmatpush1.bf16.msra.mxu0 %v6801
    %7172 = vmatprep.subr.bf16.mxu0 0
    %7173 = vmatpush1.bf16.msra.mxu0 %v6802
    %7174 = vmatprep.mubr.bf16.mxu0 %v5937
    %7175 = vmatmul.mubr.bf16.gmra.mrb[0].mxu0 %v5936
    %v7176 = vpop.f32.mrb[0].mxu0
    %v7177 = vadd.f32 %v7128, %v7176
    %v7178 = vpop.f32.mrb[0].mxu0
    %v7179 = vpop.f32.mrb[0].mxu0
    %v7180 = vadd.f32 %v7131, %v7179
    %v7181 = vpop.f32.mrb[0].mxu0
    %7182 = vmatprep.mubr.bf16.mxu0 %v5953
    %7183 = vmatmul.mubr.bf16.gmra.mrb[0].mxu0 %v5952
    %v7184 = vpop.f32.mrb[0].mxu0
    %v7185 = vadd.f32 %v7136, %v7184
    %v7186 = vpop.f32.mrb[0].mxu0
    %v7187 = vpop.f32.mrb[0].mxu0
    %v7188 = vadd.f32 %v7139, %v7187
    %v7189 = vpop.f32.mrb[0].mxu0
    %7190 = vdwg.mxu0
    %7191 = vmatprep.subr.bf16.mxu0 0
    %7192 = vmatpush1.bf16.msra.mxu0 %v6803
    %7193 = vmatprep.subr.bf16.mxu0 0
    %7194 = vmatpush1.bf16.msra.mxu0 %v6804
    %7195 = vmatprep.subr.bf16.mxu0 0
    %7196 = vmatpush1.bf16.msra.mxu0 %v6805
    %7197 = vmatprep.subr.bf16.mxu0 0
    %7198 = vmatpush1.bf16.msra.mxu0 %v6806
    %7199 = vmatprep.subr.bf16.mxu0 0
    %7200 = vmatpush1.bf16.msra.mxu0 %v6807
    %7201 = vmatprep.subr.bf16.mxu0 0
    %7202 = vmatpush1.bf16.msra.mxu0 %v6808
    %7203 = vmatprep.subr.bf16.mxu0 0
    %7204 = vmatpush1.bf16.msra.mxu0 %v6809
    %7205 = vmatprep.subr.bf16.mxu0 0
    %7206 = vmatpush1.bf16.msra.mxu0 %v6810
    %7207 = vmatprep.subr.bf16.mxu0 0
    %7208 = vmatpush1.bf16.msra.mxu0 %v6811
    %7209 = vmatprep.subr.bf16.mxu0 0
    %7210 = vmatpush1.bf16.msra.mxu0 %v6812
    %7211 = vmatprep.subr.bf16.mxu0 0
    %7212 = vmatpush1.bf16.msra.mxu0 %v6813
    %7213 = vmatprep.subr.bf16.mxu0 0
    %7214 = vmatpush1.bf16.msra.mxu0 %v6814
    %7215 = vmatprep.subr.bf16.mxu0 0
    %7216 = vmatpush1.bf16.msra.mxu0 %v6815
    %7217 = vmatprep.subr.bf16.mxu0 0
    %7218 = vmatpush1.bf16.msra.mxu0 %v6816
    %7219 = vmatprep.subr.bf16.mxu0 0
    %7220 = vmatpush1.bf16.msra.mxu0 %v6817
    %7221 = vmatprep.subr.bf16.mxu0 0
    %7222 = vmatpush1.bf16.msra.mxu0 %v6818
    %7223 = vmatprep.mubr.bf16.mxu0 %v5939
    %7224 = vmatmul.mubr.bf16.gmra.mrb[0].mxu0 %v5938
    %v7225 = vpop.f32.mrb[0].mxu0
    %v7226 = vadd.f32 %v7177, %v7225
    %v7227 = vpop.f32.mrb[0].mxu0
    %v7228 = vpop.f32.mrb[0].mxu0
    %v7229 = vadd.f32 %v7180, %v7228
    %v7230 = vpop.f32.mrb[0].mxu0
    %7231 = vmatprep.mubr.bf16.mxu0 %v5955
    %7232 = vmatmul.mubr.bf16.gmra.mrb[0].mxu0 %v5954
    %v7233 = vpop.f32.mrb[0].mxu0
    %v7234 = vadd.f32 %v7185, %v7233
    %v7235 = vpop.f32.mrb[0].mxu0
    %v7236 = vpop.f32.mrb[0].mxu0
    %v7237 = vadd.f32 %v7188, %v7236
    %v7238 = vpop.f32.mrb[0].mxu0
    %7239 = vdwg.mxu0
    %7240 = vmatprep.subr.bf16.mxu0 0
    %7241 = vmatpush1.bf16.msra.mxu0 %v6819
    %7242 = vmatprep.subr.bf16.mxu0 0
    %7243 = vmatpush1.bf16.msra.mxu0 %v6820
    %7244 = vmatprep.subr.bf16.mxu0 0
    %7245 = vmatpush1.bf16.msra.mxu0 %v6821
    %7246 = vmatprep.subr.bf16.mxu0 0
    %7247 = vmatpush1.bf16.msra.mxu0 %v6822
    %7248 = vmatprep.subr.bf16.mxu0 0
    %7249 = vmatpush1.bf16.msra.mxu0 %v6823
    %7250 = vmatprep.subr.bf16.mxu0 0
    %7251 = vmatpush1.bf16.msra.mxu0 %v6824
    %7252 = vmatprep.subr.bf16.mxu0 0
    %7253 = vmatpush1.bf16.msra.mxu0 %v6825
    %7254 = vmatprep.subr.bf16.mxu0 0
    %7255 = vmatpush1.bf16.msra.mxu0 %v6826
    %7256 = vmatprep.subr.bf16.mxu0 0
    %7257 = vmatpush1.bf16.msra.mxu0 %v6827
    %7258 = vmatprep.subr.bf16.mxu0 0
    %7259 = vmatpush1.bf16.msra.mxu0 %v6828
    %7260 = vmatprep.subr.bf16.mxu0 0
    %7261 = vmatpush1.bf16.msra.mxu0 %v6829
    %7262 = vmatprep.subr.bf16.mxu0 0
    %7263 = vmatpush1.bf16.msra.mxu0 %v6830
    %7264 = vmatprep.subr.bf16.mxu0 0
    %7265 = vmatpush1.bf16.msra.mxu0 %v6831
    %7266 = vmatprep.subr.bf16.mxu0 0
    %7267 = vmatpush1.bf16.msra.mxu0 %v6832
    %7268 = vmatprep.subr.bf16.mxu0 0
    %7269 = vmatpush1.bf16.msra.mxu0 %v6833
    %7270 = vmatprep.subr.bf16.mxu0 0
    %7271 = vmatpush1.bf16.msra.mxu0 %v6834
    %7272 = vmatprep.mubr.bf16.mxu0 %v5941
    %7273 = vmatmul.mubr.bf16.gmra.mrb[0].mxu0 %v5940
    %v7274 = vpop.f32.mrb[0].mxu0
    %v7275 = vadd.f32 %v7226, %v7274
    %v7276 = vpop.f32.mrb[0].mxu0
    %v7277 = vpop.f32.mrb[0].mxu0
    %v7278 = vadd.f32 %v7229, %v7277
    %v7279 = vpop.f32.mrb[0].mxu0
    %7280 = vmatprep.mubr.bf16.mxu0 %v5957
    %7281 = vmatmul.mubr.bf16.gmra.mrb[0].mxu0 %v5956
    %v7282 = vpop.f32.mrb[0].mxu0
    %v7283 = vadd.f32 %v7234, %v7282
    %v7284 = vpop.f32.mrb[0].mxu0
    %v7285 = vpop.f32.mrb[0].mxu0
    %v7286 = vadd.f32 %v7237, %v7285
    %v7287 = vpop.f32.mrb[0].mxu0
    %7288 = vdwg.mxu0
    %7289 = vmatprep.subr.bf16.mxu0 0
    %7290 = vmatpush1.bf16.msra.mxu0 %v6835
    %7291 = vmatprep.subr.bf16.mxu0 0
    %7292 = vmatpush1.bf16.msra.mxu0 %v6836
    %7293 = vmatprep.subr.bf16.mxu0 0
    %7294 = vmatpush1.bf16.msra.mxu0 %v6837
    %7295 = vmatprep.subr.bf16.mxu0 0
    %7296 = vmatpush1.bf16.msra.mxu0 %v6838
    %7297 = vmatprep.subr.bf16.mxu0 0
    %7298 = vmatpush1.bf16.msra.mxu0 %v6839
    %7299 = vmatprep.subr.bf16.mxu0 0
    %7300 = vmatpush1.bf16.msra.mxu0 %v6840
    %7301 = vmatprep.subr.bf16.mxu0 0
    %7302 = vmatpush1.bf16.msra.mxu0 %v6841
    %7303 = vmatprep.subr.bf16.mxu0 0
    %7304 = vmatpush1.bf16.msra.mxu0 %v6842
    %7305 = vmatprep.subr.bf16.mxu0 0
    %7306 = vmatpush1.bf16.msra.mxu0 %v6843
    %7307 = vmatprep.subr.bf16.mxu0 0
    %7308 = vmatpush1.bf16.msra.mxu0 %v6844
    %7309 = vmatprep.subr.bf16.mxu0 0
    %7310 = vmatpush1.bf16.msra.mxu0 %v6845
    %7311 = vmatprep.subr.bf16.mxu0 0
    %7312 = vmatpush1.bf16.msra.mxu0 %v6846
    %7313 = vmatprep.subr.bf16.mxu0 0
    %7314 = vmatpush1.bf16.msra.mxu0 %v6847
    %7315 = vmatprep.subr.bf16.mxu0 0
    %7316 = vmatpush1.bf16.msra.mxu0 %v6848
    %7317 = vmatprep.subr.bf16.mxu0 0
    %7318 = vmatpush1.bf16.msra.mxu0 %v6849
    %7319 = vmatprep.subr.bf16.mxu0 0
    %7320 = vmatpush1.bf16.msra.mxu0 %v6850
    %7321 = vmatprep.mubr.bf16.mxu0 %v5943
    %7322 = vmatmul.mubr.bf16.gmra.mrb[0].mxu0 %v5942
    %v7323 = vpop.f32.mrb[0].mxu0
    %v7324 = vadd.f32 %v7275, %v7323
    %v7325 = vpop.f32.mrb[0].mxu0
    %v7326 = vpop.f32.mrb[0].mxu0
    %v7327 = vadd.f32 %v7278, %v7326
    %v7328 = vpop.f32.mrb[0].mxu0
    %7329 = vmatprep.mubr.bf16.mxu0 %v5959
    %7330 = vmatmul.mubr.bf16.gmra.mrb[0].mxu0 %v5958
    %v7331 = vpop.f32.mrb[0].mxu0
    %v7332 = vadd.f32 %v7283, %v7331
    %v7333 = vpop.f32.mrb[0].mxu0
    %v7334 = vpop.f32.mrb[0].mxu0
    %v7335 = vadd.f32 %v7286, %v7334
    %v7336 = vpop.f32.mrb[0].mxu0
    %7337 = vdwg.mxu0
    %7338 = vmatprep.subr.bf16.mxu0 0
    %7339 = vmatpush1.bf16.msra.mxu0 %v6851
    %7340 = vmatprep.subr.bf16.mxu0 0
    %7341 = vmatpush1.bf16.msra.mxu0 %v6852
    %7342 = vmatprep.subr.bf16.mxu0 0
    %7343 = vmatpush1.bf16.msra.mxu0 %v6853
    %7344 = vmatprep.subr.bf16.mxu0 0
    %7345 = vmatpush1.bf16.msra.mxu0 %v6854
    %7346 = vmatprep.subr.bf16.mxu0 0
    %7347 = vmatpush1.bf16.msra.mxu0 %v6855
    %7348 = vmatprep.subr.bf16.mxu0 0
    %7349 = vmatpush1.bf16.msra.mxu0 %v6856
    %7350 = vmatprep.subr.bf16.mxu0 0
    %7351 = vmatpush1.bf16.msra.mxu0 %v6857
    %7352 = vmatprep.subr.bf16.mxu0 0
    %7353 = vmatpush1.bf16.msra.mxu0 %v6858
    %7354 = vmatprep.subr.bf16.mxu0 0
    %7355 = vmatpush1.bf16.msra.mxu0 %v6859
    %7356 = vmatprep.subr.bf16.mxu0 0
    %7357 = vmatpush1.bf16.msra.mxu0 %v6860
    %7358 = vmatprep.subr.bf16.mxu0 0
    %7359 = vmatpush1.bf16.msra.mxu0 %v6861
    %7360 = vmatprep.subr.bf16.mxu0 0
    %7361 = vmatpush1.bf16.msra.mxu0 %v6862
    %7362 = vmatprep.subr.bf16.mxu0 0
    %7363 = vmatpush1.bf16.msra.mxu0 %v6863
    %7364 = vmatprep.subr.bf16.mxu0 0
    %7365 = vmatpush1.bf16.msra.mxu0 %v6864
    %7366 = vmatprep.subr.bf16.mxu0 0
    %7367 = vmatpush1.bf16.msra.mxu0 %v6865
    %7368 = vmatprep.subr.bf16.mxu0 0
    %7369 = vmatpush1.bf16.msra.mxu0 %v6866
    %7370 = vmatprep.mubr.bf16.mxu0 %v5945
    %7371 = vmatmul.mubr.bf16.gmra.mrb[0].mxu0 %v5944
    %v7372 = vpop.f32.mrb[0].mxu0
    %v7373 = vadd.f32 %v7324, %v7372
    %v7374 = vpop.f32.mrb[0].mxu0
    %v7375 = vpop.f32.mrb[0].mxu0
    %v7376 = vadd.f32 %v7327, %v7375
    %v7377 = vpop.f32.mrb[0].mxu0
    %7378 = vmatprep.mubr.bf16.mxu0 %v5961
    %7379 = vmatmul.mubr.bf16.gmra.mrb[0].mxu0 %v5960
    %v7380 = vpop.f32.mrb[0].mxu0
    %v7381 = vadd.f32 %v7332, %v7380
    %v7382 = vpop.f32.mrb[0].mxu0
    %v7383 = vpop.f32.mrb[0].mxu0
    %v7384 = vadd.f32 %v7335, %v7383
    %v7385 = vpop.f32.mrb[0].mxu0
    %7386 = vdwg.mxu0
    %v7387 = vadd.f32 %v4980, %v7373
    %v7388 = vadd.f32 %v4981, %v7376
    %v7389 = vadd.f32 %v4982, %v7381
    %v7390 = vadd.f32 %v4983, %v7384
    %s7391 = scalar_lea.vmem %s6, 2
    %v7392 = vld [vmem:[%s7391] sm:$0x1]
    %s7393 = scalar_lea.vmem %s7, 2
    %v7394 = vld [vmem:[%s7393] sm:$0x1]
    %v7395 = vsel %vm68, %v7387, 0.0
    %7396 = vadd.xlane.f32.xlu0 %v7395
    %v7397 = vpop.xlane.xlu0 %7396
    %v7398 = vsel %vm68, %v7388, 0.0
    %7399 = vadd.xlane.f32.xlu0 %v7398
    %v7400 = vpop.xlane.xlu0 %7399
    %v7401 = vsel %vm68, %v7389, 0.0
    %7402 = vadd.xlane.f32.xlu0 %v7401
    %v7403 = vpop.xlane.xlu0 %7402
    %v7404 = vsel %vm68, %v7390, 0.0
    %7405 = vadd.xlane.f32.xlu0 %v7404
    %v7406 = vpop.xlane.xlu0 %7405
    %v7407 = vmul.f32 %v7397, %v81
    %v7408 = vmul.f32 %v7400, %v81
    %v7409 = vmul.f32 %v7403, %v81
    %v7410 = vmul.f32 %v7406, %v81
    %v7411 = vsub.f32 %v7387, %v7407
    %v7412 = vsub.f32 %v7388, %v7408
    %v7413 = vsub.f32 %v7389, %v7409
    %v7414 = vsub.f32 %v7390, %v7410
    %v7415 = vmul.f32 %v7411, %v7411
    %v7416 = vmul.f32 %v7412, %v7412
    %v7417 = vmul.f32 %v7413, %v7413
    %v7418 = vmul.f32 %v7414, %v7414
    %v7419 = vsel %vm68, %v7415, 0.0
    %7420 = vadd.xlane.f32.xlu0 %v7419
    %v7421 = vpop.xlane.xlu0 %7420
    %v7422 = vsel %vm68, %v7416, 0.0
    %7423 = vadd.xlane.f32.xlu0 %v7422
    %v7424 = vpop.xlane.xlu0 %7423
    %v7425 = vsel %vm68, %v7417, 0.0
    %7426 = vadd.xlane.f32.xlu0 %v7425
    %v7427 = vpop.xlane.xlu0 %7426
    %v7428 = vsel %vm68, %v7418, 0.0
    %7429 = vadd.xlane.f32.xlu0 %v7428
    %v7430 = vpop.xlane.xlu0 %7429
    %v7431 = vmul.f32 %v7421, %v81
    %v7432 = vmul.f32 %v7424, %v81
    %v7433 = vmul.f32 %v7427, %v81
    %v7434 = vmul.f32 %v7430, %v81
    %v7435 = vadd.f32 %v7431, 1e-05
    %v7436 = vadd.f32 %v7432, 1e-05
    %v7437 = vadd.f32 %v7433, 1e-05
    %v7438 = vadd.f32 %v7434, 1e-05
    %v7439 = vrsqrt.pop %v7435
    %v7440 = vrsqrt.pop %v7436
    %v7441 = vrsqrt.pop %v7437
    %v7442 = vrsqrt.pop %v7438
    %v7443 = vmul.f32 %v7411, %v7439
    %v7444 = vmul.f32 %v7412, %v7440
    %v7445 = vmul.f32 %v7413, %v7441
    %v7446 = vmul.f32 %v7414, %v7442
    %v7448 = vlaneseq
    %v7449 = vshrl.u32 %v7448, 7
    %v7450 = vsub.s32 0, %v7449
    %v7451 = vrot.slane %v7392, %v7450
    %v7453 = vmul.f32 %v7443, %v7451
    %v7454 = vmul.f32 %v7444, %v7451
    %v7455 = vmul.f32 %v7445, %v7451
    %v7456 = vmul.f32 %v7446, %v7451
    %v7458 = vlaneseq
    %v7459 = vshrl.u32 %v7458, 7
    %v7460 = vsub.s32 0, %v7459
    %v7461 = vrot.slane %v7394, %v7460
    %v7463 = vadd.f32 %v7453, %v7461
    %v7464 = vadd.f32 %v7454, %v7461
    %v7465 = vadd.f32 %v7455, %v7461
    %v7466 = vadd.f32 %v7456, %v7461
    %v7467 = vpack.c.bf16 %v7464, %v7463
    %v7468 = vpack.c.bf16 %v7466, %v7465
    %s7469 = scalar_lea.vmem %s2, 40
    %v7470 = vld [vmem:[%s7469] sm:$0xf]
    %v7471 = vld [vmem:[%s7469 + $0x4] sm:$0xf]
    %v7472 = vld [vmem:[%s7469 + $0x8] sm:$0xf]
    %v7473 = vld [vmem:[%s7469 + $0xc] sm:$0xf]
    %v7474 = vld [vmem:[%s7469 + $0x10] sm:$0xf]
    %s7475 = scalar_lea.vmem %s3, 2
    %v7476 = vld [vmem:[%s7475] sm:$0x1]
    %v7478 = vlaneseq
    %v7479 = vshrl.u32 %v7478, 7
    %v7480 = vsub.s32 0, %v7479
    %v7481 = vrot.slane %v7476, %v7480
    %v7488 = vunpack.c.l.b16 %v7470
    %v7489 = vunpack.c.l.b16 %v7471
    %v7490 = vunpack.c.l.b16 %v7472
    %v7491 = vunpack.c.l.b16 %v7473
    %v7492 = vunpack.c.l.b16 %v7474
    %v7493 = vpack.c.b16 %v7489, %v7488
    %v7494 = vpack.c.b16 %v7491, %v7490
    %v7495 = vpack.c.b16 %v7492, %v7492
    %v7499 = vsel %vm68, %v7467, 0
    %v7502 = vsel %vm68, %v7468, 0
    %v7505 = vsel %vm177, %v7495, 0
    %7507 = vmatprep.subr.bf16.mxu0 0
    %7508 = vmatpush1.bf16.msra.mxu0 %v7493
    %7509 = vmatprep.subr.bf16.mxu0 0
    %7510 = vmatpush1.bf16.msra.mxu0 %v7494
    %7511 = vmatprep.subr.bf16.mxu0 0
    %7512 = vmatpush1.bf16.msra.mxu0 %v7505
    %7513 = vmatprep.subr.bf16.mxu0 0
    %7514 = vmatpush1.bf16.msra.mxu0 0
    %7515 = vmatprep.subr.bf16.mxu0 0
    %7516 = vmatpush1.bf16.msra.mxu0 0
    %7517 = vmatprep.subr.bf16.mxu0 0
    %7518 = vmatpush1.bf16.msra.mxu0 0
    %7519 = vmatprep.subr.bf16.mxu0 0
    %7520 = vmatpush1.bf16.msra.mxu0 0
    %7521 = vmatprep.subr.bf16.mxu0 0
    %7522 = vmatpush1.bf16.msra.mxu0 0
    %7523 = vmatprep.subr.bf16.mxu0 0
    %7524 = vmatpush1.bf16.msra.mxu0 0
    %7525 = vmatprep.subr.bf16.mxu0 0
    %7526 = vmatpush1.bf16.msra.mxu0 0
    %7527 = vmatprep.subr.bf16.mxu0 0
    %7528 = vmatpush1.bf16.msra.mxu0 0
    %7529 = vmatprep.subr.bf16.mxu0 0
    %7530 = vmatpush1.bf16.msra.mxu0 0
    %7531 = vmatprep.subr.bf16.mxu0 0
    %7532 = vmatpush1.bf16.msra.mxu0 0
    %7533 = vmatprep.subr.bf16.mxu0 0
    %7534 = vmatpush1.bf16.msra.mxu0 0
    %7535 = vmatprep.subr.bf16.mxu0 0
    %7536 = vmatpush1.bf16.msra.mxu0 0
    %7537 = vmatprep.subr.bf16.mxu0 0
    %7538 = vmatpush1.bf16.msra.mxu0 0
    %7539 = vmatprep.mubr.bf16.mxu0 0
    %7540 = vmatmul.mubr.bf16.gmra.mrb[0].mxu0 %v7499
    %v7541 = vpop.f32.mrb[0].mxu0
    %v7542 = vadd.f32 %v7481, %v7541
    %v7543 = vpop.f32.mrb[0].mxu0
    %v7544 = vpop.f32.mrb[0].mxu0
    %v7545 = vadd.f32 %v7481, %v7544
    %v7546 = vpop.f32.mrb[0].mxu0
    %7547 = vmatprep.mubr.bf16.mxu0 0
    %7548 = vmatmul.mubr.bf16.gmra.mrb[0].mxu0 %v7502
    %v7549 = vpop.f32.mrb[0].mxu0
    %v7550 = vadd.f32 %v7481, %v7549
    %v7551 = vpop.f32.mrb[0].mxu0
    %v7552 = vpop.f32.mrb[0].mxu0
    %v7553 = vadd.f32 %v7481, %v7552
    %v7554 = vpop.f32.mrb[0].mxu0
    %7555 = vdwg.mxu0
    %v7556 = vpack.c.bf16 %v7545, %v7542
    %v7557 = vpack.c.bf16 %v7553, %v7550
    %7560 = vrot.lane.b32.xlu0 %v7556, 104
    %v7561 = vpop.permute.xlu0 %7560
    %7562 = vrot.lane.b32.xlu0 %v7557, 104
    %v7563 = vpop.permute.xlu0 %7562
    %7564 = vrot.lane.b32.xlu0 %v7556, 80
    %v7565 = vpop.permute.xlu0 %7564
    %7566 = vrot.lane.b32.xlu0 %v7557, 80
    %v7567 = vpop.permute.xlu0 %7566
    %7568 = vrot.lane.b32.xlu0 %v7556, 56
    %v7569 = vpop.permute.xlu0 %7568
    %7570 = vrot.lane.b32.xlu0 %v7557, 56
    %v7571 = vpop.permute.xlu0 %7570
    %7572 = vrot.lane.b32.xlu0 %v7556, 32
    %v7573 = vpop.permute.xlu0 %7572
    %7574 = vrot.lane.b32.xlu0 %v7557, 32
    %v7575 = vpop.permute.xlu0 %7574
    %7576 = vrot.lane.b32.xlu0 %v7556, 120
    %v7577 = vpop.permute.xlu0 %7576
    %7578 = vrot.lane.b32.xlu0 %v7557, 120
    %v7579 = vpop.permute.xlu0 %7578
    %v7581 = vsel %vm254, %v7556, 0
    %v7584 = vsel %vm254, %v7557, 0
    %v7587 = vsel %vm254, %v7577, 0
    %v7590 = vsel %vm254, %v7579, 0
    %7592 = vmatprep.subr.bf16.mxu0 0
    %7593 = vmatpush1.bf16.xpose.msra.mxu0 %v7587
    %7594 = vmatprep.subr.bf16.mxu0 0
    %7595 = vmatpush1.bf16.xpose.msra.mxu0 %v7590
    %7596 = vmatprep.subr.bf16.mxu0 0
    %7597 = vmatpush1.bf16.xpose.msra.mxu0 0
    %7598 = vmatprep.subr.bf16.mxu0 0
    %7599 = vmatpush1.bf16.xpose.msra.mxu0 0
    %7600 = vmatprep.subr.bf16.mxu0 0
    %7601 = vmatpush1.bf16.xpose.msra.mxu0 0
    %7602 = vmatprep.subr.bf16.mxu0 0
    %7603 = vmatpush1.bf16.xpose.msra.mxu0 0
    %7604 = vmatprep.subr.bf16.mxu0 0
    %7605 = vmatpush1.bf16.xpose.msra.mxu0 0
    %7606 = vmatprep.subr.bf16.mxu0 0
    %7607 = vmatpush1.bf16.xpose.msra.mxu0 0
    %7608 = vmatprep.subr.bf16.mxu0 0
    %7609 = vmatpush1.bf16.xpose.msra.mxu0 0
    %7610 = vmatprep.subr.bf16.mxu0 0
    %7611 = vmatpush1.bf16.xpose.msra.mxu0 0
    %7612 = vmatprep.subr.bf16.mxu0 0
    %7613 = vmatpush1.bf16.xpose.msra.mxu0 0
    %7614 = vmatprep.subr.bf16.mxu0 0
    %7615 = vmatpush1.bf16.xpose.msra.mxu0 0
    %7616 = vmatprep.subr.bf16.mxu0 0
    %7617 = vmatpush1.bf16.xpose.msra.mxu0 0
    %7618 = vmatprep.subr.bf16.mxu0 0
    %7619 = vmatpush1.bf16.xpose.msra.mxu0 0
    %7620 = vmatprep.subr.bf16.mxu0 0
    %7621 = vmatpush1.bf16.xpose.msra.mxu0 0
    %7622 = vmatprep.subr.bf16.mxu0 0
    %7623 = vmatpush1.bf16.xpose.msra.mxu0 0
    %7624 = vmatprep.mubr.bf16.mxu0 0
    %7625 = vmatmul.mubr.bf16.gmra.mrb[0].mxu0 %v7581
    %v7626 = vpop.f32.mrb[0].mxu0
    %v7627 = vadd.f32 0.0, %v7626
    %v7628 = vpop.f32.mrb[0].mxu0
    %v7629 = vpop.f32.mrb[0].mxu0
    %v7630 = vadd.f32 0.0, %v7629
    %v7631 = vpop.f32.mrb[0].mxu0
    %7632 = vmatprep.mubr.bf16.mxu0 0
    %7633 = vmatmul.mubr.bf16.gmra.mrb[0].mxu0 %v7584
    %v7634 = vpop.f32.mrb[0].mxu0
    %v7635 = vadd.f32 0.0, %v7634
    %v7636 = vpop.f32.mrb[0].mxu0
    %v7637 = vpop.f32.mrb[0].mxu0
    %v7638 = vadd.f32 0.0, %v7637
    %v7639 = vpop.f32.mrb[0].mxu0
    %7640 = vdwg.mxu0
    %7641 = vrot.lane.b32.xlu0 %v7561, 120
    %v7642 = vpop.permute.xlu0 %7641
    %7643 = vrot.lane.b32.xlu0 %v7563, 120
    %v7644 = vpop.permute.xlu0 %7643
    %v7646 = vsel %vm254, %v7561, 0
    %v7649 = vsel %vm254, %v7563, 0
    %v7652 = vsel %vm254, %v7642, 0
    %v7655 = vsel %vm254, %v7644, 0
    %7657 = vmatprep.subr.bf16.mxu0 0
    %7658 = vmatpush1.bf16.xpose.msra.mxu0 %v7652
    %7659 = vmatprep.subr.bf16.mxu0 0
    %7660 = vmatpush1.bf16.xpose.msra.mxu0 %v7655
    %7661 = vmatprep.subr.bf16.mxu0 0
    %7662 = vmatpush1.bf16.xpose.msra.mxu0 0
    %7663 = vmatprep.subr.bf16.mxu0 0
    %7664 = vmatpush1.bf16.xpose.msra.mxu0 0
    %7665 = vmatprep.subr.bf16.mxu0 0
    %7666 = vmatpush1.bf16.xpose.msra.mxu0 0
    %7667 = vmatprep.subr.bf16.mxu0 0
    %7668 = vmatpush1.bf16.xpose.msra.mxu0 0
    %7669 = vmatprep.subr.bf16.mxu0 0
    %7670 = vmatpush1.bf16.xpose.msra.mxu0 0
    %7671 = vmatprep.subr.bf16.mxu0 0
    %7672 = vmatpush1.bf16.xpose.msra.mxu0 0
    %7673 = vmatprep.subr.bf16.mxu0 0
    %7674 = vmatpush1.bf16.xpose.msra.mxu0 0
    %7675 = vmatprep.subr.bf16.mxu0 0
    %7676 = vmatpush1.bf16.xpose.msra.mxu0 0
    %7677 = vmatprep.subr.bf16.mxu0 0
    %7678 = vmatpush1.bf16.xpose.msra.mxu0 0
    %7679 = vmatprep.subr.bf16.mxu0 0
    %7680 = vmatpush1.bf16.xpose.msra.mxu0 0
    %7681 = vmatprep.subr.bf16.mxu0 0
    %7682 = vmatpush1.bf16.xpose.msra.mxu0 0
    %7683 = vmatprep.subr.bf16.mxu0 0
    %7684 = vmatpush1.bf16.xpose.msra.mxu0 0
    %7685 = vmatprep.subr.bf16.mxu0 0
    %7686 = vmatpush1.bf16.xpose.msra.mxu0 0
    %7687 = vmatprep.subr.bf16.mxu0 0
    %7688 = vmatpush1.bf16.xpose.msra.mxu0 0
    %7689 = vmatprep.mubr.bf16.mxu0 0
    %7690 = vmatmul.mubr.bf16.gmra.mrb[0].mxu0 %v7646
    %v7691 = vpop.f32.mrb[0].mxu0
    %v7692 = vadd.f32 0.0, %v7691
    %v7693 = vpop.f32.mrb[0].mxu0
    %v7694 = vpop.f32.mrb[0].mxu0
    %v7695 = vadd.f32 0.0, %v7694
    %v7696 = vpop.f32.mrb[0].mxu0
    %7697 = vmatprep.mubr.bf16.mxu0 0
    %7698 = vmatmul.mubr.bf16.gmra.mrb[0].mxu0 %v7649
    %v7699 = vpop.f32.mrb[0].mxu0
    %v7700 = vadd.f32 0.0, %v7699
    %v7701 = vpop.f32.mrb[0].mxu0
    %v7702 = vpop.f32.mrb[0].mxu0
    %v7703 = vadd.f32 0.0, %v7702
    %v7704 = vpop.f32.mrb[0].mxu0
    %7705 = vdwg.mxu0
    %7706 = vrot.lane.b32.xlu0 %v7565, 120
    %v7707 = vpop.permute.xlu0 %7706
    %7708 = vrot.lane.b32.xlu0 %v7567, 120
    %v7709 = vpop.permute.xlu0 %7708
    %v7711 = vsel %vm254, %v7565, 0
    %v7714 = vsel %vm254, %v7567, 0
    %v7717 = vsel %vm254, %v7707, 0
    %v7720 = vsel %vm254, %v7709, 0
    %7722 = vmatprep.subr.bf16.mxu0 0
    %7723 = vmatpush1.bf16.xpose.msra.mxu0 %v7717
    %7724 = vmatprep.subr.bf16.mxu0 0
    %7725 = vmatpush1.bf16.xpose.msra.mxu0 %v7720
    %7726 = vmatprep.subr.bf16.mxu0 0
    %7727 = vmatpush1.bf16.xpose.msra.mxu0 0
    %7728 = vmatprep.subr.bf16.mxu0 0
    %7729 = vmatpush1.bf16.xpose.msra.mxu0 0
    %7730 = vmatprep.subr.bf16.mxu0 0
    %7731 = vmatpush1.bf16.xpose.msra.mxu0 0
    %7732 = vmatprep.subr.bf16.mxu0 0
    %7733 = vmatpush1.bf16.xpose.msra.mxu0 0
    %7734 = vmatprep.subr.bf16.mxu0 0
    %7735 = vmatpush1.bf16.xpose.msra.mxu0 0
    %7736 = vmatprep.subr.bf16.mxu0 0
    %7737 = vmatpush1.bf16.xpose.msra.mxu0 0
    %7738 = vmatprep.subr.bf16.mxu0 0
    %7739 = vmatpush1.bf16.xpose.msra.mxu0 0
    %7740 = vmatprep.subr.bf16.mxu0 0
    %7741 = vmatpush1.bf16.xpose.msra.mxu0 0
    %7742 = vmatprep.subr.bf16.mxu0 0
    %7743 = vmatpush1.bf16.xpose.msra.mxu0 0
    %7744 = vmatprep.subr.bf16.mxu0 0
    %7745 = vmatpush1.bf16.xpose.msra.mxu0 0
    %7746 = vmatprep.subr.bf16.mxu0 0
    %7747 = vmatpush1.bf16.xpose.msra.mxu0 0
    %7748 = vmatprep.subr.bf16.mxu0 0
    %7749 = vmatpush1.bf16.xpose.msra.mxu0 0
    %7750 = vmatprep.subr.bf16.mxu0 0
    %7751 = vmatpush1.bf16.xpose.msra.mxu0 0
    %7752 = vmatprep.subr.bf16.mxu0 0
    %7753 = vmatpush1.bf16.xpose.msra.mxu0 0
    %7754 = vmatprep.mubr.bf16.mxu0 0
    %7755 = vmatmul.mubr.bf16.gmra.mrb[0].mxu0 %v7711
    %v7756 = vpop.f32.mrb[0].mxu0
    %v7757 = vadd.f32 0.0, %v7756
    %v7758 = vpop.f32.mrb[0].mxu0
    %v7759 = vpop.f32.mrb[0].mxu0
    %v7760 = vadd.f32 0.0, %v7759
    %v7761 = vpop.f32.mrb[0].mxu0
    %7762 = vmatprep.mubr.bf16.mxu0 0
    %7763 = vmatmul.mubr.bf16.gmra.mrb[0].mxu0 %v7714
    %v7764 = vpop.f32.mrb[0].mxu0
    %v7765 = vadd.f32 0.0, %v7764
    %v7766 = vpop.f32.mrb[0].mxu0
    %v7767 = vpop.f32.mrb[0].mxu0
    %v7768 = vadd.f32 0.0, %v7767
    %v7769 = vpop.f32.mrb[0].mxu0
    %7770 = vdwg.mxu0
    %7771 = vrot.lane.b32.xlu0 %v7569, 120
    %v7772 = vpop.permute.xlu0 %7771
    %7773 = vrot.lane.b32.xlu0 %v7571, 120
    %v7774 = vpop.permute.xlu0 %7773
    %v7776 = vsel %vm254, %v7569, 0
    %v7779 = vsel %vm254, %v7571, 0
    %v7782 = vsel %vm254, %v7772, 0
    %v7785 = vsel %vm254, %v7774, 0
    %7787 = vmatprep.subr.bf16.mxu0 0
    %7788 = vmatpush1.bf16.xpose.msra.mxu0 %v7782
    %7789 = vmatprep.subr.bf16.mxu0 0
    %7790 = vmatpush1.bf16.xpose.msra.mxu0 %v7785
    %7791 = vmatprep.subr.bf16.mxu0 0
    %7792 = vmatpush1.bf16.xpose.msra.mxu0 0
    %7793 = vmatprep.subr.bf16.mxu0 0
    %7794 = vmatpush1.bf16.xpose.msra.mxu0 0
    %7795 = vmatprep.subr.bf16.mxu0 0
    %7796 = vmatpush1.bf16.xpose.msra.mxu0 0
    %7797 = vmatprep.subr.bf16.mxu0 0
    %7798 = vmatpush1.bf16.xpose.msra.mxu0 0
    %7799 = vmatprep.subr.bf16.mxu0 0
    %7800 = vmatpush1.bf16.xpose.msra.mxu0 0
    %7801 = vmatprep.subr.bf16.mxu0 0
    %7802 = vmatpush1.bf16.xpose.msra.mxu0 0
    %7803 = vmatprep.subr.bf16.mxu0 0
    %7804 = vmatpush1.bf16.xpose.msra.mxu0 0
    %7805 = vmatprep.subr.bf16.mxu0 0
    %7806 = vmatpush1.bf16.xpose.msra.mxu0 0
    %7807 = vmatprep.subr.bf16.mxu0 0
    %7808 = vmatpush1.bf16.xpose.msra.mxu0 0
    %7809 = vmatprep.subr.bf16.mxu0 0
    %7810 = vmatpush1.bf16.xpose.msra.mxu0 0
    %7811 = vmatprep.subr.bf16.mxu0 0
    %7812 = vmatpush1.bf16.xpose.msra.mxu0 0
    %7813 = vmatprep.subr.bf16.mxu0 0
    %7814 = vmatpush1.bf16.xpose.msra.mxu0 0
    %7815 = vmatprep.subr.bf16.mxu0 0
    %7816 = vmatpush1.bf16.xpose.msra.mxu0 0
    %7817 = vmatprep.subr.bf16.mxu0 0
    %7818 = vmatpush1.bf16.xpose.msra.mxu0 0
    %7819 = vmatprep.mubr.bf16.mxu0 0
    %7820 = vmatmul.mubr.bf16.gmra.mrb[0].mxu0 %v7776
    %v7821 = vpop.f32.mrb[0].mxu0
    %v7822 = vadd.f32 0.0, %v7821
    %v7823 = vpop.f32.mrb[0].mxu0
    %v7824 = vpop.f32.mrb[0].mxu0
    %v7825 = vadd.f32 0.0, %v7824
    %v7826 = vpop.f32.mrb[0].mxu0
    %7827 = vmatprep.mubr.bf16.mxu0 0
    %7828 = vmatmul.mubr.bf16.gmra.mrb[0].mxu0 %v7779
    %v7829 = vpop.f32.mrb[0].mxu0
    %v7830 = vadd.f32 0.0, %v7829
    %v7831 = vpop.f32.mrb[0].mxu0
    %v7832 = vpop.f32.mrb[0].mxu0
    %v7833 = vadd.f32 0.0, %v7832
    %v7834 = vpop.f32.mrb[0].mxu0
    %7835 = vdwg.mxu0
    %7836 = vrot.lane.b32.xlu0 %v7573, 120
    %v7837 = vpop.permute.xlu0 %7836
    %7838 = vrot.lane.b32.xlu0 %v7575, 120
    %v7839 = vpop.permute.xlu0 %7838
    %v7841 = vsel %vm254, %v7573, 0
    %v7844 = vsel %vm254, %v7575, 0
    %v7847 = vsel %vm254, %v7837, 0
    %v7850 = vsel %vm254, %v7839, 0
    %7852 = vmatprep.subr.bf16.mxu0 0
    %7853 = vmatpush1.bf16.xpose.msra.mxu0 %v7847
    %7854 = vmatprep.subr.bf16.mxu0 0
    %7855 = vmatpush1.bf16.xpose.msra.mxu0 %v7850
    %7856 = vmatprep.subr.bf16.mxu0 0
    %7857 = vmatpush1.bf16.xpose.msra.mxu0 0
    %7858 = vmatprep.subr.bf16.mxu0 0
    %7859 = vmatpush1.bf16.xpose.msra.mxu0 0
    %7860 = vmatprep.subr.bf16.mxu0 0
    %7861 = vmatpush1.bf16.xpose.msra.mxu0 0
    %7862 = vmatprep.subr.bf16.mxu0 0
    %7863 = vmatpush1.bf16.xpose.msra.mxu0 0
    %7864 = vmatprep.subr.bf16.mxu0 0
    %7865 = vmatpush1.bf16.xpose.msra.mxu0 0
    %7866 = vmatprep.subr.bf16.mxu0 0
    %7867 = vmatpush1.bf16.xpose.msra.mxu0 0
    %7868 = vmatprep.subr.bf16.mxu0 0
    %7869 = vmatpush1.bf16.xpose.msra.mxu0 0
    %7870 = vmatprep.subr.bf16.mxu0 0
    %7871 = vmatpush1.bf16.xpose.msra.mxu0 0
    %7872 = vmatprep.subr.bf16.mxu0 0
    %7873 = vmatpush1.bf16.xpose.msra.mxu0 0
    %7874 = vmatprep.subr.bf16.mxu0 0
    %7875 = vmatpush1.bf16.xpose.msra.mxu0 0
    %7876 = vmatprep.subr.bf16.mxu0 0
    %7877 = vmatpush1.bf16.xpose.msra.mxu0 0
    %7878 = vmatprep.subr.bf16.mxu0 0
    %7879 = vmatpush1.bf16.xpose.msra.mxu0 0
    %7880 = vmatprep.subr.bf16.mxu0 0
    %7881 = vmatpush1.bf16.xpose.msra.mxu0 0
    %7882 = vmatprep.subr.bf16.mxu0 0
    %7883 = vmatpush1.bf16.xpose.msra.mxu0 0
    %7884 = vmatprep.mubr.bf16.mxu0 0
    %7885 = vmatmul.mubr.bf16.gmra.mrb[0].mxu0 %v7841
    %v7886 = vpop.f32.mrb[0].mxu0
    %v7887 = vadd.f32 0.0, %v7886
    %v7888 = vpop.f32.mrb[0].mxu0
    %v7889 = vpop.f32.mrb[0].mxu0
    %v7890 = vadd.f32 0.0, %v7889
    %v7891 = vpop.f32.mrb[0].mxu0
    %7892 = vmatprep.mubr.bf16.mxu0 0
    %7893 = vmatmul.mubr.bf16.gmra.mrb[0].mxu0 %v7844
    %v7894 = vpop.f32.mrb[0].mxu0
    %v7895 = vadd.f32 0.0, %v7894
    %v7896 = vpop.f32.mrb[0].mxu0
    %v7897 = vpop.f32.mrb[0].mxu0
    %v7898 = vadd.f32 0.0, %v7897
    %v7899 = vpop.f32.mrb[0].mxu0
    %7900 = vdwg.mxu0
    %v7901 = vmul.f32 %v7627, 0.35355338
    %v7902 = vmul.f32 %v7630, 0.35355338
    %v7903 = vmul.f32 %v7635, 0.35355338
    %v7904 = vmul.f32 %v7638, 0.35355338
    %v7905 = vmul.f32 %v7692, 0.35355338
    %v7906 = vmul.f32 %v7695, 0.35355338
    %v7907 = vmul.f32 %v7700, 0.35355338
    %v7908 = vmul.f32 %v7703, 0.35355338
    %v7909 = vmul.f32 %v7757, 0.35355338
    %v7910 = vmul.f32 %v7760, 0.35355338
    %v7911 = vmul.f32 %v7765, 0.35355338
    %v7912 = vmul.f32 %v7768, 0.35355338
    %v7913 = vmul.f32 %v7822, 0.35355338
    %v7914 = vmul.f32 %v7825, 0.35355338
    %v7915 = vmul.f32 %v7830, 0.35355338
    %v7916 = vmul.f32 %v7833, 0.35355338
    %v7917 = vmul.f32 %v7887, 0.35355338
    %v7918 = vmul.f32 %v7890, 0.35355338
    %v7919 = vmul.f32 %v7895, 0.35355338
    %v7920 = vmul.f32 %v7898, 0.35355338
    %v7921 = vadd.f32 %v7901, %v62
    %v7922 = vadd.f32 %v7902, %v63
    %v7923 = vadd.f32 %v7903, %v64
    %v7924 = vadd.f32 %v7904, %v65
    %v7925 = vadd.f32 %v7905, %v62
    %v7926 = vadd.f32 %v7906, %v63
    %v7927 = vadd.f32 %v7907, %v64
    %v7928 = vadd.f32 %v7908, %v65
    %v7929 = vadd.f32 %v7909, %v62
    %v7930 = vadd.f32 %v7910, %v63
    %v7931 = vadd.f32 %v7911, %v64
    %v7932 = vadd.f32 %v7912, %v65
    %v7933 = vadd.f32 %v7913, %v62
    %v7934 = vadd.f32 %v7914, %v63
    %v7935 = vadd.f32 %v7915, %v64
    %v7936 = vadd.f32 %v7916, %v65
    %v7937 = vadd.f32 %v7917, %v62
    %v7938 = vadd.f32 %v7918, %v63
    %v7939 = vadd.f32 %v7919, %v64
    %v7940 = vadd.f32 %v7920, %v65
    %v7941 = vsel %vm616, %v7921, -inf
    %7942 = vmax.xlane.f32.xlu0 %v7941
    %v7943 = vpop.xlane.xlu0 %7942
    %v7944 = vsel %vm616, %v7922, -inf
    %7945 = vmax.xlane.f32.xlu0 %v7944
    %v7946 = vpop.xlane.xlu0 %7945
    %v7947 = vsel %vm616, %v7923, -inf
    %7948 = vmax.xlane.f32.xlu0 %v7947
    %v7949 = vpop.xlane.xlu0 %7948
    %v7950 = vsel %vm616, %v7924, -inf
    %7951 = vmax.xlane.f32.xlu0 %v7950
    %v7952 = vpop.xlane.xlu0 %7951
    %v7953 = vsel %vm616, %v7925, -inf
    %7954 = vmax.xlane.f32.xlu0 %v7953
    %v7955 = vpop.xlane.xlu0 %7954
    %v7956 = vsel %vm616, %v7926, -inf
    %7957 = vmax.xlane.f32.xlu0 %v7956
    %v7958 = vpop.xlane.xlu0 %7957
    %v7959 = vsel %vm616, %v7927, -inf
    %7960 = vmax.xlane.f32.xlu0 %v7959
    %v7961 = vpop.xlane.xlu0 %7960
    %v7962 = vsel %vm616, %v7928, -inf
    %7963 = vmax.xlane.f32.xlu0 %v7962
    %v7964 = vpop.xlane.xlu0 %7963
    %v7965 = vsel %vm616, %v7929, -inf
    %7966 = vmax.xlane.f32.xlu0 %v7965
    %v7967 = vpop.xlane.xlu0 %7966
    %v7968 = vsel %vm616, %v7930, -inf
    %7969 = vmax.xlane.f32.xlu0 %v7968
    %v7970 = vpop.xlane.xlu0 %7969
    %v7971 = vsel %vm616, %v7931, -inf
    %7972 = vmax.xlane.f32.xlu0 %v7971
    %v7973 = vpop.xlane.xlu0 %7972
    %v7974 = vsel %vm616, %v7932, -inf
    %7975 = vmax.xlane.f32.xlu0 %v7974
    %v7976 = vpop.xlane.xlu0 %7975
    %v7977 = vsel %vm616, %v7933, -inf
    %7978 = vmax.xlane.f32.xlu0 %v7977
    %v7979 = vpop.xlane.xlu0 %7978
    %v7980 = vsel %vm616, %v7934, -inf
    %7981 = vmax.xlane.f32.xlu0 %v7980
    %v7982 = vpop.xlane.xlu0 %7981
    %v7983 = vsel %vm616, %v7935, -inf
    %7984 = vmax.xlane.f32.xlu0 %v7983
    %v7985 = vpop.xlane.xlu0 %7984
    %v7986 = vsel %vm616, %v7936, -inf
    %7987 = vmax.xlane.f32.xlu0 %v7986
    %v7988 = vpop.xlane.xlu0 %7987
    %v7989 = vsel %vm616, %v7937, -inf
    %7990 = vmax.xlane.f32.xlu0 %v7989
    %v7991 = vpop.xlane.xlu0 %7990
    %v7992 = vsel %vm616, %v7938, -inf
    %7993 = vmax.xlane.f32.xlu0 %v7992
    %v7994 = vpop.xlane.xlu0 %7993
    %v7995 = vsel %vm616, %v7939, -inf
    %7996 = vmax.xlane.f32.xlu0 %v7995
    %v7997 = vpop.xlane.xlu0 %7996
    %v7998 = vsel %vm616, %v7940, -inf
    %7999 = vmax.xlane.f32.xlu0 %v7998
    %v8000 = vpop.xlane.xlu0 %7999
    %v8001 = vsub.f32 %v7921, %v7943
    %v8002 = vsub.f32 %v7922, %v7946
    %v8003 = vsub.f32 %v7923, %v7949
    %v8004 = vsub.f32 %v7924, %v7952
    %v8005 = vsub.f32 %v7925, %v7955
    %v8006 = vsub.f32 %v7926, %v7958
    %v8007 = vsub.f32 %v7927, %v7961
    %v8008 = vsub.f32 %v7928, %v7964
    %v8009 = vsub.f32 %v7929, %v7967
    %v8010 = vsub.f32 %v7930, %v7970
    %v8011 = vsub.f32 %v7931, %v7973
    %v8012 = vsub.f32 %v7932, %v7976
    %v8013 = vsub.f32 %v7933, %v7979
    %v8014 = vsub.f32 %v7934, %v7982
    %v8015 = vsub.f32 %v7935, %v7985
    %v8016 = vsub.f32 %v7936, %v7988
    %v8017 = vsub.f32 %v7937, %v7991
    %v8018 = vsub.f32 %v7938, %v7994
    %v8019 = vsub.f32 %v7939, %v7997
    %v8020 = vsub.f32 %v7940, %v8000
    %v8021 = vmul.f32 %v8001, 1.442695
    %v8022 = vpow.pop %v8021
    %v8023 = vmul.f32 %v8002, 1.442695
    %v8024 = vpow.pop %v8023
    %v8025 = vmul.f32 %v8003, 1.442695
    %v8026 = vpow.pop %v8025
    %v8027 = vmul.f32 %v8004, 1.442695
    %v8028 = vpow.pop %v8027
    %v8029 = vmul.f32 %v8005, 1.442695
    %v8030 = vpow.pop %v8029
    %v8031 = vmul.f32 %v8006, 1.442695
    %v8032 = vpow.pop %v8031
    %v8033 = vmul.f32 %v8007, 1.442695
    %v8034 = vpow.pop %v8033
    %v8035 = vmul.f32 %v8008, 1.442695
    %v8036 = vpow.pop %v8035
    %v8037 = vmul.f32 %v8009, 1.442695
    %v8038 = vpow.pop %v8037
    %v8039 = vmul.f32 %v8010, 1.442695
    %v8040 = vpow.pop %v8039
    %v8041 = vmul.f32 %v8011, 1.442695
    %v8042 = vpow.pop %v8041
    %v8043 = vmul.f32 %v8012, 1.442695
    %v8044 = vpow.pop %v8043
    %v8045 = vmul.f32 %v8013, 1.442695
    %v8046 = vpow.pop %v8045
    %v8047 = vmul.f32 %v8014, 1.442695
    %v8048 = vpow.pop %v8047
    %v8049 = vmul.f32 %v8015, 1.442695
    %v8050 = vpow.pop %v8049
    %v8051 = vmul.f32 %v8016, 1.442695
    %v8052 = vpow.pop %v8051
    %v8053 = vmul.f32 %v8017, 1.442695
    %v8054 = vpow.pop %v8053
    %v8055 = vmul.f32 %v8018, 1.442695
    %v8056 = vpow.pop %v8055
    %v8057 = vmul.f32 %v8019, 1.442695
    %v8058 = vpow.pop %v8057
    %v8059 = vmul.f32 %v8020, 1.442695
    %v8060 = vpow.pop %v8059
    %v8061 = vsel %vm616, %v8022, 0.0
    %8062 = vadd.xlane.f32.xlu0 %v8061
    %v8063 = vpop.xlane.xlu0 %8062
    %v8064 = vsel %vm616, %v8024, 0.0
    %8065 = vadd.xlane.f32.xlu0 %v8064
    %v8066 = vpop.xlane.xlu0 %8065
    %v8067 = vsel %vm616, %v8026, 0.0
    %8068 = vadd.xlane.f32.xlu0 %v8067
    %v8069 = vpop.xlane.xlu0 %8068
    %v8070 = vsel %vm616, %v8028, 0.0
    %8071 = vadd.xlane.f32.xlu0 %v8070
    %v8072 = vpop.xlane.xlu0 %8071
    %v8073 = vsel %vm616, %v8030, 0.0
    %8074 = vadd.xlane.f32.xlu0 %v8073
    %v8075 = vpop.xlane.xlu0 %8074
    %v8076 = vsel %vm616, %v8032, 0.0
    %8077 = vadd.xlane.f32.xlu0 %v8076
    %v8078 = vpop.xlane.xlu0 %8077
    %v8079 = vsel %vm616, %v8034, 0.0
    %8080 = vadd.xlane.f32.xlu0 %v8079
    %v8081 = vpop.xlane.xlu0 %8080
    %v8082 = vsel %vm616, %v8036, 0.0
    %8083 = vadd.xlane.f32.xlu0 %v8082
    %v8084 = vpop.xlane.xlu0 %8083
    %v8085 = vsel %vm616, %v8038, 0.0
    %8086 = vadd.xlane.f32.xlu0 %v8085
    %v8087 = vpop.xlane.xlu0 %8086
    %v8088 = vsel %vm616, %v8040, 0.0
    %8089 = vadd.xlane.f32.xlu0 %v8088
    %v8090 = vpop.xlane.xlu0 %8089
    %v8091 = vsel %vm616, %v8042, 0.0
    %8092 = vadd.xlane.f32.xlu0 %v8091
    %v8093 = vpop.xlane.xlu0 %8092
    %v8094 = vsel %vm616, %v8044, 0.0
    %8095 = vadd.xlane.f32.xlu0 %v8094
    %v8096 = vpop.xlane.xlu0 %8095
    %v8097 = vsel %vm616, %v8046, 0.0
    %8098 = vadd.xlane.f32.xlu0 %v8097
    %v8099 = vpop.xlane.xlu0 %8098
    %v8100 = vsel %vm616, %v8048, 0.0
    %8101 = vadd.xlane.f32.xlu0 %v8100
    %v8102 = vpop.xlane.xlu0 %8101
    %v8103 = vsel %vm616, %v8050, 0.0
    %8104 = vadd.xlane.f32.xlu0 %v8103
    %v8105 = vpop.xlane.xlu0 %8104
    %v8106 = vsel %vm616, %v8052, 0.0
    %8107 = vadd.xlane.f32.xlu0 %v8106
    %v8108 = vpop.xlane.xlu0 %8107
    %v8109 = vsel %vm616, %v8054, 0.0
    %8110 = vadd.xlane.f32.xlu0 %v8109
    %v8111 = vpop.xlane.xlu0 %8110
    %v8112 = vsel %vm616, %v8056, 0.0
    %8113 = vadd.xlane.f32.xlu0 %v8112
    %v8114 = vpop.xlane.xlu0 %8113
    %v8115 = vsel %vm616, %v8058, 0.0
    %8116 = vadd.xlane.f32.xlu0 %v8115
    %v8117 = vpop.xlane.xlu0 %8116
    %v8118 = vsel %vm616, %v8060, 0.0
    %8119 = vadd.xlane.f32.xlu0 %v8118
    %v8120 = vpop.xlane.xlu0 %8119
    %v8121 = vrcp.pop %v8063
    %v8122 = vmul.f32 %v8022, %v8121
    %v8123 = vrcp.pop %v8066
    %v8124 = vmul.f32 %v8024, %v8123
    %v8125 = vrcp.pop %v8069
    %v8126 = vmul.f32 %v8026, %v8125
    %v8127 = vrcp.pop %v8072
    %v8128 = vmul.f32 %v8028, %v8127
    %v8129 = vrcp.pop %v8075
    %v8130 = vmul.f32 %v8030, %v8129
    %v8131 = vrcp.pop %v8078
    %v8132 = vmul.f32 %v8032, %v8131
    %v8133 = vrcp.pop %v8081
    %v8134 = vmul.f32 %v8034, %v8133
    %v8135 = vrcp.pop %v8084
    %v8136 = vmul.f32 %v8036, %v8135
    %v8137 = vrcp.pop %v8087
    %v8138 = vmul.f32 %v8038, %v8137
    %v8139 = vrcp.pop %v8090
    %v8140 = vmul.f32 %v8040, %v8139
    %v8141 = vrcp.pop %v8093
    %v8142 = vmul.f32 %v8042, %v8141
    %v8143 = vrcp.pop %v8096
    %v8144 = vmul.f32 %v8044, %v8143
    %v8145 = vrcp.pop %v8099
    %v8146 = vmul.f32 %v8046, %v8145
    %v8147 = vrcp.pop %v8102
    %v8148 = vmul.f32 %v8048, %v8147
    %v8149 = vrcp.pop %v8105
    %v8150 = vmul.f32 %v8050, %v8149
    %v8151 = vrcp.pop %v8108
    %v8152 = vmul.f32 %v8052, %v8151
    %v8153 = vrcp.pop %v8111
    %v8154 = vmul.f32 %v8054, %v8153
    %v8155 = vrcp.pop %v8114
    %v8156 = vmul.f32 %v8056, %v8155
    %v8157 = vrcp.pop %v8117
    %v8158 = vmul.f32 %v8058, %v8157
    %v8159 = vrcp.pop %v8120
    %v8160 = vmul.f32 %v8060, %v8159
    %v8161 = vpack.c.bf16 %v8124, %v8122
    %v8162 = vpack.c.bf16 %v8128, %v8126
    %v8163 = vpack.c.bf16 %v8132, %v8130
    %v8164 = vpack.c.bf16 %v8136, %v8134
    %v8165 = vpack.c.bf16 %v8140, %v8138
    %v8166 = vpack.c.bf16 %v8144, %v8142
    %v8167 = vpack.c.bf16 %v8148, %v8146
    %v8168 = vpack.c.bf16 %v8152, %v8150
    %v8169 = vpack.c.bf16 %v8156, %v8154
    %v8170 = vpack.c.bf16 %v8160, %v8158
    %8171 = vrot.lane.b32.xlu0 %v7556, 112
    %v8172 = vpop.permute.xlu0 %8171
    %8173 = vrot.lane.b32.xlu0 %v7557, 112
    %v8174 = vpop.permute.xlu0 %8173
    %v8178 = vsel %vm616, %v8161, 0
    %v8181 = vsel %vm616, %v8162, 0
    %8183 = vmatprep.subr.bf16.mxu0 0
    %8184 = vmatpush1.bf16.msra.mxu0 %v8172
    %8185 = vmatprep.subr.bf16.mxu0 0
    %8186 = vmatpush1.bf16.msra.mxu0 %v8174
    %8187 = vmatprep.subr.bf16.mxu0 0
    %8188 = vmatpush1.bf16.msra.mxu0 0
    %8189 = vmatprep.subr.bf16.mxu0 0
    %8190 = vmatpush1.bf16.msra.mxu0 0
    %8191 = vmatprep.subr.bf16.mxu0 0
    %8192 = vmatpush1.bf16.msra.mxu0 0
    %8193 = vmatprep.subr.bf16.mxu0 0
    %8194 = vmatpush1.bf16.msra.mxu0 0
    %8195 = vmatprep.subr.bf16.mxu0 0
    %8196 = vmatpush1.bf16.msra.mxu0 0
    %8197 = vmatprep.subr.bf16.mxu0 0
    %8198 = vmatpush1.bf16.msra.mxu0 0
    %8199 = vmatprep.subr.bf16.mxu0 0
    %8200 = vmatpush1.bf16.msra.mxu0 0
    %8201 = vmatprep.subr.bf16.mxu0 0
    %8202 = vmatpush1.bf16.msra.mxu0 0
    %8203 = vmatprep.subr.bf16.mxu0 0
    %8204 = vmatpush1.bf16.msra.mxu0 0
    %8205 = vmatprep.subr.bf16.mxu0 0
    %8206 = vmatpush1.bf16.msra.mxu0 0
    %8207 = vmatprep.subr.bf16.mxu0 0
    %8208 = vmatpush1.bf16.msra.mxu0 0
    %8209 = vmatprep.subr.bf16.mxu0 0
    %8210 = vmatpush1.bf16.msra.mxu0 0
    %8211 = vmatprep.subr.bf16.mxu0 0
    %8212 = vmatpush1.bf16.msra.mxu0 0
    %8213 = vmatprep.subr.bf16.mxu0 0
    %8214 = vmatpush1.bf16.msra.mxu0 0
    %8215 = vmatprep.mubr.bf16.mxu0 0
    %8216 = vmatmul.mubr.bf16.gmra.mrb[0].mxu0 %v8178
    %v8217 = vpop.f32.mrb[0].mxu0
    %v8218 = vadd.f32 0.0, %v8217
    %v8219 = vpop.f32.mrb[0].mxu0
    %v8220 = vpop.f32.mrb[0].mxu0
    %v8221 = vadd.f32 0.0, %v8220
    %v8222 = vpop.f32.mrb[0].mxu0
    %8223 = vmatprep.mubr.bf16.mxu0 0
    %8224 = vmatmul.mubr.bf16.gmra.mrb[0].mxu0 %v8181
    %v8225 = vpop.f32.mrb[0].mxu0
    %v8226 = vadd.f32 0.0, %v8225
    %v8227 = vpop.f32.mrb[0].mxu0
    %v8228 = vpop.f32.mrb[0].mxu0
    %v8229 = vadd.f32 0.0, %v8228
    %v8230 = vpop.f32.mrb[0].mxu0
    %8231 = vdwg.mxu0
    %8232 = vrot.lane.b32.xlu0 %v7561, 112
    %v8233 = vpop.permute.xlu0 %8232
    %8234 = vrot.lane.b32.xlu0 %v7563, 112
    %v8235 = vpop.permute.xlu0 %8234
    %v8239 = vsel %vm616, %v8163, 0
    %v8242 = vsel %vm616, %v8164, 0
    %8244 = vmatprep.subr.bf16.mxu0 0
    %8245 = vmatpush1.bf16.msra.mxu0 %v8233
    %8246 = vmatprep.subr.bf16.mxu0 0
    %8247 = vmatpush1.bf16.msra.mxu0 %v8235
    %8248 = vmatprep.subr.bf16.mxu0 0
    %8249 = vmatpush1.bf16.msra.mxu0 0
    %8250 = vmatprep.subr.bf16.mxu0 0
    %8251 = vmatpush1.bf16.msra.mxu0 0
    %8252 = vmatprep.subr.bf16.mxu0 0
    %8253 = vmatpush1.bf16.msra.mxu0 0
    %8254 = vmatprep.subr.bf16.mxu0 0
    %8255 = vmatpush1.bf16.msra.mxu0 0
    %8256 = vmatprep.subr.bf16.mxu0 0
    %8257 = vmatpush1.bf16.msra.mxu0 0
    %8258 = vmatprep.subr.bf16.mxu0 0
    %8259 = vmatpush1.bf16.msra.mxu0 0
    %8260 = vmatprep.subr.bf16.mxu0 0
    %8261 = vmatpush1.bf16.msra.mxu0 0
    %8262 = vmatprep.subr.bf16.mxu0 0
    %8263 = vmatpush1.bf16.msra.mxu0 0
    %8264 = vmatprep.subr.bf16.mxu0 0
    %8265 = vmatpush1.bf16.msra.mxu0 0
    %8266 = vmatprep.subr.bf16.mxu0 0
    %8267 = vmatpush1.bf16.msra.mxu0 0
    %8268 = vmatprep.subr.bf16.mxu0 0
    %8269 = vmatpush1.bf16.msra.mxu0 0
    %8270 = vmatprep.subr.bf16.mxu0 0
    %8271 = vmatpush1.bf16.msra.mxu0 0
    %8272 = vmatprep.subr.bf16.mxu0 0
    %8273 = vmatpush1.bf16.msra.mxu0 0
    %8274 = vmatprep.subr.bf16.mxu0 0
    %8275 = vmatpush1.bf16.msra.mxu0 0
    %8276 = vmatprep.mubr.bf16.mxu0 0
    %8277 = vmatmul.mubr.bf16.gmra.mrb[0].mxu0 %v8239
    %v8278 = vpop.f32.mrb[0].mxu0
    %v8279 = vadd.f32 0.0, %v8278
    %v8280 = vpop.f32.mrb[0].mxu0
    %v8281 = vpop.f32.mrb[0].mxu0
    %v8282 = vadd.f32 0.0, %v8281
    %v8283 = vpop.f32.mrb[0].mxu0
    %8284 = vmatprep.mubr.bf16.mxu0 0
    %8285 = vmatmul.mubr.bf16.gmra.mrb[0].mxu0 %v8242
    %v8286 = vpop.f32.mrb[0].mxu0
    %v8287 = vadd.f32 0.0, %v8286
    %v8288 = vpop.f32.mrb[0].mxu0
    %v8289 = vpop.f32.mrb[0].mxu0
    %v8290 = vadd.f32 0.0, %v8289
    %v8291 = vpop.f32.mrb[0].mxu0
    %8292 = vdwg.mxu0
    %8293 = vrot.lane.b32.xlu0 %v7565, 112
    %v8294 = vpop.permute.xlu0 %8293
    %8295 = vrot.lane.b32.xlu0 %v7567, 112
    %v8296 = vpop.permute.xlu0 %8295
    %v8300 = vsel %vm616, %v8165, 0
    %v8303 = vsel %vm616, %v8166, 0
    %8305 = vmatprep.subr.bf16.mxu0 0
    %8306 = vmatpush1.bf16.msra.mxu0 %v8294
    %8307 = vmatprep.subr.bf16.mxu0 0
    %8308 = vmatpush1.bf16.msra.mxu0 %v8296
    %8309 = vmatprep.subr.bf16.mxu0 0
    %8310 = vmatpush1.bf16.msra.mxu0 0
    %8311 = vmatprep.subr.bf16.mxu0 0
    %8312 = vmatpush1.bf16.msra.mxu0 0
    %8313 = vmatprep.subr.bf16.mxu0 0
    %8314 = vmatpush1.bf16.msra.mxu0 0
    %8315 = vmatprep.subr.bf16.mxu0 0
    %8316 = vmatpush1.bf16.msra.mxu0 0
    %8317 = vmatprep.subr.bf16.mxu0 0
    %8318 = vmatpush1.bf16.msra.mxu0 0
    %8319 = vmatprep.subr.bf16.mxu0 0
    %8320 = vmatpush1.bf16.msra.mxu0 0
    %8321 = vmatprep.subr.bf16.mxu0 0
    %8322 = vmatpush1.bf16.msra.mxu0 0
    %8323 = vmatprep.subr.bf16.mxu0 0
    %8324 = vmatpush1.bf16.msra.mxu0 0
    %8325 = vmatprep.subr.bf16.mxu0 0
    %8326 = vmatpush1.bf16.msra.mxu0 0
    %8327 = vmatprep.subr.bf16.mxu0 0
    %8328 = vmatpush1.bf16.msra.mxu0 0
    %8329 = vmatprep.subr.bf16.mxu0 0
    %8330 = vmatpush1.bf16.msra.mxu0 0
    %8331 = vmatprep.subr.bf16.mxu0 0
    %8332 = vmatpush1.bf16.msra.mxu0 0
    %8333 = vmatprep.subr.bf16.mxu0 0
    %8334 = vmatpush1.bf16.msra.mxu0 0
    %8335 = vmatprep.subr.bf16.mxu0 0
    %8336 = vmatpush1.bf16.msra.mxu0 0
    %8337 = vmatprep.mubr.bf16.mxu0 0
    %8338 = vmatmul.mubr.bf16.gmra.mrb[0].mxu0 %v8300
    %v8339 = vpop.f32.mrb[0].mxu0
    %v8340 = vadd.f32 0.0, %v8339
    %v8341 = vpop.f32.mrb[0].mxu0
    %v8342 = vpop.f32.mrb[0].mxu0
    %v8343 = vadd.f32 0.0, %v8342
    %v8344 = vpop.f32.mrb[0].mxu0
    %8345 = vmatprep.mubr.bf16.mxu0 0
    %8346 = vmatmul.mubr.bf16.gmra.mrb[0].mxu0 %v8303
    %v8347 = vpop.f32.mrb[0].mxu0
    %v8348 = vadd.f32 0.0, %v8347
    %v8349 = vpop.f32.mrb[0].mxu0
    %v8350 = vpop.f32.mrb[0].mxu0
    %v8351 = vadd.f32 0.0, %v8350
    %v8352 = vpop.f32.mrb[0].mxu0
    %8353 = vdwg.mxu0
    %8354 = vrot.lane.b32.xlu0 %v7569, 112
    %v8355 = vpop.permute.xlu0 %8354
    %8356 = vrot.lane.b32.xlu0 %v7571, 112
    %v8357 = vpop.permute.xlu0 %8356
    %v8361 = vsel %vm616, %v8167, 0
    %v8364 = vsel %vm616, %v8168, 0
    %8366 = vmatprep.subr.bf16.mxu0 0
    %8367 = vmatpush1.bf16.msra.mxu0 %v8355
    %8368 = vmatprep.subr.bf16.mxu0 0
    %8369 = vmatpush1.bf16.msra.mxu0 %v8357
    %8370 = vmatprep.subr.bf16.mxu0 0
    %8371 = vmatpush1.bf16.msra.mxu0 0
    %8372 = vmatprep.subr.bf16.mxu0 0
    %8373 = vmatpush1.bf16.msra.mxu0 0
    %8374 = vmatprep.subr.bf16.mxu0 0
    %8375 = vmatpush1.bf16.msra.mxu0 0
    %8376 = vmatprep.subr.bf16.mxu0 0
    %8377 = vmatpush1.bf16.msra.mxu0 0
    %8378 = vmatprep.subr.bf16.mxu0 0
    %8379 = vmatpush1.bf16.msra.mxu0 0
    %8380 = vmatprep.subr.bf16.mxu0 0
    %8381 = vmatpush1.bf16.msra.mxu0 0
    %8382 = vmatprep.subr.bf16.mxu0 0
    %8383 = vmatpush1.bf16.msra.mxu0 0
    %8384 = vmatprep.subr.bf16.mxu0 0
    %8385 = vmatpush1.bf16.msra.mxu0 0
    %8386 = vmatprep.subr.bf16.mxu0 0
    %8387 = vmatpush1.bf16.msra.mxu0 0
    %8388 = vmatprep.subr.bf16.mxu0 0
    %8389 = vmatpush1.bf16.msra.mxu0 0
    %8390 = vmatprep.subr.bf16.mxu0 0
    %8391 = vmatpush1.bf16.msra.mxu0 0
    %8392 = vmatprep.subr.bf16.mxu0 0
    %8393 = vmatpush1.bf16.msra.mxu0 0
    %8394 = vmatprep.subr.bf16.mxu0 0
    %8395 = vmatpush1.bf16.msra.mxu0 0
    %8396 = vmatprep.subr.bf16.mxu0 0
    %8397 = vmatpush1.bf16.msra.mxu0 0
    %8398 = vmatprep.mubr.bf16.mxu0 0
    %8399 = vmatmul.mubr.bf16.gmra.mrb[0].mxu0 %v8361
    %v8400 = vpop.f32.mrb[0].mxu0
    %v8401 = vadd.f32 0.0, %v8400
    %v8402 = vpop.f32.mrb[0].mxu0
    %v8403 = vpop.f32.mrb[0].mxu0
    %v8404 = vadd.f32 0.0, %v8403
    %v8405 = vpop.f32.mrb[0].mxu0
    %8406 = vmatprep.mubr.bf16.mxu0 0
    %8407 = vmatmul.mubr.bf16.gmra.mrb[0].mxu0 %v8364
    %v8408 = vpop.f32.mrb[0].mxu0
    %v8409 = vadd.f32 0.0, %v8408
    %v8410 = vpop.f32.mrb[0].mxu0
    %v8411 = vpop.f32.mrb[0].mxu0
    %v8412 = vadd.f32 0.0, %v8411
    %v8413 = vpop.f32.mrb[0].mxu0
    %8414 = vdwg.mxu0
    %8415 = vrot.lane.b32.xlu0 %v7573, 112
    %v8416 = vpop.permute.xlu0 %8415
    %8417 = vrot.lane.b32.xlu0 %v7575, 112
    %v8418 = vpop.permute.xlu0 %8417
    %v8422 = vsel %vm616, %v8169, 0
    %v8425 = vsel %vm616, %v8170, 0
    %8427 = vmatprep.subr.bf16.mxu0 0
    %8428 = vmatpush1.bf16.msra.mxu0 %v8416
    %8429 = vmatprep.subr.bf16.mxu0 0
    %8430 = vmatpush1.bf16.msra.mxu0 %v8418
    %8431 = vmatprep.subr.bf16.mxu0 0
    %8432 = vmatpush1.bf16.msra.mxu0 0
    %8433 = vmatprep.subr.bf16.mxu0 0
    %8434 = vmatpush1.bf16.msra.mxu0 0
    %8435 = vmatprep.subr.bf16.mxu0 0
    %8436 = vmatpush1.bf16.msra.mxu0 0
    %8437 = vmatprep.subr.bf16.mxu0 0
    %8438 = vmatpush1.bf16.msra.mxu0 0
    %8439 = vmatprep.subr.bf16.mxu0 0
    %8440 = vmatpush1.bf16.msra.mxu0 0
    %8441 = vmatprep.subr.bf16.mxu0 0
    %8442 = vmatpush1.bf16.msra.mxu0 0
    %8443 = vmatprep.subr.bf16.mxu0 0
    %8444 = vmatpush1.bf16.msra.mxu0 0
    %8445 = vmatprep.subr.bf16.mxu0 0
    %8446 = vmatpush1.bf16.msra.mxu0 0
    %8447 = vmatprep.subr.bf16.mxu0 0
    %8448 = vmatpush1.bf16.msra.mxu0 0
    %8449 = vmatprep.subr.bf16.mxu0 0
    %8450 = vmatpush1.bf16.msra.mxu0 0
    %8451 = vmatprep.subr.bf16.mxu0 0
    %8452 = vmatpush1.bf16.msra.mxu0 0
    %8453 = vmatprep.subr.bf16.mxu0 0
    %8454 = vmatpush1.bf16.msra.mxu0 0
    %8455 = vmatprep.subr.bf16.mxu0 0
    %8456 = vmatpush1.bf16.msra.mxu0 0
    %8457 = vmatprep.subr.bf16.mxu0 0
    %8458 = vmatpush1.bf16.msra.mxu0 0
    %8459 = vmatprep.mubr.bf16.mxu0 0
    %8460 = vmatmul.mubr.bf16.gmra.mrb[0].mxu0 %v8422
    %v8461 = vpop.f32.mrb[0].mxu0
    %v8462 = vadd.f32 0.0, %v8461
    %v8463 = vpop.f32.mrb[0].mxu0
    %v8464 = vpop.f32.mrb[0].mxu0
    %v8465 = vadd.f32 0.0, %v8464
    %v8466 = vpop.f32.mrb[0].mxu0
    %8467 = vmatprep.mubr.bf16.mxu0 0
    %8468 = vmatmul.mubr.bf16.gmra.mrb[0].mxu0 %v8425
    %v8469 = vpop.f32.mrb[0].mxu0
    %v8470 = vadd.f32 0.0, %v8469
    %v8471 = vpop.f32.mrb[0].mxu0
    %v8472 = vpop.f32.mrb[0].mxu0
    %v8473 = vadd.f32 0.0, %v8472
    %v8474 = vpop.f32.mrb[0].mxu0
    %8475 = vdwg.mxu0
    %8480 = vrot.lane.b32.xlu0 %v8279, 8
    %v8481 = vpop.permute.xlu0 %8480
    %8482 = vrot.lane.b32.xlu0 %v8282, 8
    %v8483 = vpop.permute.xlu0 %8482
    %8484 = vrot.lane.b32.xlu0 %v8287, 8
    %v8485 = vpop.permute.xlu0 %8484
    %8486 = vrot.lane.b32.xlu0 %v8290, 8
    %v8487 = vpop.permute.xlu0 %8486
    %8496 = vrot.lane.b32.xlu0 %v8340, 16
    %v8497 = vpop.permute.xlu0 %8496
    %8498 = vrot.lane.b32.xlu0 %v8343, 16
    %v8499 = vpop.permute.xlu0 %8498
    %8500 = vrot.lane.b32.xlu0 %v8348, 16
    %v8501 = vpop.permute.xlu0 %8500
    %8502 = vrot.lane.b32.xlu0 %v8351, 16
    %v8503 = vpop.permute.xlu0 %8502
    %8512 = vrot.lane.b32.xlu0 %v8401, 24
    %v8513 = vpop.permute.xlu0 %8512
    %8514 = vrot.lane.b32.xlu0 %v8404, 24
    %v8515 = vpop.permute.xlu0 %8514
    %8516 = vrot.lane.b32.xlu0 %v8409, 24
    %v8517 = vpop.permute.xlu0 %8516
    %8518 = vrot.lane.b32.xlu0 %v8412, 24
    %v8519 = vpop.permute.xlu0 %8518
    %8528 = vrot.lane.b32.xlu0 %v8462, 32
    %v8529 = vpop.permute.xlu0 %8528
    %8530 = vrot.lane.b32.xlu0 %v8465, 32
    %v8531 = vpop.permute.xlu0 %8530
    %8532 = vrot.lane.b32.xlu0 %v8470, 32
    %v8533 = vpop.permute.xlu0 %8532
    %8534 = vrot.lane.b32.xlu0 %v8473, 32
    %v8535 = vpop.permute.xlu0 %8534
    %v8540 = vsel %vm254, %v8218, %v8481
    %v8541 = vsel %vm254, %v8221, %v8483
    %v8542 = vsel %vm254, %v8226, %v8485
    %v8543 = vsel %vm254, %v8229, %v8487
    %v8544 = vsel %vm1220, %v8540, %v8497
    %v8545 = vsel %vm1220, %v8541, %v8499
    %v8546 = vsel %vm1220, %v8542, %v8501
    %v8547 = vsel %vm1220, %v8543, %v8503
    %v8548 = vsel %vm1225, %v8544, %v8513
    %v8549 = vsel %vm1225, %v8545, %v8515
    %v8550 = vsel %vm1225, %v8546, %v8517
    %v8551 = vsel %vm1225, %v8547, %v8519
    %v8552 = vsel %vm616, %v8548, %v8529
    %v8553 = vsel %vm616, %v8549, %v8531
    %v8554 = vsel %vm616, %v8550, %v8533
    %v8555 = vsel %vm616, %v8551, %v8535
    %v8556 = vpack.c.bf16 %v8553, %v8552
    %v8557 = vpack.c.bf16 %v8555, %v8554
    %s8558 = scalar_lea.vmem %s4, 40
    %v8559 = vld [vmem:[%s8558] sm:$0xf]
    %v8560 = vld [vmem:[%s8558 + $0x4] sm:$0xf]
    %v8561 = vld [vmem:[%s8558 + $0x8] sm:$0xf]
    %v8562 = vld [vmem:[%s8558 + $0xc] sm:$0xf]
    %v8563 = vld [vmem:[%s8558 + $0x10] sm:$0xf]
    %s8564 = scalar_lea.vmem %s5, 2
    %v8565 = vld [vmem:[%s8564] sm:$0x1]
    %v8567 = vlaneseq
    %v8568 = vshrl.u32 %v8567, 7
    %v8569 = vsub.s32 0, %v8568
    %v8570 = vrot.slane %v8565, %v8569
    %v8577 = vunpack.c.l.b16 %v8559
    %v8578 = vunpack.c.l.b16 %v8560
    %v8579 = vunpack.c.l.b16 %v8561
    %v8580 = vunpack.c.l.b16 %v8562
    %v8581 = vunpack.c.l.b16 %v8563
    %v8582 = vpack.c.b16 %v8578, %v8577
    %v8583 = vpack.c.b16 %v8580, %v8579
    %v8584 = vpack.c.b16 %v8581, %v8581
    %v8588 = vsel %vm68, %v8556, 0
    %v8591 = vsel %vm68, %v8557, 0
    %v8594 = vsel %vm177, %v8584, 0
    %8596 = vmatprep.subr.bf16.mxu0 0
    %8597 = vmatpush1.bf16.msra.mxu0 %v8582
    %8598 = vmatprep.subr.bf16.mxu0 0
    %8599 = vmatpush1.bf16.msra.mxu0 %v8583
    %8600 = vmatprep.subr.bf16.mxu0 0
    %8601 = vmatpush1.bf16.msra.mxu0 %v8594
    %8602 = vmatprep.subr.bf16.mxu0 0
    %8603 = vmatpush1.bf16.msra.mxu0 0
    %8604 = vmatprep.subr.bf16.mxu0 0
    %8605 = vmatpush1.bf16.msra.mxu0 0
    %8606 = vmatprep.subr.bf16.mxu0 0
    %8607 = vmatpush1.bf16.msra.mxu0 0
    %8608 = vmatprep.subr.bf16.mxu0 0
    %8609 = vmatpush1.bf16.msra.mxu0 0
    %8610 = vmatprep.subr.bf16.mxu0 0
    %8611 = vmatpush1.bf16.msra.mxu0 0
    %8612 = vmatprep.subr.bf16.mxu0 0
    %8613 = vmatpush1.bf16.msra.mxu0 0
    %8614 = vmatprep.subr.bf16.mxu0 0
    %8615 = vmatpush1.bf16.msra.mxu0 0
    %8616 = vmatprep.subr.bf16.mxu0 0
    %8617 = vmatpush1.bf16.msra.mxu0 0
    %8618 = vmatprep.subr.bf16.mxu0 0
    %8619 = vmatpush1.bf16.msra.mxu0 0
    %8620 = vmatprep.subr.bf16.mxu0 0
    %8621 = vmatpush1.bf16.msra.mxu0 0
    %8622 = vmatprep.subr.bf16.mxu0 0
    %8623 = vmatpush1.bf16.msra.mxu0 0
    %8624 = vmatprep.subr.bf16.mxu0 0
    %8625 = vmatpush1.bf16.msra.mxu0 0
    %8626 = vmatprep.subr.bf16.mxu0 0
    %8627 = vmatpush1.bf16.msra.mxu0 0
    %8628 = vmatprep.mubr.bf16.mxu0 0
    %8629 = vmatmul.mubr.bf16.gmra.mrb[0].mxu0 %v8588
    %v8630 = vpop.f32.mrb[0].mxu0
    %v8631 = vadd.f32 %v8570, %v8630
    %v8632 = vpop.f32.mrb[0].mxu0
    %v8633 = vpop.f32.mrb[0].mxu0
    %v8634 = vadd.f32 %v8570, %v8633
    %v8635 = vpop.f32.mrb[0].mxu0
    %8636 = vmatprep.mubr.bf16.mxu0 0
    %8637 = vmatmul.mubr.bf16.gmra.mrb[0].mxu0 %v8591
    %v8638 = vpop.f32.mrb[0].mxu0
    %v8639 = vadd.f32 %v8570, %v8638
    %v8640 = vpop.f32.mrb[0].mxu0
    %v8641 = vpop.f32.mrb[0].mxu0
    %v8642 = vadd.f32 %v8570, %v8641
    %v8643 = vpop.f32.mrb[0].mxu0
    %8644 = vdwg.mxu0
    %v8645 = vadd.f32 %v7387, %v8631
    %v8646 = vadd.f32 %v7388, %v8634
    %v8647 = vadd.f32 %v7389, %v8639
    %v8648 = vadd.f32 %v7390, %v8642
    %8649 = vst.msk [vmem:[#allocation4] sm:$0xff] %vm1220, %v8122
    %8650 = vst.msk [vmem:[#allocation4 + $0x8] sm:$0xff] %vm1220, %v8124
    %8651 = vst.msk [vmem:[#allocation4 + $0x10] sm:$0xff] %vm1220, %v8130
    %8652 = vst.msk [vmem:[#allocation4 + $0x18] sm:$0xff] %vm1220, %v8132
    %8653 = vst.msk [vmem:[#allocation4 + $0x20] sm:$0xff] %vm1220, %v8138
    %8654 = vst.msk [vmem:[#allocation4 + $0x28] sm:$0xff] %vm1220, %v8140
    %8655 = vst.msk [vmem:[#allocation4 + $0x30] sm:$0xff] %vm1220, %v8146
    %8656 = vst.msk [vmem:[#allocation4 + $0x38] sm:$0xff] %vm1220, %v8148
    %8657 = vst.msk [vmem:[#allocation4 + $0x40] sm:$0xff] %vm1220, %v8154
    %8658 = vst.msk [vmem:[#allocation4 + $0x48] sm:$0xff] %vm1220, %v8156
    %8669 = vrot.lane.b32.xlu0 %v8126, 112
    %v8670 = vpop.permute.xlu0 %8669
    %8671 = vrot.lane.b32.xlu0 %v8128, 112
    %v8672 = vpop.permute.xlu0 %8671
    %8673 = vrot.lane.b32.xlu0 %v8134, 112
    %v8674 = vpop.permute.xlu0 %8673
    %8675 = vrot.lane.b32.xlu0 %v8136, 112
    %v8676 = vpop.permute.xlu0 %8675
    %8677 = vrot.lane.b32.xlu0 %v8142, 112
    %v8678 = vpop.permute.xlu0 %8677
    %8679 = vrot.lane.b32.xlu0 %v8144, 112
    %v8680 = vpop.permute.xlu0 %8679
    %8681 = vrot.lane.b32.xlu0 %v8150, 112
    %v8682 = vpop.permute.xlu0 %8681
    %8683 = vrot.lane.b32.xlu0 %v8152, 112
    %v8684 = vpop.permute.xlu0 %8683
    %8685 = vrot.lane.b32.xlu0 %v8158, 112
    %v8686 = vpop.permute.xlu0 %8685
    %8687 = vrot.lane.b32.xlu0 %v8160, 112
    %v8688 = vpop.permute.xlu0 %8687
    %s8699 = scalar_lea.vmem [#allocation4], 80
    %8700 = vst.msk [vmem:[%s8699] sm:$0xff] %vm1220, %v8670
    %8701 = vst.msk [vmem:[%s8699 + $0x8] sm:$0xff] %vm1220, %v8672
    %8702 = vst.msk [vmem:[%s8699 + $0x10] sm:$0xff] %vm1220, %v8674
    %8703 = vst.msk [vmem:[%s8699 + $0x18] sm:$0xff] %vm1220, %v8676
    %8704 = vst.msk [vmem:[%s8699 + $0x20] sm:$0xff] %vm1220, %v8678
    %8705 = vst.msk [vmem:[%s8699 + $0x28] sm:$0xff] %vm1220, %v8680
    %8706 = vst.msk [vmem:[%s8699 + $0x30] sm:$0xff] %vm1220, %v8682
    %8707 = vst.msk [vmem:[%s8699 + $0x38] sm:$0xff] %vm1220, %v8684
    %8708 = vst.msk [vmem:[%s8699 + $0x40] sm:$0xff] %vm1220, %v8686
    %8709 = vst.msk [vmem:[%s8699 + $0x48] sm:$0xff] %vm1220, %v8688
    %s8710 = scalar_lea.vmem %s8, 2
    %v8711 = vld [vmem:[%s8710] sm:$0x1]
    %s8712 = scalar_lea.vmem %s9, 2
    %v8713 = vld [vmem:[%s8712] sm:$0x1]
    %v8714 = vsel %vm68, %v8645, 0.0
    %8715 = vadd.xlane.f32.xlu0 %v8714
    %v8716 = vpop.xlane.xlu0 %8715
    %v8717 = vsel %vm68, %v8646, 0.0
    %8718 = vadd.xlane.f32.xlu0 %v8717
    %v8719 = vpop.xlane.xlu0 %8718
    %v8720 = vsel %vm68, %v8647, 0.0
    %8721 = vadd.xlane.f32.xlu0 %v8720
    %v8722 = vpop.xlane.xlu0 %8721
    %v8723 = vsel %vm68, %v8648, 0.0
    %8724 = vadd.xlane.f32.xlu0 %v8723
    %v8725 = vpop.xlane.xlu0 %8724
    %v8726 = vmul.f32 %v8716, %v81
    %v8727 = vmul.f32 %v8719, %v81
    %v8728 = vmul.f32 %v8722, %v81
    %v8729 = vmul.f32 %v8725, %v81
    %v8730 = vsub.f32 %v8645, %v8726
    %v8731 = vsub.f32 %v8646, %v8727
    %v8732 = vsub.f32 %v8647, %v8728
    %v8733 = vsub.f32 %v8648, %v8729
    %v8734 = vmul.f32 %v8730, %v8730
    %v8735 = vmul.f32 %v8731, %v8731
    %v8736 = vmul.f32 %v8732, %v8732
    %v8737 = vmul.f32 %v8733, %v8733
    %v8738 = vsel %vm68, %v8734, 0.0
    %8739 = vadd.xlane.f32.xlu0 %v8738
    %v8740 = vpop.xlane.xlu0 %8739
    %v8741 = vsel %vm68, %v8735, 0.0
    %8742 = vadd.xlane.f32.xlu0 %v8741
    %v8743 = vpop.xlane.xlu0 %8742
    %v8744 = vsel %vm68, %v8736, 0.0
    %8745 = vadd.xlane.f32.xlu0 %v8744
    %v8746 = vpop.xlane.xlu0 %8745
    %v8747 = vsel %vm68, %v8737, 0.0
    %8748 = vadd.xlane.f32.xlu0 %v8747
    %v8749 = vpop.xlane.xlu0 %8748
    %v8750 = vmul.f32 %v8740, %v81
    %v8751 = vmul.f32 %v8743, %v81
    %v8752 = vmul.f32 %v8746, %v81
    %v8753 = vmul.f32 %v8749, %v81
    %v8754 = vadd.f32 %v8750, 1e-05
    %v8755 = vadd.f32 %v8751, 1e-05
    %v8756 = vadd.f32 %v8752, 1e-05
    %v8757 = vadd.f32 %v8753, 1e-05
    %v8758 = vrsqrt.pop %v8754
    %v8759 = vrsqrt.pop %v8755
    %v8760 = vrsqrt.pop %v8756
    %v8761 = vrsqrt.pop %v8757
    %v8762 = vmul.f32 %v8730, %v8758
    %v8763 = vmul.f32 %v8731, %v8759
    %v8764 = vmul.f32 %v8732, %v8760
    %v8765 = vmul.f32 %v8733, %v8761
    %v8767 = vlaneseq
    %v8768 = vshrl.u32 %v8767, 7
    %v8769 = vsub.s32 0, %v8768
    %v8770 = vrot.slane %v8711, %v8769
    %v8772 = vmul.f32 %v8762, %v8770
    %v8773 = vmul.f32 %v8763, %v8770
    %v8774 = vmul.f32 %v8764, %v8770
    %v8775 = vmul.f32 %v8765, %v8770
    %v8777 = vlaneseq
    %v8778 = vshrl.u32 %v8777, 7
    %v8779 = vsub.s32 0, %v8778
    %v8780 = vrot.slane %v8713, %v8779
    %v8782 = vadd.f32 %v8772, %v8780
    %v8783 = vadd.f32 %v8773, %v8780
    %v8784 = vadd.f32 %v8774, %v8780
    %v8785 = vadd.f32 %v8775, %v8780
    %v8786 = vpack.c.bf16 %v8783, %v8782
    %v8787 = vpack.c.bf16 %v8785, %v8784
    %s8788 = scalar_lea.vmem %s10, 640
    %v8789 = vld [vmem:[%s8788] sm:$0xff]
    %v8790 = vld [vmem:[%s8788 + $0x8] sm:$0xff]
    %v8791 = vld [vmem:[%s8788 + $0x10] sm:$0xff]
    %v8792 = vld [vmem:[%s8788 + $0x18] sm:$0xff]
    %v8793 = vld [vmem:[%s8788 + $0x20] sm:$0xff]
    %v8794 = vld [vmem:[%s8788 + $0x28] sm:$0xff]
    %v8795 = vld [vmem:[%s8788 + $0x30] sm:$0xff]
    %v8796 = vld [vmem:[%s8788 + $0x38] sm:$0xff]
    %v8797 = vld [vmem:[%s8788 + $0x40] sm:$0xff]
    %v8798 = vld [vmem:[%s8788 + $0x48] sm:$0xff]
    %v8799 = vld [vmem:[%s8788 + $0x50] sm:$0xff]
    %v8800 = vld [vmem:[%s8788 + $0x58] sm:$0xff]
    %v8801 = vld [vmem:[%s8788 + $0x60] sm:$0xff]
    %v8802 = vld [vmem:[%s8788 + $0x68] sm:$0xff]
    %v8803 = vld [vmem:[%s8788 + $0x70] sm:$0xff]
    %v8804 = vld [vmem:[%s8788 + $0x78] sm:$0xff]
    %v8805 = vld [vmem:[%s8788 + $0x80] sm:$0xff]
    %v8806 = vld [vmem:[%s8788 + $0x88] sm:$0xff]
    %v8807 = vld [vmem:[%s8788 + $0x90] sm:$0xff]
    %v8808 = vld [vmem:[%s8788 + $0x98] sm:$0xff]
    %v8809 = vld [vmem:[%s8788 + $0xa0] sm:$0xff]
    %v8810 = vld [vmem:[%s8788 + $0xa8] sm:$0xff]
    %v8811 = vld [vmem:[%s8788 + $0xb0] sm:$0xff]
    %v8812 = vld [vmem:[%s8788 + $0xb8] sm:$0xff]
    %v8813 = vld [vmem:[%s8788 + $0xc0] sm:$0xff]
    %v8814 = vld [vmem:[%s8788 + $0xc8] sm:$0xff]
    %v8815 = vld [vmem:[%s8788 + $0xd0] sm:$0xff]
    %v8816 = vld [vmem:[%s8788 + $0xd8] sm:$0xff]
    %v8817 = vld [vmem:[%s8788 + $0xe0] sm:$0xff]
    %v8818 = vld [vmem:[%s8788 + $0xe8] sm:$0xff]
    %v8819 = vld [vmem:[%s8788 + $0xf0] sm:$0xff]
    %v8820 = vld [vmem:[%s8788 + $0xf8] sm:$0xff]
    %v8821 = vld [vmem:[%s8788 + $0x100] sm:$0xff]
    %v8822 = vld [vmem:[%s8788 + $0x108] sm:$0xff]
    %v8823 = vld [vmem:[%s8788 + $0x110] sm:$0xff]
    %v8824 = vld [vmem:[%s8788 + $0x118] sm:$0xff]
    %v8825 = vld [vmem:[%s8788 + $0x120] sm:$0xff]
    %v8826 = vld [vmem:[%s8788 + $0x128] sm:$0xff]
    %v8827 = vld [vmem:[%s8788 + $0x130] sm:$0xff]
    %v8828 = vld [vmem:[%s8788 + $0x138] sm:$0xff]
    %s8829 = scalar_lea.vmem %s11, 32
    %v8830 = vld [vmem:[%s8829] sm:$0xff]
    %v8831 = vld [vmem:[%s8829 + $0x8] sm:$0xff]
    %v8834 = vlaneseq
    %v8835 = vshrl.u32 %v8834, 7
    %v8836 = vsub.s32 0, %v8835
    %v8837 = vrot.slane %v8830, %v8836
    %v8838 = vlaneseq
    %v8839 = vshrl.u32 %v8838, 7
    %v8840 = vsub.s32 1, %v8839
    %v8841 = vrot.slane %v8830, %v8840
    %v8842 = vlaneseq
    %v8843 = vshrl.u32 %v8842, 7
    %v8844 = vsub.s32 2, %v8843
    %v8845 = vrot.slane %v8830, %v8844
    %v8846 = vlaneseq
    %v8847 = vshrl.u32 %v8846, 7
    %v8848 = vsub.s32 3, %v8847
    %v8849 = vrot.slane %v8830, %v8848
    %v8850 = vlaneseq
    %v8851 = vshrl.u32 %v8850, 7
    %v8852 = vsub.s32 4, %v8851
    %v8853 = vrot.slane %v8830, %v8852
    %v8854 = vlaneseq
    %v8855 = vshrl.u32 %v8854, 7
    %v8856 = vsub.s32 5, %v8855
    %v8857 = vrot.slane %v8830, %v8856
    %v8858 = vlaneseq
    %v8859 = vshrl.u32 %v8858, 7
    %v8860 = vsub.s32 6, %v8859
    %v8861 = vrot.slane %v8830, %v8860
    %v8862 = vlaneseq
    %v8863 = vshrl.u32 %v8862, 7
    %v8864 = vsub.s32 7, %v8863
    %v8865 = vrot.slane %v8830, %v8864
    %v8866 = vlaneseq
    %v8867 = vshrl.u32 %v8866, 7
    %v8868 = vsub.s32 0, %v8867
    %v8869 = vrot.slane %v8831, %v8868
    %v8870 = vlaneseq
    %v8871 = vshrl.u32 %v8870, 7
    %v8872 = vsub.s32 1, %v8871
    %v8873 = vrot.slane %v8831, %v8872
    %v8874 = vlaneseq
    %v8875 = vshrl.u32 %v8874, 7
    %v8876 = vsub.s32 2, %v8875
    %v8877 = vrot.slane %v8831, %v8876
    %v8878 = vlaneseq
    %v8879 = vshrl.u32 %v8878, 7
    %v8880 = vsub.s32 3, %v8879
    %v8881 = vrot.slane %v8831, %v8880
    %v8882 = vlaneseq
    %v8883 = vshrl.u32 %v8882, 7
    %v8884 = vsub.s32 4, %v8883
    %v8885 = vrot.slane %v8831, %v8884
    %v8886 = vlaneseq
    %v8887 = vshrl.u32 %v8886, 7
    %v8888 = vsub.s32 5, %v8887
    %v8889 = vrot.slane %v8831, %v8888
    %v8890 = vlaneseq
    %v8891 = vshrl.u32 %v8890, 7
    %v8892 = vsub.s32 6, %v8891
    %v8893 = vrot.slane %v8831, %v8892
    %v8894 = vlaneseq
    %v8895 = vshrl.u32 %v8894, 7
    %v8896 = vsub.s32 7, %v8895
    %v8897 = vrot.slane %v8831, %v8896
    %v8954 = vunpack.c.l.b16 %v8789
    %v8955 = vunpack.c.h.b16 %v8789
    %v8956 = vunpack.c.l.b16 %v8790
    %v8957 = vunpack.c.h.b16 %v8790
    %v8958 = vunpack.c.l.b16 %v8791
    %v8959 = vunpack.c.h.b16 %v8791
    %v8960 = vunpack.c.l.b16 %v8792
    %v8961 = vunpack.c.h.b16 %v8792
    %v8962 = vunpack.c.l.b16 %v8793
    %v8963 = vunpack.c.h.b16 %v8793
    %v8964 = vunpack.c.l.b16 %v8794
    %v8965 = vunpack.c.h.b16 %v8794
    %v8966 = vunpack.c.l.b16 %v8795
    %v8967 = vunpack.c.h.b16 %v8795
    %v8968 = vunpack.c.l.b16 %v8796
    %v8969 = vunpack.c.h.b16 %v8796
    %v8970 = vunpack.c.l.b16 %v8797
    %v8971 = vunpack.c.h.b16 %v8797
    %v8972 = vunpack.c.l.b16 %v8798
    %v8973 = vunpack.c.h.b16 %v8798
    %v8974 = vunpack.c.l.b16 %v8799
    %v8975 = vunpack.c.h.b16 %v8799
    %v8976 = vunpack.c.l.b16 %v8800
    %v8977 = vunpack.c.h.b16 %v8800
    %v8978 = vunpack.c.l.b16 %v8801
    %v8979 = vunpack.c.h.b16 %v8801
    %v8980 = vunpack.c.l.b16 %v8802
    %v8981 = vunpack.c.h.b16 %v8802
    %v8982 = vunpack.c.l.b16 %v8803
    %v8983 = vunpack.c.h.b16 %v8803
    %v8984 = vunpack.c.l.b16 %v8804
    %v8985 = vunpack.c.h.b16 %v8804
    %v8986 = vunpack.c.l.b16 %v8805
    %v8987 = vunpack.c.h.b16 %v8805
    %v8988 = vunpack.c.l.b16 %v8806
    %v8989 = vunpack.c.h.b16 %v8806
    %v8990 = vunpack.c.l.b16 %v8807
    %v8991 = vunpack.c.h.b16 %v8807
    %v8992 = vunpack.c.l.b16 %v8808
    %v8993 = vunpack.c.h.b16 %v8808
    %v8994 = vunpack.c.l.b16 %v8809
    %v8995 = vunpack.c.h.b16 %v8809
    %v8996 = vunpack.c.l.b16 %v8810
    %v8997 = vunpack.c.h.b16 %v8810
    %v8998 = vunpack.c.l.b16 %v8811
    %v8999 = vunpack.c.h.b16 %v8811
    %v9000 = vunpack.c.l.b16 %v8812
    %v9001 = vunpack.c.h.b16 %v8812
    %v9002 = vunpack.c.l.b16 %v8813
    %v9003 = vunpack.c.h.b16 %v8813
    %v9004 = vunpack.c.l.b16 %v8814
    %v9005 = vunpack.c.h.b16 %v8814
    %v9006 = vunpack.c.l.b16 %v8815
    %v9007 = vunpack.c.h.b16 %v8815
    %v9008 = vunpack.c.l.b16 %v8816
    %v9009 = vunpack.c.h.b16 %v8816
    %v9010 = vunpack.c.l.b16 %v8817
    %v9011 = vunpack.c.h.b16 %v8817
    %v9012 = vunpack.c.l.b16 %v8818
    %v9013 = vunpack.c.h.b16 %v8818
    %v9014 = vunpack.c.l.b16 %v8819
    %v9015 = vunpack.c.h.b16 %v8819
    %v9016 = vunpack.c.l.b16 %v8820
    %v9017 = vunpack.c.h.b16 %v8820
    %v9018 = vunpack.c.l.b16 %v8821
    %v9019 = vunpack.c.h.b16 %v8821
    %v9020 = vunpack.c.l.b16 %v8822
    %v9021 = vunpack.c.h.b16 %v8822
    %v9022 = vunpack.c.l.b16 %v8823
    %v9023 = vunpack.c.h.b16 %v8823
    %v9024 = vunpack.c.l.b16 %v8824
    %v9025 = vunpack.c.h.b16 %v8824
    %v9026 = vunpack.c.l.b16 %v8825
    %v9027 = vunpack.c.h.b16 %v8825
    %v9028 = vunpack.c.l.b16 %v8826
    %v9029 = vunpack.c.h.b16 %v8826
    %v9030 = vunpack.c.l.b16 %v8827
    %v9031 = vunpack.c.h.b16 %v8827
    %v9032 = vunpack.c.l.b16 %v8828
    %v9033 = vunpack.c.h.b16 %v8828
    %v9034 = vpack.c.b16 %v8970, %v8954
    %v9035 = vpack.c.b16 %v8971, %v8955
    %v9036 = vpack.c.b16 %v8972, %v8956
    %v9037 = vpack.c.b16 %v8973, %v8957
    %v9038 = vpack.c.b16 %v8974, %v8958
    %v9039 = vpack.c.b16 %v8975, %v8959
    %v9040 = vpack.c.b16 %v8976, %v8960
    %v9041 = vpack.c.b16 %v8977, %v8961
    %v9042 = vpack.c.b16 %v8978, %v8962
    %v9043 = vpack.c.b16 %v8979, %v8963
    %v9044 = vpack.c.b16 %v8980, %v8964
    %v9045 = vpack.c.b16 %v8981, %v8965
    %v9046 = vpack.c.b16 %v8982, %v8966
    %v9047 = vpack.c.b16 %v8983, %v8967
    %v9048 = vpack.c.b16 %v8984, %v8968
    %v9049 = vpack.c.b16 %v8985, %v8969
    %v9050 = vpack.c.b16 %v9002, %v8986
    %v9051 = vpack.c.b16 %v9003, %v8987
    %v9052 = vpack.c.b16 %v9004, %v8988
    %v9053 = vpack.c.b16 %v9005, %v8989
    %v9054 = vpack.c.b16 %v9006, %v8990
    %v9055 = vpack.c.b16 %v9007, %v8991
    %v9056 = vpack.c.b16 %v9008, %v8992
    %v9057 = vpack.c.b16 %v9009, %v8993
    %v9058 = vpack.c.b16 %v9010, %v8994
    %v9059 = vpack.c.b16 %v9011, %v8995
    %v9060 = vpack.c.b16 %v9012, %v8996
    %v9061 = vpack.c.b16 %v9013, %v8997
    %v9062 = vpack.c.b16 %v9014, %v8998
    %v9063 = vpack.c.b16 %v9015, %v8999
    %v9064 = vpack.c.b16 %v9016, %v9000
    %v9065 = vpack.c.b16 %v9017, %v9001
    %v9066 = vpack.c.b16 %v9018, %v9018
    %v9067 = vpack.c.b16 %v9019, %v9019
    %v9068 = vpack.c.b16 %v9020, %v9020
    %v9069 = vpack.c.b16 %v9021, %v9021
    %v9070 = vpack.c.b16 %v9022, %v9022
    %v9071 = vpack.c.b16 %v9023, %v9023
    %v9072 = vpack.c.b16 %v9024, %v9024
    %v9073 = vpack.c.b16 %v9025, %v9025
    %v9074 = vpack.c.b16 %v9026, %v9026
    %v9075 = vpack.c.b16 %v9027, %v9027
    %v9076 = vpack.c.b16 %v9028, %v9028
    %v9077 = vpack.c.b16 %v9029, %v9029
    %v9078 = vpack.c.b16 %v9030, %v9030
    %v9079 = vpack.c.b16 %v9031, %v9031
    %v9080 = vpack.c.b16 %v9032, %v9032
    %v9081 = vpack.c.b16 %v9033, %v9033
    %v9115 = vsel %vm68, %v8786, 0
    %v9118 = vsel %vm68, %v8787, 0
    %v9121 = vsel %vm177, %v9066, 0
    %v9124 = vsel %vm177, %v9067, 0
    %v9127 = vsel %vm177, %v9068, 0
    %v9130 = vsel %vm177, %v9069, 0
    %v9133 = vsel %vm177, %v9070, 0
    %v9136 = vsel %vm177, %v9071, 0
    %v9139 = vsel %vm177, %v9072, 0
    %v9142 = vsel %vm177, %v9073, 0
    %v9145 = vsel %vm177, %v9074, 0
    %v9148 = vsel %vm177, %v9075, 0
    %v9151 = vsel %vm177, %v9076, 0
    %v9154 = vsel %vm177, %v9077, 0
    %v9157 = vsel %vm177, %v9078, 0
    %v9160 = vsel %vm177, %v9079, 0
    %v9163 = vsel %vm177, %v9080, 0
    %v9166 = vsel %vm177, %v9081, 0
    %9168 = vmatprep.subr.bf16.mxu0 %v9035
    %9169 = vmatpush1.bf16.msra.mxu0 %v9034
    %9170 = vmatprep.subr.bf16.mxu0 %v9051
    %9171 = vmatpush1.bf16.msra.mxu0 %v9050
    %9172 = vmatprep.subr.bf16.mxu0 %v9124
    %9173 = vmatpush1.bf16.msra.mxu0 %v9121
    %9174 = vmatprep.subr.bf16.mxu0 0
    %9175 = vmatpush1.bf16.msra.mxu0 0
    %9176 = vmatprep.subr.bf16.mxu0 0
    %9177 = vmatpush1.bf16.msra.mxu0 0
    %9178 = vmatprep.subr.bf16.mxu0 0
    %9179 = vmatpush1.bf16.msra.mxu0 0
    %9180 = vmatprep.subr.bf16.mxu0 0
    %9181 = vmatpush1.bf16.msra.mxu0 0
    %9182 = vmatprep.subr.bf16.mxu0 0
    %9183 = vmatpush1.bf16.msra.mxu0 0
    %9184 = vmatprep.subr.bf16.mxu0 0
    %9185 = vmatpush1.bf16.msra.mxu0 0
    %9186 = vmatprep.subr.bf16.mxu0 0
    %9187 = vmatpush1.bf16.msra.mxu0 0
    %9188 = vmatprep.subr.bf16.mxu0 0
    %9189 = vmatpush1.bf16.msra.mxu0 0
    %9190 = vmatprep.subr.bf16.mxu0 0
    %9191 = vmatpush1.bf16.msra.mxu0 0
    %9192 = vmatprep.subr.bf16.mxu0 0
    %9193 = vmatpush1.bf16.msra.mxu0 0
    %9194 = vmatprep.subr.bf16.mxu0 0
    %9195 = vmatpush1.bf16.msra.mxu0 0
    %9196 = vmatprep.subr.bf16.mxu0 0
    %9197 = vmatpush1.bf16.msra.mxu0 0
    %9198 = vmatprep.subr.bf16.mxu0 0
    %9199 = vmatpush1.bf16.msra.mxu0 0
    %9200 = vmatprep.mubr.bf16.mxu0 0
    %9201 = vmatmul.mubr.bf16.gmra.mrb[0].mxu0 %v9115
    %v9202 = vpop.f32.mrb[0].mxu0
    %v9203 = vadd.f32 %v8837, %v9202
    %v9204 = vpop.f32.mrb[0].mxu0
    %v9205 = vadd.f32 %v8841, %v9204
    %v9206 = vpop.f32.mrb[0].mxu0
    %v9207 = vadd.f32 %v8837, %v9206
    %v9208 = vpop.f32.mrb[0].mxu0
    %v9209 = vadd.f32 %v8841, %v9208
    %9210 = vmatprep.mubr.bf16.mxu0 0
    %9211 = vmatmul.mubr.bf16.gmra.mrb[0].mxu0 %v9118
    %v9212 = vpop.f32.mrb[0].mxu0
    %v9213 = vadd.f32 %v8837, %v9212
    %v9214 = vpop.f32.mrb[0].mxu0
    %v9215 = vadd.f32 %v8841, %v9214
    %v9216 = vpop.f32.mrb[0].mxu0
    %v9217 = vadd.f32 %v8837, %v9216
    %v9218 = vpop.f32.mrb[0].mxu0
    %v9219 = vadd.f32 %v8841, %v9218
    %9220 = vdwg.mxu0
    %9221 = vmatprep.subr.bf16.mxu0 %v9037
    %9222 = vmatpush1.bf16.msra.mxu0 %v9036
    %9223 = vmatprep.subr.bf16.mxu0 %v9053
    %9224 = vmatpush1.bf16.msra.mxu0 %v9052
    %9225 = vmatprep.subr.bf16.mxu0 %v9130
    %9226 = vmatpush1.bf16.msra.mxu0 %v9127
    %9227 = vmatprep.subr.bf16.mxu0 0
    %9228 = vmatpush1.bf16.msra.mxu0 0
    %9229 = vmatprep.subr.bf16.mxu0 0
    %9230 = vmatpush1.bf16.msra.mxu0 0
    %9231 = vmatprep.subr.bf16.mxu0 0
    %9232 = vmatpush1.bf16.msra.mxu0 0
    %9233 = vmatprep.subr.bf16.mxu0 0
    %9234 = vmatpush1.bf16.msra.mxu0 0
    %9235 = vmatprep.subr.bf16.mxu0 0
    %9236 = vmatpush1.bf16.msra.mxu0 0
    %9237 = vmatprep.subr.bf16.mxu0 0
    %9238 = vmatpush1.bf16.msra.mxu0 0
    %9239 = vmatprep.subr.bf16.mxu0 0
    %9240 = vmatpush1.bf16.msra.mxu0 0
    %9241 = vmatprep.subr.bf16.mxu0 0
    %9242 = vmatpush1.bf16.msra.mxu0 0
    %9243 = vmatprep.subr.bf16.mxu0 0
    %9244 = vmatpush1.bf16.msra.mxu0 0
    %9245 = vmatprep.subr.bf16.mxu0 0
    %9246 = vmatpush1.bf16.msra.mxu0 0
    %9247 = vmatprep.subr.bf16.mxu0 0
    %9248 = vmatpush1.bf16.msra.mxu0 0
    %9249 = vmatprep.subr.bf16.mxu0 0
    %9250 = vmatpush1.bf16.msra.mxu0 0
    %9251 = vmatprep.subr.bf16.mxu0 0
    %9252 = vmatpush1.bf16.msra.mxu0 0
    %9253 = vmatprep.mubr.bf16.mxu0 0
    %9254 = vmatmul.mubr.bf16.gmra.mrb[0].mxu0 %v9115
    %v9255 = vpop.f32.mrb[0].mxu0
    %v9256 = vadd.f32 %v8845, %v9255
    %v9257 = vpop.f32.mrb[0].mxu0
    %v9258 = vadd.f32 %v8849, %v9257
    %v9259 = vpop.f32.mrb[0].mxu0
    %v9260 = vadd.f32 %v8845, %v9259
    %v9261 = vpop.f32.mrb[0].mxu0
    %v9262 = vadd.f32 %v8849, %v9261
    %9263 = vmatprep.mubr.bf16.mxu0 0
    %9264 = vmatmul.mubr.bf16.gmra.mrb[0].mxu0 %v9118
    %v9265 = vpop.f32.mrb[0].mxu0
    %v9266 = vadd.f32 %v8845, %v9265
    %v9267 = vpop.f32.mrb[0].mxu0
    %v9268 = vadd.f32 %v8849, %v9267
    %v9269 = vpop.f32.mrb[0].mxu0
    %v9270 = vadd.f32 %v8845, %v9269
    %v9271 = vpop.f32.mrb[0].mxu0
    %v9272 = vadd.f32 %v8849, %v9271
    %9273 = vdwg.mxu0
    %9274 = vmatprep.subr.bf16.mxu0 %v9039
    %9275 = vmatpush1.bf16.msra.mxu0 %v9038
    %9276 = vmatprep.subr.bf16.mxu0 %v9055
    %9277 = vmatpush1.bf16.msra.mxu0 %v9054
    %9278 = vmatprep.subr.bf16.mxu0 %v9136
    %9279 = vmatpush1.bf16.msra.mxu0 %v9133
    %9280 = vmatprep.subr.bf16.mxu0 0
    %9281 = vmatpush1.bf16.msra.mxu0 0
    %9282 = vmatprep.subr.bf16.mxu0 0
    %9283 = vmatpush1.bf16.msra.mxu0 0
    %9284 = vmatprep.subr.bf16.mxu0 0
    %9285 = vmatpush1.bf16.msra.mxu0 0
    %9286 = vmatprep.subr.bf16.mxu0 0
    %9287 = vmatpush1.bf16.msra.mxu0 0
    %9288 = vmatprep.subr.bf16.mxu0 0
    %9289 = vmatpush1.bf16.msra.mxu0 0
    %9290 = vmatprep.subr.bf16.mxu0 0
    %9291 = vmatpush1.bf16.msra.mxu0 0
    %9292 = vmatprep.subr.bf16.mxu0 0
    %9293 = vmatpush1.bf16.msra.mxu0 0
    %9294 = vmatprep.subr.bf16.mxu0 0
    %9295 = vmatpush1.bf16.msra.mxu0 0
    %9296 = vmatprep.subr.bf16.mxu0 0
    %9297 = vmatpush1.bf16.msra.mxu0 0
    %9298 = vmatprep.subr.bf16.mxu0 0
    %9299 = vmatpush1.bf16.msra.mxu0 0
    %9300 = vmatprep.subr.bf16.mxu0 0
    %9301 = vmatpush1.bf16.msra.mxu0 0
    %9302 = vmatprep.subr.bf16.mxu0 0
    %9303 = vmatpush1.bf16.msra.mxu0 0
    %9304 = vmatprep.subr.bf16.mxu0 0
    %9305 = vmatpush1.bf16.msra.mxu0 0
    %9306 = vmatprep.mubr.bf16.mxu0 0
    %9307 = vmatmul.mubr.bf16.gmra.mrb[0].mxu0 %v9115
    %v9308 = vpop.f32.mrb[0].mxu0
    %v9309 = vadd.f32 %v8853, %v9308
    %v9310 = vpop.f32.mrb[0].mxu0
    %v9311 = vadd.f32 %v8857, %v9310
    %v9312 = vpop.f32.mrb[0].mxu0
    %v9313 = vadd.f32 %v8853, %v9312
    %v9314 = vpop.f32.mrb[0].mxu0
    %v9315 = vadd.f32 %v8857, %v9314
    %9316 = vmatprep.mubr.bf16.mxu0 0
    %9317 = vmatmul.mubr.bf16.gmra.mrb[0].mxu0 %v9118
    %v9318 = vpop.f32.mrb[0].mxu0
    %v9319 = vadd.f32 %v8853, %v9318
    %v9320 = vpop.f32.mrb[0].mxu0
    %v9321 = vadd.f32 %v8857, %v9320
    %v9322 = vpop.f32.mrb[0].mxu0
    %v9323 = vadd.f32 %v8853, %v9322
    %v9324 = vpop.f32.mrb[0].mxu0
    %v9325 = vadd.f32 %v8857, %v9324
    %9326 = vdwg.mxu0
    %9327 = vmatprep.subr.bf16.mxu0 %v9041
    %9328 = vmatpush1.bf16.msra.mxu0 %v9040
    %9329 = vmatprep.subr.bf16.mxu0 %v9057
    %9330 = vmatpush1.bf16.msra.mxu0 %v9056
    %9331 = vmatprep.subr.bf16.mxu0 %v9142
    %9332 = vmatpush1.bf16.msra.mxu0 %v9139
    %9333 = vmatprep.subr.bf16.mxu0 0
    %9334 = vmatpush1.bf16.msra.mxu0 0
    %9335 = vmatprep.subr.bf16.mxu0 0
    %9336 = vmatpush1.bf16.msra.mxu0 0
    %9337 = vmatprep.subr.bf16.mxu0 0
    %9338 = vmatpush1.bf16.msra.mxu0 0
    %9339 = vmatprep.subr.bf16.mxu0 0
    %9340 = vmatpush1.bf16.msra.mxu0 0
    %9341 = vmatprep.subr.bf16.mxu0 0
    %9342 = vmatpush1.bf16.msra.mxu0 0
    %9343 = vmatprep.subr.bf16.mxu0 0
    %9344 = vmatpush1.bf16.msra.mxu0 0
    %9345 = vmatprep.subr.bf16.mxu0 0
    %9346 = vmatpush1.bf16.msra.mxu0 0
    %9347 = vmatprep.subr.bf16.mxu0 0
    %9348 = vmatpush1.bf16.msra.mxu0 0
    %9349 = vmatprep.subr.bf16.mxu0 0
    %9350 = vmatpush1.bf16.msra.mxu0 0
    %9351 = vmatprep.subr.bf16.mxu0 0
    %9352 = vmatpush1.bf16.msra.mxu0 0
    %9353 = vmatprep.subr.bf16.mxu0 0
    %9354 = vmatpush1.bf16.msra.mxu0 0
    %9355 = vmatprep.subr.bf16.mxu0 0
    %9356 = vmatpush1.bf16.msra.mxu0 0
    %9357 = vmatprep.subr.bf16.mxu0 0
    %9358 = vmatpush1.bf16.msra.mxu0 0
    %9359 = vmatprep.mubr.bf16.mxu0 0
    %9360 = vmatmul.mubr.bf16.gmra.mrb[0].mxu0 %v9115
    %v9361 = vpop.f32.mrb[0].mxu0
    %v9362 = vadd.f32 %v8861, %v9361
    %v9363 = vpop.f32.mrb[0].mxu0
    %v9364 = vadd.f32 %v8865, %v9363
    %v9365 = vpop.f32.mrb[0].mxu0
    %v9366 = vadd.f32 %v8861, %v9365
    %v9367 = vpop.f32.mrb[0].mxu0
    %v9368 = vadd.f32 %v8865, %v9367
    %9369 = vmatprep.mubr.bf16.mxu0 0
    %9370 = vmatmul.mubr.bf16.gmra.mrb[0].mxu0 %v9118
    %v9371 = vpop.f32.mrb[0].mxu0
    %v9372 = vadd.f32 %v8861, %v9371
    %v9373 = vpop.f32.mrb[0].mxu0
    %v9374 = vadd.f32 %v8865, %v9373
    %v9375 = vpop.f32.mrb[0].mxu0
    %v9376 = vadd.f32 %v8861, %v9375
    %v9377 = vpop.f32.mrb[0].mxu0
    %v9378 = vadd.f32 %v8865, %v9377
    %9379 = vdwg.mxu0
    %9380 = vmatprep.subr.bf16.mxu0 %v9043
    %9381 = vmatpush1.bf16.msra.mxu0 %v9042
    %9382 = vmatprep.subr.bf16.mxu0 %v9059
    %9383 = vmatpush1.bf16.msra.mxu0 %v9058
    %9384 = vmatprep.subr.bf16.mxu0 %v9148
    %9385 = vmatpush1.bf16.msra.mxu0 %v9145
    %9386 = vmatprep.subr.bf16.mxu0 0
    %9387 = vmatpush1.bf16.msra.mxu0 0
    %9388 = vmatprep.subr.bf16.mxu0 0
    %9389 = vmatpush1.bf16.msra.mxu0 0
    %9390 = vmatprep.subr.bf16.mxu0 0
    %9391 = vmatpush1.bf16.msra.mxu0 0
    %9392 = vmatprep.subr.bf16.mxu0 0
    %9393 = vmatpush1.bf16.msra.mxu0 0
    %9394 = vmatprep.subr.bf16.mxu0 0
    %9395 = vmatpush1.bf16.msra.mxu0 0
    %9396 = vmatprep.subr.bf16.mxu0 0
    %9397 = vmatpush1.bf16.msra.mxu0 0
    %9398 = vmatprep.subr.bf16.mxu0 0
    %9399 = vmatpush1.bf16.msra.mxu0 0
    %9400 = vmatprep.subr.bf16.mxu0 0
    %9401 = vmatpush1.bf16.msra.mxu0 0
    %9402 = vmatprep.subr.bf16.mxu0 0
    %9403 = vmatpush1.bf16.msra.mxu0 0
    %9404 = vmatprep.subr.bf16.mxu0 0
    %9405 = vmatpush1.bf16.msra.mxu0 0
    %9406 = vmatprep.subr.bf16.mxu0 0
    %9407 = vmatpush1.bf16.msra.mxu0 0
    %9408 = vmatprep.subr.bf16.mxu0 0
    %9409 = vmatpush1.bf16.msra.mxu0 0
    %9410 = vmatprep.subr.bf16.mxu0 0
    %9411 = vmatpush1.bf16.msra.mxu0 0
    %9412 = vmatprep.mubr.bf16.mxu0 0
    %9413 = vmatmul.mubr.bf16.gmra.mrb[0].mxu0 %v9115
    %v9414 = vpop.f32.mrb[0].mxu0
    %v9415 = vadd.f32 %v8869, %v9414
    %v9416 = vpop.f32.mrb[0].mxu0
    %v9417 = vadd.f32 %v8873, %v9416
    %v9418 = vpop.f32.mrb[0].mxu0
    %v9419 = vadd.f32 %v8869, %v9418
    %v9420 = vpop.f32.mrb[0].mxu0
    %v9421 = vadd.f32 %v8873, %v9420
    %9422 = vmatprep.mubr.bf16.mxu0 0
    %9423 = vmatmul.mubr.bf16.gmra.mrb[0].mxu0 %v9118
    %v9424 = vpop.f32.mrb[0].mxu0
    %v9425 = vadd.f32 %v8869, %v9424
    %v9426 = vpop.f32.mrb[0].mxu0
    %v9427 = vadd.f32 %v8873, %v9426
    %v9428 = vpop.f32.mrb[0].mxu0
    %v9429 = vadd.f32 %v8869, %v9428
    %v9430 = vpop.f32.mrb[0].mxu0
    %v9431 = vadd.f32 %v8873, %v9430
    %9432 = vdwg.mxu0
    %9433 = vmatprep.subr.bf16.mxu0 %v9045
    %9434 = vmatpush1.bf16.msra.mxu0 %v9044
    %9435 = vmatprep.subr.bf16.mxu0 %v9061
    %9436 = vmatpush1.bf16.msra.mxu0 %v9060
    %9437 = vmatprep.subr.bf16.mxu0 %v9154
    %9438 = vmatpush1.bf16.msra.mxu0 %v9151
    %9439 = vmatprep.subr.bf16.mxu0 0
    %9440 = vmatpush1.bf16.msra.mxu0 0
    %9441 = vmatprep.subr.bf16.mxu0 0
    %9442 = vmatpush1.bf16.msra.mxu0 0
    %9443 = vmatprep.subr.bf16.mxu0 0
    %9444 = vmatpush1.bf16.msra.mxu0 0
    %9445 = vmatprep.subr.bf16.mxu0 0
    %9446 = vmatpush1.bf16.msra.mxu0 0
    %9447 = vmatprep.subr.bf16.mxu0 0
    %9448 = vmatpush1.bf16.msra.mxu0 0
    %9449 = vmatprep.subr.bf16.mxu0 0
    %9450 = vmatpush1.bf16.msra.mxu0 0
    %9451 = vmatprep.subr.bf16.mxu0 0
    %9452 = vmatpush1.bf16.msra.mxu0 0
    %9453 = vmatprep.subr.bf16.mxu0 0
    %9454 = vmatpush1.bf16.msra.mxu0 0
    %9455 = vmatprep.subr.bf16.mxu0 0
    %9456 = vmatpush1.bf16.msra.mxu0 0
    %9457 = vmatprep.subr.bf16.mxu0 0
    %9458 = vmatpush1.bf16.msra.mxu0 0
    %9459 = vmatprep.subr.bf16.mxu0 0
    %9460 = vmatpush1.bf16.msra.mxu0 0
    %9461 = vmatprep.subr.bf16.mxu0 0
    %9462 = vmatpush1.bf16.msra.mxu0 0
    %9463 = vmatprep.subr.bf16.mxu0 0
    %9464 = vmatpush1.bf16.msra.mxu0 0
    %9465 = vmatprep.mubr.bf16.mxu0 0
    %9466 = vmatmul.mubr.bf16.gmra.mrb[0].mxu0 %v9115
    %v9467 = vpop.f32.mrb[0].mxu0
    %v9468 = vadd.f32 %v8877, %v9467
    %v9469 = vpop.f32.mrb[0].mxu0
    %v9470 = vadd.f32 %v8881, %v9469
    %v9471 = vpop.f32.mrb[0].mxu0
    %v9472 = vadd.f32 %v8877, %v9471
    %v9473 = vpop.f32.mrb[0].mxu0
    %v9474 = vadd.f32 %v8881, %v9473
    %9475 = vmatprep.mubr.bf16.mxu0 0
    %9476 = vmatmul.mubr.bf16.gmra.mrb[0].mxu0 %v9118
    %v9477 = vpop.f32.mrb[0].mxu0
    %v9478 = vadd.f32 %v8877, %v9477
    %v9479 = vpop.f32.mrb[0].mxu0
    %v9480 = vadd.f32 %v8881, %v9479
    %v9481 = vpop.f32.mrb[0].mxu0
    %v9482 = vadd.f32 %v8877, %v9481
    %v9483 = vpop.f32.mrb[0].mxu0
    %v9484 = vadd.f32 %v8881, %v9483
    %9485 = vdwg.mxu0
    %9486 = vmatprep.subr.bf16.mxu0 %v9047
    %9487 = vmatpush1.bf16.msra.mxu0 %v9046
    %9488 = vmatprep.subr.bf16.mxu0 %v9063
    %9489 = vmatpush1.bf16.msra.mxu0 %v9062
    %9490 = vmatprep.subr.bf16.mxu0 %v9160
    %9491 = vmatpush1.bf16.msra.mxu0 %v9157
    %9492 = vmatprep.subr.bf16.mxu0 0
    %9493 = vmatpush1.bf16.msra.mxu0 0
    %9494 = vmatprep.subr.bf16.mxu0 0
    %9495 = vmatpush1.bf16.msra.mxu0 0
    %9496 = vmatprep.subr.bf16.mxu0 0
    %9497 = vmatpush1.bf16.msra.mxu0 0
    %9498 = vmatprep.subr.bf16.mxu0 0
    %9499 = vmatpush1.bf16.msra.mxu0 0
    %9500 = vmatprep.subr.bf16.mxu0 0
    %9501 = vmatpush1.bf16.msra.mxu0 0
    %9502 = vmatprep.subr.bf16.mxu0 0
    %9503 = vmatpush1.bf16.msra.mxu0 0
    %9504 = vmatprep.subr.bf16.mxu0 0
    %9505 = vmatpush1.bf16.msra.mxu0 0
    %9506 = vmatprep.subr.bf16.mxu0 0
    %9507 = vmatpush1.bf16.msra.mxu0 0
    %9508 = vmatprep.subr.bf16.mxu0 0
    %9509 = vmatpush1.bf16.msra.mxu0 0
    %9510 = vmatprep.subr.bf16.mxu0 0
    %9511 = vmatpush1.bf16.msra.mxu0 0
    %9512 = vmatprep.subr.bf16.mxu0 0
    %9513 = vmatpush1.bf16.msra.mxu0 0
    %9514 = vmatprep.subr.bf16.mxu0 0
    %9515 = vmatpush1.bf16.msra.mxu0 0
    %9516 = vmatprep.subr.bf16.mxu0 0
    %9517 = vmatpush1.bf16.msra.mxu0 0
    %9518 = vmatprep.mubr.bf16.mxu0 0
    %9519 = vmatmul.mubr.bf16.gmra.mrb[0].mxu0 %v9115
    %v9520 = vpop.f32.mrb[0].mxu0
    %v9521 = vadd.f32 %v8885, %v9520
    %v9522 = vpop.f32.mrb[0].mxu0
    %v9523 = vadd.f32 %v8889, %v9522
    %v9524 = vpop.f32.mrb[0].mxu0
    %v9525 = vadd.f32 %v8885, %v9524
    %v9526 = vpop.f32.mrb[0].mxu0
    %v9527 = vadd.f32 %v8889, %v9526
    %9528 = vmatprep.mubr.bf16.mxu0 0
    %9529 = vmatmul.mubr.bf16.gmra.mrb[0].mxu0 %v9118
    %v9530 = vpop.f32.mrb[0].mxu0
    %v9531 = vadd.f32 %v8885, %v9530
    %v9532 = vpop.f32.mrb[0].mxu0
    %v9533 = vadd.f32 %v8889, %v9532
    %v9534 = vpop.f32.mrb[0].mxu0
    %v9535 = vadd.f32 %v8885, %v9534
    %v9536 = vpop.f32.mrb[0].mxu0
    %v9537 = vadd.f32 %v8889, %v9536
    %9538 = vdwg.mxu0
    %9539 = vmatprep.subr.bf16.mxu0 %v9049
    %9540 = vmatpush1.bf16.msra.mxu0 %v9048
    %9541 = vmatprep.subr.bf16.mxu0 %v9065
    %9542 = vmatpush1.bf16.msra.mxu0 %v9064
    %9543 = vmatprep.subr.bf16.mxu0 %v9166
    %9544 = vmatpush1.bf16.msra.mxu0 %v9163
    %9545 = vmatprep.subr.bf16.mxu0 0
    %9546 = vmatpush1.bf16.msra.mxu0 0
    %9547 = vmatprep.subr.bf16.mxu0 0
    %9548 = vmatpush1.bf16.msra.mxu0 0
    %9549 = vmatprep.subr.bf16.mxu0 0
    %9550 = vmatpush1.bf16.msra.mxu0 0
    %9551 = vmatprep.subr.bf16.mxu0 0
    %9552 = vmatpush1.bf16.msra.mxu0 0
    %9553 = vmatprep.subr.bf16.mxu0 0
    %9554 = vmatpush1.bf16.msra.mxu0 0
    %9555 = vmatprep.subr.bf16.mxu0 0
    %9556 = vmatpush1.bf16.msra.mxu0 0
    %9557 = vmatprep.subr.bf16.mxu0 0
    %9558 = vmatpush1.bf16.msra.mxu0 0
    %9559 = vmatprep.subr.bf16.mxu0 0
    %9560 = vmatpush1.bf16.msra.mxu0 0
    %9561 = vmatprep.subr.bf16.mxu0 0
    %9562 = vmatpush1.bf16.msra.mxu0 0
    %9563 = vmatprep.subr.bf16.mxu0 0
    %9564 = vmatpush1.bf16.msra.mxu0 0
    %9565 = vmatprep.subr.bf16.mxu0 0
    %9566 = vmatpush1.bf16.msra.mxu0 0
    %9567 = vmatprep.subr.bf16.mxu0 0
    %9568 = vmatpush1.bf16.msra.mxu0 0
    %9569 = vmatprep.subr.bf16.mxu0 0
    %9570 = vmatpush1.bf16.msra.mxu0 0
    %9571 = vmatprep.mubr.bf16.mxu0 0
    %9572 = vmatmul.mubr.bf16.gmra.mrb[0].mxu0 %v9115
    %v9573 = vpop.f32.mrb[0].mxu0
    %v9574 = vadd.f32 %v8893, %v9573
    %v9575 = vpop.f32.mrb[0].mxu0
    %v9576 = vadd.f32 %v8897, %v9575
    %v9577 = vpop.f32.mrb[0].mxu0
    %v9578 = vadd.f32 %v8893, %v9577
    %v9579 = vpop.f32.mrb[0].mxu0
    %v9580 = vadd.f32 %v8897, %v9579
    %9581 = vmatprep.mubr.bf16.mxu0 0
    %9582 = vmatmul.mubr.bf16.gmra.mrb[0].mxu0 %v9118
    %v9583 = vpop.f32.mrb[0].mxu0
    %v9584 = vadd.f32 %v8893, %v9583
    %v9585 = vpop.f32.mrb[0].mxu0
    %v9586 = vadd.f32 %v8897, %v9585
    %v9587 = vpop.f32.mrb[0].mxu0
    %v9588 = vadd.f32 %v8893, %v9587
    %v9589 = vpop.f32.mrb[0].mxu0
    %v9590 = vadd.f32 %v8897, %v9589
    %9591 = vdwg.mxu0
    %v9592 = vmax.f32 %v9203, 0.0
    %v9593 = vmax.f32 %v9205, 0.0
    %v9594 = vmax.f32 %v9256, 0.0
    %v9595 = vmax.f32 %v9258, 0.0
    %v9596 = vmax.f32 %v9309, 0.0
    %v9597 = vmax.f32 %v9311, 0.0
    %v9598 = vmax.f32 %v9362, 0.0
    %v9599 = vmax.f32 %v9364, 0.0
    %v9600 = vmax.f32 %v9415, 0.0
    %v9601 = vmax.f32 %v9417, 0.0
    %v9602 = vmax.f32 %v9468, 0.0
    %v9603 = vmax.f32 %v9470, 0.0
    %v9604 = vmax.f32 %v9521, 0.0
    %v9605 = vmax.f32 %v9523, 0.0
    %v9606 = vmax.f32 %v9574, 0.0
    %v9607 = vmax.f32 %v9576, 0.0
    %v9608 = vmax.f32 %v9207, 0.0
    %v9609 = vmax.f32 %v9209, 0.0
    %v9610 = vmax.f32 %v9260, 0.0
    %v9611 = vmax.f32 %v9262, 0.0
    %v9612 = vmax.f32 %v9313, 0.0
    %v9613 = vmax.f32 %v9315, 0.0
    %v9614 = vmax.f32 %v9366, 0.0
    %v9615 = vmax.f32 %v9368, 0.0
    %v9616 = vmax.f32 %v9419, 0.0
    %v9617 = vmax.f32 %v9421, 0.0
    %v9618 = vmax.f32 %v9472, 0.0
    %v9619 = vmax.f32 %v9474, 0.0
    %v9620 = vmax.f32 %v9525, 0.0
    %v9621 = vmax.f32 %v9527, 0.0
    %v9622 = vmax.f32 %v9578, 0.0
    %v9623 = vmax.f32 %v9580, 0.0
    %v9624 = vmax.f32 %v9213, 0.0
    %v9625 = vmax.f32 %v9215, 0.0
    %v9626 = vmax.f32 %v9266, 0.0
    %v9627 = vmax.f32 %v9268, 0.0
    %v9628 = vmax.f32 %v9319, 0.0
    %v9629 = vmax.f32 %v9321, 0.0
    %v9630 = vmax.f32 %v9372, 0.0
    %v9631 = vmax.f32 %v9374, 0.0
    %v9632 = vmax.f32 %v9425, 0.0
    %v9633 = vmax.f32 %v9427, 0.0
    %v9634 = vmax.f32 %v9478, 0.0
    %v9635 = vmax.f32 %v9480, 0.0
    %v9636 = vmax.f32 %v9531, 0.0
    %v9637 = vmax.f32 %v9533, 0.0
    %v9638 = vmax.f32 %v9584, 0.0
    %v9639 = vmax.f32 %v9586, 0.0
    %v9640 = vmax.f32 %v9217, 0.0
    %v9641 = vmax.f32 %v9219, 0.0
    %v9642 = vmax.f32 %v9270, 0.0
    %v9643 = vmax.f32 %v9272, 0.0
    %v9644 = vmax.f32 %v9323, 0.0
    %v9645 = vmax.f32 %v9325, 0.0
    %v9646 = vmax.f32 %v9376, 0.0
    %v9647 = vmax.f32 %v9378, 0.0
    %v9648 = vmax.f32 %v9429, 0.0
    %v9649 = vmax.f32 %v9431, 0.0
    %v9650 = vmax.f32 %v9482, 0.0
    %v9651 = vmax.f32 %v9484, 0.0
    %v9652 = vmax.f32 %v9535, 0.0
    %v9653 = vmax.f32 %v9537, 0.0
    %v9654 = vmax.f32 %v9588, 0.0
    %v9655 = vmax.f32 %v9590, 0.0
    %v9656 = vpack.c.bf16 %v9608, %v9592
    %v9657 = vpack.c.bf16 %v9609, %v9593
    %v9658 = vpack.c.bf16 %v9610, %v9594
    %v9659 = vpack.c.bf16 %v9611, %v9595
    %v9660 = vpack.c.bf16 %v9612, %v9596
    %v9661 = vpack.c.bf16 %v9613, %v9597
    %v9662 = vpack.c.bf16 %v9614, %v9598
    %v9663 = vpack.c.bf16 %v9615, %v9599
    %v9664 = vpack.c.bf16 %v9616, %v9600
    %v9665 = vpack.c.bf16 %v9617, %v9601
    %v9666 = vpack.c.bf16 %v9618, %v9602
    %v9667 = vpack.c.bf16 %v9619, %v9603
    %v9668 = vpack.c.bf16 %v9620, %v9604
    %v9669 = vpack.c.bf16 %v9621, %v9605
    %v9670 = vpack.c.bf16 %v9622, %v9606
    %v9671 = vpack.c.bf16 %v9623, %v9607
    %v9672 = vpack.c.bf16 %v9640, %v9624
    %v9673 = vpack.c.bf16 %v9641, %v9625
    %v9674 = vpack.c.bf16 %v9642, %v9626
    %v9675 = vpack.c.bf16 %v9643, %v9627
    %v9676 = vpack.c.bf16 %v9644, %v9628
    %v9677 = vpack.c.bf16 %v9645, %v9629
    %v9678 = vpack.c.bf16 %v9646, %v9630
    %v9679 = vpack.c.bf16 %v9647, %v9631
    %v9680 = vpack.c.bf16 %v9648, %v9632
    %v9681 = vpack.c.bf16 %v9649, %v9633
    %v9682 = vpack.c.bf16 %v9650, %v9634
    %v9683 = vpack.c.bf16 %v9651, %v9635
    %v9684 = vpack.c.bf16 %v9652, %v9636
    %v9685 = vpack.c.bf16 %v9653, %v9637
    %v9686 = vpack.c.bf16 %v9654, %v9638
    %v9687 = vpack.c.bf16 %v9655, %v9639
    %s9688 = scalar_lea.vmem %s12, 2048
    %v9689 = vld [vmem:[%s9688] sm:$0xf]
    %v9690 = vld [vmem:[%s9688 + $0x4] sm:$0xf]
    %v9691 = vld [vmem:[%s9688 + $0x8] sm:$0xf]
    %v9692 = vld [vmem:[%s9688 + $0xc] sm:$0xf]
    %v9693 = vld [vmem:[%s9688 + $0x10] sm:$0xf]
    %v9694 = vld [vmem:[%s9688 + $0x14] sm:$0xf]
    %v9695 = vld [vmem:[%s9688 + $0x18] sm:$0xf]
    %v9696 = vld [vmem:[%s9688 + $0x1c] sm:$0xf]
    %v9697 = vld [vmem:[%s9688 + $0x20] sm:$0xf]
    %v9698 = vld [vmem:[%s9688 + $0x24] sm:$0xf]
    %v9699 = vld [vmem:[%s9688 + $0x28] sm:$0xf]
    %v9700 = vld [vmem:[%s9688 + $0x2c] sm:$0xf]
    %v9701 = vld [vmem:[%s9688 + $0x30] sm:$0xf]
    %v9702 = vld [vmem:[%s9688 + $0x34] sm:$0xf]
    %v9703 = vld [vmem:[%s9688 + $0x38] sm:$0xf]
    %v9704 = vld [vmem:[%s9688 + $0x3c] sm:$0xf]
    %v9705 = vld [vmem:[%s9688 + $0x40] sm:$0xf]
    %v9706 = vld [vmem:[%s9688 + $0x44] sm:$0xf]
    %v9707 = vld [vmem:[%s9688 + $0x48] sm:$0xf]
    %v9708 = vld [vmem:[%s9688 + $0x4c] sm:$0xf]
    %v9709 = vld [vmem:[%s9688 + $0x50] sm:$0xf]
    %v9710 = vld [vmem:[%s9688 + $0x54] sm:$0xf]
    %v9711 = vld [vmem:[%s9688 + $0x58] sm:$0xf]
    %v9712 = vld [vmem:[%s9688 + $0x5c] sm:$0xf]
    %v9713 = vld [vmem:[%s9688 + $0x60] sm:$0xf]
    %v9714 = vld [vmem:[%s9688 + $0x64] sm:$0xf]
    %v9715 = vld [vmem:[%s9688 + $0x68] sm:$0xf]
    %v9716 = vld [vmem:[%s9688 + $0x6c] sm:$0xf]
    %v9717 = vld [vmem:[%s9688 + $0x70] sm:$0xf]
    %v9718 = vld [vmem:[%s9688 + $0x74] sm:$0xf]
    %v9719 = vld [vmem:[%s9688 + $0x78] sm:$0xf]
    %v9720 = vld [vmem:[%s9688 + $0x7c] sm:$0xf]
    %v9721 = vld [vmem:[%s9688 + $0x80] sm:$0xf]
    %v9722 = vld [vmem:[%s9688 + $0x84] sm:$0xf]
    %v9723 = vld [vmem:[%s9688 + $0x88] sm:$0xf]
    %v9724 = vld [vmem:[%s9688 + $0x8c] sm:$0xf]
    %v9725 = vld [vmem:[%s9688 + $0x90] sm:$0xf]
    %v9726 = vld [vmem:[%s9688 + $0x94] sm:$0xf]
    %v9727 = vld [vmem:[%s9688 + $0x98] sm:$0xf]
    %v9728 = vld [vmem:[%s9688 + $0x9c] sm:$0xf]
    %v9729 = vld [vmem:[%s9688 + $0xa0] sm:$0xf]
    %v9730 = vld [vmem:[%s9688 + $0xa4] sm:$0xf]
    %v9731 = vld [vmem:[%s9688 + $0xa8] sm:$0xf]
    %v9732 = vld [vmem:[%s9688 + $0xac] sm:$0xf]
    %v9733 = vld [vmem:[%s9688 + $0xb0] sm:$0xf]
    %v9734 = vld [vmem:[%s9688 + $0xb4] sm:$0xf]
    %v9735 = vld [vmem:[%s9688 + $0xb8] sm:$0xf]
    %v9736 = vld [vmem:[%s9688 + $0xbc] sm:$0xf]
    %v9737 = vld [vmem:[%s9688 + $0xc0] sm:$0xf]
    %v9738 = vld [vmem:[%s9688 + $0xc4] sm:$0xf]
    %v9739 = vld [vmem:[%s9688 + $0xc8] sm:$0xf]
    %v9740 = vld [vmem:[%s9688 + $0xcc] sm:$0xf]
    %v9741 = vld [vmem:[%s9688 + $0xd0] sm:$0xf]
    %v9742 = vld [vmem:[%s9688 + $0xd4] sm:$0xf]
    %v9743 = vld [vmem:[%s9688 + $0xd8] sm:$0xf]
    %v9744 = vld [vmem:[%s9688 + $0xdc] sm:$0xf]
    %v9745 = vld [vmem:[%s9688 + $0xe0] sm:$0xf]
    %v9746 = vld [vmem:[%s9688 + $0xe4] sm:$0xf]
    %v9747 = vld [vmem:[%s9688 + $0xe8] sm:$0xf]
    %v9748 = vld [vmem:[%s9688 + $0xec] sm:$0xf]
    %v9749 = vld [vmem:[%s9688 + $0xf0] sm:$0xf]
    %v9750 = vld [vmem:[%s9688 + $0xf4] sm:$0xf]
    %v9751 = vld [vmem:[%s9688 + $0xf8] sm:$0xf]
    %v9752 = vld [vmem:[%s9688 + $0xfc] sm:$0xf]
    %v9753 = vld [vmem:[%s9688 + $0x100] sm:$0xf]
    %v9754 = vld [vmem:[%s9688 + $0x104] sm:$0xf]
    %v9755 = vld [vmem:[%s9688 + $0x108] sm:$0xf]
    %v9756 = vld [vmem:[%s9688 + $0x10c] sm:$0xf]
    %v9757 = vld [vmem:[%s9688 + $0x110] sm:$0xf]
    %v9758 = vld [vmem:[%s9688 + $0x114] sm:$0xf]
    %v9759 = vld [vmem:[%s9688 + $0x118] sm:$0xf]
    %v9760 = vld [vmem:[%s9688 + $0x11c] sm:$0xf]
    %v9761 = vld [vmem:[%s9688 + $0x120] sm:$0xf]
    %v9762 = vld [vmem:[%s9688 + $0x124] sm:$0xf]
    %v9763 = vld [vmem:[%s9688 + $0x128] sm:$0xf]
    %v9764 = vld [vmem:[%s9688 + $0x12c] sm:$0xf]
    %v9765 = vld [vmem:[%s9688 + $0x130] sm:$0xf]
    %v9766 = vld [vmem:[%s9688 + $0x134] sm:$0xf]
    %v9767 = vld [vmem:[%s9688 + $0x138] sm:$0xf]
    %v9768 = vld [vmem:[%s9688 + $0x13c] sm:$0xf]
    %v9769 = vld [vmem:[%s9688 + $0x140] sm:$0xf]
    %v9770 = vld [vmem:[%s9688 + $0x144] sm:$0xf]
    %v9771 = vld [vmem:[%s9688 + $0x148] sm:$0xf]
    %v9772 = vld [vmem:[%s9688 + $0x14c] sm:$0xf]
    %v9773 = vld [vmem:[%s9688 + $0x150] sm:$0xf]
    %v9774 = vld [vmem:[%s9688 + $0x154] sm:$0xf]
    %v9775 = vld [vmem:[%s9688 + $0x158] sm:$0xf]
    %v9776 = vld [vmem:[%s9688 + $0x15c] sm:$0xf]
    %v9777 = vld [vmem:[%s9688 + $0x160] sm:$0xf]
    %v9778 = vld [vmem:[%s9688 + $0x164] sm:$0xf]
    %v9779 = vld [vmem:[%s9688 + $0x168] sm:$0xf]
    %v9780 = vld [vmem:[%s9688 + $0x16c] sm:$0xf]
    %v9781 = vld [vmem:[%s9688 + $0x170] sm:$0xf]
    %v9782 = vld [vmem:[%s9688 + $0x174] sm:$0xf]
    %v9783 = vld [vmem:[%s9688 + $0x178] sm:$0xf]
    %v9784 = vld [vmem:[%s9688 + $0x17c] sm:$0xf]
    %v9785 = vld [vmem:[%s9688 + $0x180] sm:$0xf]
    %v9786 = vld [vmem:[%s9688 + $0x184] sm:$0xf]
    %v9787 = vld [vmem:[%s9688 + $0x188] sm:$0xf]
    %v9788 = vld [vmem:[%s9688 + $0x18c] sm:$0xf]
    %v9789 = vld [vmem:[%s9688 + $0x190] sm:$0xf]
    %v9790 = vld [vmem:[%s9688 + $0x194] sm:$0xf]
    %v9791 = vld [vmem:[%s9688 + $0x198] sm:$0xf]
    %v9792 = vld [vmem:[%s9688 + $0x19c] sm:$0xf]
    %v9793 = vld [vmem:[%s9688 + $0x1a0] sm:$0xf]
    %v9794 = vld [vmem:[%s9688 + $0x1a4] sm:$0xf]
    %v9795 = vld [vmem:[%s9688 + $0x1a8] sm:$0xf]
    %v9796 = vld [vmem:[%s9688 + $0x1ac] sm:$0xf]
    %v9797 = vld [vmem:[%s9688 + $0x1b0] sm:$0xf]
    %v9798 = vld [vmem:[%s9688 + $0x1b4] sm:$0xf]
    %v9799 = vld [vmem:[%s9688 + $0x1b8] sm:$0xf]
    %v9800 = vld [vmem:[%s9688 + $0x1bc] sm:$0xf]
    %v9801 = vld [vmem:[%s9688 + $0x1c0] sm:$0xf]
    %v9802 = vld [vmem:[%s9688 + $0x1c4] sm:$0xf]
    %v9803 = vld [vmem:[%s9688 + $0x1c8] sm:$0xf]
    %v9804 = vld [vmem:[%s9688 + $0x1cc] sm:$0xf]
    %v9805 = vld [vmem:[%s9688 + $0x1d0] sm:$0xf]
    %v9806 = vld [vmem:[%s9688 + $0x1d4] sm:$0xf]
    %v9807 = vld [vmem:[%s9688 + $0x1d8] sm:$0xf]
    %v9808 = vld [vmem:[%s9688 + $0x1dc] sm:$0xf]
    %v9809 = vld [vmem:[%s9688 + $0x1e0] sm:$0xf]
    %v9810 = vld [vmem:[%s9688 + $0x1e4] sm:$0xf]
    %v9811 = vld [vmem:[%s9688 + $0x1e8] sm:$0xf]
    %v9812 = vld [vmem:[%s9688 + $0x1ec] sm:$0xf]
    %v9813 = vld [vmem:[%s9688 + $0x1f0] sm:$0xf]
    %v9814 = vld [vmem:[%s9688 + $0x1f4] sm:$0xf]
    %v9815 = vld [vmem:[%s9688 + $0x1f8] sm:$0xf]
    %v9816 = vld [vmem:[%s9688 + $0x1fc] sm:$0xf]
    %v9817 = vld [vmem:[%s9688 + $0x200] sm:$0xf]
    %v9818 = vld [vmem:[%s9688 + $0x204] sm:$0xf]
    %v9819 = vld [vmem:[%s9688 + $0x208] sm:$0xf]
    %v9820 = vld [vmem:[%s9688 + $0x20c] sm:$0xf]
    %v9821 = vld [vmem:[%s9688 + $0x210] sm:$0xf]
    %v9822 = vld [vmem:[%s9688 + $0x214] sm:$0xf]
    %v9823 = vld [vmem:[%s9688 + $0x218] sm:$0xf]
    %v9824 = vld [vmem:[%s9688 + $0x21c] sm:$0xf]
    %v9825 = vld [vmem:[%s9688 + $0x220] sm:$0xf]
    %v9826 = vld [vmem:[%s9688 + $0x224] sm:$0xf]
    %v9827 = vld [vmem:[%s9688 + $0x228] sm:$0xf]
    %v9828 = vld [vmem:[%s9688 + $0x22c] sm:$0xf]
    %v9829 = vld [vmem:[%s9688 + $0x230] sm:$0xf]
    %v9830 = vld [vmem:[%s9688 + $0x234] sm:$0xf]
    %v9831 = vld [vmem:[%s9688 + $0x238] sm:$0xf]
    %v9832 = vld [vmem:[%s9688 + $0x23c] sm:$0xf]
    %v9833 = vld [vmem:[%s9688 + $0x240] sm:$0xf]
    %v9834 = vld [vmem:[%s9688 + $0x244] sm:$0xf]
    %v9835 = vld [vmem:[%s9688 + $0x248] sm:$0xf]
    %v9836 = vld [vmem:[%s9688 + $0x24c] sm:$0xf]
    %v9837 = vld [vmem:[%s9688 + $0x250] sm:$0xf]
    %v9838 = vld [vmem:[%s9688 + $0x254] sm:$0xf]
    %v9839 = vld [vmem:[%s9688 + $0x258] sm:$0xf]
    %v9840 = vld [vmem:[%s9688 + $0x25c] sm:$0xf]
    %v9841 = vld [vmem:[%s9688 + $0x260] sm:$0xf]
    %v9842 = vld [vmem:[%s9688 + $0x264] sm:$0xf]
    %v9843 = vld [vmem:[%s9688 + $0x268] sm:$0xf]
    %v9844 = vld [vmem:[%s9688 + $0x26c] sm:$0xf]
    %v9845 = vld [vmem:[%s9688 + $0x270] sm:$0xf]
    %v9846 = vld [vmem:[%s9688 + $0x274] sm:$0xf]
    %v9847 = vld [vmem:[%s9688 + $0x278] sm:$0xf]
    %v9848 = vld [vmem:[%s9688 + $0x27c] sm:$0xf]
    %v9849 = vld [vmem:[%s9688 + $0x280] sm:$0xf]
    %v9850 = vld [vmem:[%s9688 + $0x284] sm:$0xf]
    %v9851 = vld [vmem:[%s9688 + $0x288] sm:$0xf]
    %v9852 = vld [vmem:[%s9688 + $0x28c] sm:$0xf]
    %v9853 = vld [vmem:[%s9688 + $0x290] sm:$0xf]
    %v9854 = vld [vmem:[%s9688 + $0x294] sm:$0xf]
    %v9855 = vld [vmem:[%s9688 + $0x298] sm:$0xf]
    %v9856 = vld [vmem:[%s9688 + $0x29c] sm:$0xf]
    %v9857 = vld [vmem:[%s9688 + $0x2a0] sm:$0xf]
    %v9858 = vld [vmem:[%s9688 + $0x2a4] sm:$0xf]
    %v9859 = vld [vmem:[%s9688 + $0x2a8] sm:$0xf]
    %v9860 = vld [vmem:[%s9688 + $0x2ac] sm:$0xf]
    %v9861 = vld [vmem:[%s9688 + $0x2b0] sm:$0xf]
    %v9862 = vld [vmem:[%s9688 + $0x2b4] sm:$0xf]
    %v9863 = vld [vmem:[%s9688 + $0x2b8] sm:$0xf]
    %v9864 = vld [vmem:[%s9688 + $0x2bc] sm:$0xf]
    %v9865 = vld [vmem:[%s9688 + $0x2c0] sm:$0xf]
    %v9866 = vld [vmem:[%s9688 + $0x2c4] sm:$0xf]
    %v9867 = vld [vmem:[%s9688 + $0x2c8] sm:$0xf]
    %v9868 = vld [vmem:[%s9688 + $0x2cc] sm:$0xf]
    %v9869 = vld [vmem:[%s9688 + $0x2d0] sm:$0xf]
    %v9870 = vld [vmem:[%s9688 + $0x2d4] sm:$0xf]
    %v9871 = vld [vmem:[%s9688 + $0x2d8] sm:$0xf]
    %v9872 = vld [vmem:[%s9688 + $0x2dc] sm:$0xf]
    %v9873 = vld [vmem:[%s9688 + $0x2e0] sm:$0xf]
    %v9874 = vld [vmem:[%s9688 + $0x2e4] sm:$0xf]
    %v9875 = vld [vmem:[%s9688 + $0x2e8] sm:$0xf]
    %v9876 = vld [vmem:[%s9688 + $0x2ec] sm:$0xf]
    %v9877 = vld [vmem:[%s9688 + $0x2f0] sm:$0xf]
    %v9878 = vld [vmem:[%s9688 + $0x2f4] sm:$0xf]
    %v9879 = vld [vmem:[%s9688 + $0x2f8] sm:$0xf]
    %v9880 = vld [vmem:[%s9688 + $0x2fc] sm:$0xf]
    %v9881 = vld [vmem:[%s9688 + $0x300] sm:$0xf]
    %v9882 = vld [vmem:[%s9688 + $0x304] sm:$0xf]
    %v9883 = vld [vmem:[%s9688 + $0x308] sm:$0xf]
    %v9884 = vld [vmem:[%s9688 + $0x30c] sm:$0xf]
    %v9885 = vld [vmem:[%s9688 + $0x310] sm:$0xf]
    %v9886 = vld [vmem:[%s9688 + $0x314] sm:$0xf]
    %v9887 = vld [vmem:[%s9688 + $0x318] sm:$0xf]
    %v9888 = vld [vmem:[%s9688 + $0x31c] sm:$0xf]
    %v9889 = vld [vmem:[%s9688 + $0x320] sm:$0xf]
    %v9890 = vld [vmem:[%s9688 + $0x324] sm:$0xf]
    %v9891 = vld [vmem:[%s9688 + $0x328] sm:$0xf]
    %v9892 = vld [vmem:[%s9688 + $0x32c] sm:$0xf]
    %v9893 = vld [vmem:[%s9688 + $0x330] sm:$0xf]
    %v9894 = vld [vmem:[%s9688 + $0x334] sm:$0xf]
    %v9895 = vld [vmem:[%s9688 + $0x338] sm:$0xf]
    %v9896 = vld [vmem:[%s9688 + $0x33c] sm:$0xf]
    %v9897 = vld [vmem:[%s9688 + $0x340] sm:$0xf]
    %v9898 = vld [vmem:[%s9688 + $0x344] sm:$0xf]
    %v9899 = vld [vmem:[%s9688 + $0x348] sm:$0xf]
    %v9900 = vld [vmem:[%s9688 + $0x34c] sm:$0xf]
    %v9901 = vld [vmem:[%s9688 + $0x350] sm:$0xf]
    %v9902 = vld [vmem:[%s9688 + $0x354] sm:$0xf]
    %v9903 = vld [vmem:[%s9688 + $0x358] sm:$0xf]
    %v9904 = vld [vmem:[%s9688 + $0x35c] sm:$0xf]
    %v9905 = vld [vmem:[%s9688 + $0x360] sm:$0xf]
    %v9906 = vld [vmem:[%s9688 + $0x364] sm:$0xf]
    %v9907 = vld [vmem:[%s9688 + $0x368] sm:$0xf]
    %v9908 = vld [vmem:[%s9688 + $0x36c] sm:$0xf]
    %v9909 = vld [vmem:[%s9688 + $0x370] sm:$0xf]
    %v9910 = vld [vmem:[%s9688 + $0x374] sm:$0xf]
    %v9911 = vld [vmem:[%s9688 + $0x378] sm:$0xf]
    %v9912 = vld [vmem:[%s9688 + $0x37c] sm:$0xf]
    %v9913 = vld [vmem:[%s9688 + $0x380] sm:$0xf]
    %v9914 = vld [vmem:[%s9688 + $0x384] sm:$0xf]
    %v9915 = vld [vmem:[%s9688 + $0x388] sm:$0xf]
    %v9916 = vld [vmem:[%s9688 + $0x38c] sm:$0xf]
    %v9917 = vld [vmem:[%s9688 + $0x390] sm:$0xf]
    %v9918 = vld [vmem:[%s9688 + $0x394] sm:$0xf]
    %v9919 = vld [vmem:[%s9688 + $0x398] sm:$0xf]
    %v9920 = vld [vmem:[%s9688 + $0x39c] sm:$0xf]
    %v9921 = vld [vmem:[%s9688 + $0x3a0] sm:$0xf]
    %v9922 = vld [vmem:[%s9688 + $0x3a4] sm:$0xf]
    %v9923 = vld [vmem:[%s9688 + $0x3a8] sm:$0xf]
    %v9924 = vld [vmem:[%s9688 + $0x3ac] sm:$0xf]
    %v9925 = vld [vmem:[%s9688 + $0x3b0] sm:$0xf]
    %v9926 = vld [vmem:[%s9688 + $0x3b4] sm:$0xf]
    %v9927 = vld [vmem:[%s9688 + $0x3b8] sm:$0xf]
    %v9928 = vld [vmem:[%s9688 + $0x3bc] sm:$0xf]
    %v9929 = vld [vmem:[%s9688 + $0x3c0] sm:$0xf]
    %v9930 = vld [vmem:[%s9688 + $0x3c4] sm:$0xf]
    %v9931 = vld [vmem:[%s9688 + $0x3c8] sm:$0xf]
    %v9932 = vld [vmem:[%s9688 + $0x3cc] sm:$0xf]
    %v9933 = vld [vmem:[%s9688 + $0x3d0] sm:$0xf]
    %v9934 = vld [vmem:[%s9688 + $0x3d4] sm:$0xf]
    %v9935 = vld [vmem:[%s9688 + $0x3d8] sm:$0xf]
    %v9936 = vld [vmem:[%s9688 + $0x3dc] sm:$0xf]
    %v9937 = vld [vmem:[%s9688 + $0x3e0] sm:$0xf]
    %v9938 = vld [vmem:[%s9688 + $0x3e4] sm:$0xf]
    %v9939 = vld [vmem:[%s9688 + $0x3e8] sm:$0xf]
    %v9940 = vld [vmem:[%s9688 + $0x3ec] sm:$0xf]
    %v9941 = vld [vmem:[%s9688 + $0x3f0] sm:$0xf]
    %v9942 = vld [vmem:[%s9688 + $0x3f4] sm:$0xf]
    %v9943 = vld [vmem:[%s9688 + $0x3f8] sm:$0xf]
    %v9944 = vld [vmem:[%s9688 + $0x3fc] sm:$0xf]
    %s9945 = scalar_lea.vmem %s13, 2
    %v9946 = vld [vmem:[%s9945] sm:$0x1]
    %v9948 = vlaneseq
    %v9949 = vshrl.u32 %v9948, 7
    %v9950 = vsub.s32 0, %v9949
    %v9951 = vrot.slane %v9946, %v9950
    %v10209 = vunpack.c.l.b16 %v9689
    %v10210 = vunpack.c.l.b16 %v9690
    %v10211 = vunpack.c.l.b16 %v9691
    %v10212 = vunpack.c.l.b16 %v9692
    %v10213 = vunpack.c.l.b16 %v9693
    %v10214 = vunpack.c.l.b16 %v9694
    %v10215 = vunpack.c.l.b16 %v9695
    %v10216 = vunpack.c.l.b16 %v9696
    %v10217 = vunpack.c.l.b16 %v9697
    %v10218 = vunpack.c.l.b16 %v9698
    %v10219 = vunpack.c.l.b16 %v9699
    %v10220 = vunpack.c.l.b16 %v9700
    %v10221 = vunpack.c.l.b16 %v9701
    %v10222 = vunpack.c.l.b16 %v9702
    %v10223 = vunpack.c.l.b16 %v9703
    %v10224 = vunpack.c.l.b16 %v9704
    %v10225 = vunpack.c.l.b16 %v9705
    %v10226 = vunpack.c.l.b16 %v9706
    %v10227 = vunpack.c.l.b16 %v9707
    %v10228 = vunpack.c.l.b16 %v9708
    %v10229 = vunpack.c.l.b16 %v9709
    %v10230 = vunpack.c.l.b16 %v9710
    %v10231 = vunpack.c.l.b16 %v9711
    %v10232 = vunpack.c.l.b16 %v9712
    %v10233 = vunpack.c.l.b16 %v9713
    %v10234 = vunpack.c.l.b16 %v9714
    %v10235 = vunpack.c.l.b16 %v9715
    %v10236 = vunpack.c.l.b16 %v9716
    %v10237 = vunpack.c.l.b16 %v9717
    %v10238 = vunpack.c.l.b16 %v9718
    %v10239 = vunpack.c.l.b16 %v9719
    %v10240 = vunpack.c.l.b16 %v9720
    %v10241 = vunpack.c.l.b16 %v9721
    %v10242 = vunpack.c.l.b16 %v9722
    %v10243 = vunpack.c.l.b16 %v9723
    %v10244 = vunpack.c.l.b16 %v9724
    %v10245 = vunpack.c.l.b16 %v9725
    %v10246 = vunpack.c.l.b16 %v9726
    %v10247 = vunpack.c.l.b16 %v9727
    %v10248 = vunpack.c.l.b16 %v9728
    %v10249 = vunpack.c.l.b16 %v9729
    %v10250 = vunpack.c.l.b16 %v9730
    %v10251 = vunpack.c.l.b16 %v9731
    %v10252 = vunpack.c.l.b16 %v9732
    %v10253 = vunpack.c.l.b16 %v9733
    %v10254 = vunpack.c.l.b16 %v9734
    %v10255 = vunpack.c.l.b16 %v9735
    %v10256 = vunpack.c.l.b16 %v9736
    %v10257 = vunpack.c.l.b16 %v9737
    %v10258 = vunpack.c.l.b16 %v9738
    %v10259 = vunpack.c.l.b16 %v9739
    %v10260 = vunpack.c.l.b16 %v9740
    %v10261 = vunpack.c.l.b16 %v9741
    %v10262 = vunpack.c.l.b16 %v9742
    %v10263 = vunpack.c.l.b16 %v9743
    %v10264 = vunpack.c.l.b16 %v9744
    %v10265 = vunpack.c.l.b16 %v9745
    %v10266 = vunpack.c.l.b16 %v9746
    %v10267 = vunpack.c.l.b16 %v9747
    %v10268 = vunpack.c.l.b16 %v9748
    %v10269 = vunpack.c.l.b16 %v9749
    %v10270 = vunpack.c.l.b16 %v9750
    %v10271 = vunpack.c.l.b16 %v9751
    %v10272 = vunpack.c.l.b16 %v9752
    %v10273 = vunpack.c.l.b16 %v9753
    %v10274 = vunpack.c.l.b16 %v9754
    %v10275 = vunpack.c.l.b16 %v9755
    %v10276 = vunpack.c.l.b16 %v9756
    %v10277 = vunpack.c.l.b16 %v9757
    %v10278 = vunpack.c.l.b16 %v9758
    %v10279 = vunpack.c.l.b16 %v9759
    %v10280 = vunpack.c.l.b16 %v9760
    %v10281 = vunpack.c.l.b16 %v9761
    %v10282 = vunpack.c.l.b16 %v9762
    %v10283 = vunpack.c.l.b16 %v9763
    %v10284 = vunpack.c.l.b16 %v9764
    %v10285 = vunpack.c.l.b16 %v9765
    %v10286 = vunpack.c.l.b16 %v9766
    %v10287 = vunpack.c.l.b16 %v9767
    %v10288 = vunpack.c.l.b16 %v9768
    %v10289 = vunpack.c.l.b16 %v9769
    %v10290 = vunpack.c.l.b16 %v9770
    %v10291 = vunpack.c.l.b16 %v9771
    %v10292 = vunpack.c.l.b16 %v9772
    %v10293 = vunpack.c.l.b16 %v9773
    %v10294 = vunpack.c.l.b16 %v9774
    %v10295 = vunpack.c.l.b16 %v9775
    %v10296 = vunpack.c.l.b16 %v9776
    %v10297 = vunpack.c.l.b16 %v9777
    %v10298 = vunpack.c.l.b16 %v9778
    %v10299 = vunpack.c.l.b16 %v9779
    %v10300 = vunpack.c.l.b16 %v9780
    %v10301 = vunpack.c.l.b16 %v9781
    %v10302 = vunpack.c.l.b16 %v9782
    %v10303 = vunpack.c.l.b16 %v9783
    %v10304 = vunpack.c.l.b16 %v9784
    %v10305 = vunpack.c.l.b16 %v9785
    %v10306 = vunpack.c.l.b16 %v9786
    %v10307 = vunpack.c.l.b16 %v9787
    %v10308 = vunpack.c.l.b16 %v9788
    %v10309 = vunpack.c.l.b16 %v9789
    %v10310 = vunpack.c.l.b16 %v9790
    %v10311 = vunpack.c.l.b16 %v9791
    %v10312 = vunpack.c.l.b16 %v9792
    %v10313 = vunpack.c.l.b16 %v9793
    %v10314 = vunpack.c.l.b16 %v9794
    %v10315 = vunpack.c.l.b16 %v9795
    %v10316 = vunpack.c.l.b16 %v9796
    %v10317 = vunpack.c.l.b16 %v9797
    %v10318 = vunpack.c.l.b16 %v9798
    %v10319 = vunpack.c.l.b16 %v9799
    %v10320 = vunpack.c.l.b16 %v9800
    %v10321 = vunpack.c.l.b16 %v9801
    %v10322 = vunpack.c.l.b16 %v9802
    %v10323 = vunpack.c.l.b16 %v9803
    %v10324 = vunpack.c.l.b16 %v9804
    %v10325 = vunpack.c.l.b16 %v9805
    %v10326 = vunpack.c.l.b16 %v9806
    %v10327 = vunpack.c.l.b16 %v9807
    %v10328 = vunpack.c.l.b16 %v9808
    %v10329 = vunpack.c.l.b16 %v9809
    %v10330 = vunpack.c.l.b16 %v9810
    %v10331 = vunpack.c.l.b16 %v9811
    %v10332 = vunpack.c.l.b16 %v9812
    %v10333 = vunpack.c.l.b16 %v9813
    %v10334 = vunpack.c.l.b16 %v9814
    %v10335 = vunpack.c.l.b16 %v9815
    %v10336 = vunpack.c.l.b16 %v9816
    %v10337 = vunpack.c.l.b16 %v9817
    %v10338 = vunpack.c.l.b16 %v9818
    %v10339 = vunpack.c.l.b16 %v9819
    %v10340 = vunpack.c.l.b16 %v9820
    %v10341 = vunpack.c.l.b16 %v9821
    %v10342 = vunpack.c.l.b16 %v9822
    %v10343 = vunpack.c.l.b16 %v9823
    %v10344 = vunpack.c.l.b16 %v9824
    %v10345 = vunpack.c.l.b16 %v9825
    %v10346 = vunpack.c.l.b16 %v9826
    %v10347 = vunpack.c.l.b16 %v9827
    %v10348 = vunpack.c.l.b16 %v9828
    %v10349 = vunpack.c.l.b16 %v9829
    %v10350 = vunpack.c.l.b16 %v9830
    %v10351 = vunpack.c.l.b16 %v9831
    %v10352 = vunpack.c.l.b16 %v9832
    %v10353 = vunpack.c.l.b16 %v9833
    %v10354 = vunpack.c.l.b16 %v9834
    %v10355 = vunpack.c.l.b16 %v9835
    %v10356 = vunpack.c.l.b16 %v9836
    %v10357 = vunpack.c.l.b16 %v9837
    %v10358 = vunpack.c.l.b16 %v9838
    %v10359 = vunpack.c.l.b16 %v9839
    %v10360 = vunpack.c.l.b16 %v9840
    %v10361 = vunpack.c.l.b16 %v9841
    %v10362 = vunpack.c.l.b16 %v9842
    %v10363 = vunpack.c.l.b16 %v9843
    %v10364 = vunpack.c.l.b16 %v9844
    %v10365 = vunpack.c.l.b16 %v9845
    %v10366 = vunpack.c.l.b16 %v9846
    %v10367 = vunpack.c.l.b16 %v9847
    %v10368 = vunpack.c.l.b16 %v9848
    %v10369 = vunpack.c.l.b16 %v9849
    %v10370 = vunpack.c.l.b16 %v9850
    %v10371 = vunpack.c.l.b16 %v9851
    %v10372 = vunpack.c.l.b16 %v9852
    %v10373 = vunpack.c.l.b16 %v9853
    %v10374 = vunpack.c.l.b16 %v9854
    %v10375 = vunpack.c.l.b16 %v9855
    %v10376 = vunpack.c.l.b16 %v9856
    %v10377 = vunpack.c.l.b16 %v9857
    %v10378 = vunpack.c.l.b16 %v9858
    %v10379 = vunpack.c.l.b16 %v9859
    %v10380 = vunpack.c.l.b16 %v9860
    %v10381 = vunpack.c.l.b16 %v9861
    %v10382 = vunpack.c.l.b16 %v9862
    %v10383 = vunpack.c.l.b16 %v9863
    %v10384 = vunpack.c.l.b16 %v9864
    %v10385 = vunpack.c.l.b16 %v9865
    %v10386 = vunpack.c.l.b16 %v9866
    %v10387 = vunpack.c.l.b16 %v9867
    %v10388 = vunpack.c.l.b16 %v9868
    %v10389 = vunpack.c.l.b16 %v9869
    %v10390 = vunpack.c.l.b16 %v9870
    %v10391 = vunpack.c.l.b16 %v9871
    %v10392 = vunpack.c.l.b16 %v9872
    %v10393 = vunpack.c.l.b16 %v9873
    %v10394 = vunpack.c.l.b16 %v9874
    %v10395 = vunpack.c.l.b16 %v9875
    %v10396 = vunpack.c.l.b16 %v9876
    %v10397 = vunpack.c.l.b16 %v9877
    %v10398 = vunpack.c.l.b16 %v9878
    %v10399 = vunpack.c.l.b16 %v9879
    %v10400 = vunpack.c.l.b16 %v9880
    %v10401 = vunpack.c.l.b16 %v9881
    %v10402 = vunpack.c.l.b16 %v9882
    %v10403 = vunpack.c.l.b16 %v9883
    %v10404 = vunpack.c.l.b16 %v9884
    %v10405 = vunpack.c.l.b16 %v9885
    %v10406 = vunpack.c.l.b16 %v9886
    %v10407 = vunpack.c.l.b16 %v9887
    %v10408 = vunpack.c.l.b16 %v9888
    %v10409 = vunpack.c.l.b16 %v9889
    %v10410 = vunpack.c.l.b16 %v9890
    %v10411 = vunpack.c.l.b16 %v9891
    %v10412 = vunpack.c.l.b16 %v9892
    %v10413 = vunpack.c.l.b16 %v9893
    %v10414 = vunpack.c.l.b16 %v9894
    %v10415 = vunpack.c.l.b16 %v9895
    %v10416 = vunpack.c.l.b16 %v9896
    %v10417 = vunpack.c.l.b16 %v9897
    %v10418 = vunpack.c.l.b16 %v9898
    %v10419 = vunpack.c.l.b16 %v9899
    %v10420 = vunpack.c.l.b16 %v9900
    %v10421 = vunpack.c.l.b16 %v9901
    %v10422 = vunpack.c.l.b16 %v9902
    %v10423 = vunpack.c.l.b16 %v9903
    %v10424 = vunpack.c.l.b16 %v9904
    %v10425 = vunpack.c.l.b16 %v9905
    %v10426 = vunpack.c.l.b16 %v9906
    %v10427 = vunpack.c.l.b16 %v9907
    %v10428 = vunpack.c.l.b16 %v9908
    %v10429 = vunpack.c.l.b16 %v9909
    %v10430 = vunpack.c.l.b16 %v9910
    %v10431 = vunpack.c.l.b16 %v9911
    %v10432 = vunpack.c.l.b16 %v9912
    %v10433 = vunpack.c.l.b16 %v9913
    %v10434 = vunpack.c.l.b16 %v9914
    %v10435 = vunpack.c.l.b16 %v9915
    %v10436 = vunpack.c.l.b16 %v9916
    %v10437 = vunpack.c.l.b16 %v9917
    %v10438 = vunpack.c.l.b16 %v9918
    %v10439 = vunpack.c.l.b16 %v9919
    %v10440 = vunpack.c.l.b16 %v9920
    %v10441 = vunpack.c.l.b16 %v9921
    %v10442 = vunpack.c.l.b16 %v9922
    %v10443 = vunpack.c.l.b16 %v9923
    %v10444 = vunpack.c.l.b16 %v9924
    %v10445 = vunpack.c.l.b16 %v9925
    %v10446 = vunpack.c.l.b16 %v9926
    %v10447 = vunpack.c.l.b16 %v9927
    %v10448 = vunpack.c.l.b16 %v9928
    %v10449 = vunpack.c.l.b16 %v9929
    %v10450 = vunpack.c.l.b16 %v9930
    %v10451 = vunpack.c.l.b16 %v9931
    %v10452 = vunpack.c.l.b16 %v9932
    %v10453 = vunpack.c.l.b16 %v9933
    %v10454 = vunpack.c.l.b16 %v9934
    %v10455 = vunpack.c.l.b16 %v9935
    %v10456 = vunpack.c.l.b16 %v9936
    %v10457 = vunpack.c.l.b16 %v9937
    %v10458 = vunpack.c.l.b16 %v9938
    %v10459 = vunpack.c.l.b16 %v9939
    %v10460 = vunpack.c.l.b16 %v9940
    %v10461 = vunpack.c.l.b16 %v9941
    %v10462 = vunpack.c.l.b16 %v9942
    %v10463 = vunpack.c.l.b16 %v9943
    %v10464 = vunpack.c.l.b16 %v9944
    %v10465 = vpack.c.b16 %v10210, %v10209
    %v10466 = vpack.c.b16 %v10212, %v10211
    %v10467 = vpack.c.b16 %v10214, %v10213
    %v10468 = vpack.c.b16 %v10216, %v10215
    %v10469 = vpack.c.b16 %v10218, %v10217
    %v10470 = vpack.c.b16 %v10220, %v10219
    %v10471 = vpack.c.b16 %v10222, %v10221
    %v10472 = vpack.c.b16 %v10224, %v10223
    %v10473 = vpack.c.b16 %v10226, %v10225
    %v10474 = vpack.c.b16 %v10228, %v10227
    %v10475 = vpack.c.b16 %v10230, %v10229
    %v10476 = vpack.c.b16 %v10232, %v10231
    %v10477 = vpack.c.b16 %v10234, %v10233
    %v10478 = vpack.c.b16 %v10236, %v10235
    %v10479 = vpack.c.b16 %v10238, %v10237
    %v10480 = vpack.c.b16 %v10240, %v10239
    %v10481 = vpack.c.b16 %v10242, %v10241
    %v10482 = vpack.c.b16 %v10244, %v10243
    %v10483 = vpack.c.b16 %v10246, %v10245
    %v10484 = vpack.c.b16 %v10248, %v10247
    %v10485 = vpack.c.b16 %v10250, %v10249
    %v10486 = vpack.c.b16 %v10252, %v10251
    %v10487 = vpack.c.b16 %v10254, %v10253
    %v10488 = vpack.c.b16 %v10256, %v10255
    %v10489 = vpack.c.b16 %v10258, %v10257
    %v10490 = vpack.c.b16 %v10260, %v10259
    %v10491 = vpack.c.b16 %v10262, %v10261
    %v10492 = vpack.c.b16 %v10264, %v10263
    %v10493 = vpack.c.b16 %v10266, %v10265
    %v10494 = vpack.c.b16 %v10268, %v10267
    %v10495 = vpack.c.b16 %v10270, %v10269
    %v10496 = vpack.c.b16 %v10272, %v10271
    %v10497 = vpack.c.b16 %v10274, %v10273
    %v10498 = vpack.c.b16 %v10276, %v10275
    %v10499 = vpack.c.b16 %v10278, %v10277
    %v10500 = vpack.c.b16 %v10280, %v10279
    %v10501 = vpack.c.b16 %v10282, %v10281
    %v10502 = vpack.c.b16 %v10284, %v10283
    %v10503 = vpack.c.b16 %v10286, %v10285
    %v10504 = vpack.c.b16 %v10288, %v10287
    %v10505 = vpack.c.b16 %v10290, %v10289
    %v10506 = vpack.c.b16 %v10292, %v10291
    %v10507 = vpack.c.b16 %v10294, %v10293
    %v10508 = vpack.c.b16 %v10296, %v10295
    %v10509 = vpack.c.b16 %v10298, %v10297
    %v10510 = vpack.c.b16 %v10300, %v10299
    %v10511 = vpack.c.b16 %v10302, %v10301
    %v10512 = vpack.c.b16 %v10304, %v10303
    %v10513 = vpack.c.b16 %v10306, %v10305
    %v10514 = vpack.c.b16 %v10308, %v10307
    %v10515 = vpack.c.b16 %v10310, %v10309
    %v10516 = vpack.c.b16 %v10312, %v10311
    %v10517 = vpack.c.b16 %v10314, %v10313
    %v10518 = vpack.c.b16 %v10316, %v10315
    %v10519 = vpack.c.b16 %v10318, %v10317
    %v10520 = vpack.c.b16 %v10320, %v10319
    %v10521 = vpack.c.b16 %v10322, %v10321
    %v10522 = vpack.c.b16 %v10324, %v10323
    %v10523 = vpack.c.b16 %v10326, %v10325
    %v10524 = vpack.c.b16 %v10328, %v10327
    %v10525 = vpack.c.b16 %v10330, %v10329
    %v10526 = vpack.c.b16 %v10332, %v10331
    %v10527 = vpack.c.b16 %v10334, %v10333
    %v10528 = vpack.c.b16 %v10336, %v10335
    %v10529 = vpack.c.b16 %v10338, %v10337
    %v10530 = vpack.c.b16 %v10340, %v10339
    %v10531 = vpack.c.b16 %v10342, %v10341
    %v10532 = vpack.c.b16 %v10344, %v10343
    %v10533 = vpack.c.b16 %v10346, %v10345
    %v10534 = vpack.c.b16 %v10348, %v10347
    %v10535 = vpack.c.b16 %v10350, %v10349
    %v10536 = vpack.c.b16 %v10352, %v10351
    %v10537 = vpack.c.b16 %v10354, %v10353
    %v10538 = vpack.c.b16 %v10356, %v10355
    %v10539 = vpack.c.b16 %v10358, %v10357
    %v10540 = vpack.c.b16 %v10360, %v10359
    %v10541 = vpack.c.b16 %v10362, %v10361
    %v10542 = vpack.c.b16 %v10364, %v10363
    %v10543 = vpack.c.b16 %v10366, %v10365
    %v10544 = vpack.c.b16 %v10368, %v10367
    %v10545 = vpack.c.b16 %v10370, %v10369
    %v10546 = vpack.c.b16 %v10372, %v10371
    %v10547 = vpack.c.b16 %v10374, %v10373
    %v10548 = vpack.c.b16 %v10376, %v10375
    %v10549 = vpack.c.b16 %v10378, %v10377
    %v10550 = vpack.c.b16 %v10380, %v10379
    %v10551 = vpack.c.b16 %v10382, %v10381
    %v10552 = vpack.c.b16 %v10384, %v10383
    %v10553 = vpack.c.b16 %v10386, %v10385
    %v10554 = vpack.c.b16 %v10388, %v10387
    %v10555 = vpack.c.b16 %v10390, %v10389
    %v10556 = vpack.c.b16 %v10392, %v10391
    %v10557 = vpack.c.b16 %v10394, %v10393
    %v10558 = vpack.c.b16 %v10396, %v10395
    %v10559 = vpack.c.b16 %v10398, %v10397
    %v10560 = vpack.c.b16 %v10400, %v10399
    %v10561 = vpack.c.b16 %v10402, %v10401
    %v10562 = vpack.c.b16 %v10404, %v10403
    %v10563 = vpack.c.b16 %v10406, %v10405
    %v10564 = vpack.c.b16 %v10408, %v10407
    %v10565 = vpack.c.b16 %v10410, %v10409
    %v10566 = vpack.c.b16 %v10412, %v10411
    %v10567 = vpack.c.b16 %v10414, %v10413
    %v10568 = vpack.c.b16 %v10416, %v10415
    %v10569 = vpack.c.b16 %v10418, %v10417
    %v10570 = vpack.c.b16 %v10420, %v10419
    %v10571 = vpack.c.b16 %v10422, %v10421
    %v10572 = vpack.c.b16 %v10424, %v10423
    %v10573 = vpack.c.b16 %v10426, %v10425
    %v10574 = vpack.c.b16 %v10428, %v10427
    %v10575 = vpack.c.b16 %v10430, %v10429
    %v10576 = vpack.c.b16 %v10432, %v10431
    %v10577 = vpack.c.b16 %v10434, %v10433
    %v10578 = vpack.c.b16 %v10436, %v10435
    %v10579 = vpack.c.b16 %v10438, %v10437
    %v10580 = vpack.c.b16 %v10440, %v10439
    %v10581 = vpack.c.b16 %v10442, %v10441
    %v10582 = vpack.c.b16 %v10444, %v10443
    %v10583 = vpack.c.b16 %v10446, %v10445
    %v10584 = vpack.c.b16 %v10448, %v10447
    %v10585 = vpack.c.b16 %v10450, %v10449
    %v10586 = vpack.c.b16 %v10452, %v10451
    %v10587 = vpack.c.b16 %v10454, %v10453
    %v10588 = vpack.c.b16 %v10456, %v10455
    %v10589 = vpack.c.b16 %v10458, %v10457
    %v10590 = vpack.c.b16 %v10460, %v10459
    %v10591 = vpack.c.b16 %v10462, %v10461
    %v10592 = vpack.c.b16 %v10464, %v10463
    %10721 = vmatprep.subr.bf16.mxu0 0
    %10722 = vmatpush1.bf16.msra.mxu0 %v10465
    %10723 = vmatprep.subr.bf16.mxu0 0
    %10724 = vmatpush1.bf16.msra.mxu0 %v10466
    %10725 = vmatprep.subr.bf16.mxu0 0
    %10726 = vmatpush1.bf16.msra.mxu0 %v10467
    %10727 = vmatprep.subr.bf16.mxu0 0
    %10728 = vmatpush1.bf16.msra.mxu0 %v10468
    %10729 = vmatprep.subr.bf16.mxu0 0
    %10730 = vmatpush1.bf16.msra.mxu0 %v10469
    %10731 = vmatprep.subr.bf16.mxu0 0
    %10732 = vmatpush1.bf16.msra.mxu0 %v10470
    %10733 = vmatprep.subr.bf16.mxu0 0
    %10734 = vmatpush1.bf16.msra.mxu0 %v10471
    %10735 = vmatprep.subr.bf16.mxu0 0
    %10736 = vmatpush1.bf16.msra.mxu0 %v10472
    %10737 = vmatprep.subr.bf16.mxu0 0
    %10738 = vmatpush1.bf16.msra.mxu0 %v10473
    %10739 = vmatprep.subr.bf16.mxu0 0
    %10740 = vmatpush1.bf16.msra.mxu0 %v10474
    %10741 = vmatprep.subr.bf16.mxu0 0
    %10742 = vmatpush1.bf16.msra.mxu0 %v10475
    %10743 = vmatprep.subr.bf16.mxu0 0
    %10744 = vmatpush1.bf16.msra.mxu0 %v10476
    %10745 = vmatprep.subr.bf16.mxu0 0
    %10746 = vmatpush1.bf16.msra.mxu0 %v10477
    %10747 = vmatprep.subr.bf16.mxu0 0
    %10748 = vmatpush1.bf16.msra.mxu0 %v10478
    %10749 = vmatprep.subr.bf16.mxu0 0
    %10750 = vmatpush1.bf16.msra.mxu0 %v10479
    %10751 = vmatprep.subr.bf16.mxu0 0
    %10752 = vmatpush1.bf16.msra.mxu0 %v10480
    %10753 = vmatprep.mubr.bf16.mxu0 %v9657
    %10754 = vmatmul.mubr.bf16.gmra.mrb[0].mxu0 %v9656
    %v10755 = vpop.f32.mrb[0].mxu0
    %v10756 = vadd.f32 %v9951, %v10755
    %v10757 = vpop.f32.mrb[0].mxu0
    %v10758 = vpop.f32.mrb[0].mxu0
    %v10759 = vadd.f32 %v9951, %v10758
    %v10760 = vpop.f32.mrb[0].mxu0
    %10761 = vmatprep.mubr.bf16.mxu0 %v9673
    %10762 = vmatmul.mubr.bf16.gmra.mrb[0].mxu0 %v9672
    %v10763 = vpop.f32.mrb[0].mxu0
    %v10764 = vadd.f32 %v9951, %v10763
    %v10765 = vpop.f32.mrb[0].mxu0
    %v10766 = vpop.f32.mrb[0].mxu0
    %v10767 = vadd.f32 %v9951, %v10766
    %v10768 = vpop.f32.mrb[0].mxu0
    %10769 = vdwg.mxu0
    %10770 = vmatprep.subr.bf16.mxu0 0
    %10771 = vmatpush1.bf16.msra.mxu0 %v10481
    %10772 = vmatprep.subr.bf16.mxu0 0
    %10773 = vmatpush1.bf16.msra.mxu0 %v10482
    %10774 = vmatprep.subr.bf16.mxu0 0
    %10775 = vmatpush1.bf16.msra.mxu0 %v10483
    %10776 = vmatprep.subr.bf16.mxu0 0
    %10777 = vmatpush1.bf16.msra.mxu0 %v10484
    %10778 = vmatprep.subr.bf16.mxu0 0
    %10779 = vmatpush1.bf16.msra.mxu0 %v10485
    %10780 = vmatprep.subr.bf16.mxu0 0
    %10781 = vmatpush1.bf16.msra.mxu0 %v10486
    %10782 = vmatprep.subr.bf16.mxu0 0
    %10783 = vmatpush1.bf16.msra.mxu0 %v10487
    %10784 = vmatprep.subr.bf16.mxu0 0
    %10785 = vmatpush1.bf16.msra.mxu0 %v10488
    %10786 = vmatprep.subr.bf16.mxu0 0
    %10787 = vmatpush1.bf16.msra.mxu0 %v10489
    %10788 = vmatprep.subr.bf16.mxu0 0
    %10789 = vmatpush1.bf16.msra.mxu0 %v10490
    %10790 = vmatprep.subr.bf16.mxu0 0
    %10791 = vmatpush1.bf16.msra.mxu0 %v10491
    %10792 = vmatprep.subr.bf16.mxu0 0
    %10793 = vmatpush1.bf16.msra.mxu0 %v10492
    %10794 = vmatprep.subr.bf16.mxu0 0
    %10795 = vmatpush1.bf16.msra.mxu0 %v10493
    %10796 = vmatprep.subr.bf16.mxu0 0
    %10797 = vmatpush1.bf16.msra.mxu0 %v10494
    %10798 = vmatprep.subr.bf16.mxu0 0
    %10799 = vmatpush1.bf16.msra.mxu0 %v10495
    %10800 = vmatprep.subr.bf16.mxu0 0
    %10801 = vmatpush1.bf16.msra.mxu0 %v10496
    %10802 = vmatprep.mubr.bf16.mxu0 %v9659
    %10803 = vmatmul.mubr.bf16.gmra.mrb[0].mxu0 %v9658
    %v10804 = vpop.f32.mrb[0].mxu0
    %v10805 = vadd.f32 %v10756, %v10804
    %v10806 = vpop.f32.mrb[0].mxu0
    %v10807 = vpop.f32.mrb[0].mxu0
    %v10808 = vadd.f32 %v10759, %v10807
    %v10809 = vpop.f32.mrb[0].mxu0
    %10810 = vmatprep.mubr.bf16.mxu0 %v9675
    %10811 = vmatmul.mubr.bf16.gmra.mrb[0].mxu0 %v9674
    %v10812 = vpop.f32.mrb[0].mxu0
    %v10813 = vadd.f32 %v10764, %v10812
    %v10814 = vpop.f32.mrb[0].mxu0
    %v10815 = vpop.f32.mrb[0].mxu0
    %v10816 = vadd.f32 %v10767, %v10815
    %v10817 = vpop.f32.mrb[0].mxu0
    %10818 = vdwg.mxu0
    %10819 = vmatprep.subr.bf16.mxu0 0
    %10820 = vmatpush1.bf16.msra.mxu0 %v10497
    %10821 = vmatprep.subr.bf16.mxu0 0
    %10822 = vmatpush1.bf16.msra.mxu0 %v10498
    %10823 = vmatprep.subr.bf16.mxu0 0
    %10824 = vmatpush1.bf16.msra.mxu0 %v10499
    %10825 = vmatprep.subr.bf16.mxu0 0
    %10826 = vmatpush1.bf16.msra.mxu0 %v10500
    %10827 = vmatprep.subr.bf16.mxu0 0
    %10828 = vmatpush1.bf16.msra.mxu0 %v10501
    %10829 = vmatprep.subr.bf16.mxu0 0
    %10830 = vmatpush1.bf16.msra.mxu0 %v10502
    %10831 = vmatprep.subr.bf16.mxu0 0
    %10832 = vmatpush1.bf16.msra.mxu0 %v10503
    %10833 = vmatprep.subr.bf16.mxu0 0
    %10834 = vmatpush1.bf16.msra.mxu0 %v10504
    %10835 = vmatprep.subr.bf16.mxu0 0
    %10836 = vmatpush1.bf16.msra.mxu0 %v10505
    %10837 = vmatprep.subr.bf16.mxu0 0
    %10838 = vmatpush1.bf16.msra.mxu0 %v10506
    %10839 = vmatprep.subr.bf16.mxu0 0
    %10840 = vmatpush1.bf16.msra.mxu0 %v10507
    %10841 = vmatprep.subr.bf16.mxu0 0
    %10842 = vmatpush1.bf16.msra.mxu0 %v10508
    %10843 = vmatprep.subr.bf16.mxu0 0
    %10844 = vmatpush1.bf16.msra.mxu0 %v10509
    %10845 = vmatprep.subr.bf16.mxu0 0
    %10846 = vmatpush1.bf16.msra.mxu0 %v10510
    %10847 = vmatprep.subr.bf16.mxu0 0
    %10848 = vmatpush1.bf16.msra.mxu0 %v10511
    %10849 = vmatprep.subr.bf16.mxu0 0
    %10850 = vmatpush1.bf16.msra.mxu0 %v10512
    %10851 = vmatprep.mubr.bf16.mxu0 %v9661
    %10852 = vmatmul.mubr.bf16.gmra.mrb[0].mxu0 %v9660
    %v10853 = vpop.f32.mrb[0].mxu0
    %v10854 = vadd.f32 %v10805, %v10853
    %v10855 = vpop.f32.mrb[0].mxu0
    %v10856 = vpop.f32.mrb[0].mxu0
    %v10857 = vadd.f32 %v10808, %v10856
    %v10858 = vpop.f32.mrb[0].mxu0
    %10859 = vmatprep.mubr.bf16.mxu0 %v9677
    %10860 = vmatmul.mubr.bf16.gmra.mrb[0].mxu0 %v9676
    %v10861 = vpop.f32.mrb[0].mxu0
    %v10862 = vadd.f32 %v10813, %v10861
    %v10863 = vpop.f32.mrb[0].mxu0
    %v10864 = vpop.f32.mrb[0].mxu0
    %v10865 = vadd.f32 %v10816, %v10864
    %v10866 = vpop.f32.mrb[0].mxu0
    %10867 = vdwg.mxu0
    %10868 = vmatprep.subr.bf16.mxu0 0
    %10869 = vmatpush1.bf16.msra.mxu0 %v10513
    %10870 = vmatprep.subr.bf16.mxu0 0
    %10871 = vmatpush1.bf16.msra.mxu0 %v10514
    %10872 = vmatprep.subr.bf16.mxu0 0
    %10873 = vmatpush1.bf16.msra.mxu0 %v10515
    %10874 = vmatprep.subr.bf16.mxu0 0
    %10875 = vmatpush1.bf16.msra.mxu0 %v10516
    %10876 = vmatprep.subr.bf16.mxu0 0
    %10877 = vmatpush1.bf16.msra.mxu0 %v10517
    %10878 = vmatprep.subr.bf16.mxu0 0
    %10879 = vmatpush1.bf16.msra.mxu0 %v10518
    %10880 = vmatprep.subr.bf16.mxu0 0
    %10881 = vmatpush1.bf16.msra.mxu0 %v10519
    %10882 = vmatprep.subr.bf16.mxu0 0
    %10883 = vmatpush1.bf16.msra.mxu0 %v10520
    %10884 = vmatprep.subr.bf16.mxu0 0
    %10885 = vmatpush1.bf16.msra.mxu0 %v10521
    %10886 = vmatprep.subr.bf16.mxu0 0
    %10887 = vmatpush1.bf16.msra.mxu0 %v10522
    %10888 = vmatprep.subr.bf16.mxu0 0
    %10889 = vmatpush1.bf16.msra.mxu0 %v10523
    %10890 = vmatprep.subr.bf16.mxu0 0
    %10891 = vmatpush1.bf16.msra.mxu0 %v10524
    %10892 = vmatprep.subr.bf16.mxu0 0
    %10893 = vmatpush1.bf16.msra.mxu0 %v10525
    %10894 = vmatprep.subr.bf16.mxu0 0
    %10895 = vmatpush1.bf16.msra.mxu0 %v10526
    %10896 = vmatprep.subr.bf16.mxu0 0
    %10897 = vmatpush1.bf16.msra.mxu0 %v10527
    %10898 = vmatprep.subr.bf16.mxu0 0
    %10899 = vmatpush1.bf16.msra.mxu0 %v10528
    %10900 = vmatprep.mubr.bf16.mxu0 %v9663
    %10901 = vmatmul.mubr.bf16.gmra.mrb[0].mxu0 %v9662
    %v10902 = vpop.f32.mrb[0].mxu0
    %v10903 = vadd.f32 %v10854, %v10902
    %v10904 = vpop.f32.mrb[0].mxu0
    %v10905 = vpop.f32.mrb[0].mxu0
    %v10906 = vadd.f32 %v10857, %v10905
    %v10907 = vpop.f32.mrb[0].mxu0
    %10908 = vmatprep.mubr.bf16.mxu0 %v9679
    %10909 = vmatmul.mubr.bf16.gmra.mrb[0].mxu0 %v9678
    %v10910 = vpop.f32.mrb[0].mxu0
    %v10911 = vadd.f32 %v10862, %v10910
    %v10912 = vpop.f32.mrb[0].mxu0
    %v10913 = vpop.f32.mrb[0].mxu0
    %v10914 = vadd.f32 %v10865, %v10913
    %v10915 = vpop.f32.mrb[0].mxu0
    %10916 = vdwg.mxu0
    %10917 = vmatprep.subr.bf16.mxu0 0
    %10918 = vmatpush1.bf16.msra.mxu0 %v10529
    %10919 = vmatprep.subr.bf16.mxu0 0
    %10920 = vmatpush1.bf16.msra.mxu0 %v10530
    %10921 = vmatprep.subr.bf16.mxu0 0
    %10922 = vmatpush1.bf16.msra.mxu0 %v10531
    %10923 = vmatprep.subr.bf16.mxu0 0
    %10924 = vmatpush1.bf16.msra.mxu0 %v10532
    %10925 = vmatprep.subr.bf16.mxu0 0
    %10926 = vmatpush1.bf16.msra.mxu0 %v10533
    %10927 = vmatprep.subr.bf16.mxu0 0
    %10928 = vmatpush1.bf16.msra.mxu0 %v10534
    %10929 = vmatprep.subr.bf16.mxu0 0
    %10930 = vmatpush1.bf16.msra.mxu0 %v10535
    %10931 = vmatprep.subr.bf16.mxu0 0
    %10932 = vmatpush1.bf16.msra.mxu0 %v10536
    %10933 = vmatprep.subr.bf16.mxu0 0
    %10934 = vmatpush1.bf16.msra.mxu0 %v10537
    %10935 = vmatprep.subr.bf16.mxu0 0
    %10936 = vmatpush1.bf16.msra.mxu0 %v10538
    %10937 = vmatprep.subr.bf16.mxu0 0
    %10938 = vmatpush1.bf16.msra.mxu0 %v10539
    %10939 = vmatprep.subr.bf16.mxu0 0
    %10940 = vmatpush1.bf16.msra.mxu0 %v10540
    %10941 = vmatprep.subr.bf16.mxu0 0
    %10942 = vmatpush1.bf16.msra.mxu0 %v10541
    %10943 = vmatprep.subr.bf16.mxu0 0
    %10944 = vmatpush1.bf16.msra.mxu0 %v10542
    %10945 = vmatprep.subr.bf16.mxu0 0
    %10946 = vmatpush1.bf16.msra.mxu0 %v10543
    %10947 = vmatprep.subr.bf16.mxu0 0
    %10948 = vmatpush1.bf16.msra.mxu0 %v10544
    %10949 = vmatprep.mubr.bf16.mxu0 %v9665
    %10950 = vmatmul.mubr.bf16.gmra.mrb[0].mxu0 %v9664
    %v10951 = vpop.f32.mrb[0].mxu0
    %v10952 = vadd.f32 %v10903, %v10951
    %v10953 = vpop.f32.mrb[0].mxu0
    %v10954 = vpop.f32.mrb[0].mxu0
    %v10955 = vadd.f32 %v10906, %v10954
    %v10956 = vpop.f32.mrb[0].mxu0
    %10957 = vmatprep.mubr.bf16.mxu0 %v9681
    %10958 = vmatmul.mubr.bf16.gmra.mrb[0].mxu0 %v9680
    %v10959 = vpop.f32.mrb[0].mxu0
    %v10960 = vadd.f32 %v10911, %v10959
    %v10961 = vpop.f32.mrb[0].mxu0
    %v10962 = vpop.f32.mrb[0].mxu0
    %v10963 = vadd.f32 %v10914, %v10962
    %v10964 = vpop.f32.mrb[0].mxu0
    %10965 = vdwg.mxu0
    %10966 = vmatprep.subr.bf16.mxu0 0
    %10967 = vmatpush1.bf16.msra.mxu0 %v10545
    %10968 = vmatprep.subr.bf16.mxu0 0
    %10969 = vmatpush1.bf16.msra.mxu0 %v10546
    %10970 = vmatprep.subr.bf16.mxu0 0
    %10971 = vmatpush1.bf16.msra.mxu0 %v10547
    %10972 = vmatprep.subr.bf16.mxu0 0
    %10973 = vmatpush1.bf16.msra.mxu0 %v10548
    %10974 = vmatprep.subr.bf16.mxu0 0
    %10975 = vmatpush1.bf16.msra.mxu0 %v10549
    %10976 = vmatprep.subr.bf16.mxu0 0
    %10977 = vmatpush1.bf16.msra.mxu0 %v10550
    %10978 = vmatprep.subr.bf16.mxu0 0
    %10979 = vmatpush1.bf16.msra.mxu0 %v10551
    %10980 = vmatprep.subr.bf16.mxu0 0
    %10981 = vmatpush1.bf16.msra.mxu0 %v10552
    %10982 = vmatprep.subr.bf16.mxu0 0
    %10983 = vmatpush1.bf16.msra.mxu0 %v10553
    %10984 = vmatprep.subr.bf16.mxu0 0
    %10985 = vmatpush1.bf16.msra.mxu0 %v10554
    %10986 = vmatprep.subr.bf16.mxu0 0
    %10987 = vmatpush1.bf16.msra.mxu0 %v10555
    %10988 = vmatprep.subr.bf16.mxu0 0
    %10989 = vmatpush1.bf16.msra.mxu0 %v10556
    %10990 = vmatprep.subr.bf16.mxu0 0
    %10991 = vmatpush1.bf16.msra.mxu0 %v10557
    %10992 = vmatprep.subr.bf16.mxu0 0
    %10993 = vmatpush1.bf16.msra.mxu0 %v10558
    %10994 = vmatprep.subr.bf16.mxu0 0
    %10995 = vmatpush1.bf16.msra.mxu0 %v10559
    %10996 = vmatprep.subr.bf16.mxu0 0
    %10997 = vmatpush1.bf16.msra.mxu0 %v10560
    %10998 = vmatprep.mubr.bf16.mxu0 %v9667
    %10999 = vmatmul.mubr.bf16.gmra.mrb[0].mxu0 %v9666
    %v11000 = vpop.f32.mrb[0].mxu0
    %v11001 = vadd.f32 %v10952, %v11000
    %v11002 = vpop.f32.mrb[0].mxu0
    %v11003 = vpop.f32.mrb[0].mxu0
    %v11004 = vadd.f32 %v10955, %v11003
    %v11005 = vpop.f32.mrb[0].mxu0
    %11006 = vmatprep.mubr.bf16.mxu0 %v9683
    %11007 = vmatmul.mubr.bf16.gmra.mrb[0].mxu0 %v9682
    %v11008 = vpop.f32.mrb[0].mxu0
    %v11009 = vadd.f32 %v10960, %v11008
    %v11010 = vpop.f32.mrb[0].mxu0
    %v11011 = vpop.f32.mrb[0].mxu0
    %v11012 = vadd.f32 %v10963, %v11011
    %v11013 = vpop.f32.mrb[0].mxu0
    %11014 = vdwg.mxu0
    %11015 = vmatprep.subr.bf16.mxu0 0
    %11016 = vmatpush1.bf16.msra.mxu0 %v10561
    %11017 = vmatprep.subr.bf16.mxu0 0
    %11018 = vmatpush1.bf16.msra.mxu0 %v10562
    %11019 = vmatprep.subr.bf16.mxu0 0
    %11020 = vmatpush1.bf16.msra.mxu0 %v10563
    %11021 = vmatprep.subr.bf16.mxu0 0
    %11022 = vmatpush1.bf16.msra.mxu0 %v10564
    %11023 = vmatprep.subr.bf16.mxu0 0
    %11024 = vmatpush1.bf16.msra.mxu0 %v10565
    %11025 = vmatprep.subr.bf16.mxu0 0
    %11026 = vmatpush1.bf16.msra.mxu0 %v10566
    %11027 = vmatprep.subr.bf16.mxu0 0
    %11028 = vmatpush1.bf16.msra.mxu0 %v10567
    %11029 = vmatprep.subr.bf16.mxu0 0
    %11030 = vmatpush1.bf16.msra.mxu0 %v10568
    %11031 = vmatprep.subr.bf16.mxu0 0
    %11032 = vmatpush1.bf16.msra.mxu0 %v10569
    %11033 = vmatprep.subr.bf16.mxu0 0
    %11034 = vmatpush1.bf16.msra.mxu0 %v10570
    %11035 = vmatprep.subr.bf16.mxu0 0
    %11036 = vmatpush1.bf16.msra.mxu0 %v10571
    %11037 = vmatprep.subr.bf16.mxu0 0
    %11038 = vmatpush1.bf16.msra.mxu0 %v10572
    %11039 = vmatprep.subr.bf16.mxu0 0
    %11040 = vmatpush1.bf16.msra.mxu0 %v10573
    %11041 = vmatprep.subr.bf16.mxu0 0
    %11042 = vmatpush1.bf16.msra.mxu0 %v10574
    %11043 = vmatprep.subr.bf16.mxu0 0
    %11044 = vmatpush1.bf16.msra.mxu0 %v10575
    %11045 = vmatprep.subr.bf16.mxu0 0
    %11046 = vmatpush1.bf16.msra.mxu0 %v10576
    %11047 = vmatprep.mubr.bf16.mxu0 %v9669
    %11048 = vmatmul.mubr.bf16.gmra.mrb[0].mxu0 %v9668
    %v11049 = vpop.f32.mrb[0].mxu0
    %v11050 = vadd.f32 %v11001, %v11049
    %v11051 = vpop.f32.mrb[0].mxu0
    %v11052 = vpop.f32.mrb[0].mxu0
    %v11053 = vadd.f32 %v11004, %v11052
    %v11054 = vpop.f32.mrb[0].mxu0
    %11055 = vmatprep.mubr.bf16.mxu0 %v9685
    %11056 = vmatmul.mubr.bf16.gmra.mrb[0].mxu0 %v9684
    %v11057 = vpop.f32.mrb[0].mxu0
    %v11058 = vadd.f32 %v11009, %v11057
    %v11059 = vpop.f32.mrb[0].mxu0
    %v11060 = vpop.f32.mrb[0].mxu0
    %v11061 = vadd.f32 %v11012, %v11060
    %v11062 = vpop.f32.mrb[0].mxu0
    %11063 = vdwg.mxu0
    %11064 = vmatprep.subr.bf16.mxu0 0
    %11065 = vmatpush1.bf16.msra.mxu0 %v10577
    %11066 = vmatprep.subr.bf16.mxu0 0
    %11067 = vmatpush1.bf16.msra.mxu0 %v10578
    %11068 = vmatprep.subr.bf16.mxu0 0
    %11069 = vmatpush1.bf16.msra.mxu0 %v10579
    %11070 = vmatprep.subr.bf16.mxu0 0
    %11071 = vmatpush1.bf16.msra.mxu0 %v10580
    %11072 = vmatprep.subr.bf16.mxu0 0
    %11073 = vmatpush1.bf16.msra.mxu0 %v10581
    %11074 = vmatprep.subr.bf16.mxu0 0
    %11075 = vmatpush1.bf16.msra.mxu0 %v10582
    %11076 = vmatprep.subr.bf16.mxu0 0
    %11077 = vmatpush1.bf16.msra.mxu0 %v10583
    %11078 = vmatprep.subr.bf16.mxu0 0
    %11079 = vmatpush1.bf16.msra.mxu0 %v10584
    %11080 = vmatprep.subr.bf16.mxu0 0
    %11081 = vmatpush1.bf16.msra.mxu0 %v10585
    %11082 = vmatprep.subr.bf16.mxu0 0
    %11083 = vmatpush1.bf16.msra.mxu0 %v10586
    %11084 = vmatprep.subr.bf16.mxu0 0
    %11085 = vmatpush1.bf16.msra.mxu0 %v10587
    %11086 = vmatprep.subr.bf16.mxu0 0
    %11087 = vmatpush1.bf16.msra.mxu0 %v10588
    %11088 = vmatprep.subr.bf16.mxu0 0
    %11089 = vmatpush1.bf16.msra.mxu0 %v10589
    %11090 = vmatprep.subr.bf16.mxu0 0
    %11091 = vmatpush1.bf16.msra.mxu0 %v10590
    %11092 = vmatprep.subr.bf16.mxu0 0
    %11093 = vmatpush1.bf16.msra.mxu0 %v10591
    %11094 = vmatprep.subr.bf16.mxu0 0
    %11095 = vmatpush1.bf16.msra.mxu0 %v10592
    %11096 = vmatprep.mubr.bf16.mxu0 %v9671
    %11097 = vmatmul.mubr.bf16.gmra.mrb[0].mxu0 %v9670
    %v11098 = vpop.f32.mrb[0].mxu0
    %v11099 = vadd.f32 %v11050, %v11098
    %v11100 = vpop.f32.mrb[0].mxu0
    %v11101 = vpop.f32.mrb[0].mxu0
    %v11102 = vadd.f32 %v11053, %v11101
    %v11103 = vpop.f32.mrb[0].mxu0
    %11104 = vmatprep.mubr.bf16.mxu0 %v9687
    %11105 = vmatmul.mubr.bf16.gmra.mrb[0].mxu0 %v9686
    %v11106 = vpop.f32.mrb[0].mxu0
    %v11107 = vadd.f32 %v11058, %v11106
    %v11108 = vpop.f32.mrb[0].mxu0
    %v11109 = vpop.f32.mrb[0].mxu0
    %v11110 = vadd.f32 %v11061, %v11109
    %v11111 = vpop.f32.mrb[0].mxu0
    %11112 = vdwg.mxu0
    %v11113 = vadd.f32 %v8645, %v11099
    %v11114 = vadd.f32 %v8646, %v11102
    %v11115 = vadd.f32 %v8647, %v11107
    %v11116 = vadd.f32 %v8648, %v11110
    %v11117 = vld [vmem:[%s14] sm:$0x1]
    %v11118 = vld [vmem:[%s15] sm:$0x1]
    %v11119 = vsel %vm68, %v11113, 0.0
    %11120 = vadd.xlane.f32.xlu0 %v11119
    %v11121 = vpop.xlane.xlu0 %11120
    %v11122 = vsel %vm68, %v11114, 0.0
    %11123 = vadd.xlane.f32.xlu0 %v11122
    %v11124 = vpop.xlane.xlu0 %11123
    %v11125 = vsel %vm68, %v11115, 0.0
    %11126 = vadd.xlane.f32.xlu0 %v11125
    %v11127 = vpop.xlane.xlu0 %11126
    %v11128 = vsel %vm68, %v11116, 0.0
    %11129 = vadd.xlane.f32.xlu0 %v11128
    %v11130 = vpop.xlane.xlu0 %11129
    %v11131 = vmul.f32 %v11121, %v81
    %v11132 = vmul.f32 %v11124, %v81
    %v11133 = vmul.f32 %v11127, %v81
    %v11134 = vmul.f32 %v11130, %v81
    %v11135 = vsub.f32 %v11113, %v11131
    %v11136 = vsub.f32 %v11114, %v11132
    %v11137 = vsub.f32 %v11115, %v11133
    %v11138 = vsub.f32 %v11116, %v11134
    %v11139 = vmul.f32 %v11135, %v11135
    %v11140 = vmul.f32 %v11136, %v11136
    %v11141 = vmul.f32 %v11137, %v11137
    %v11142 = vmul.f32 %v11138, %v11138
    %v11143 = vsel %vm68, %v11139, 0.0
    %11144 = vadd.xlane.f32.xlu0 %v11143
    %v11145 = vpop.xlane.xlu0 %11144
    %v11146 = vsel %vm68, %v11140, 0.0
    %11147 = vadd.xlane.f32.xlu0 %v11146
    %v11148 = vpop.xlane.xlu0 %11147
    %v11149 = vsel %vm68, %v11141, 0.0
    %11150 = vadd.xlane.f32.xlu0 %v11149
    %v11151 = vpop.xlane.xlu0 %11150
    %v11152 = vsel %vm68, %v11142, 0.0
    %11153 = vadd.xlane.f32.xlu0 %v11152
    %v11154 = vpop.xlane.xlu0 %11153
    %v11155 = vmul.f32 %v11145, %v81
    %v11156 = vmul.f32 %v11148, %v81
    %v11157 = vmul.f32 %v11151, %v81
    %v11158 = vmul.f32 %v11154, %v81
    %v11159 = vadd.f32 %v11155, 1e-05
    %v11160 = vadd.f32 %v11156, 1e-05
    %v11161 = vadd.f32 %v11157, 1e-05
    %v11162 = vadd.f32 %v11158, 1e-05
    %v11163 = vrsqrt.pop %v11159
    %v11164 = vrsqrt.pop %v11160
    %v11165 = vrsqrt.pop %v11161
    %v11166 = vrsqrt.pop %v11162
    %v11167 = vmul.f32 %v11135, %v11163
    %v11168 = vmul.f32 %v11136, %v11164
    %v11169 = vmul.f32 %v11137, %v11165
    %v11170 = vmul.f32 %v11138, %v11166
    %v11172 = vlaneseq
    %v11173 = vshrl.u32 %v11172, 7
    %v11174 = vsub.s32 0, %v11173
    %v11175 = vrot.slane %v11117, %v11174
    %v11177 = vmul.f32 %v11167, %v11175
    %v11178 = vmul.f32 %v11168, %v11175
    %v11179 = vmul.f32 %v11169, %v11175
    %v11180 = vmul.f32 %v11170, %v11175
    %v11182 = vlaneseq
    %v11183 = vshrl.u32 %v11182, 7
    %v11184 = vsub.s32 0, %v11183
    %v11185 = vrot.slane %v11118, %v11184
    %v11187 = vadd.f32 %v11177, %v11185
    %v11188 = vadd.f32 %v11178, %v11185
    %v11189 = vadd.f32 %v11179, %v11185
    %v11190 = vadd.f32 %v11180, %v11185
    %11191 = vst.msk [vmem:[#allocation2] sm:$0xff] %vm68, %v11187
    %11192 = vst.msk [vmem:[#allocation2 + $0x8] sm:$0xff] %vm68, %v11188
    %11193 = vst.msk [vmem:[#allocation2 + $0x10] sm:$0xff] %vm68, %v11189
    %11194 = vst.msk [vmem:[#allocation2 + $0x18] sm:$0xff] %vm68, %v11190
    // Predicated region
    $region66: #{encoder_forward.1} parent=1 // pred_check
      _
    $region67: #{encoder_forward.1} parent=1 // pred_check_branch
      %11196 = sbr.rel (0) target = $region69
    $region68: #{encoder_forward.1} parent=1 // pred_region
      %s11198 = ssub.s32 512, 512
      %11199 = vsyncadd [#allocation3], %s11198
      %s11200 = sshll.u32 [#allocation2], 4
      %s11201 = int_to_ptr.vmem [resolvable:$true] %s11200
      %11206 = dma.vmem_to_hbm [thread:$0]  %s11201, 512, %s16, [#allocation3], 128, 128, 8
    $region69: #{encoder_forward.1} parent=1 // pred_fallthru
      _
    // Predicated region
    $region70: #{encoder_forward.1} parent=1 // pred_check
      _
    $region71: #{encoder_forward.1} parent=1 // pred_check_branch
      %11208 = sbr.rel (0) target = $region73
    $region72: #{encoder_forward.1} parent=1 // pred_region
      %s11210 = ssub.s32 2560, 2560
      %11211 = vsyncadd [#allocation5], %s11210
      %s11212 = sshll.u32 [#allocation4], 4
      %s11213 = int_to_ptr.vmem [resolvable:$true] %s11212
      %11218 = dma.vmem_to_hbm [thread:$0]  %s11213, 2560, %s17, [#allocation5], 128, 128, 8
    $region73: #{encoder_forward.1} parent=1 // pred_fallthru
      _
    // Predicated region
    $region74: #{encoder_forward.1} parent=1 // pred_check
      _
    $region75: #{encoder_forward.1} parent=1 // pred_check_branch
      %11220 = sbr.rel (0) target = $region77
    $region76: #{encoder_forward.1} parent=1 // pred_region
      %11221 = dma.done [#allocation3], 512
    $region77: #{encoder_forward.1} parent=1 // pred_fallthru
      _
    // Predicated region
    $region78: #{encoder_forward.1} parent=1 // pred_check
      _
    $region79: #{encoder_forward.1} parent=1 // pred_check_branch
      %11223 = sbr.rel (0) target = $region81
    $region80: #{encoder_forward.1} parent=1 // pred_region
      %11224 = dma.done [#allocation5], 2560
    $region81: #{encoder_forward.1} parent=1 // pred_fallthru
      _
    %11225 = vsyncpa [#allocation3], 1
    %11226 = vsyncpa [#allocation5], 1

</llo_original>
